<compile_context>
chip_gen: v7x
topology: tpu7x:2x2x1
jax: 0.10.0
libtpu: 0.0.40
codegen_flags: <defaults>
</compile_context>

<pallas_src>
import functools

import jax
import jax.numpy as jnp
from jax.experimental import pallas as pl
from jax.experimental.pallas import tpu as pltpu


# ----------------------------------------------------------------------------
# helpers
# ----------------------------------------------------------------------------
def _round_up(x, m):
    return (x + m - 1) // m * m


_VMEM_LIMIT = None


def _vmem_limit():
    """Generation-aware VMEM request: never the whole physical VMEM (v7x = 64 MiB)."""
    global _VMEM_LIMIT
    if _VMEM_LIMIT is None:
        cap = 128 << 20
        try:
            cap = int(pltpu.get_tpu_info().vmem_capacity_bytes)
        except Exception:
            pass
        _VMEM_LIMIT = int(min(64 << 20, (cap * 3) // 4))
    return _VMEM_LIMIT


def _choose_tiles(G, Mp, Kp, Np):
    tm = Mp if Mp <= 256 else 256
    tn = 256 if Np % 256 == 0 else 128          # 256-wide N feeds v6e/v7x 256x256 MXU
    tk = next(c for c in (2048, 1024, 512, 256, 128) if Kp % c == 0)
    # Give v7x's two TensorCores at least 2 parallel blocks when it is cheap.
    if G * (Mp // tm) * (Np // tn) == 1:
        if Mp % 32 == 0:
            tm = Mp // 2
        elif Np % 256 == 0:
            tn = 128
    return tm, tn, tk


# ----------------------------------------------------------------------------
# Pallas kernel: tiled matmul (bf16 operands, f32 accumulate) + bias + activation
# ----------------------------------------------------------------------------
def _mm_bias_act_kernel(a_ref, w_ref, b_ref, o_ref, acc_ref, *, act):
    k = pl.program_id(3)

    @pl.when(k == 0)
    def _():
        acc_ref[...] = jnp.zeros_like(acc_ref)

    acc_ref[...] += jnp.dot(a_ref[...], w_ref[...],
                            preferred_element_type=jnp.float32)

    @pl.when(k == pl.num_programs(3) - 1)
    def _():
        out = acc_ref[...] + b_ref[...]
        if act == "relu":
            out = jnp.maximum(out, 0.0)
        elif act == "sigmoid":
            # exp and approx-reciprocal both run on the EUP slot (off the VALU);
            # clip keeps the output in [0, 1] despite the approximation.
            out = pl.reciprocal(1.0 + jnp.exp(-out), approx=True)
            out = jnp.clip(out, 0.0, 1.0)
        o_ref[...] = out.astype(o_ref.dtype)


def fused_matmul(a, w_p, b_p, n_out, act="none", out_dtype=jnp.float32):
    """act(a @ w_p + b_p) for a batch of G independent matmuls (one pallas_call).

    a:   (G, M, K)    activations (cast to bf16 for the MXU)
    w_p: (G, Kp, Np)  pre-packed bf16 weights, Kp/Np multiples of 128, K <= Kp
    b_p: (G, 1, Np)   pre-packed f32 bias
    returns (G, M, n_out) in out_dtype.
    """
    G, M, K = a.shape
    Gw, Kp, Np = w_p.shape
    assert Gw == G and K <= Kp and b_p.shape == (G, 1, Np)

    Mp = _round_up(M, 16) if M <= 256 else _round_up(M, 256)
    a = a.astype(jnp.bfloat16)
    if (Mp, Kp) != (M, K):
        a = jnp.pad(a, ((0, 0), (0, Mp - M), (0, Kp - K)))

    tm, tn, tk = _choose_tiles(G, Mp, Kp, Np)
    grid = (G, Mp // tm, Np // tn, Kp // tk)

    out = pl.pallas_call(
        functools.partial(_mm_bias_act_kernel, act=act),
        out_shape=jax.ShapeDtypeStruct((G, Mp, Np), out_dtype),
        grid_spec=pltpu.PrefetchScalarGridSpec(
            num_scalar_prefetch=0,
            grid=grid,
            in_specs=[
                pl.BlockSpec((None, tm, tk), lambda g, i, j, k: (g, i, k)),
                pl.BlockSpec((None, tk, tn), lambda g, i, j, k: (g, k, j)),
                pl.BlockSpec((None, 1, tn), lambda g, i, j, k: (g, 0, j)),
            ],
            out_specs=pl.BlockSpec((None, tm, tn), lambda g, i, j, k: (g, i, j)),
            scratch_shapes=[pltpu.VMEM((tm, tn), jnp.float32)],
        ),
        compiler_params=pltpu.CompilerParams(
            dimension_semantics=("parallel", "parallel", "parallel", "arbitrary"),
            vmem_limit_bytes=_vmem_limit(),
        ),
    )(a, w_p, b_p)

    return out[:, :M, :n_out]


# ----------------------------------------------------------------------------
# Conv / ConvTranspose lowering (NHWC, im2col, sub-pixel deconv)
# ----------------------------------------------------------------------------
def conv2d_nhwc(x, w_p, b_p, n_out, ksize, stride, padding, act, out_dtype):
    """x: (B,H,W,Cin). Weight pre-packed with rows in (kh, kw, cin) order."""
    B, H, W, Cin = x.shape
    Ho = (H + 2 * padding - ksize) // stride + 1
    Wo = (W + 2 * padding - ksize) // stride + 1
    xp = jnp.pad(x, ((0, 0), (padding, padding), (padding, padding), (0, 0))) \
        if padding else x
    taps = [xp[:, kh:kh + stride * (Ho - 1) + 1:stride,
               kw:kw + stride * (Wo - 1) + 1:stride, :]
            for kh in range(ksize) for kw in range(ksize)]
    cols = jnp.concatenate(taps, axis=-1).reshape(B * Ho * Wo, ksize * ksize * Cin)
    out = fused_matmul(cols[None], w_p, b_p, n_out, act, out_dtype)
    return out[0].reshape(B, Ho, Wo, n_out)


def deconv2x_nhwc(x, w_p, b_p, n_out, act, out_dtype):
    """ConvTranspose2d(kernel=4, stride=2, padding=1) via sub-pixel decomposition.

    Output phase (r, c) at pixel (2m+r, 2n+c) is a 2x2 stride-1 conv of the
    1-padded input; the 4 phases run as one batched matmul (leading G=4 axis).
    """
    B, H, W, Cin = x.shape
    xp = jnp.pad(x, ((0, 0), (1, 1), (1, 1), (0, 0)))
    cols = []
    for r in (0, 1):
        for c in (0, 1):
            taps = [xp[:, r + kh:r + kh + H, c + kw:c + kw + W, :]
                    for kh in (0, 1) for kw in (0, 1)]
            cols.append(jnp.concatenate(taps, axis=-1).reshape(B * H * W, 4 * Cin))
    a = jnp.stack(cols, axis=0)                                 # (4, B*H*W, 4*Cin)
    out = fused_matmul(a, w_p, b_p, n_out, act, out_dtype)      # (4, B*H*W, n_out)
    out = out.reshape(2, 2, B, H, W, n_out)                     # (r, c, B, H, W, N)
    out = out.transpose(2, 3, 0, 4, 1, 5).reshape(B, 2 * H, 2 * W, n_out)
    return out


# ----------------------------------------------------------------------------
# Parameter init (PyTorch layouts) + one-time packing into kernel operands
# ----------------------------------------------------------------------------
def init_params(key, in_channel, img_sz, z_size):
    fs = img_sz // 8
    feature_volume = 512 * fs * fs

    def nrm(k, shape, fan_in):
        return jax.random.normal(k, shape, jnp.float32) / jnp.sqrt(fan_in)

    ks = jax.random.split(key, 18)
    p = {}
    enc_ch = [(in_channel, 64), (64, 128), (128, 512)]
    for i, (ci, co) in enumerate(enc_ch, start=1):
        p[f"enc{i}_w"] = nrm(ks[2 * i - 2], (co, ci, 4, 4), ci * 16)
        p[f"enc{i}_b"] = jnp.zeros((co,), jnp.float32)
    p["qm_w"] = nrm(ks[6], (z_size, feature_volume), feature_volume)
    p["qm_b"] = jnp.zeros((z_size,), jnp.float32)
    p["qv_w"] = nrm(ks[7], (z_size, feature_volume), feature_volume)
    p["qv_b"] = jnp.zeros((z_size,), jnp.float32)
    p["proj_w"] = nrm(ks[8], (feature_volume, z_size), z_size)
    p["proj_b"] = jnp.zeros((feature_volume,), jnp.float32)
    dec_ch = [(512, 256), (256, 64), (64, in_channel)]
    for i, (ci, co) in enumerate(dec_ch, start=1):
        p[f"dec{i}_w"] = nrm(ks[9 + 2 * i], (ci, co, 4, 4), ci * 16)
        p[f"dec{i}_b"] = jnp.zeros((co,), jnp.float32)
    return p


def _pack_matmul(wmat, bias):
    """(K, N) f32 weight + (N,) bias -> ((1,Kp,Np) bf16, (1,1,Np) f32)."""
    K, N = wmat.shape
    Kp, Np = _round_up(K, 128), _round_up(N, 128)
    w = jnp.pad(wmat, ((0, Kp - K), (0, Np - N))).astype(jnp.bfloat16)[None]
    b = jnp.pad(bias.astype(jnp.float32), (0, Np - N)).reshape(1, 1, Np)
    return w, b


def _pack_conv(w, b):
    """PyTorch Conv2d weight (Cout,Cin,K,K) -> im2col operand with (kh,kw,cin) rows."""
    Cout, Cin, K, _ = w.shape
    wmat = w.transpose(2, 3, 1, 0).reshape(K * K * Cin, Cout)
    return _pack_matmul(wmat, b)


def _pack_deconv(w, b):
    """PyTorch ConvTranspose2d weight (Cin,Cout,4,4) -> 4 sub-pixel 2x2 conv operands.

    For stride 2 / pad 1 / k=4: output phase 0 uses taps [3,1], phase 1 uses [2,0]
    (per spatial axis), applied as a cross-correlation over the 1-padded input.
    """
    Cin, Cout, K, _ = w.shape
    assert K == 4
    taps = {0: jnp.array([3, 1]), 1: jnp.array([2, 0])}
    ws, bs = [], []
    for r in (0, 1):
        for c in (0, 1):
            sub = jnp.take(w, taps[r], axis=2)
            sub = jnp.take(sub, taps[c], axis=3)                 # (Cin,Cout,2,2)
            wmat = sub.transpose(2, 3, 0, 1).reshape(4 * Cin, Cout)
            wp, bp = _pack_matmul(wmat, b)
            ws.append(wp)
            bs.append(bp)
    return jnp.concatenate(ws, axis=0), jnp.concatenate(bs, axis=0)


def _pack_q(qm_w, qm_b, qv_w, qv_b, fs):
    """Fuse q_mean & q_logvar (N = 2z); convert input index order NCHW->NHWC flatten."""
    z = qm_w.shape[0]

    def to_nhwc_in(wt):          # (z, 512*fs*fs) cols in (c,h,w) -> (fv, z) rows in (h,w,c)
        return wt.reshape(z, 512, fs, fs).transpose(0, 2, 3, 1).reshape(z, -1).T

    wmat = jnp.concatenate([to_nhwc_in(qm_w), to_nhwc_in(qv_w)], axis=1)
    bias = jnp.concatenate([qm_b, qv_b], axis=0)
    return _pack_matmul(wmat, bias)


def _pack_project(pw, pb, fs):
    """project Linear (fv, z); convert output index order NCHW->NHWC flatten."""
    fv, z = pw.shape
    wmat = pw.T.reshape(z, 512, fs, fs).transpose(0, 2, 3, 1).reshape(z, fv)
    bias = pb.reshape(512, fs, fs).transpose(1, 2, 0).reshape(fv)
    return _pack_matmul(wmat, bias)


def pack_params(p, img_sz):
    fs = img_sz // 8
    return {
        "enc1": _pack_conv(p["enc1_w"], p["enc1_b"]),
        "enc2": _pack_conv(p["enc2_w"], p["enc2_b"]),
        "enc3": _pack_conv(p["enc3_w"], p["enc3_b"]),
        "q": _pack_q(p["qm_w"], p["qm_b"], p["qv_w"], p["qv_b"], fs),
        "proj": _pack_project(p["proj_w"], p["proj_b"], fs),
        "dec1": _pack_deconv(p["dec1_w"], p["dec1_b"]),
        "dec2": _pack_deconv(p["dec2_w"], p["dec2_b"]),
        "dec3": _pack_deconv(p["dec3_w"], p["dec3_b"]),
    }


# ----------------------------------------------------------------------------
# Forward pass (eval-mode AutoEncoder.forward)
# ----------------------------------------------------------------------------
def autoencoder_forward(packed, x, z_size):
    """Returns (x_recon, mu, logvar, z) for NCHW input x, matching eval-mode forward()."""
    B, Cin, img, _ = x.shape
    fs = img // 8
    bf16 = jnp.bfloat16

    xh = jnp.transpose(x, (0, 2, 3, 1)).astype(bf16)               # NCHW -> NHWC once

    # ---- encode ----
    h = conv2d_nhwc(xh, *packed["enc1"], n_out=64, ksize=4, stride=2, padding=1,
                    act="relu", out_dtype=bf16)
    h = conv2d_nhwc(h, *packed["enc2"], n_out=128, ksize=4, stride=2, padding=1,
                    act="relu", out_dtype=bf16)
    hE = conv2d_nhwc(h, *packed["enc3"], n_out=512, ksize=4, stride=2, padding=1,
                     act="relu", out_dtype=bf16)

    unrolled = hE.reshape(B, fs * fs * 512)                        # NHWC flatten
    wq, bq = packed["q"]
    stats = fused_matmul(unrolled[None], wq, bq, 2 * z_size)[0]    # fused mu|logvar, f32
    mu, logvar = stats[:, :z_size], stats[:, z_size:]

    # eval-mode forward(): z = mu
    # TODO(synk): training-mode reparameterize() draws torch-normal eps; RNG streams
    # cannot match torch, so the deterministic eval branch is implemented.
    z = mu

    # ---- decode ----
    wp, bp = packed["proj"]
    zp = fused_matmul(z[None], wp, bp, fs * fs * 512,
                      out_dtype=bf16)[0].reshape(B, fs, fs, 512)
    d = deconv2x_nhwc(zp, *packed["dec1"], n_out=256, act="relu", out_dtype=bf16)
    d = deconv2x_nhwc(d, *packed["dec2"], n_out=64, act="relu", out_dtype=bf16)
    xr = deconv2x_nhwc(d, *packed["dec3"], n_out=Cin, act="sigmoid",
                       out_dtype=jnp.float32)
    x_recon = jnp.transpose(xr, (0, 3, 1, 2))                      # NHWC -> NCHW
    return x_recon, mu, logvar, z


# ----------------------------------------------------------------------------
# Pure-XLA f32 reference (PyTorch layouts / semantics) for a layout sanity check
# ----------------------------------------------------------------------------
def _reference_forward(params, x):
    def conv(v, w, b, s, p):
        y = jax.lax.conv_general_dilated(v, w, (s, s), ((p, p), (p, p)),
                                         dimension_numbers=("NCHW", "OIHW", "NCHW"))
        return y + b.reshape(1, -1, 1, 1)

    def deconv(v, w, b, s, p):
        k = w.shape[2]
        w_eq = jnp.flip(w, (2, 3)).transpose(1, 0, 2, 3)
        y = jax.lax.conv_general_dilated(v, w_eq, (1, 1),
                                         ((k - 1 - p, k - 1 - p),) * 2,
                                         lhs_dilation=(s, s),
                                         dimension_numbers=("NCHW", "OIHW", "NCHW"))
        return y + b.reshape(1, -1, 1, 1)

    relu = lambda v: jnp.maximum(v, 0.0)
    B = x.shape[0]
    fs = x.shape[2] // 8
    h = relu(conv(x, params["enc1_w"], params["enc1_b"], 2, 1))
    h = relu(conv(h, params["enc2_w"], params["enc2_b"], 2, 1))
    hE = relu(conv(h, params["enc3_w"], params["enc3_b"], 2, 1))
    unrolled = hE.reshape(B, -1)
    mu = unrolled @ params["qm_w"].T + params["qm_b"]
    logvar = unrolled @ params["qv_w"].T + params["qv_b"]
    z = mu
    zp = (z @ params["proj_w"].T + params["proj_b"]).reshape(B, 512, fs, fs)
    d = relu(deconv(zp, params["dec1_w"], params["dec1_b"], 2, 1))
    d = relu(deconv(d, params["dec2_w"], params["dec2_b"], 2, 1))
    xr = jax.nn.sigmoid(deconv(d, params["dec3_w"], params["dec3_b"], 2, 1))
    return xr, mu, logvar, z


# ----------------------------------------------------------------------------
if __name__ == "__main__":
    B, C, IMG, Z = 2, 4, 16, 32          # small shapes: img_sz divisible by 8

    key = jax.random.PRNGKey(0)
    k_param, k_x = jax.random.split(key)
    params = init_params(k_param, in_channel=C, img_sz=IMG, z_size=Z)
    packed = pack_params(params, img_sz=IMG)      # one-time weight packing
    x = jax.random.normal(k_x, (B, C, IMG, IMG), jnp.float32)

    fwd = jax.jit(functools.partial(autoencoder_forward, z_size=Z))
    x_recon, mu, logvar, z = fwd(packed, x)
    jax.block_until_ready((x_recon, mu, logvar, z))

    assert x_recon.shape == (B, C, IMG, IMG)
    assert mu.shape == (B, Z) and logvar.shape == (B, Z) and z.shape == (B, Z)
    assert bool(jnp.all(jnp.isfinite(x_recon)))
    assert bool(jnp.all((x_recon >= 0.0) & (x_recon <= 1.0)))     # sigmoid output

    # layout / lowering sanity check vs an f32 XLA reference (loose tol: bf16 MXU)
    ref = jax.jit(_reference_forward)(params, x)
    for name, got, want in (("x_recon", x_recon, ref[0]),
                            ("mu", mu, ref[1]),
                            ("logvar", logvar, ref[2])):
        err = float(jnp.max(jnp.abs(got - want)))
        assert err < 0.1, f"{name}: max|pallas - reference| = {err}"

    print("KERNEL_OK")
</pallas_src>

<mosaic_0001>
module attributes {stable_mosaic.version = 11 : i64} {
  func.func @_mm_bias_act_kernel(%arg0: i32, %arg1: i32, %arg2: i32, %arg3: i32, %arg4: memref<1x64x128xbf16, #tpu.memory_space<vmem>>, %arg5: memref<1x128x128xbf16, #tpu.memory_space<vmem>>, %arg6: memref<1x1x128xf32, #tpu.memory_space<vmem>>, %arg7: memref<1x64x128xbf16, #tpu.memory_space<vmem>>, %arg8: memref<64x128xf32, #tpu.memory_space<vmem>>) attributes {dimension_semantics = [#tpu.dimension_semantics<parallel>, #tpu.dimension_semantics<parallel>, #tpu.dimension_semantics<parallel>, #tpu.dimension_semantics<arbitrary>], iteration_bounds = array<i64: 1, 2, 1, 1>, scalar_prefetch = 0 : i64, scratch_operands = 1 : i64, tpu.core_type = #tpu.core_type<tc>, window_params = [{transform_indices = @transform_0, window_bounds = array<i64: 1, 64, 128>}, {transform_indices = @transform_1, window_bounds = array<i64: 1, 128, 128>}, {transform_indices = @transform_2, window_bounds = array<i64: 1, 1, 128>}, {transform_indices = @transform_3, window_bounds = array<i64: 1, 64, 128>}]} {
    %c0_i32 = arith.constant 0 : i32
    %0 = arith.cmpi eq, %arg3, %c0_i32 : i32
    %1 = arith.extui %0 : i1 to i32
    %c0_i32_0 = arith.constant 0 : i32
    %2 = arith.cmpi ne, %1, %c0_i32_0 : i32
    scf.if %2 {
      %cst_12 = arith.constant 0.000000e+00 : f32
      %14 = vector.broadcast %cst_12 : f32 to vector<64x128xf32>
      %c0_13 = arith.constant 0 : index
      %c0_14 = arith.constant 0 : index
      %15 = vector.load %arg8[%c0_13, %c0_14] : memref<64x128xf32, #tpu.memory_space<vmem>>, vector<64x128xf32>
      tpu.vector_store %arg8[%c0_13, %c0_14], %14 {strides = array<i32>} : memref<64x128xf32, #tpu.memory_space<vmem>>, vector<64x128xf32>,
    } else {
    }
    %c0 = arith.constant 0 : index
    %c0_1 = arith.constant 0 : index
    %3 = vector.load %arg8[%c0, %c0_1] : memref<64x128xf32, #tpu.memory_space<vmem>>, vector<64x128xf32>
    %c0_2 = arith.constant 0 : index
    %c0_3 = arith.constant 0 : index
    %c0_4 = arith.constant 0 : index
    %4 = vector.load %arg4[%c0_2, %c0_3, %c0_4] : memref<1x64x128xbf16, #tpu.memory_space<vmem>>, vector<1x64x128xbf16>
    %5 = vector.shape_cast %4 : vector<1x64x128xbf16> to vector<64x128xbf16>
    %c0_5 = arith.constant 0 : index
    %c0_6 = arith.constant 0 : index
    %c0_7 = arith.constant 0 : index
    %6 = vector.load %arg5[%c0_5, %c0_6, %c0_7] : memref<1x128x128xbf16, #tpu.memory_space<vmem>>, vector<1x128x128xbf16>
    %7 = vector.shape_cast %6 : vector<1x128x128xbf16> to vector<128x128xbf16>
    %cst = arith.constant dense<0.000000e+00> : vector<64x128xf32>
    %8 = tpu.matmul %5, %7, %cst {dimension_numbers = #tpu.dot_dimension_numbers<[1], [0], [0], [1], [0, 0, 1, 1], [], []>} : vector<64x128xbf16>, vector<128x128xbf16>, vector<64x128xf32> -> vector<64x128xf32>
    %9 = arith.addf %3, %8 : vector<64x128xf32>
    %c0_8 = arith.constant 0 : index
    %c0_9 = arith.constant 0 : index
    %10 = vector.load %arg8[%c0_8, %c0_9] : memref<64x128xf32, #tpu.memory_space<vmem>>, vector<64x128xf32>
    tpu.vector_store %arg8[%c0_8, %c0_9], %9 {strides = array<i32>} : memref<64x128xf32, #tpu.memory_space<vmem>>, vector<64x128xf32>,
    %c0_i32_10 = arith.constant 0 : i32
    %11 = arith.cmpi eq, %arg3, %c0_i32_10 : i32
    %12 = arith.extui %11 : i1 to i32
    %c0_i32_11 = arith.constant 0 : i32
    %13 = arith.cmpi ne, %12, %c0_i32_11 : i32
    scf.if %13 {
      %c0_12 = arith.constant 0 : index
      %c0_13 = arith.constant 0 : index
      %14 = vector.load %arg8[%c0_12, %c0_13] : memref<64x128xf32, #tpu.memory_space<vmem>>, vector<64x128xf32>
      %c0_14 = arith.constant 0 : index
      %c0_15 = arith.constant 0 : index
      %c0_16 = arith.constant 0 : index
      %15 = vector.load %arg6[%c0_14, %c0_15, %c0_16] : memref<1x1x128xf32, #tpu.memory_space<vmem>>, vector<1x1x128xf32>
      %16 = vector.shape_cast %15 : vector<1x1x128xf32> to vector<1x128xf32>
      %17 = vector.broadcast %16 : vector<1x128xf32> to vector<64x128xf32>
      %18 = arith.addf %14, %17 : vector<64x128xf32>
      %cst_17 = arith.constant 0.000000e+00 : f32
      %19 = vector.broadcast %cst_17 : f32 to vector<64x128xf32>
      %20 = arith.maximumf %18, %19 : vector<64x128xf32>
      %21 = arith.truncf %20 : vector<64x128xf32> to vector<64x128xbf16>
      %c0_18 = arith.constant 0 : index
      %c0_19 = arith.constant 0 : index
      %c0_20 = arith.constant 0 : index
      %22 = vector.load %arg7[%c0_18, %c0_19, %c0_20] : memref<1x64x128xbf16, #tpu.memory_space<vmem>>, vector<1x64x128xbf16>
      %23 = vector.shape_cast %22 : vector<1x64x128xbf16> to vector<64x128xbf16>
      %24 = vector.shape_cast %21 : vector<64x128xbf16> to vector<1x64x128xbf16>
      tpu.vector_store %arg7[%c0_18, %c0_19, %c0_20], %24 {strides = array<i32>} : memref<1x64x128xbf16, #tpu.memory_space<vmem>>, vector<1x64x128xbf16>,
    } else {
    }
    return
  }
  func.func @transform_0(%arg0: i32, %arg1: i32, %arg2: i32, %arg3: i32) -> (i32, i32, i32) {
    %c0_i32 = arith.constant 0 : i32
    return %arg0, %arg1, %arg3 : i32, i32, i32
  }
  func.func @transform_1(%arg0: i32, %arg1: i32, %arg2: i32, %arg3: i32) -> (i32, i32, i32) {
    %c0_i32 = arith.constant 0 : i32
    return %arg0, %arg3, %arg2 : i32, i32, i32
  }
  func.func @transform_2(%arg0: i32, %arg1: i32, %arg2: i32, %arg3: i32) -> (i32, i32, i32) {
    %c0_i32 = arith.constant 0 : i32
    %c0_i32_0 = arith.constant 0 : i32
    return %arg0, %c0_i32, %arg2 : i32, i32, i32
  }
  func.func @transform_3(%arg0: i32, %arg1: i32, %arg2: i32, %arg3: i32) -> (i32, i32, i32) {
    %c0_i32 = arith.constant 0 : i32
    return %arg0, %arg1, %arg2 : i32, i32, i32
  }
}

module attributes {stable_mosaic.version = 11 : i64} {
  func.func @_mm_bias_act_kernel(%arg0: i32, %arg1: i32, %arg2: i32, %arg3: i32, %arg4: memref<1x16x1024xbf16, #tpu.memory_space<vmem>>, %arg5: memref<1x1024x128xbf16, #tpu.memory_space<vmem>>, %arg6: memref<1x1x128xf32, #tpu.memory_space<vmem>>, %arg7: memref<1x16x128xbf16, #tpu.memory_space<vmem>>, %arg8: memref<16x128xf32, #tpu.memory_space<vmem>>) attributes {dimension_semantics = [#tpu.dimension_semantics<parallel>, #tpu.dimension_semantics<parallel>, #tpu.dimension_semantics<parallel>, #tpu.dimension_semantics<arbitrary>], iteration_bounds = array<i64: 1, 2, 1, 1>, scalar_prefetch = 0 : i64, scratch_operands = 1 : i64, tpu.core_type = #tpu.core_type<tc>, window_params = [{transform_indices = @transform_0, window_bounds = array<i64: 1, 16, 1024>}, {transform_indices = @transform_1, window_bounds = array<i64: 1, 1024, 128>}, {transform_indices = @transform_2, window_bounds = array<i64: 1, 1, 128>}, {transform_indices = @transform_3, window_bounds = array<i64: 1, 16, 128>}]} {
    %c0_i32 = arith.constant 0 : i32
    %0 = arith.cmpi eq, %arg3, %c0_i32 : i32
    %1 = arith.extui %0 : i1 to i32
    %c0_i32_0 = arith.constant 0 : i32
    %2 = arith.cmpi ne, %1, %c0_i32_0 : i32
    scf.if %2 {
      %cst_12 = arith.constant 0.000000e+00 : f32
      %14 = vector.broadcast %cst_12 : f32 to vector<16x128xf32>
      %c0_13 = arith.constant 0 : index
      %c0_14 = arith.constant 0 : index
      %15 = vector.load %arg8[%c0_13, %c0_14] : memref<16x128xf32, #tpu.memory_space<vmem>>, vector<16x128xf32>
      tpu.vector_store %arg8[%c0_13, %c0_14], %14 {strides = array<i32>} : memref<16x128xf32, #tpu.memory_space<vmem>>, vector<16x128xf32>,
    } else {
    }
    %c0 = arith.constant 0 : index
    %c0_1 = arith.constant 0 : index
    %3 = vector.load %arg8[%c0, %c0_1] : memref<16x128xf32, #tpu.memory_space<vmem>>, vector<16x128xf32>
    %c0_2 = arith.constant 0 : index
    %c0_3 = arith.constant 0 : index
    %c0_4 = arith.constant 0 : index
    %4 = vector.load %arg4[%c0_2, %c0_3, %c0_4] : memref<1x16x1024xbf16, #tpu.memory_space<vmem>>, vector<1x16x1024xbf16>
    %5 = vector.shape_cast %4 : vector<1x16x1024xbf16> to vector<16x1024xbf16>
    %c0_5 = arith.constant 0 : index
    %c0_6 = arith.constant 0 : index
    %c0_7 = arith.constant 0 : index
    %6 = vector.load %arg5[%c0_5, %c0_6, %c0_7] : memref<1x1024x128xbf16, #tpu.memory_space<vmem>>, vector<1x1024x128xbf16>
    %7 = vector.shape_cast %6 : vector<1x1024x128xbf16> to vector<1024x128xbf16>
    %cst = arith.constant dense<0.000000e+00> : vector<16x128xf32>
    %8 = tpu.matmul %5, %7, %cst {dimension_numbers = #tpu.dot_dimension_numbers<[1], [0], [0], [1], [0, 0, 1, 1], [], []>} : vector<16x1024xbf16>, vector<1024x128xbf16>, vector<16x128xf32> -> vector<16x128xf32>
    %9 = arith.addf %3, %8 : vector<16x128xf32>
    %c0_8 = arith.constant 0 : index
    %c0_9 = arith.constant 0 : index
    %10 = vector.load %arg8[%c0_8, %c0_9] : memref<16x128xf32, #tpu.memory_space<vmem>>, vector<16x128xf32>
    tpu.vector_store %arg8[%c0_8, %c0_9], %9 {strides = array<i32>} : memref<16x128xf32, #tpu.memory_space<vmem>>, vector<16x128xf32>,
    %c0_i32_10 = arith.constant 0 : i32
    %11 = arith.cmpi eq, %arg3, %c0_i32_10 : i32
    %12 = arith.extui %11 : i1 to i32
    %c0_i32_11 = arith.constant 0 : i32
    %13 = arith.cmpi ne, %12, %c0_i32_11 : i32
    scf.if %13 {
      %c0_12 = arith.constant 0 : index
      %c0_13 = arith.constant 0 : index
      %14 = vector.load %arg8[%c0_12, %c0_13] : memref<16x128xf32, #tpu.memory_space<vmem>>, vector<16x128xf32>
      %c0_14 = arith.constant 0 : index
      %c0_15 = arith.constant 0 : index
      %c0_16 = arith.constant 0 : index
      %15 = vector.load %arg6[%c0_14, %c0_15, %c0_16] : memref<1x1x128xf32, #tpu.memory_space<vmem>>, vector<1x1x128xf32>
      %16 = vector.shape_cast %15 : vector<1x1x128xf32> to vector<1x128xf32>
      %17 = vector.broadcast %16 : vector<1x128xf32> to vector<16x128xf32>
      %18 = arith.addf %14, %17 : vector<16x128xf32>
      %cst_17 = arith.constant 0.000000e+00 : f32
      %19 = vector.broadcast %cst_17 : f32 to vector<16x128xf32>
      %20 = arith.maximumf %18, %19 : vector<16x128xf32>
      %21 = arith.truncf %20 : vector<16x128xf32> to vector<16x128xbf16>
      %c0_18 = arith.constant 0 : index
      %c0_19 = arith.constant 0 : index
      %c0_20 = arith.constant 0 : index
      %22 = vector.load %arg7[%c0_18, %c0_19, %c0_20] : memref<1x16x128xbf16, #tpu.memory_space<vmem>>, vector<1x16x128xbf16>
      %23 = vector.shape_cast %22 : vector<1x16x128xbf16> to vector<16x128xbf16>
      %24 = vector.shape_cast %21 : vector<16x128xbf16> to vector<1x16x128xbf16>
      tpu.vector_store %arg7[%c0_18, %c0_19, %c0_20], %24 {strides = array<i32>} : memref<1x16x128xbf16, #tpu.memory_space<vmem>>, vector<1x16x128xbf16>,
    } else {
    }
    return
  }
  func.func @transform_0(%arg0: i32, %arg1: i32, %arg2: i32, %arg3: i32) -> (i32, i32, i32) {
    %c0_i32 = arith.constant 0 : i32
    return %arg0, %arg1, %arg3 : i32, i32, i32
  }
  func.func @transform_1(%arg0: i32, %arg1: i32, %arg2: i32, %arg3: i32) -> (i32, i32, i32) {
    %c0_i32 = arith.constant 0 : i32
    return %arg0, %arg3, %arg2 : i32, i32, i32
  }
  func.func @transform_2(%arg0: i32, %arg1: i32, %arg2: i32, %arg3: i32) -> (i32, i32, i32) {
    %c0_i32 = arith.constant 0 : i32
    %c0_i32_0 = arith.constant 0 : i32
    return %arg0, %c0_i32, %arg2 : i32, i32, i32
  }
  func.func @transform_3(%arg0: i32, %arg1: i32, %arg2: i32, %arg3: i32) -> (i32, i32, i32) {
    %c0_i32 = arith.constant 0 : i32
    return %arg0, %arg1, %arg2 : i32, i32, i32
  }
}

module attributes {stable_mosaic.version = 11 : i64} {
  func.func @_mm_bias_act_kernel(%arg0: i32, %arg1: i32, %arg2: i32, %arg3: i32, %arg4: memref<1x16x2048xbf16, #tpu.memory_space<vmem>>, %arg5: memref<1x2048x256xbf16, #tpu.memory_space<vmem>>, %arg6: memref<1x1x256xf32, #tpu.memory_space<vmem>>, %arg7: memref<1x16x256xbf16, #tpu.memory_space<vmem>>, %arg8: memref<16x256xf32, #tpu.memory_space<vmem>>) attributes {dimension_semantics = [#tpu.dimension_semantics<parallel>, #tpu.dimension_semantics<parallel>, #tpu.dimension_semantics<parallel>, #tpu.dimension_semantics<arbitrary>], iteration_bounds = array<i64: 1, 1, 2, 1>, scalar_prefetch = 0 : i64, scratch_operands = 1 : i64, tpu.core_type = #tpu.core_type<tc>, window_params = [{transform_indices = @transform_0, window_bounds = array<i64: 1, 16, 2048>}, {transform_indices = @transform_1, window_bounds = array<i64: 1, 2048, 256>}, {transform_indices = @transform_2, window_bounds = array<i64: 1, 1, 256>}, {transform_indices = @transform_3, window_bounds = array<i64: 1, 16, 256>}]} {
    %c0_i32 = arith.constant 0 : i32
    %0 = arith.cmpi eq, %arg3, %c0_i32 : i32
    %1 = arith.extui %0 : i1 to i32
    %c0_i32_0 = arith.constant 0 : i32
    %2 = arith.cmpi ne, %1, %c0_i32_0 : i32
    scf.if %2 {
      %cst_12 = arith.constant 0.000000e+00 : f32
      %14 = vector.broadcast %cst_12 : f32 to vector<16x256xf32>
      %c0_13 = arith.constant 0 : index
      %c0_14 = arith.constant 0 : index
      %15 = vector.load %arg8[%c0_13, %c0_14] : memref<16x256xf32, #tpu.memory_space<vmem>>, vector<16x256xf32>
      tpu.vector_store %arg8[%c0_13, %c0_14], %14 {strides = array<i32>} : memref<16x256xf32, #tpu.memory_space<vmem>>, vector<16x256xf32>,
    } else {
    }
    %c0 = arith.constant 0 : index
    %c0_1 = arith.constant 0 : index
    %3 = vector.load %arg8[%c0, %c0_1] : memref<16x256xf32, #tpu.memory_space<vmem>>, vector<16x256xf32>
    %c0_2 = arith.constant 0 : index
    %c0_3 = arith.constant 0 : index
    %c0_4 = arith.constant 0 : index
    %4 = vector.load %arg4[%c0_2, %c0_3, %c0_4] : memref<1x16x2048xbf16, #tpu.memory_space<vmem>>, vector<1x16x2048xbf16>
    %5 = vector.shape_cast %4 : vector<1x16x2048xbf16> to vector<16x2048xbf16>
    %c0_5 = arith.constant 0 : index
    %c0_6 = arith.constant 0 : index
    %c0_7 = arith.constant 0 : index
    %6 = vector.load %arg5[%c0_5, %c0_6, %c0_7] : memref<1x2048x256xbf16, #tpu.memory_space<vmem>>, vector<1x2048x256xbf16>
    %7 = vector.shape_cast %6 : vector<1x2048x256xbf16> to vector<2048x256xbf16>
    %cst = arith.constant dense<0.000000e+00> : vector<16x256xf32>
    %8 = tpu.matmul %5, %7, %cst {dimension_numbers = #tpu.dot_dimension_numbers<[1], [0], [0], [1], [0, 0, 1, 1], [], []>} : vector<16x2048xbf16>, vector<2048x256xbf16>, vector<16x256xf32> -> vector<16x256xf32>
    %9 = arith.addf %3, %8 : vector<16x256xf32>
    %c0_8 = arith.constant 0 : index
    %c0_9 = arith.constant 0 : index
    %10 = vector.load %arg8[%c0_8, %c0_9] : memref<16x256xf32, #tpu.memory_space<vmem>>, vector<16x256xf32>
    tpu.vector_store %arg8[%c0_8, %c0_9], %9 {strides = array<i32>} : memref<16x256xf32, #tpu.memory_space<vmem>>, vector<16x256xf32>,
    %c0_i32_10 = arith.constant 0 : i32
    %11 = arith.cmpi eq, %arg3, %c0_i32_10 : i32
    %12 = arith.extui %11 : i1 to i32
    %c0_i32_11 = arith.constant 0 : i32
    %13 = arith.cmpi ne, %12, %c0_i32_11 : i32
    scf.if %13 {
      %c0_12 = arith.constant 0 : index
      %c0_13 = arith.constant 0 : index
      %14 = vector.load %arg8[%c0_12, %c0_13] : memref<16x256xf32, #tpu.memory_space<vmem>>, vector<16x256xf32>
      %c0_14 = arith.constant 0 : index
      %c0_15 = arith.constant 0 : index
      %c0_16 = arith.constant 0 : index
      %15 = vector.load %arg6[%c0_14, %c0_15, %c0_16] : memref<1x1x256xf32, #tpu.memory_space<vmem>>, vector<1x1x256xf32>
      %16 = vector.shape_cast %15 : vector<1x1x256xf32> to vector<1x256xf32>
      %17 = vector.broadcast %16 : vector<1x256xf32> to vector<16x256xf32>
      %18 = arith.addf %14, %17 : vector<16x256xf32>
      %cst_17 = arith.constant 0.000000e+00 : f32
      %19 = vector.broadcast %cst_17 : f32 to vector<16x256xf32>
      %20 = arith.maximumf %18, %19 : vector<16x256xf32>
      %21 = arith.truncf %20 : vector<16x256xf32> to vector<16x256xbf16>
      %c0_18 = arith.constant 0 : index
      %c0_19 = arith.constant 0 : index
      %c0_20 = arith.constant 0 : index
      %22 = vector.load %arg7[%c0_18, %c0_19, %c0_20] : memref<1x16x256xbf16, #tpu.memory_space<vmem>>, vector<1x16x256xbf16>
      %23 = vector.shape_cast %22 : vector<1x16x256xbf16> to vector<16x256xbf16>
      %24 = vector.shape_cast %21 : vector<16x256xbf16> to vector<1x16x256xbf16>
      tpu.vector_store %arg7[%c0_18, %c0_19, %c0_20], %24 {strides = array<i32>} : memref<1x16x256xbf16, #tpu.memory_space<vmem>>, vector<1x16x256xbf16>,
    } else {
    }
    return
  }
  func.func @transform_0(%arg0: i32, %arg1: i32, %arg2: i32, %arg3: i32) -> (i32, i32, i32) {
    %c0_i32 = arith.constant 0 : i32
    return %arg0, %arg1, %arg3 : i32, i32, i32
  }
  func.func @transform_1(%arg0: i32, %arg1: i32, %arg2: i32, %arg3: i32) -> (i32, i32, i32) {
    %c0_i32 = arith.constant 0 : i32
    return %arg0, %arg3, %arg2 : i32, i32, i32
  }
  func.func @transform_2(%arg0: i32, %arg1: i32, %arg2: i32, %arg3: i32) -> (i32, i32, i32) {
    %c0_i32 = arith.constant 0 : i32
    %c0_i32_0 = arith.constant 0 : i32
    return %arg0, %c0_i32, %arg2 : i32, i32, i32
  }
  func.func @transform_3(%arg0: i32, %arg1: i32, %arg2: i32, %arg3: i32) -> (i32, i32, i32) {
    %c0_i32 = arith.constant 0 : i32
    return %arg0, %arg1, %arg2 : i32, i32, i32
  }
}

module attributes {stable_mosaic.version = 11 : i64} {
  func.func @_mm_bias_act_kernel(%arg0: i32, %arg1: i32, %arg2: i32, %arg3: i32, %arg4: memref<1x16x2048xbf16, #tpu.memory_space<vmem>>, %arg5: memref<1x2048x128xbf16, #tpu.memory_space<vmem>>, %arg6: memref<1x1x128xf32, #tpu.memory_space<vmem>>, %arg7: memref<1x16x128xf32, #tpu.memory_space<vmem>>, %arg8: memref<16x128xf32, #tpu.memory_space<vmem>>) attributes {dimension_semantics = [#tpu.dimension_semantics<parallel>, #tpu.dimension_semantics<parallel>, #tpu.dimension_semantics<parallel>, #tpu.dimension_semantics<arbitrary>], iteration_bounds = array<i64: 1, 1, 1, 1>, scalar_prefetch = 0 : i64, scratch_operands = 1 : i64, tpu.core_type = #tpu.core_type<tc>, window_params = [{transform_indices = @transform_0, window_bounds = array<i64: 1, 16, 2048>}, {transform_indices = @transform_1, window_bounds = array<i64: 1, 2048, 128>}, {transform_indices = @transform_2, window_bounds = array<i64: 1, 1, 128>}, {transform_indices = @transform_3, window_bounds = array<i64: 1, 16, 128>}]} {
    %c0_i32 = arith.constant 0 : i32
    %0 = arith.cmpi eq, %arg3, %c0_i32 : i32
    %1 = arith.extui %0 : i1 to i32
    %c0_i32_0 = arith.constant 0 : i32
    %2 = arith.cmpi ne, %1, %c0_i32_0 : i32
    scf.if %2 {
      %cst_12 = arith.constant 0.000000e+00 : f32
      %14 = vector.broadcast %cst_12 : f32 to vector<16x128xf32>
      %c0_13 = arith.constant 0 : index
      %c0_14 = arith.constant 0 : index
      %15 = vector.load %arg8[%c0_13, %c0_14] : memref<16x128xf32, #tpu.memory_space<vmem>>, vector<16x128xf32>
      tpu.vector_store %arg8[%c0_13, %c0_14], %14 {strides = array<i32>} : memref<16x128xf32, #tpu.memory_space<vmem>>, vector<16x128xf32>,
    } else {
    }
    %c0 = arith.constant 0 : index
    %c0_1 = arith.constant 0 : index
    %3 = vector.load %arg8[%c0, %c0_1] : memref<16x128xf32, #tpu.memory_space<vmem>>, vector<16x128xf32>
    %c0_2 = arith.constant 0 : index
    %c0_3 = arith.constant 0 : index
    %c0_4 = arith.constant 0 : index
    %4 = vector.load %arg4[%c0_2, %c0_3, %c0_4] : memref<1x16x2048xbf16, #tpu.memory_space<vmem>>, vector<1x16x2048xbf16>
    %5 = vector.shape_cast %4 : vector<1x16x2048xbf16> to vector<16x2048xbf16>
    %c0_5 = arith.constant 0 : index
    %c0_6 = arith.constant 0 : index
    %c0_7 = arith.constant 0 : index
    %6 = vector.load %arg5[%c0_5, %c0_6, %c0_7] : memref<1x2048x128xbf16, #tpu.memory_space<vmem>>, vector<1x2048x128xbf16>
    %7 = vector.shape_cast %6 : vector<1x2048x128xbf16> to vector<2048x128xbf16>
    %cst = arith.constant dense<0.000000e+00> : vector<16x128xf32>
    %8 = tpu.matmul %5, %7, %cst {dimension_numbers = #tpu.dot_dimension_numbers<[1], [0], [0], [1], [0, 0, 1, 1], [], []>} : vector<16x2048xbf16>, vector<2048x128xbf16>, vector<16x128xf32> -> vector<16x128xf32>
    %9 = arith.addf %3, %8 : vector<16x128xf32>
    %c0_8 = arith.constant 0 : index
    %c0_9 = arith.constant 0 : index
    %10 = vector.load %arg8[%c0_8, %c0_9] : memref<16x128xf32, #tpu.memory_space<vmem>>, vector<16x128xf32>
    tpu.vector_store %arg8[%c0_8, %c0_9], %9 {strides = array<i32>} : memref<16x128xf32, #tpu.memory_space<vmem>>, vector<16x128xf32>,
    %c0_i32_10 = arith.constant 0 : i32
    %11 = arith.cmpi eq, %arg3, %c0_i32_10 : i32
    %12 = arith.extui %11 : i1 to i32
    %c0_i32_11 = arith.constant 0 : i32
    %13 = arith.cmpi ne, %12, %c0_i32_11 : i32
    scf.if %13 {
      %c0_12 = arith.constant 0 : index
      %c0_13 = arith.constant 0 : index
      %14 = vector.load %arg8[%c0_12, %c0_13] : memref<16x128xf32, #tpu.memory_space<vmem>>, vector<16x128xf32>
      %c0_14 = arith.constant 0 : index
      %c0_15 = arith.constant 0 : index
      %c0_16 = arith.constant 0 : index
      %15 = vector.load %arg6[%c0_14, %c0_15, %c0_16] : memref<1x1x128xf32, #tpu.memory_space<vmem>>, vector<1x1x128xf32>
      %16 = vector.shape_cast %15 : vector<1x1x128xf32> to vector<1x128xf32>
      %17 = vector.broadcast %16 : vector<1x128xf32> to vector<16x128xf32>
      %18 = arith.addf %14, %17 : vector<16x128xf32>
      %c0_17 = arith.constant 0 : index
      %c0_18 = arith.constant 0 : index
      %c0_19 = arith.constant 0 : index
      %19 = vector.load %arg7[%c0_17, %c0_18, %c0_19] : memref<1x16x128xf32, #tpu.memory_space<vmem>>, vector<1x16x128xf32>
      %20 = vector.shape_cast %19 : vector<1x16x128xf32> to vector<16x128xf32>
      %21 = vector.shape_cast %18 : vector<16x128xf32> to vector<1x16x128xf32>
      tpu.vector_store %arg7[%c0_17, %c0_18, %c0_19], %21 {strides = array<i32>} : memref<1x16x128xf32, #tpu.memory_space<vmem>>, vector<1x16x128xf32>,
    } else {
    }
    return
  }
  func.func @transform_0(%arg0: i32, %arg1: i32, %arg2: i32, %arg3: i32) -> (i32, i32, i32) {
    %c0_i32 = arith.constant 0 : i32
    return %arg0, %arg1, %arg3 : i32, i32, i32
  }
  func.func @transform_1(%arg0: i32, %arg1: i32, %arg2: i32, %arg3: i32) -> (i32, i32, i32) {
    %c0_i32 = arith.constant 0 : i32
    return %arg0, %arg3, %arg2 : i32, i32, i32
  }
  func.func @transform_2(%arg0: i32, %arg1: i32, %arg2: i32, %arg3: i32) -> (i32, i32, i32) {
    %c0_i32 = arith.constant 0 : i32
    %c0_i32_0 = arith.constant 0 : i32
    return %arg0, %c0_i32, %arg2 : i32, i32, i32
  }
  func.func @transform_3(%arg0: i32, %arg1: i32, %arg2: i32, %arg3: i32) -> (i32, i32, i32) {
    %c0_i32 = arith.constant 0 : i32
    return %arg0, %arg1, %arg2 : i32, i32, i32
  }
}

module attributes {stable_mosaic.version = 11 : i64} {
  func.func @_mm_bias_act_kernel(%arg0: i32, %arg1: i32, %arg2: i32, %arg3: i32, %arg4: memref<1x16x128xbf16, #tpu.memory_space<vmem>>, %arg5: memref<1x128x256xbf16, #tpu.memory_space<vmem>>, %arg6: memref<1x1x256xf32, #tpu.memory_space<vmem>>, %arg7: memref<1x16x256xbf16, #tpu.memory_space<vmem>>, %arg8: memref<16x256xf32, #tpu.memory_space<vmem>>) attributes {dimension_semantics = [#tpu.dimension_semantics<parallel>, #tpu.dimension_semantics<parallel>, #tpu.dimension_semantics<parallel>, #tpu.dimension_semantics<arbitrary>], iteration_bounds = array<i64: 1, 1, 8, 1>, scalar_prefetch = 0 : i64, scratch_operands = 1 : i64, tpu.core_type = #tpu.core_type<tc>, window_params = [{transform_indices = @transform_0, window_bounds = array<i64: 1, 16, 128>}, {transform_indices = @transform_1, window_bounds = array<i64: 1, 128, 256>}, {transform_indices = @transform_2, window_bounds = array<i64: 1, 1, 256>}, {transform_indices = @transform_3, window_bounds = array<i64: 1, 16, 256>}]} {
    %c0_i32 = arith.constant 0 : i32
    %0 = arith.cmpi eq, %arg3, %c0_i32 : i32
    %1 = arith.extui %0 : i1 to i32
    %c0_i32_0 = arith.constant 0 : i32
    %2 = arith.cmpi ne, %1, %c0_i32_0 : i32
    scf.if %2 {
      %cst_12 = arith.constant 0.000000e+00 : f32
      %14 = vector.broadcast %cst_12 : f32 to vector<16x256xf32>
      %c0_13 = arith.constant 0 : index
      %c0_14 = arith.constant 0 : index
      %15 = vector.load %arg8[%c0_13, %c0_14] : memref<16x256xf32, #tpu.memory_space<vmem>>, vector<16x256xf32>
      tpu.vector_store %arg8[%c0_13, %c0_14], %14 {strides = array<i32>} : memref<16x256xf32, #tpu.memory_space<vmem>>, vector<16x256xf32>,
    } else {
    }
    %c0 = arith.constant 0 : index
    %c0_1 = arith.constant 0 : index
    %3 = vector.load %arg8[%c0, %c0_1] : memref<16x256xf32, #tpu.memory_space<vmem>>, vector<16x256xf32>
    %c0_2 = arith.constant 0 : index
    %c0_3 = arith.constant 0 : index
    %c0_4 = arith.constant 0 : index
    %4 = vector.load %arg4[%c0_2, %c0_3, %c0_4] : memref<1x16x128xbf16, #tpu.memory_space<vmem>>, vector<1x16x128xbf16>
    %5 = vector.shape_cast %4 : vector<1x16x128xbf16> to vector<16x128xbf16>
    %c0_5 = arith.constant 0 : index
    %c0_6 = arith.constant 0 : index
    %c0_7 = arith.constant 0 : index
    %6 = vector.load %arg5[%c0_5, %c0_6, %c0_7] : memref<1x128x256xbf16, #tpu.memory_space<vmem>>, vector<1x128x256xbf16>
    %7 = vector.shape_cast %6 : vector<1x128x256xbf16> to vector<128x256xbf16>
    %cst = arith.constant dense<0.000000e+00> : vector<16x256xf32>
    %8 = tpu.matmul %5, %7, %cst {dimension_numbers = #tpu.dot_dimension_numbers<[1], [0], [0], [1], [0, 0, 1, 1], [], []>} : vector<16x128xbf16>, vector<128x256xbf16>, vector<16x256xf32> -> vector<16x256xf32>
    %9 = arith.addf %3, %8 : vector<16x256xf32>
    %c0_8 = arith.constant 0 : index
    %c0_9 = arith.constant 0 : index
    %10 = vector.load %arg8[%c0_8, %c0_9] : memref<16x256xf32, #tpu.memory_space<vmem>>, vector<16x256xf32>
    tpu.vector_store %arg8[%c0_8, %c0_9], %9 {strides = array<i32>} : memref<16x256xf32, #tpu.memory_space<vmem>>, vector<16x256xf32>,
    %c0_i32_10 = arith.constant 0 : i32
    %11 = arith.cmpi eq, %arg3, %c0_i32_10 : i32
    %12 = arith.extui %11 : i1 to i32
    %c0_i32_11 = arith.constant 0 : i32
    %13 = arith.cmpi ne, %12, %c0_i32_11 : i32
    scf.if %13 {
      %c0_12 = arith.constant 0 : index
      %c0_13 = arith.constant 0 : index
      %14 = vector.load %arg8[%c0_12, %c0_13] : memref<16x256xf32, #tpu.memory_space<vmem>>, vector<16x256xf32>
      %c0_14 = arith.constant 0 : index
      %c0_15 = arith.constant 0 : index
      %c0_16 = arith.constant 0 : index
      %15 = vector.load %arg6[%c0_14, %c0_15, %c0_16] : memref<1x1x256xf32, #tpu.memory_space<vmem>>, vector<1x1x256xf32>
      %16 = vector.shape_cast %15 : vector<1x1x256xf32> to vector<1x256xf32>
      %17 = vector.broadcast %16 : vector<1x256xf32> to vector<16x256xf32>
      %18 = arith.addf %14, %17 : vector<16x256xf32>
      %19 = arith.truncf %18 : vector<16x256xf32> to vector<16x256xbf16>
      %c0_17 = arith.constant 0 : index
      %c0_18 = arith.constant 0 : index
      %c0_19 = arith.constant 0 : index
      %20 = vector.load %arg7[%c0_17, %c0_18, %c0_19] : memref<1x16x256xbf16, #tpu.memory_space<vmem>>, vector<1x16x256xbf16>
      %21 = vector.shape_cast %20 : vector<1x16x256xbf16> to vector<16x256xbf16>
      %22 = vector.shape_cast %19 : vector<16x256xbf16> to vector<1x16x256xbf16>
      tpu.vector_store %arg7[%c0_17, %c0_18, %c0_19], %22 {strides = array<i32>} : memref<1x16x256xbf16, #tpu.memory_space<vmem>>, vector<1x16x256xbf16>,
    } else {
    }
    return
  }
  func.func @transform_0(%arg0: i32, %arg1: i32, %arg2: i32, %arg3: i32) -> (i32, i32, i32) {
    %c0_i32 = arith.constant 0 : i32
    return %arg0, %arg1, %arg3 : i32, i32, i32
  }
  func.func @transform_1(%arg0: i32, %arg1: i32, %arg2: i32, %arg3: i32) -> (i32, i32, i32) {
    %c0_i32 = arith.constant 0 : i32
    return %arg0, %arg3, %arg2 : i32, i32, i32
  }
  func.func @transform_2(%arg0: i32, %arg1: i32, %arg2: i32, %arg3: i32) -> (i32, i32, i32) {
    %c0_i32 = arith.constant 0 : i32
    %c0_i32_0 = arith.constant 0 : i32
    return %arg0, %c0_i32, %arg2 : i32, i32, i32
  }
  func.func @transform_3(%arg0: i32, %arg1: i32, %arg2: i32, %arg3: i32) -> (i32, i32, i32) {
    %c0_i32 = arith.constant 0 : i32
    return %arg0, %arg1, %arg2 : i32, i32, i32
  }
}

module attributes {stable_mosaic.version = 11 : i64} {
  func.func @_mm_bias_act_kernel(%arg0: i32, %arg1: i32, %arg2: i32, %arg3: i32, %arg4: memref<1x16x2048xbf16, #tpu.memory_space<vmem>>, %arg5: memref<1x2048x256xbf16, #tpu.memory_space<vmem>>, %arg6: memref<1x1x256xf32, #tpu.memory_space<vmem>>, %arg7: memref<1x16x256xbf16, #tpu.memory_space<vmem>>, %arg8: memref<16x256xf32, #tpu.memory_space<vmem>>) attributes {dimension_semantics = [#tpu.dimension_semantics<parallel>, #tpu.dimension_semantics<parallel>, #tpu.dimension_semantics<parallel>, #tpu.dimension_semantics<arbitrary>], iteration_bounds = array<i64: 4, 1, 1, 1>, scalar_prefetch = 0 : i64, scratch_operands = 1 : i64, tpu.core_type = #tpu.core_type<tc>, window_params = [{transform_indices = @transform_0, window_bounds = array<i64: 1, 16, 2048>}, {transform_indices = @transform_1, window_bounds = array<i64: 1, 2048, 256>}, {transform_indices = @transform_2, window_bounds = array<i64: 1, 1, 256>}, {transform_indices = @transform_3, window_bounds = array<i64: 1, 16, 256>}]} {
    %c0_i32 = arith.constant 0 : i32
    %0 = arith.cmpi eq, %arg3, %c0_i32 : i32
    %1 = arith.extui %0 : i1 to i32
    %c0_i32_0 = arith.constant 0 : i32
    %2 = arith.cmpi ne, %1, %c0_i32_0 : i32
    scf.if %2 {
      %cst_12 = arith.constant 0.000000e+00 : f32
      %14 = vector.broadcast %cst_12 : f32 to vector<16x256xf32>
      %c0_13 = arith.constant 0 : index
      %c0_14 = arith.constant 0 : index
      %15 = vector.load %arg8[%c0_13, %c0_14] : memref<16x256xf32, #tpu.memory_space<vmem>>, vector<16x256xf32>
      tpu.vector_store %arg8[%c0_13, %c0_14], %14 {strides = array<i32>} : memref<16x256xf32, #tpu.memory_space<vmem>>, vector<16x256xf32>,
    } else {
    }
    %c0 = arith.constant 0 : index
    %c0_1 = arith.constant 0 : index
    %3 = vector.load %arg8[%c0, %c0_1] : memref<16x256xf32, #tpu.memory_space<vmem>>, vector<16x256xf32>
    %c0_2 = arith.constant 0 : index
    %c0_3 = arith.constant 0 : index
    %c0_4 = arith.constant 0 : index
    %4 = vector.load %arg4[%c0_2, %c0_3, %c0_4] : memref<1x16x2048xbf16, #tpu.memory_space<vmem>>, vector<1x16x2048xbf16>
    %5 = vector.shape_cast %4 : vector<1x16x2048xbf16> to vector<16x2048xbf16>
    %c0_5 = arith.constant 0 : index
    %c0_6 = arith.constant 0 : index
    %c0_7 = arith.constant 0 : index
    %6 = vector.load %arg5[%c0_5, %c0_6, %c0_7] : memref<1x2048x256xbf16, #tpu.memory_space<vmem>>, vector<1x2048x256xbf16>
    %7 = vector.shape_cast %6 : vector<1x2048x256xbf16> to vector<2048x256xbf16>
    %cst = arith.constant dense<0.000000e+00> : vector<16x256xf32>
    %8 = tpu.matmul %5, %7, %cst {dimension_numbers = #tpu.dot_dimension_numbers<[1], [0], [0], [1], [0, 0, 1, 1], [], []>} : vector<16x2048xbf16>, vector<2048x256xbf16>, vector<16x256xf32> -> vector<16x256xf32>
    %9 = arith.addf %3, %8 : vector<16x256xf32>
    %c0_8 = arith.constant 0 : index
    %c0_9 = arith.constant 0 : index
    %10 = vector.load %arg8[%c0_8, %c0_9] : memref<16x256xf32, #tpu.memory_space<vmem>>, vector<16x256xf32>
    tpu.vector_store %arg8[%c0_8, %c0_9], %9 {strides = array<i32>} : memref<16x256xf32, #tpu.memory_space<vmem>>, vector<16x256xf32>,
    %c0_i32_10 = arith.constant 0 : i32
    %11 = arith.cmpi eq, %arg3, %c0_i32_10 : i32
    %12 = arith.extui %11 : i1 to i32
    %c0_i32_11 = arith.constant 0 : i32
    %13 = arith.cmpi ne, %12, %c0_i32_11 : i32
    scf.if %13 {
      %c0_12 = arith.constant 0 : index
      %c0_13 = arith.constant 0 : index
      %14 = vector.load %arg8[%c0_12, %c0_13] : memref<16x256xf32, #tpu.memory_space<vmem>>, vector<16x256xf32>
      %c0_14 = arith.constant 0 : index
      %c0_15 = arith.constant 0 : index
      %c0_16 = arith.constant 0 : index
      %15 = vector.load %arg6[%c0_14, %c0_15, %c0_16] : memref<1x1x256xf32, #tpu.memory_space<vmem>>, vector<1x1x256xf32>
      %16 = vector.shape_cast %15 : vector<1x1x256xf32> to vector<1x256xf32>
      %17 = vector.broadcast %16 : vector<1x256xf32> to vector<16x256xf32>
      %18 = arith.addf %14, %17 : vector<16x256xf32>
      %cst_17 = arith.constant 0.000000e+00 : f32
      %19 = vector.broadcast %cst_17 : f32 to vector<16x256xf32>
      %20 = arith.maximumf %18, %19 : vector<16x256xf32>
      %21 = arith.truncf %20 : vector<16x256xf32> to vector<16x256xbf16>
      %c0_18 = arith.constant 0 : index
      %c0_19 = arith.constant 0 : index
      %c0_20 = arith.constant 0 : index
      %22 = vector.load %arg7[%c0_18, %c0_19, %c0_20] : memref<1x16x256xbf16, #tpu.memory_space<vmem>>, vector<1x16x256xbf16>
      %23 = vector.shape_cast %22 : vector<1x16x256xbf16> to vector<16x256xbf16>
      %24 = vector.shape_cast %21 : vector<16x256xbf16> to vector<1x16x256xbf16>
      tpu.vector_store %arg7[%c0_18, %c0_19, %c0_20], %24 {strides = array<i32>} : memref<1x16x256xbf16, #tpu.memory_space<vmem>>, vector<1x16x256xbf16>,
    } else {
    }
    return
  }
  func.func @transform_0(%arg0: i32, %arg1: i32, %arg2: i32, %arg3: i32) -> (i32, i32, i32) {
    %c0_i32 = arith.constant 0 : i32
    return %arg0, %arg1, %arg3 : i32, i32, i32
  }
  func.func @transform_1(%arg0: i32, %arg1: i32, %arg2: i32, %arg3: i32) -> (i32, i32, i32) {
    %c0_i32 = arith.constant 0 : i32
    return %arg0, %arg3, %arg2 : i32, i32, i32
  }
  func.func @transform_2(%arg0: i32, %arg1: i32, %arg2: i32, %arg3: i32) -> (i32, i32, i32) {
    %c0_i32 = arith.constant 0 : i32
    %c0_i32_0 = arith.constant 0 : i32
    return %arg0, %c0_i32, %arg2 : i32, i32, i32
  }
  func.func @transform_3(%arg0: i32, %arg1: i32, %arg2: i32, %arg3: i32) -> (i32, i32, i32) {
    %c0_i32 = arith.constant 0 : i32
    return %arg0, %arg1, %arg2 : i32, i32, i32
  }
}

module attributes {stable_mosaic.version = 11 : i64} {
  func.func @_mm_bias_act_kernel(%arg0: i32, %arg1: i32, %arg2: i32, %arg3: i32, %arg4: memref<1x32x1024xbf16, #tpu.memory_space<vmem>>, %arg5: memref<1x1024x128xbf16, #tpu.memory_space<vmem>>, %arg6: memref<1x1x128xf32, #tpu.memory_space<vmem>>, %arg7: memref<1x32x128xbf16, #tpu.memory_space<vmem>>, %arg8: memref<32x128xf32, #tpu.memory_space<vmem>>) attributes {dimension_semantics = [#tpu.dimension_semantics<parallel>, #tpu.dimension_semantics<parallel>, #tpu.dimension_semantics<parallel>, #tpu.dimension_semantics<arbitrary>], iteration_bounds = array<i64: 4, 1, 1, 1>, scalar_prefetch = 0 : i64, scratch_operands = 1 : i64, tpu.core_type = #tpu.core_type<tc>, window_params = [{transform_indices = @transform_0, window_bounds = array<i64: 1, 32, 1024>}, {transform_indices = @transform_1, window_bounds = array<i64: 1, 1024, 128>}, {transform_indices = @transform_2, window_bounds = array<i64: 1, 1, 128>}, {transform_indices = @transform_3, window_bounds = array<i64: 1, 32, 128>}]} {
    %c0_i32 = arith.constant 0 : i32
    %0 = arith.cmpi eq, %arg3, %c0_i32 : i32
    %1 = arith.extui %0 : i1 to i32
    %c0_i32_0 = arith.constant 0 : i32
    %2 = arith.cmpi ne, %1, %c0_i32_0 : i32
    scf.if %2 {
      %cst_12 = arith.constant 0.000000e+00 : f32
      %14 = vector.broadcast %cst_12 : f32 to vector<32x128xf32>
      %c0_13 = arith.constant 0 : index
      %c0_14 = arith.constant 0 : index
      %15 = vector.load %arg8[%c0_13, %c0_14] : memref<32x128xf32, #tpu.memory_space<vmem>>, vector<32x128xf32>
      tpu.vector_store %arg8[%c0_13, %c0_14], %14 {strides = array<i32>} : memref<32x128xf32, #tpu.memory_space<vmem>>, vector<32x128xf32>,
    } else {
    }
    %c0 = arith.constant 0 : index
    %c0_1 = arith.constant 0 : index
    %3 = vector.load %arg8[%c0, %c0_1] : memref<32x128xf32, #tpu.memory_space<vmem>>, vector<32x128xf32>
    %c0_2 = arith.constant 0 : index
    %c0_3 = arith.constant 0 : index
    %c0_4 = arith.constant 0 : index
    %4 = vector.load %arg4[%c0_2, %c0_3, %c0_4] : memref<1x32x1024xbf16, #tpu.memory_space<vmem>>, vector<1x32x1024xbf16>
    %5 = vector.shape_cast %4 : vector<1x32x1024xbf16> to vector<32x1024xbf16>
    %c0_5 = arith.constant 0 : index
    %c0_6 = arith.constant 0 : index
    %c0_7 = arith.constant 0 : index
    %6 = vector.load %arg5[%c0_5, %c0_6, %c0_7] : memref<1x1024x128xbf16, #tpu.memory_space<vmem>>, vector<1x1024x128xbf16>
    %7 = vector.shape_cast %6 : vector<1x1024x128xbf16> to vector<1024x128xbf16>
    %cst = arith.constant dense<0.000000e+00> : vector<32x128xf32>
    %8 = tpu.matmul %5, %7, %cst {dimension_numbers = #tpu.dot_dimension_numbers<[1], [0], [0], [1], [0, 0, 1, 1], [], []>} : vector<32x1024xbf16>, vector<1024x128xbf16>, vector<32x128xf32> -> vector<32x128xf32>
    %9 = arith.addf %3, %8 : vector<32x128xf32>
    %c0_8 = arith.constant 0 : index
    %c0_9 = arith.constant 0 : index
    %10 = vector.load %arg8[%c0_8, %c0_9] : memref<32x128xf32, #tpu.memory_space<vmem>>, vector<32x128xf32>
    tpu.vector_store %arg8[%c0_8, %c0_9], %9 {strides = array<i32>} : memref<32x128xf32, #tpu.memory_space<vmem>>, vector<32x128xf32>,
    %c0_i32_10 = arith.constant 0 : i32
    %11 = arith.cmpi eq, %arg3, %c0_i32_10 : i32
    %12 = arith.extui %11 : i1 to i32
    %c0_i32_11 = arith.constant 0 : i32
    %13 = arith.cmpi ne, %12, %c0_i32_11 : i32
    scf.if %13 {
      %c0_12 = arith.constant 0 : index
      %c0_13 = arith.constant 0 : index
      %14 = vector.load %arg8[%c0_12, %c0_13] : memref<32x128xf32, #tpu.memory_space<vmem>>, vector<32x128xf32>
      %c0_14 = arith.constant 0 : index
      %c0_15 = arith.constant 0 : index
      %c0_16 = arith.constant 0 : index
      %15 = vector.load %arg6[%c0_14, %c0_15, %c0_16] : memref<1x1x128xf32, #tpu.memory_space<vmem>>, vector<1x1x128xf32>
      %16 = vector.shape_cast %15 : vector<1x1x128xf32> to vector<1x128xf32>
      %17 = vector.broadcast %16 : vector<1x128xf32> to vector<32x128xf32>
      %18 = arith.addf %14, %17 : vector<32x128xf32>
      %cst_17 = arith.constant 0.000000e+00 : f32
      %19 = vector.broadcast %cst_17 : f32 to vector<32x128xf32>
      %20 = arith.maximumf %18, %19 : vector<32x128xf32>
      %21 = arith.truncf %20 : vector<32x128xf32> to vector<32x128xbf16>
      %c0_18 = arith.constant 0 : index
      %c0_19 = arith.constant 0 : index
      %c0_20 = arith.constant 0 : index
      %22 = vector.load %arg7[%c0_18, %c0_19, %c0_20] : memref<1x32x128xbf16, #tpu.memory_space<vmem>>, vector<1x32x128xbf16>
      %23 = vector.shape_cast %22 : vector<1x32x128xbf16> to vector<32x128xbf16>
      %24 = vector.shape_cast %21 : vector<32x128xbf16> to vector<1x32x128xbf16>
      tpu.vector_store %arg7[%c0_18, %c0_19, %c0_20], %24 {strides = array<i32>} : memref<1x32x128xbf16, #tpu.memory_space<vmem>>, vector<1x32x128xbf16>,
    } else {
    }
    return
  }
  func.func @transform_0(%arg0: i32, %arg1: i32, %arg2: i32, %arg3: i32) -> (i32, i32, i32) {
    %c0_i32 = arith.constant 0 : i32
    return %arg0, %arg1, %arg3 : i32, i32, i32
  }
  func.func @transform_1(%arg0: i32, %arg1: i32, %arg2: i32, %arg3: i32) -> (i32, i32, i32) {
    %c0_i32 = arith.constant 0 : i32
    return %arg0, %arg3, %arg2 : i32, i32, i32
  }
  func.func @transform_2(%arg0: i32, %arg1: i32, %arg2: i32, %arg3: i32) -> (i32, i32, i32) {
    %c0_i32 = arith.constant 0 : i32
    %c0_i32_0 = arith.constant 0 : i32
    return %arg0, %c0_i32, %arg2 : i32, i32, i32
  }
  func.func @transform_3(%arg0: i32, %arg1: i32, %arg2: i32, %arg3: i32) -> (i32, i32, i32) {
    %c0_i32 = arith.constant 0 : i32
    return %arg0, %arg1, %arg2 : i32, i32, i32
  }
}

module attributes {stable_mosaic.version = 11 : i64} {
  func.func @_mm_bias_act_kernel(%arg0: i32, %arg1: i32, %arg2: i32, %arg3: i32, %arg4: memref<1x128x256xbf16, #tpu.memory_space<vmem>>, %arg5: memref<1x256x128xbf16, #tpu.memory_space<vmem>>, %arg6: memref<1x1x128xf32, #tpu.memory_space<vmem>>, %arg7: memref<1x128x128xf32, #tpu.memory_space<vmem>>, %arg8: memref<128x128xf32, #tpu.memory_space<vmem>>) attributes {dimension_semantics = [#tpu.dimension_semantics<parallel>, #tpu.dimension_semantics<parallel>, #tpu.dimension_semantics<parallel>, #tpu.dimension_semantics<arbitrary>], iteration_bounds = array<i64: 4, 1, 1, 1>, scalar_prefetch = 0 : i64, scratch_operands = 1 : i64, tpu.core_type = #tpu.core_type<tc>, window_params = [{transform_indices = @transform_0, window_bounds = array<i64: 1, 128, 256>}, {transform_indices = @transform_1, window_bounds = array<i64: 1, 256, 128>}, {transform_indices = @transform_2, window_bounds = array<i64: 1, 1, 128>}, {transform_indices = @transform_3, window_bounds = array<i64: 1, 128, 128>}]} {
    %c0_i32 = arith.constant 0 : i32
    %0 = arith.cmpi eq, %arg3, %c0_i32 : i32
    %1 = arith.extui %0 : i1 to i32
    %c0_i32_0 = arith.constant 0 : i32
    %2 = arith.cmpi ne, %1, %c0_i32_0 : i32
    scf.if %2 {
      %cst_12 = arith.constant 0.000000e+00 : f32
      %14 = vector.broadcast %cst_12 : f32 to vector<128x128xf32>
      %c0_13 = arith.constant 0 : index
      %c0_14 = arith.constant 0 : index
      %15 = vector.load %arg8[%c0_13, %c0_14] : memref<128x128xf32, #tpu.memory_space<vmem>>, vector<128x128xf32>
      tpu.vector_store %arg8[%c0_13, %c0_14], %14 {strides = array<i32>} : memref<128x128xf32, #tpu.memory_space<vmem>>, vector<128x128xf32>,
    } else {
    }
    %c0 = arith.constant 0 : index
    %c0_1 = arith.constant 0 : index
    %3 = vector.load %arg8[%c0, %c0_1] : memref<128x128xf32, #tpu.memory_space<vmem>>, vector<128x128xf32>
    %c0_2 = arith.constant 0 : index
    %c0_3 = arith.constant 0 : index
    %c0_4 = arith.constant 0 : index
    %4 = vector.load %arg4[%c0_2, %c0_3, %c0_4] : memref<1x128x256xbf16, #tpu.memory_space<vmem>>, vector<1x128x256xbf16>
    %5 = vector.shape_cast %4 : vector<1x128x256xbf16> to vector<128x256xbf16>
    %c0_5 = arith.constant 0 : index
    %c0_6 = arith.constant 0 : index
    %c0_7 = arith.constant 0 : index
    %6 = vector.load %arg5[%c0_5, %c0_6, %c0_7] : memref<1x256x128xbf16, #tpu.memory_space<vmem>>, vector<1x256x128xbf16>
    %7 = vector.shape_cast %6 : vector<1x256x128xbf16> to vector<256x128xbf16>
    %cst = arith.constant dense<0.000000e+00> : vector<128x128xf32>
    %8 = tpu.matmul %5, %7, %cst {dimension_numbers = #tpu.dot_dimension_numbers<[1], [0], [0], [1], [0, 0, 1, 1], [], []>} : vector<128x256xbf16>, vector<256x128xbf16>, vector<128x128xf32> -> vector<128x128xf32>
    %9 = arith.addf %3, %8 : vector<128x128xf32>
    %c0_8 = arith.constant 0 : index
    %c0_9 = arith.constant 0 : index
    %10 = vector.load %arg8[%c0_8, %c0_9] : memref<128x128xf32, #tpu.memory_space<vmem>>, vector<128x128xf32>
    tpu.vector_store %arg8[%c0_8, %c0_9], %9 {strides = array<i32>} : memref<128x128xf32, #tpu.memory_space<vmem>>, vector<128x128xf32>,
    %c0_i32_10 = arith.constant 0 : i32
    %11 = arith.cmpi eq, %arg3, %c0_i32_10 : i32
    %12 = arith.extui %11 : i1 to i32
    %c0_i32_11 = arith.constant 0 : i32
    %13 = arith.cmpi ne, %12, %c0_i32_11 : i32
    scf.if %13 {
      %c0_12 = arith.constant 0 : index
      %c0_13 = arith.constant 0 : index
      %14 = vector.load %arg8[%c0_12, %c0_13] : memref<128x128xf32, #tpu.memory_space<vmem>>, vector<128x128xf32>
      %c0_14 = arith.constant 0 : index
      %c0_15 = arith.constant 0 : index
      %c0_16 = arith.constant 0 : index
      %15 = vector.load %arg6[%c0_14, %c0_15, %c0_16] : memref<1x1x128xf32, #tpu.memory_space<vmem>>, vector<1x1x128xf32>
      %16 = vector.shape_cast %15 : vector<1x1x128xf32> to vector<1x128xf32>
      %17 = vector.broadcast %16 : vector<1x128xf32> to vector<128x128xf32>
      %18 = arith.addf %14, %17 : vector<128x128xf32>
      %cst_17 = arith.constant 0.000000e+00 : f32
      %19 = vector.broadcast %cst_17 : f32 to vector<128x128xf32>
      %20 = arith.subf %19, %18 : vector<128x128xf32>
      %21 = math.exp %20 : vector<128x128xf32>
      %cst_18 = arith.constant 1.000000e+00 : f32
      %22 = vector.broadcast %cst_18 : f32 to vector<128x128xf32>
      %23 = arith.addf %22, %21 : vector<128x128xf32>
      %24 = tpu.reciprocal %23 {approx = true} : vector<128x128xf32> -> vector<128x128xf32>
      %cst_19 = arith.constant 0.000000e+00 : f32
      %cst_20 = arith.constant 1.000000e+00 : f32
      %25 = vector.broadcast %cst_19 : f32 to vector<128x128xf32>
      %26 = arith.maximumf %25, %24 : vector<128x128xf32>
      %27 = vector.broadcast %cst_20 : f32 to vector<128x128xf32>
      %28 = arith.minimumf %27, %26 : vector<128x128xf32>
      %c0_21 = arith.constant 0 : index
      %c0_22 = arith.constant 0 : index
      %c0_23 = arith.constant 0 : index
      %29 = vector.load %arg7[%c0_21, %c0_22, %c0_23] : memref<1x128x128xf32, #tpu.memory_space<vmem>>, vector<1x128x128xf32>
      %30 = vector.shape_cast %29 : vector<1x128x128xf32> to vector<128x128xf32>
      %31 = vector.shape_cast %28 : vector<128x128xf32> to vector<1x128x128xf32>
      tpu.vector_store %arg7[%c0_21, %c0_22, %c0_23], %31 {strides = array<i32>} : memref<1x128x128xf32, #tpu.memory_space<vmem>>, vector<1x128x128xf32>,
    } else {
    }
    return
  }
  func.func @transform_0(%arg0: i32, %arg1: i32, %arg2: i32, %arg3: i32) -> (i32, i32, i32) {
    %c0_i32 = arith.constant 0 : i32
    return %arg0, %arg1, %arg3 : i32, i32, i32
  }
  func.func @transform_1(%arg0: i32, %arg1: i32, %arg2: i32, %arg3: i32) -> (i32, i32, i32) {
    %c0_i32 = arith.constant 0 : i32
    return %arg0, %arg3, %arg2 : i32, i32, i32
  }
  func.func @transform_2(%arg0: i32, %arg1: i32, %arg2: i32, %arg3: i32) -> (i32, i32, i32) {
    %c0_i32 = arith.constant 0 : i32
    %c0_i32_0 = arith.constant 0 : i32
    return %arg0, %c0_i32, %arg2 : i32, i32, i32
  }
  func.func @transform_3(%arg0: i32, %arg1: i32, %arg2: i32, %arg3: i32) -> (i32, i32, i32) {
    %c0_i32 = arith.constant 0 : i32
    return %arg0, %arg1, %arg2 : i32, i32, i32
  }
}

</mosaic_0001>

<llo_original>
// kernel: autoencoder_forward.8
$region0: #{autoencoder_forward.8}
  #allocation0 [shape = 'u32[]', space=smem, size = 0x4, offset = 0x4, fixed_abs, tag = 'smem constant byte address 0x4 - core index']
  #allocation1 [shape = 'u32[144,128]{1,0:T(1,128)}', space=vmem, size = 0x12000, scoped, tag = 'internal scratch']
  #allocation2 [shape = 'f32[64,128]{1,0:T(8,128)}', space=vmem, size = 0x8000, scoped, tag = 'scratch operand']
  %s0 = inlined_call_operand.hbm [shape: bf16[1,128,128], index: 0, kind: input, shape index: {}]
  %s1 = inlined_call_operand.hbm [shape: bf16[1,128,128], index: 1, kind: input, shape index: {}]
  %s2 = inlined_call_operand.hbm [shape: f32[1,1,128], index: 2, kind: input, shape index: {}]
  %s3 = inlined_call_operand.hbm [shape: bf16[1,128,128], index: 3, kind: output, shape index: {}]
  %s4 = sld [smem:[#allocation0]]
  $region65: #{autoencoder_forward.8} parent=0
    _
  %s6 = ssub.s32 1, %s4
  %s7 = scalar_select 0, %s6, %s4
  $region1: #{autoencoder_forward.8} parent=0
    #allocation3 [shape = 'u8[32768]{0}', space=vmem, size = 0x8000, scoped, tag = 'input window, operand 0']
    #allocation4 [shape = 's32[2]{0}', space=sflag, size = 0x8, scoped, tag = 'scoped memory for autoencoder_forward.8']
    #allocation5 [shape = 's32[2]{0}', space=sflag, size = 0x8, scoped, tag = 'scoped memory for autoencoder_forward.8']
    #allocation6 [shape = 'u8[32768]{0}', space=vmem, size = 0x8000, scoped, tag = 'input window, operand 1, single buffered']
    #allocation7 [shape = 's32[1]{0}', space=sflag, size = 0x4, scoped, tag = 'scoped memory for autoencoder_forward.8']
    #allocation8 [shape = 'u8[512]{0}', space=vmem, size = 0x400, scoped, tag = 'input window, operand 2, single buffered']
    #allocation9 [shape = 'u8[32768]{0}', space=vmem, size = 0x8000, scoped, tag = 'output window, operand 0']
    %8 = vsyncpa [#allocation4], 0
    %s9 = scalar_lea.sflag [#allocation4], 1
    %10 = vsyncpa %s9, 0
    %11 = vsyncpa [#allocation7], 0
    %12 = vsyncpa [#allocation5], 0
    %s13 = scalar_lea.sflag [#allocation5], 1
    %14 = vsyncpa %s13, 0
    loop: start=0, step=1, limit=4
    $region2: #{autoencoder_forward.8} parent=1 // loop_pre_header
      _
    $region3: #{autoencoder_forward.8} parent=1 // loop_header
      %s16 = sphi 0, %s20
      %p17 = scmp.ge.s32.totalorder %s16, 4
      %s23 = sphi 0, %s49
      %s24 = sphi 0, %s45
      %s25 = sphi 0, %s41
      %s26 = sphi 0, %s37
      %s27 = sphi 0, %s23
      %s28 = sphi 0, %s24
      %s29 = sphi 0, %s25
      %s30 = sphi 0, %s26
      %s31 = sphi 0, %s27
      %s32 = sphi 0, %s28
      %s33 = sphi 0, %s29
      %s34 = sphi 0, %s30
      %s56 = sphi 0, %s58
      %s59 = sphi 0, %s56
      %s60 = sphi 0, %s59
      %s76 = sphi 0, %s60
      %s86 = sphi 0, %s88
      %s89 = sphi 0, %s86
      %s90 = sphi 0, %s89
      %s106 = sphi 0, %s90
      %s114 = sphi 0, %s116
      %s117 = sphi 0, %s114
      %s118 = sphi 0, %s117
      %s134 = sphi 0, %s118
      %s144 = sphi 0, %s146
      %s147 = sphi 0, %s144
      %s148 = sphi 0, %s147
      %s164 = sphi 0, %s148
    $region4: #{autoencoder_forward.8} parent=1 // loop_header_branch
      %19 = sbr.rel (%p17) target = $region8
    $region5: #{autoencoder_forward.8} parent=1 // loop_body
      %s21 = ssub.s32 %s16, 1
      %s22 = ssub.s32 %s16, 2
      %s35 = sadd.s32 1, %s26
      %p36 = scmp.ge.s32.totalorder %s35, 1
      %s37 = scalar_select %p36, 0, %s35
      %s38 = sadd.s32 1, %s25
      %s39 = scalar_select %p36, %s38, %s25
      %p40 = scmp.ge.s32.totalorder %s39, 1
      %s41 = scalar_select %p40, 0, %s39
      %s42 = sadd.s32 1, %s24
      %s43 = scalar_select %p40, %s42, %s24
      %p44 = scmp.ge.s32.totalorder %s43, 2
      %s45 = scalar_select %p44, 0, %s43
      %s46 = sadd.s32 1, %s23
      %s47 = scalar_select %p44, %s46, %s23
      %p48 = scmp.ge.s32.totalorder %s47, 1
      %s49 = scalar_select %p48, 0, %s47
      %s50 = ssub.s32 %s23, %s49
      %s51 = ssub.s32 %s24, %s45
      %s52 = sor.u32 %s50, %s51
      %s53 = ssub.s32 %s26, %s37
      %s54 = sor.u32 %s52, %s53
      %p55 = scmp.eq.s32.totalorder %s54, 0
      %s57 = sadd.s32 %s56, 1
      %s58 = scalar_select %p55, %s56, %s57
      %p61 = pneg %p55
      %p62 = scmp.eq.s32.totalorder %s16, 1
      %p63 = por %p61, %p62
      %p64 = scmp.ne.s32.totalorder %s56, %s59
      %p65 = scmp.eq.s32.totalorder %s16, 0
      %p66 = por %p64, %p65
      %p67 = scmp.ne.s32.totalorder %s56, %s59
      %p68 = scmp.eq.s32.totalorder %s21, 1
      %p69 = por %p67, %p68
      %p70 = scmp.ne.s32.totalorder %s59, %s60
      %p71 = scmp.eq.s32.totalorder %s21, 0
      %p72 = por %p70, %p71
      %p73 = scmp.ne.s32.totalorder %s59, %s60
      %p74 = scmp.eq.s32.totalorder %s22, 1
      %p75 = por %p73, %p74
      %p77 = scmp.ne.s32.totalorder %s60, %s76
      %p78 = scmp.eq.s32.totalorder %s22, 0
      %p79 = por %p77, %p78
      %s80 = ssub.s32 %s23, %s49
      %s81 = ssub.s32 %s26, %s37
      %s82 = sor.u32 %s80, %s81
      %s83 = ssub.s32 %s25, %s41
      %s84 = sor.u32 %s82, %s83
      %p85 = scmp.eq.s32.totalorder %s84, 0
      %s87 = sadd.s32 %s86, 1
      %s88 = scalar_select %p85, %s86, %s87
      %p91 = pneg %p85
      %p92 = scmp.eq.s32.totalorder %s16, 1
      %p93 = por %p91, %p92
      %p94 = scmp.ne.s32.totalorder %s86, %s89
      %p95 = scmp.eq.s32.totalorder %s16, 0
      %p96 = por %p94, %p95
      %p97 = scmp.ne.s32.totalorder %s86, %s89
      %p98 = scmp.eq.s32.totalorder %s21, 1
      %p99 = por %p97, %p98
      %p100 = scmp.ne.s32.totalorder %s89, %s90
      %p101 = scmp.eq.s32.totalorder %s21, 0
      %p102 = por %p100, %p101
      %p103 = scmp.ne.s32.totalorder %s89, %s90
      %p104 = scmp.eq.s32.totalorder %s22, 1
      %p105 = por %p103, %p104
      %p107 = scmp.ne.s32.totalorder %s90, %s106
      %p108 = scmp.eq.s32.totalorder %s22, 0
      %p109 = por %p107, %p108
      %s110 = ssub.s32 %s23, %s49
      %s111 = ssub.s32 %s25, %s41
      %s112 = sor.u32 %s110, %s111
      %p113 = scmp.eq.s32.totalorder %s112, 0
      %s115 = sadd.s32 %s114, 1
      %s116 = scalar_select %p113, %s114, %s115
      %p119 = pneg %p113
      %p120 = scmp.eq.s32.totalorder %s16, 1
      %p121 = por %p119, %p120
      %p122 = scmp.ne.s32.totalorder %s114, %s117
      %p123 = scmp.eq.s32.totalorder %s16, 0
      %p124 = por %p122, %p123
      %p125 = scmp.ne.s32.totalorder %s114, %s117
      %p126 = scmp.eq.s32.totalorder %s21, 1
      %p127 = por %p125, %p126
      %p128 = scmp.ne.s32.totalorder %s117, %s118
      %p129 = scmp.eq.s32.totalorder %s21, 0
      %p130 = por %p128, %p129
      %p131 = scmp.ne.s32.totalorder %s117, %s118
      %p132 = scmp.eq.s32.totalorder %s22, 1
      %p133 = por %p131, %p132
      %p135 = scmp.ne.s32.totalorder %s118, %s134
      %p136 = scmp.eq.s32.totalorder %s22, 0
      %p137 = por %p135, %p136
      %s138 = ssub.s32 %s23, %s49
      %s139 = ssub.s32 %s24, %s45
      %s140 = sor.u32 %s138, %s139
      %s141 = ssub.s32 %s25, %s41
      %s142 = sor.u32 %s140, %s141
      %p143 = scmp.eq.s32.totalorder %s142, 0
      %s145 = sadd.s32 %s144, 1
      %s146 = scalar_select %p143, %s144, %s145
      %p149 = pneg %p143
      %p150 = scmp.eq.s32.totalorder %s16, 1
      %p151 = por %p149, %p150
      %p152 = scmp.ne.s32.totalorder %s144, %s147
      %p153 = scmp.eq.s32.totalorder %s16, 0
      %p154 = por %p152, %p153
      %p155 = scmp.ne.s32.totalorder %s144, %s147
      %p156 = scmp.eq.s32.totalorder %s21, 1
      %p157 = por %p155, %p156
      %p158 = scmp.ne.s32.totalorder %s147, %s148
      %p159 = scmp.eq.s32.totalorder %s21, 0
      %p160 = por %p158, %p159
      %p161 = scmp.ne.s32.totalorder %s147, %s148
      %p162 = scmp.eq.s32.totalorder %s22, 1
      %p163 = por %p161, %p162
      %p165 = scmp.ne.s32.totalorder %s148, %s164
      %p166 = scmp.eq.s32.totalorder %s22, 0
      %p167 = por %p165, %p166
      %p168 = scmp.le.s32.totalorder 1, %s16
      %p169 = scmp.lt.s32.totalorder %s16, 3
      %p170 = pnand %p168, %p169
      %p171 = pneg %p170
      // Predicated region
      $region9: #{autoencoder_forward.8} parent=5 // pred_check
        _
      $region10: #{autoencoder_forward.8} parent=5 // pred_check_branch
        %173 = sbr.rel (%p170) target = $region12
      $region11: #{autoencoder_forward.8} parent=5 // pred_region
        %s174 = ssub.s32 %s16, 1
        // Predicated region
        $region13: #{autoencoder_forward.8} parent=11 // pred_check
          %p175 = pneg %p102
        $region14: #{autoencoder_forward.8} parent=11 // pred_check_branch
          %177 = sbr.rel (%p175) target = $region16
        $region15: #{autoencoder_forward.8} parent=11 // pred_region
          %s178 = smul.u32 16, %s30
          %s180 = ssub.s32 1024, 1024
          %181 = vsyncadd [#allocation7], %s180
          %s182 = sadd.s32 %s29, %s178
          %s183 = smul.addr %s27, 16
          %s184 = sadd.s32 %s182, %s183
          %s185 = smul.addr %s184, 64
          %s186 = scalar_lea.hbm %s1, %s185
          %s187 = sshll.u32 [#allocation6], 4
          %s188 = int_to_ptr.vmem [resolvable:$true] %s187
          %193 = dma.hbm_to_vmem [thread:$0]  %s186, 1024, %s188, [#allocation7], 64, 64, 4
        $region16: #{autoencoder_forward.8} parent=11 // pred_fallthru
          _
        // Predicated region
        $region17: #{autoencoder_forward.8} parent=11 // pred_check
          %p194 = pneg %p130
        $region18: #{autoencoder_forward.8} parent=11 // pred_check_branch
          %196 = sbr.rel (%p194) target = $region20
        $region19: #{autoencoder_forward.8} parent=11 // pred_region
          %s198 = ssub.s32 16, 16
          %199 = vsyncadd [#allocation7], %s198
          %s200 = sadd.s32 %s29, %s27
          %s201 = smul.addr %s200, 16
          %s202 = scalar_lea.hbm %s2, %s201
          %s204 = sshll.u32 [#allocation8], 4
          %s205 = int_to_ptr.vmem [resolvable:$true] %s204
          %207 = dma.hbm_to_vmem [thread:$0]  %s202, 16, %s205, [#allocation7]
        $region20: #{autoencoder_forward.8} parent=11 // pred_fallthru
          _
      $region12: #{autoencoder_forward.8} parent=5 // pred_fallthru
        _
      %p208 = scmp.lt.s32.totalorder %s16, 2
      // Predicated region
      $region21: #{autoencoder_forward.8} parent=5 // pred_check
        %p209 = pneg %p208
      $region22: #{autoencoder_forward.8} parent=5 // pred_check_branch
        %211 = sbr.rel (%p209) target = $region24
      $region23: #{autoencoder_forward.8} parent=5 // pred_region
        // Predicated region
        $region25: #{autoencoder_forward.8} parent=23 // pred_check
          %p212 = pneg %p66
        $region26: #{autoencoder_forward.8} parent=23 // pred_check_branch
          %214 = sbr.rel (%p212) target = $region28
        $region27: #{autoencoder_forward.8} parent=23 // pred_region
          %s215 = sand.u32 %s56, 1
          %s216 = scalar_lea.sflag [#allocation4], %s215
          %s217 = sand.u32 %s56, 1
          %s218 = smul.addr %s217, 32
          %s219 = scalar_lea.vmem [#allocation3], %s218
          %s220 = smul.u32 8, %s24
          %s222 = ssub.s32 512, 512
          %223 = vsyncadd %s216, %s222
          %s224 = sadd.s32 %s26, %s220
          %s225 = smul.addr %s23, 16
          %s226 = sadd.s32 %s224, %s225
          %s227 = smul.addr %s226, 64
          %s228 = scalar_lea.hbm %s0, %s227
          %s229 = sshll.u32 %s219, 4
          %s230 = int_to_ptr.vmem [resolvable:$true] %s229
          %235 = dma.hbm_to_vmem [thread:$0]  %s228, 512, %s230, %s216, 64, 64, 4
        $region28: #{autoencoder_forward.8} parent=23 // pred_fallthru
          _
      $region24: #{autoencoder_forward.8} parent=5 // pred_fallthru
        _
      %p236 = scmp.le.s32.totalorder 1, %s16
      %p237 = scmp.lt.s32.totalorder %s16, 3
      %p238 = pnand %p236, %p237
      %p239 = pneg %p238
      // Predicated region
      $region29: #{autoencoder_forward.8} parent=5 // pred_check
        _
      $region30: #{autoencoder_forward.8} parent=5 // pred_check_branch
        %241 = sbr.rel (%p238) target = $region32
      $region31: #{autoencoder_forward.8} parent=5 // pred_region
        %s242 = ssub.s32 %s16, 1
        %s243 = sand.u32 %s59, 1
        %s244 = scalar_lea.sflag [#allocation4], %s243
        %s245 = sand.u32 %s59, 1
        %s246 = smul.addr %s245, 32
        %s247 = scalar_lea.vmem [#allocation3], %s246
        // Predicated region
        $region33: #{autoencoder_forward.8} parent=31 // pred_check
          %p248 = pneg %p72
        $region34: #{autoencoder_forward.8} parent=31 // pred_check_branch
          %250 = sbr.rel (%p248) target = $region36
        $region35: #{autoencoder_forward.8} parent=31 // pred_region
          %251 = dma.done %s244, 512
        $region36: #{autoencoder_forward.8} parent=31 // pred_fallthru
          _
        // Predicated region
        $region37: #{autoencoder_forward.8} parent=31 // pred_check
          %p252 = pneg %p102
        $region38: #{autoencoder_forward.8} parent=31 // pred_check_branch
          %254 = sbr.rel (%p252) target = $region40
        $region39: #{autoencoder_forward.8} parent=31 // pred_region
          %255 = dma.done [#allocation7], 1024
        $region40: #{autoencoder_forward.8} parent=31 // pred_fallthru
          _
        // Predicated region
        $region41: #{autoencoder_forward.8} parent=31 // pred_check
          %p256 = pneg %p130
        $region42: #{autoencoder_forward.8} parent=31 // pred_check_branch
          %258 = sbr.rel (%p256) target = $region44
        $region43: #{autoencoder_forward.8} parent=31 // pred_region
          %259 = dma.done [#allocation7], 16
        $region44: #{autoencoder_forward.8} parent=31 // pred_fallthru
          _
        %s260 = sand.u32 %s59, 1
        %s261 = scalar_lea.sflag [#allocation4], %s260
        %s262 = sand.u32 %s59, 1
        %s263 = smul.addr %s262, 32
        %s264 = scalar_lea.vmem [#allocation3], %s263
        %p265 = pneg %p72
        %p266 = pneg %p69
        %p267 = pneg %p102
        %p268 = pneg %p99
        %p269 = pneg %p130
        %p270 = pneg %p127
        %p271 = pneg %p160
        %p272 = pneg %p157
        %s273 = sand.u32 %s147, 1
        %s274 = scalar_lea.sflag [#allocation5], %s273
        %s275 = sand.u32 %s147, 1
        %s276 = smul.addr %s275, 32
        %s277 = scalar_lea.vmem [#allocation9], %s276
        %s278 = smul.u32 8, %s28
        %s279 = smul.u32 16, %s30
        %s280 = smul.u32 8, %s28
        %p282 = scmp.eq.s32.totalorder %s30, 0
        // Predicated region
        $region45: #{autoencoder_forward.8} parent=31 // pred_check
          %p283 = pneg %p282
        $region46: #{autoencoder_forward.8} parent=31 // pred_check_branch
          %285 = sbr.rel (%p283) target = $region48
        $region47: #{autoencoder_forward.8} parent=31 // pred_region
          %286 = vst [vmem:[#allocation2] sm:$0xff] 0.0
          %287 = vst [vmem:[#allocation2 + $0x8] sm:$0xff] 0.0
          %288 = vst [vmem:[#allocation2 + $0x10] sm:$0xff] 0.0
          %289 = vst [vmem:[#allocation2 + $0x18] sm:$0xff] 0.0
          %290 = vst [vmem:[#allocation2 + $0x20] sm:$0xff] 0.0
          %291 = vst [vmem:[#allocation2 + $0x28] sm:$0xff] 0.0
          %292 = vst [vmem:[#allocation2 + $0x30] sm:$0xff] 0.0
          %293 = vst [vmem:[#allocation2 + $0x38] sm:$0xff] 0.0
        $region48: #{autoencoder_forward.8} parent=31 // pred_fallthru
          _
        %v294 = vld [vmem:[#allocation2] sm:$0xff]
        %v295 = vld [vmem:[#allocation2 + $0x8] sm:$0xff]
        %v296 = vld [vmem:[#allocation2 + $0x10] sm:$0xff]
        %v297 = vld [vmem:[#allocation2 + $0x18] sm:$0xff]
        %v298 = vld [vmem:[#allocation2 + $0x20] sm:$0xff]
        %v299 = vld [vmem:[#allocation2 + $0x28] sm:$0xff]
        %v300 = vld [vmem:[#allocation2 + $0x30] sm:$0xff]
        %v301 = vld [vmem:[#allocation2 + $0x38] sm:$0xff]
        %v302 = vld [vmem:[%s247] sm:$0xf]
        %v303 = vld [vmem:[%s247 + $0x4] sm:$0xf]
        %v304 = vld [vmem:[%s247 + $0x8] sm:$0xf]
        %v305 = vld [vmem:[%s247 + $0xc] sm:$0xf]
        %v306 = vld [vmem:[%s247 + $0x10] sm:$0xf]
        %v307 = vld [vmem:[%s247 + $0x14] sm:$0xf]
        %v308 = vld [vmem:[%s247 + $0x18] sm:$0xf]
        %v309 = vld [vmem:[%s247 + $0x1c] sm:$0xf]
        %v310 = vld [vmem:[#allocation6] sm:$0xf]
        %v311 = vld [vmem:[#allocation6 + $0x4] sm:$0xf]
        %v312 = vld [vmem:[#allocation6 + $0x8] sm:$0xf]
        %v313 = vld [vmem:[#allocation6 + $0xc] sm:$0xf]
        %v314 = vld [vmem:[#allocation6 + $0x10] sm:$0xf]
        %v315 = vld [vmem:[#allocation6 + $0x14] sm:$0xf]
        %v316 = vld [vmem:[#allocation6 + $0x18] sm:$0xf]
        %v317 = vld [vmem:[#allocation6 + $0x1c] sm:$0xf]
        %v318 = vld [vmem:[#allocation6 + $0x20] sm:$0xf]
        %v319 = vld [vmem:[#allocation6 + $0x24] sm:$0xf]
        %v320 = vld [vmem:[#allocation6 + $0x28] sm:$0xf]
        %v321 = vld [vmem:[#allocation6 + $0x2c] sm:$0xf]
        %v322 = vld [vmem:[#allocation6 + $0x30] sm:$0xf]
        %v323 = vld [vmem:[#allocation6 + $0x34] sm:$0xf]
        %v324 = vld [vmem:[#allocation6 + $0x38] sm:$0xf]
        %v325 = vld [vmem:[#allocation6 + $0x3c] sm:$0xf]
        %v334 = vunpack.c.l.b16 %v302
        %v335 = vunpack.c.l.b16 %v303
        %v336 = vunpack.c.l.b16 %v304
        %v337 = vunpack.c.l.b16 %v305
        %v338 = vunpack.c.l.b16 %v306
        %v339 = vunpack.c.l.b16 %v307
        %v340 = vunpack.c.l.b16 %v308
        %v341 = vunpack.c.l.b16 %v309
        %v342 = vpack.c.b16 %v335, %v334
        %v343 = vpack.c.b16 %v337, %v336
        %v344 = vpack.c.b16 %v339, %v338
        %v345 = vpack.c.b16 %v341, %v340
        %v366 = vunpack.c.l.b16 %v310
        %v367 = vunpack.c.l.b16 %v311
        %v368 = vunpack.c.l.b16 %v312
        %v369 = vunpack.c.l.b16 %v313
        %v370 = vunpack.c.l.b16 %v314
        %v371 = vunpack.c.l.b16 %v315
        %v372 = vunpack.c.l.b16 %v316
        %v373 = vunpack.c.l.b16 %v317
        %v374 = vunpack.c.l.b16 %v318
        %v375 = vunpack.c.l.b16 %v319
        %v376 = vunpack.c.l.b16 %v320
        %v377 = vunpack.c.l.b16 %v321
        %v378 = vunpack.c.l.b16 %v322
        %v379 = vunpack.c.l.b16 %v323
        %v380 = vunpack.c.l.b16 %v324
        %v381 = vunpack.c.l.b16 %v325
        %v382 = vpack.c.b16 %v367, %v366
        %v383 = vpack.c.b16 %v369, %v368
        %v384 = vpack.c.b16 %v371, %v370
        %v385 = vpack.c.b16 %v373, %v372
        %v386 = vpack.c.b16 %v375, %v374
        %v387 = vpack.c.b16 %v377, %v376
        %v388 = vpack.c.b16 %v379, %v378
        %v389 = vpack.c.b16 %v381, %v380
        %398 = vmatprep.subr.bf16.mxu0 0
        %399 = vmatpush1.bf16.msra.mxu0 %v382
        %400 = vmatprep.subr.bf16.mxu0 0
        %401 = vmatpush1.bf16.msra.mxu0 %v383
        %402 = vmatprep.subr.bf16.mxu0 0
        %403 = vmatpush1.bf16.msra.mxu0 %v384
        %404 = vmatprep.subr.bf16.mxu0 0
        %405 = vmatpush1.bf16.msra.mxu0 %v385
        %406 = vmatprep.subr.bf16.mxu0 0
        %407 = vmatpush1.bf16.msra.mxu0 %v386
        %408 = vmatprep.subr.bf16.mxu0 0
        %409 = vmatpush1.bf16.msra.mxu0 %v387
        %410 = vmatprep.subr.bf16.mxu0 0
        %411 = vmatpush1.bf16.msra.mxu0 %v388
        %412 = vmatprep.subr.bf16.mxu0 0
        %413 = vmatpush1.bf16.msra.mxu0 %v389
        %414 = vmatprep.subr.bf16.mxu0 0
        %415 = vmatpush1.bf16.msra.mxu0 0
        %416 = vmatprep.subr.bf16.mxu0 0
        %417 = vmatpush1.bf16.msra.mxu0 0
        %418 = vmatprep.subr.bf16.mxu0 0
        %419 = vmatpush1.bf16.msra.mxu0 0
        %420 = vmatprep.subr.bf16.mxu0 0
        %421 = vmatpush1.bf16.msra.mxu0 0
        %422 = vmatprep.subr.bf16.mxu0 0
        %423 = vmatpush1.bf16.msra.mxu0 0
        %424 = vmatprep.subr.bf16.mxu0 0
        %425 = vmatpush1.bf16.msra.mxu0 0
        %426 = vmatprep.subr.bf16.mxu0 0
        %427 = vmatpush1.bf16.msra.mxu0 0
        %428 = vmatprep.subr.bf16.mxu0 0
        %429 = vmatpush1.bf16.msra.mxu0 0
        %430 = vmatprep.mubr.bf16.mxu0 0
        %431 = vmatmul.mubr.bf16.gmra.mrb[0].mxu0 %v342
        %v432 = vpop.f32.mrb[0].mxu0
        %v433 = vadd.f32 0.0, %v432
        %v434 = vpop.f32.mrb[0].mxu0
        %v435 = vpop.f32.mrb[0].mxu0
        %v436 = vadd.f32 0.0, %v435
        %v437 = vpop.f32.mrb[0].mxu0
        %438 = vmatprep.mubr.bf16.mxu0 0
        %439 = vmatmul.mubr.bf16.gmra.mrb[0].mxu0 %v343
        %v440 = vpop.f32.mrb[0].mxu0
        %v441 = vadd.f32 0.0, %v440
        %v442 = vpop.f32.mrb[0].mxu0
        %v443 = vpop.f32.mrb[0].mxu0
        %v444 = vadd.f32 0.0, %v443
        %v445 = vpop.f32.mrb[0].mxu0
        %446 = vmatprep.mubr.bf16.mxu0 0
        %447 = vmatmul.mubr.bf16.gmra.mrb[0].mxu0 %v344
        %v448 = vpop.f32.mrb[0].mxu0
        %v449 = vadd.f32 0.0, %v448
        %v450 = vpop.f32.mrb[0].mxu0
        %v451 = vpop.f32.mrb[0].mxu0
        %v452 = vadd.f32 0.0, %v451
        %v453 = vpop.f32.mrb[0].mxu0
        %454 = vmatprep.mubr.bf16.mxu0 0
        %455 = vmatmul.mubr.bf16.gmra.mrb[0].mxu0 %v345
        %v456 = vpop.f32.mrb[0].mxu0
        %v457 = vadd.f32 0.0, %v456
        %v458 = vpop.f32.mrb[0].mxu0
        %v459 = vpop.f32.mrb[0].mxu0
        %v460 = vadd.f32 0.0, %v459
        %v461 = vpop.f32.mrb[0].mxu0
        %462 = vdwg.mxu0
        %v463 = vadd.f32 %v294, %v433
        %v464 = vadd.f32 %v295, %v436
        %v465 = vadd.f32 %v296, %v441
        %v466 = vadd.f32 %v297, %v444
        %v467 = vadd.f32 %v298, %v449
        %v468 = vadd.f32 %v299, %v452
        %v469 = vadd.f32 %v300, %v457
        %v470 = vadd.f32 %v301, %v460
        %471 = vst [vmem:[#allocation2] sm:$0xff] %v463
        %472 = vst [vmem:[#allocation2 + $0x8] sm:$0xff] %v464
        %473 = vst [vmem:[#allocation2 + $0x10] sm:$0xff] %v465
        %474 = vst [vmem:[#allocation2 + $0x18] sm:$0xff] %v466
        %475 = vst [vmem:[#allocation2 + $0x20] sm:$0xff] %v467
        %476 = vst [vmem:[#allocation2 + $0x28] sm:$0xff] %v468
        %477 = vst [vmem:[#allocation2 + $0x30] sm:$0xff] %v469
        %478 = vst [vmem:[#allocation2 + $0x38] sm:$0xff] %v470
        // Predicated region
        $region49: #{autoencoder_forward.8} parent=31 // pred_check
          %p479 = pneg %p282
        $region50: #{autoencoder_forward.8} parent=31 // pred_check_branch
          %481 = sbr.rel (%p479) target = $region52
        $region51: #{autoencoder_forward.8} parent=31 // pred_region
          %v482 = vld [vmem:[#allocation2] sm:$0xff]
          %v483 = vld [vmem:[#allocation2 + $0x8] sm:$0xff]
          %v484 = vld [vmem:[#allocation2 + $0x10] sm:$0xff]
          %v485 = vld [vmem:[#allocation2 + $0x18] sm:$0xff]
          %v486 = vld [vmem:[#allocation2 + $0x20] sm:$0xff]
          %v487 = vld [vmem:[#allocation2 + $0x28] sm:$0xff]
          %v488 = vld [vmem:[#allocation2 + $0x30] sm:$0xff]
          %v489 = vld [vmem:[#allocation2 + $0x38] sm:$0xff]
          %v490 = vld [vmem:[#allocation8] sm:$0x1]
          %v492 = vlaneseq
          %v493 = vshrl.u32 %v492, 7
          %v494 = vsub.s32 0, %v493
          %v495 = vrot.slane %v490, %v494
          %v497 = vadd.f32 %v482, %v495
          %v498 = vadd.f32 %v483, %v495
          %v499 = vadd.f32 %v484, %v495
          %v500 = vadd.f32 %v485, %v495
          %v501 = vadd.f32 %v486, %v495
          %v502 = vadd.f32 %v487, %v495
          %v503 = vadd.f32 %v488, %v495
          %v504 = vadd.f32 %v489, %v495
          %v505 = vmax.f32 %v497, 0.0
          %v506 = vmax.f32 %v498, 0.0
          %v507 = vmax.f32 %v499, 0.0
          %v508 = vmax.f32 %v500, 0.0
          %v509 = vmax.f32 %v501, 0.0
          %v510 = vmax.f32 %v502, 0.0
          %v511 = vmax.f32 %v503, 0.0
          %v512 = vmax.f32 %v504, 0.0
          %v513 = vpack.c.bf16 %v506, %v505
          %v514 = vpack.c.bf16 %v508, %v507
          %v515 = vpack.c.bf16 %v510, %v509
          %v516 = vpack.c.bf16 %v512, %v511
          %v521 = vunpack.c.l.b16 %v513
          %v522 = vunpack.c.h.b16 %v513
          %v523 = vunpack.c.l.b16 %v514
          %v524 = vunpack.c.h.b16 %v514
          %v525 = vunpack.c.l.b16 %v515
          %v526 = vunpack.c.h.b16 %v515
          %v527 = vunpack.c.l.b16 %v516
          %v528 = vunpack.c.h.b16 %v516
          %v529 = vpack.c.b16 %v521, %v521
          %v530 = vpack.c.b16 %v522, %v522
          %v531 = vpack.c.b16 %v523, %v523
          %v532 = vpack.c.b16 %v524, %v524
          %v533 = vpack.c.b16 %v525, %v525
          %v534 = vpack.c.b16 %v526, %v526
          %v535 = vpack.c.b16 %v527, %v527
          %v536 = vpack.c.b16 %v528, %v528
          %545 = vst [vmem:[%s277] sm:$0xf] %v529
          %546 = vst [vmem:[%s277 + $0x4] sm:$0xf] %v530
          %547 = vst [vmem:[%s277 + $0x8] sm:$0xf] %v531
          %548 = vst [vmem:[%s277 + $0xc] sm:$0xf] %v532
          %549 = vst [vmem:[%s277 + $0x10] sm:$0xf] %v533
          %550 = vst [vmem:[%s277 + $0x14] sm:$0xf] %v534
          %551 = vst [vmem:[%s277 + $0x18] sm:$0xf] %v535
          %552 = vst [vmem:[%s277 + $0x1c] sm:$0xf] %v536
        $region52: #{autoencoder_forward.8} parent=31 // pred_fallthru
          _
        %s553 = sand.u32 %s147, 1
        %s554 = scalar_lea.sflag [#allocation5], %s553
        %s555 = sand.u32 %s147, 1
        %s556 = smul.addr %s555, 32
        %s557 = scalar_lea.vmem [#allocation9], %s556
        // Predicated region
        $region53: #{autoencoder_forward.8} parent=31 // pred_check
          %p558 = pneg %p157
        $region54: #{autoencoder_forward.8} parent=31 // pred_check_branch
          %560 = sbr.rel (%p558) target = $region56
        $region55: #{autoencoder_forward.8} parent=31 // pred_region
          %s561 = smul.u32 8, %s28
          %s563 = ssub.s32 512, 512
          %564 = vsyncadd %s554, %s563
          %s565 = sadd.s32 %s29, %s561
          %s566 = smul.addr %s27, 16
          %s567 = sadd.s32 %s565, %s566
          %s568 = smul.addr %s567, 64
          %s569 = scalar_lea.hbm %s3, %s568
          %s570 = sshll.u32 %s557, 4
          %s571 = int_to_ptr.vmem [resolvable:$true] %s570
          %576 = dma.vmem_to_hbm [thread:$0]  %s571, 512, %s569, %s554, 64, 64, 4
        $region56: #{autoencoder_forward.8} parent=31 // pred_fallthru
          _
      $region32: #{autoencoder_forward.8} parent=5 // pred_fallthru
        _
      %p577 = scmp.le.s32.totalorder 2, %s16
      // Predicated region
      $region57: #{autoencoder_forward.8} parent=5 // pred_check
        %p578 = pneg %p577
      $region58: #{autoencoder_forward.8} parent=5 // pred_check_branch
        %580 = sbr.rel (%p578) target = $region60
      $region59: #{autoencoder_forward.8} parent=5 // pred_region
        %s581 = ssub.s32 %s16, 2
        // Predicated region
        $region61: #{autoencoder_forward.8} parent=59 // pred_check
          %p582 = pneg %p163
        $region62: #{autoencoder_forward.8} parent=59 // pred_check_branch
          %584 = sbr.rel (%p582) target = $region64
        $region63: #{autoencoder_forward.8} parent=59 // pred_region
          %s585 = sand.u32 %s148, 1
          %s586 = scalar_lea.sflag [#allocation5], %s585
          %s587 = sand.u32 %s148, 1
          %s588 = smul.addr %s587, 32
          %s589 = scalar_lea.vmem [#allocation9], %s588
          %590 = dma.done %s586, 512
        $region64: #{autoencoder_forward.8} parent=59 // pred_fallthru
          _
      $region60: #{autoencoder_forward.8} parent=5 // pred_fallthru
        _
    $region6: #{autoencoder_forward.8} parent=1 // loop_footer
      %s20 = sadd.s32 1, %s16
    $region7: #{autoencoder_forward.8} parent=1 // loop_footer_branch
      %15 = sbr.rel target = $region3
    $region8: #{autoencoder_forward.8} parent=1 // loop_exit
      _
    %591 = vsyncpa [#allocation4], 1
    %s592 = scalar_lea.sflag [#allocation4], 1
    %593 = vsyncpa %s592, 1
    %594 = vsyncpa [#allocation7], 1
    %595 = vsyncpa [#allocation5], 1
    %s596 = scalar_lea.sflag [#allocation5], 1
    %597 = vsyncpa %s596, 1

// kernel: autoencoder_forward.9
$region0: #{autoencoder_forward.9}
  #allocation0 [shape = 'u32[]', space=smem, size = 0x4, offset = 0x4, fixed_abs, tag = 'smem constant byte address 0x4 - core index']
  #allocation1 [shape = 'u32[144,128]{1,0:T(1,128)}', space=vmem, size = 0x12000, scoped, tag = 'internal scratch']
  #allocation2 [shape = 'f32[16,128]{1,0:T(8,128)}', space=vmem, size = 0x2000, scoped, tag = 'scratch operand']
  %s0 = inlined_call_operand.hbm [shape: bf16[1,32,1024], index: 0, kind: input, shape index: {}]
  %s1 = inlined_call_operand.hbm [shape: bf16[1,1024,128], index: 1, kind: input, shape index: {}]
  %s2 = inlined_call_operand.hbm [shape: f32[1,1,128], index: 2, kind: input, shape index: {}]
  %s3 = inlined_call_operand.hbm [shape: bf16[1,32,128], index: 3, kind: output, shape index: {}]
  %s4 = sld [smem:[#allocation0]]
  $region65: #{autoencoder_forward.9} parent=0
    _
  %s6 = ssub.s32 1, %s4
  %s7 = scalar_select 0, %s6, %s4
  $region1: #{autoencoder_forward.9} parent=0
    #allocation3 [shape = 'u8[65536]{0}', space=vmem, size = 0x10000, scoped, tag = 'input window, operand 0']
    #allocation4 [shape = 's32[2]{0}', space=sflag, size = 0x8, scoped, tag = 'scoped memory for autoencoder_forward.9']
    #allocation5 [shape = 's32[2]{0}', space=sflag, size = 0x8, scoped, tag = 'scoped memory for autoencoder_forward.9']
    #allocation6 [shape = 'u8[262144]{0}', space=vmem, size = 0x40000, scoped, tag = 'input window, operand 1, single buffered']
    #allocation7 [shape = 's32[1]{0}', space=sflag, size = 0x4, scoped, tag = 'scoped memory for autoencoder_forward.9']
    #allocation8 [shape = 'u8[512]{0}', space=vmem, size = 0x400, scoped, tag = 'input window, operand 2, single buffered']
    #allocation9 [shape = 'u8[8192]{0}', space=vmem, size = 0x2000, scoped, tag = 'output window, operand 0']
    %8 = vsyncpa [#allocation4], 0
    %s9 = scalar_lea.sflag [#allocation4], 1
    %10 = vsyncpa %s9, 0
    %11 = vsyncpa [#allocation7], 0
    %12 = vsyncpa [#allocation5], 0
    %s13 = scalar_lea.sflag [#allocation5], 1
    %14 = vsyncpa %s13, 0
    loop: start=0, step=1, limit=4
    $region2: #{autoencoder_forward.9} parent=1 // loop_pre_header
      _
    $region3: #{autoencoder_forward.9} parent=1 // loop_header
      %s16 = sphi 0, %s20
      %p17 = scmp.ge.s32.totalorder %s16, 4
      %s23 = sphi 0, %s49
      %s24 = sphi 0, %s45
      %s25 = sphi 0, %s41
      %s26 = sphi 0, %s37
      %s27 = sphi 0, %s23
      %s28 = sphi 0, %s24
      %s29 = sphi 0, %s25
      %s30 = sphi 0, %s26
      %s31 = sphi 0, %s27
      %s32 = sphi 0, %s28
      %s33 = sphi 0, %s29
      %s34 = sphi 0, %s30
      %s56 = sphi 0, %s58
      %s59 = sphi 0, %s56
      %s60 = sphi 0, %s59
      %s76 = sphi 0, %s60
      %s86 = sphi 0, %s88
      %s89 = sphi 0, %s86
      %s90 = sphi 0, %s89
      %s106 = sphi 0, %s90
      %s114 = sphi 0, %s116
      %s117 = sphi 0, %s114
      %s118 = sphi 0, %s117
      %s134 = sphi 0, %s118
      %s144 = sphi 0, %s146
      %s147 = sphi 0, %s144
      %s148 = sphi 0, %s147
      %s164 = sphi 0, %s148
    $region4: #{autoencoder_forward.9} parent=1 // loop_header_branch
      %19 = sbr.rel (%p17) target = $region8
    $region5: #{autoencoder_forward.9} parent=1 // loop_body
      %s21 = ssub.s32 %s16, 1
      %s22 = ssub.s32 %s16, 2
      %s35 = sadd.s32 1, %s26
      %p36 = scmp.ge.s32.totalorder %s35, 1
      %s37 = scalar_select %p36, 0, %s35
      %s38 = sadd.s32 1, %s25
      %s39 = scalar_select %p36, %s38, %s25
      %p40 = scmp.ge.s32.totalorder %s39, 1
      %s41 = scalar_select %p40, 0, %s39
      %s42 = sadd.s32 1, %s24
      %s43 = scalar_select %p40, %s42, %s24
      %p44 = scmp.ge.s32.totalorder %s43, 2
      %s45 = scalar_select %p44, 0, %s43
      %s46 = sadd.s32 1, %s23
      %s47 = scalar_select %p44, %s46, %s23
      %p48 = scmp.ge.s32.totalorder %s47, 1
      %s49 = scalar_select %p48, 0, %s47
      %s50 = ssub.s32 %s23, %s49
      %s51 = ssub.s32 %s24, %s45
      %s52 = sor.u32 %s50, %s51
      %s53 = ssub.s32 %s26, %s37
      %s54 = sor.u32 %s52, %s53
      %p55 = scmp.eq.s32.totalorder %s54, 0
      %s57 = sadd.s32 %s56, 1
      %s58 = scalar_select %p55, %s56, %s57
      %p61 = pneg %p55
      %p62 = scmp.eq.s32.totalorder %s16, 1
      %p63 = por %p61, %p62
      %p64 = scmp.ne.s32.totalorder %s56, %s59
      %p65 = scmp.eq.s32.totalorder %s16, 0
      %p66 = por %p64, %p65
      %p67 = scmp.ne.s32.totalorder %s56, %s59
      %p68 = scmp.eq.s32.totalorder %s21, 1
      %p69 = por %p67, %p68
      %p70 = scmp.ne.s32.totalorder %s59, %s60
      %p71 = scmp.eq.s32.totalorder %s21, 0
      %p72 = por %p70, %p71
      %p73 = scmp.ne.s32.totalorder %s59, %s60
      %p74 = scmp.eq.s32.totalorder %s22, 1
      %p75 = por %p73, %p74
      %p77 = scmp.ne.s32.totalorder %s60, %s76
      %p78 = scmp.eq.s32.totalorder %s22, 0
      %p79 = por %p77, %p78
      %s80 = ssub.s32 %s23, %s49
      %s81 = ssub.s32 %s26, %s37
      %s82 = sor.u32 %s80, %s81
      %s83 = ssub.s32 %s25, %s41
      %s84 = sor.u32 %s82, %s83
      %p85 = scmp.eq.s32.totalorder %s84, 0
      %s87 = sadd.s32 %s86, 1
      %s88 = scalar_select %p85, %s86, %s87
      %p91 = pneg %p85
      %p92 = scmp.eq.s32.totalorder %s16, 1
      %p93 = por %p91, %p92
      %p94 = scmp.ne.s32.totalorder %s86, %s89
      %p95 = scmp.eq.s32.totalorder %s16, 0
      %p96 = por %p94, %p95
      %p97 = scmp.ne.s32.totalorder %s86, %s89
      %p98 = scmp.eq.s32.totalorder %s21, 1
      %p99 = por %p97, %p98
      %p100 = scmp.ne.s32.totalorder %s89, %s90
      %p101 = scmp.eq.s32.totalorder %s21, 0
      %p102 = por %p100, %p101
      %p103 = scmp.ne.s32.totalorder %s89, %s90
      %p104 = scmp.eq.s32.totalorder %s22, 1
      %p105 = por %p103, %p104
      %p107 = scmp.ne.s32.totalorder %s90, %s106
      %p108 = scmp.eq.s32.totalorder %s22, 0
      %p109 = por %p107, %p108
      %s110 = ssub.s32 %s23, %s49
      %s111 = ssub.s32 %s25, %s41
      %s112 = sor.u32 %s110, %s111
      %p113 = scmp.eq.s32.totalorder %s112, 0
      %s115 = sadd.s32 %s114, 1
      %s116 = scalar_select %p113, %s114, %s115
      %p119 = pneg %p113
      %p120 = scmp.eq.s32.totalorder %s16, 1
      %p121 = por %p119, %p120
      %p122 = scmp.ne.s32.totalorder %s114, %s117
      %p123 = scmp.eq.s32.totalorder %s16, 0
      %p124 = por %p122, %p123
      %p125 = scmp.ne.s32.totalorder %s114, %s117
      %p126 = scmp.eq.s32.totalorder %s21, 1
      %p127 = por %p125, %p126
      %p128 = scmp.ne.s32.totalorder %s117, %s118
      %p129 = scmp.eq.s32.totalorder %s21, 0
      %p130 = por %p128, %p129
      %p131 = scmp.ne.s32.totalorder %s117, %s118
      %p132 = scmp.eq.s32.totalorder %s22, 1
      %p133 = por %p131, %p132
      %p135 = scmp.ne.s32.totalorder %s118, %s134
      %p136 = scmp.eq.s32.totalorder %s22, 0
      %p137 = por %p135, %p136
      %s138 = ssub.s32 %s23, %s49
      %s139 = ssub.s32 %s24, %s45
      %s140 = sor.u32 %s138, %s139
      %s141 = ssub.s32 %s25, %s41
      %s142 = sor.u32 %s140, %s141
      %p143 = scmp.eq.s32.totalorder %s142, 0
      %s145 = sadd.s32 %s144, 1
      %s146 = scalar_select %p143, %s144, %s145
      %p149 = pneg %p143
      %p150 = scmp.eq.s32.totalorder %s16, 1
      %p151 = por %p149, %p150
      %p152 = scmp.ne.s32.totalorder %s144, %s147
      %p153 = scmp.eq.s32.totalorder %s16, 0
      %p154 = por %p152, %p153
      %p155 = scmp.ne.s32.totalorder %s144, %s147
      %p156 = scmp.eq.s32.totalorder %s21, 1
      %p157 = por %p155, %p156
      %p158 = scmp.ne.s32.totalorder %s147, %s148
      %p159 = scmp.eq.s32.totalorder %s21, 0
      %p160 = por %p158, %p159
      %p161 = scmp.ne.s32.totalorder %s147, %s148
      %p162 = scmp.eq.s32.totalorder %s22, 1
      %p163 = por %p161, %p162
      %p165 = scmp.ne.s32.totalorder %s148, %s164
      %p166 = scmp.eq.s32.totalorder %s22, 0
      %p167 = por %p165, %p166
      %p168 = scmp.le.s32.totalorder 1, %s16
      %p169 = scmp.lt.s32.totalorder %s16, 3
      %p170 = pnand %p168, %p169
      %p171 = pneg %p170
      // Predicated region
      $region9: #{autoencoder_forward.9} parent=5 // pred_check
        _
      $region10: #{autoencoder_forward.9} parent=5 // pred_check_branch
        %173 = sbr.rel (%p170) target = $region12
      $region11: #{autoencoder_forward.9} parent=5 // pred_region
        %s174 = ssub.s32 %s16, 1
        // Predicated region
        $region13: #{autoencoder_forward.9} parent=11 // pred_check
          %p175 = pneg %p102
        $region14: #{autoencoder_forward.9} parent=11 // pred_check_branch
          %177 = sbr.rel (%p175) target = $region16
        $region15: #{autoencoder_forward.9} parent=11 // pred_region
          %s178 = smul.u32 128, %s30
          %s180 = ssub.s32 8192, 8192
          %181 = vsyncadd [#allocation7], %s180
          %s182 = sadd.s32 %s29, %s178
          %s183 = smul.addr %s27, 128
          %s184 = sadd.s32 %s182, %s183
          %s185 = smul.addr %s184, 64
          %s186 = scalar_lea.hbm %s1, %s185
          %s187 = sshll.u32 [#allocation6], 4
          %s188 = int_to_ptr.vmem [resolvable:$true] %s187
          %193 = dma.hbm_to_vmem [thread:$0]  %s186, 8192, %s188, [#allocation7], 64, 64, 4
        $region16: #{autoencoder_forward.9} parent=11 // pred_fallthru
          _
        // Predicated region
        $region17: #{autoencoder_forward.9} parent=11 // pred_check
          %p194 = pneg %p130
        $region18: #{autoencoder_forward.9} parent=11 // pred_check_branch
          %196 = sbr.rel (%p194) target = $region20
        $region19: #{autoencoder_forward.9} parent=11 // pred_region
          %s198 = ssub.s32 16, 16
          %199 = vsyncadd [#allocation7], %s198
          %s200 = sadd.s32 %s29, %s27
          %s201 = smul.addr %s200, 16
          %s202 = scalar_lea.hbm %s2, %s201
          %s204 = sshll.u32 [#allocation8], 4
          %s205 = int_to_ptr.vmem [resolvable:$true] %s204
          %207 = dma.hbm_to_vmem [thread:$0]  %s202, 16, %s205, [#allocation7]
        $region20: #{autoencoder_forward.9} parent=11 // pred_fallthru
          _
      $region12: #{autoencoder_forward.9} parent=5 // pred_fallthru
        _
      %p208 = scmp.lt.s32.totalorder %s16, 2
      // Predicated region
      $region21: #{autoencoder_forward.9} parent=5 // pred_check
        %p209 = pneg %p208
      $region22: #{autoencoder_forward.9} parent=5 // pred_check_branch
        %211 = sbr.rel (%p209) target = $region24
      $region23: #{autoencoder_forward.9} parent=5 // pred_region
        // Predicated region
        $region25: #{autoencoder_forward.9} parent=23 // pred_check
          %p212 = pneg %p66
        $region26: #{autoencoder_forward.9} parent=23 // pred_check_branch
          %214 = sbr.rel (%p212) target = $region28
        $region27: #{autoencoder_forward.9} parent=23 // pred_region
          %s215 = sand.u32 %s56, 1
          %s216 = scalar_lea.sflag [#allocation4], %s215
          %s217 = sand.u32 %s56, 1
          %s218 = smul.addr %s217, 64
          %s219 = scalar_lea.vmem [#allocation3], %s218
          %s220 = smul.u32 2, %s24
          %s221 = smul.u32 8, %s26
          %s223 = ssub.s32 1024, 1024
          %224 = vsyncadd %s216, %s223
          %s225 = smul.addr %s220, 8
          %s226 = sadd.s32 %s221, %s225
          %s227 = smul.addr %s23, 32
          %s228 = sadd.s32 %s226, %s227
          %s229 = smul.addr %s228, 64
          %s230 = scalar_lea.hbm %s0, %s229
          %s231 = sshll.u32 %s219, 4
          %s232 = int_to_ptr.vmem [resolvable:$true] %s231
          %237 = dma.hbm_to_vmem [thread:$0]  %s230, 1024, %s232, %s216, 512, 512, 32
        $region28: #{autoencoder_forward.9} parent=23 // pred_fallthru
          _
      $region24: #{autoencoder_forward.9} parent=5 // pred_fallthru
        _
      %p238 = scmp.le.s32.totalorder 1, %s16
      %p239 = scmp.lt.s32.totalorder %s16, 3
      %p240 = pnand %p238, %p239
      %p241 = pneg %p240
      // Predicated region
      $region29: #{autoencoder_forward.9} parent=5 // pred_check
        _
      $region30: #{autoencoder_forward.9} parent=5 // pred_check_branch
        %243 = sbr.rel (%p240) target = $region32
      $region31: #{autoencoder_forward.9} parent=5 // pred_region
        %s244 = ssub.s32 %s16, 1
        %s245 = sand.u32 %s59, 1
        %s246 = scalar_lea.sflag [#allocation4], %s245
        %s247 = sand.u32 %s59, 1
        %s248 = smul.addr %s247, 64
        %s249 = scalar_lea.vmem [#allocation3], %s248
        // Predicated region
        $region33: #{autoencoder_forward.9} parent=31 // pred_check
          %p250 = pneg %p72
        $region34: #{autoencoder_forward.9} parent=31 // pred_check_branch
          %252 = sbr.rel (%p250) target = $region36
        $region35: #{autoencoder_forward.9} parent=31 // pred_region
          %253 = dma.done %s246, 1024
        $region36: #{autoencoder_forward.9} parent=31 // pred_fallthru
          _
        // Predicated region
        $region37: #{autoencoder_forward.9} parent=31 // pred_check
          %p254 = pneg %p102
        $region38: #{autoencoder_forward.9} parent=31 // pred_check_branch
          %256 = sbr.rel (%p254) target = $region40
        $region39: #{autoencoder_forward.9} parent=31 // pred_region
          %257 = dma.done [#allocation7], 8192
        $region40: #{autoencoder_forward.9} parent=31 // pred_fallthru
          _
        // Predicated region
        $region41: #{autoencoder_forward.9} parent=31 // pred_check
          %p258 = pneg %p130
        $region42: #{autoencoder_forward.9} parent=31 // pred_check_branch
          %260 = sbr.rel (%p258) target = $region44
        $region43: #{autoencoder_forward.9} parent=31 // pred_region
          %261 = dma.done [#allocation7], 16
        $region44: #{autoencoder_forward.9} parent=31 // pred_fallthru
          _
        %s262 = sand.u32 %s59, 1
        %s263 = scalar_lea.sflag [#allocation4], %s262
        %s264 = sand.u32 %s59, 1
        %s265 = smul.addr %s264, 64
        %s266 = scalar_lea.vmem [#allocation3], %s265
        %p267 = pneg %p72
        %p268 = pneg %p69
        %p269 = pneg %p102
        %p270 = pneg %p99
        %p271 = pneg %p130
        %p272 = pneg %p127
        %p273 = pneg %p160
        %p274 = pneg %p157
        %s275 = sand.u32 %s147, 1
        %s276 = scalar_lea.sflag [#allocation5], %s275
        %s277 = sand.u32 %s147, 1
        %s278 = smul.addr %s277, 8
        %s279 = scalar_lea.vmem [#allocation9], %s278
        %s280 = smul.u32 2, %s28
        %s281 = smul.u32 8, %s30
        %s282 = smul.u32 128, %s30
        %s283 = smul.u32 2, %s28
        %p285 = scmp.eq.s32.totalorder %s30, 0
        // Predicated region
        $region45: #{autoencoder_forward.9} parent=31 // pred_check
          %p286 = pneg %p285
        $region46: #{autoencoder_forward.9} parent=31 // pred_check_branch
          %288 = sbr.rel (%p286) target = $region48
        $region47: #{autoencoder_forward.9} parent=31 // pred_region
          %289 = vst [vmem:[#allocation2] sm:$0xff] 0.0
          %290 = vst [vmem:[#allocation2 + $0x8] sm:$0xff] 0.0
        $region48: #{autoencoder_forward.9} parent=31 // pred_fallthru
          _
        %v291 = vld [vmem:[#allocation2] sm:$0xff]
        %v292 = vld [vmem:[#allocation2 + $0x8] sm:$0xff]
        %v293 = vld [vmem:[%s249] sm:$0xff]
        %v294 = vld [vmem:[%s249 + $0x8] sm:$0xff]
        %v295 = vld [vmem:[%s249 + $0x10] sm:$0xff]
        %v296 = vld [vmem:[%s249 + $0x18] sm:$0xff]
        %v297 = vld [vmem:[%s249 + $0x20] sm:$0xff]
        %v298 = vld [vmem:[%s249 + $0x28] sm:$0xff]
        %v299 = vld [vmem:[%s249 + $0x30] sm:$0xff]
        %v300 = vld [vmem:[%s249 + $0x38] sm:$0xff]
        %v301 = vld [vmem:[#allocation6] sm:$0xf]
        %v302 = vld [vmem:[#allocation6 + $0x4] sm:$0xf]
        %v303 = vld [vmem:[#allocation6 + $0x8] sm:$0xf]
        %v304 = vld [vmem:[#allocation6 + $0xc] sm:$0xf]
        %v305 = vld [vmem:[#allocation6 + $0x10] sm:$0xf]
        %v306 = vld [vmem:[#allocation6 + $0x14] sm:$0xf]
        %v307 = vld [vmem:[#allocation6 + $0x18] sm:$0xf]
        %v308 = vld [vmem:[#allocation6 + $0x1c] sm:$0xf]
        %v309 = vld [vmem:[#allocation6 + $0x20] sm:$0xf]
        %v310 = vld [vmem:[#allocation6 + $0x24] sm:$0xf]
        %v311 = vld [vmem:[#allocation6 + $0x28] sm:$0xf]
        %v312 = vld [vmem:[#allocation6 + $0x2c] sm:$0xf]
        %v313 = vld [vmem:[#allocation6 + $0x30] sm:$0xf]
        %v314 = vld [vmem:[#allocation6 + $0x34] sm:$0xf]
        %v315 = vld [vmem:[#allocation6 + $0x38] sm:$0xf]
        %v316 = vld [vmem:[#allocation6 + $0x3c] sm:$0xf]
        %v317 = vld [vmem:[#allocation6 + $0x40] sm:$0xf]
        %v318 = vld [vmem:[#allocation6 + $0x44] sm:$0xf]
        %v319 = vld [vmem:[#allocation6 + $0x48] sm:$0xf]
        %v320 = vld [vmem:[#allocation6 + $0x4c] sm:$0xf]
        %v321 = vld [vmem:[#allocation6 + $0x50] sm:$0xf]
        %v322 = vld [vmem:[#allocation6 + $0x54] sm:$0xf]
        %v323 = vld [vmem:[#allocation6 + $0x58] sm:$0xf]
        %v324 = vld [vmem:[#allocation6 + $0x5c] sm:$0xf]
        %v325 = vld [vmem:[#allocation6 + $0x60] sm:$0xf]
        %v326 = vld [vmem:[#allocation6 + $0x64] sm:$0xf]
        %v327 = vld [vmem:[#allocation6 + $0x68] sm:$0xf]
        %v328 = vld [vmem:[#allocation6 + $0x6c] sm:$0xf]
        %v329 = vld [vmem:[#allocation6 + $0x70] sm:$0xf]
        %v330 = vld [vmem:[#allocation6 + $0x74] sm:$0xf]
        %v331 = vld [vmem:[#allocation6 + $0x78] sm:$0xf]
        %v332 = vld [vmem:[#allocation6 + $0x7c] sm:$0xf]
        %v333 = vld [vmem:[#allocation6 + $0x80] sm:$0xf]
        %v334 = vld [vmem:[#allocation6 + $0x84] sm:$0xf]
        %v335 = vld [vmem:[#allocation6 + $0x88] sm:$0xf]
        %v336 = vld [vmem:[#allocation6 + $0x8c] sm:$0xf]
        %v337 = vld [vmem:[#allocation6 + $0x90] sm:$0xf]
        %v338 = vld [vmem:[#allocation6 + $0x94] sm:$0xf]
        %v339 = vld [vmem:[#allocation6 + $0x98] sm:$0xf]
        %v340 = vld [vmem:[#allocation6 + $0x9c] sm:$0xf]
        %v341 = vld [vmem:[#allocation6 + $0xa0] sm:$0xf]
        %v342 = vld [vmem:[#allocation6 + $0xa4] sm:$0xf]
        %v343 = vld [vmem:[#allocation6 + $0xa8] sm:$0xf]
        %v344 = vld [vmem:[#allocation6 + $0xac] sm:$0xf]
        %v345 = vld [vmem:[#allocation6 + $0xb0] sm:$0xf]
        %v346 = vld [vmem:[#allocation6 + $0xb4] sm:$0xf]
        %v347 = vld [vmem:[#allocation6 + $0xb8] sm:$0xf]
        %v348 = vld [vmem:[#allocation6 + $0xbc] sm:$0xf]
        %v349 = vld [vmem:[#allocation6 + $0xc0] sm:$0xf]
        %v350 = vld [vmem:[#allocation6 + $0xc4] sm:$0xf]
        %v351 = vld [vmem:[#allocation6 + $0xc8] sm:$0xf]
        %v352 = vld [vmem:[#allocation6 + $0xcc] sm:$0xf]
        %v353 = vld [vmem:[#allocation6 + $0xd0] sm:$0xf]
        %v354 = vld [vmem:[#allocation6 + $0xd4] sm:$0xf]
        %v355 = vld [vmem:[#allocation6 + $0xd8] sm:$0xf]
        %v356 = vld [vmem:[#allocation6 + $0xdc] sm:$0xf]
        %v357 = vld [vmem:[#allocation6 + $0xe0] sm:$0xf]
        %v358 = vld [vmem:[#allocation6 + $0xe4] sm:$0xf]
        %v359 = vld [vmem:[#allocation6 + $0xe8] sm:$0xf]
        %v360 = vld [vmem:[#allocation6 + $0xec] sm:$0xf]
        %v361 = vld [vmem:[#allocation6 + $0xf0] sm:$0xf]
        %v362 = vld [vmem:[#allocation6 + $0xf4] sm:$0xf]
        %v363 = vld [vmem:[#allocation6 + $0xf8] sm:$0xf]
        %v364 = vld [vmem:[#allocation6 + $0xfc] sm:$0xf]
        %v365 = vld [vmem:[#allocation6 + $0x100] sm:$0xf]
        %v366 = vld [vmem:[#allocation6 + $0x104] sm:$0xf]
        %v367 = vld [vmem:[#allocation6 + $0x108] sm:$0xf]
        %v368 = vld [vmem:[#allocation6 + $0x10c] sm:$0xf]
        %v369 = vld [vmem:[#allocation6 + $0x110] sm:$0xf]
        %v370 = vld [vmem:[#allocation6 + $0x114] sm:$0xf]
        %v371 = vld [vmem:[#allocation6 + $0x118] sm:$0xf]
        %v372 = vld [vmem:[#allocation6 + $0x11c] sm:$0xf]
        %v373 = vld [vmem:[#allocation6 + $0x120] sm:$0xf]
        %v374 = vld [vmem:[#allocation6 + $0x124] sm:$0xf]
        %v375 = vld [vmem:[#allocation6 + $0x128] sm:$0xf]
        %v376 = vld [vmem:[#allocation6 + $0x12c] sm:$0xf]
        %v377 = vld [vmem:[#allocation6 + $0x130] sm:$0xf]
        %v378 = vld [vmem:[#allocation6 + $0x134] sm:$0xf]
        %v379 = vld [vmem:[#allocation6 + $0x138] sm:$0xf]
        %v380 = vld [vmem:[#allocation6 + $0x13c] sm:$0xf]
        %v381 = vld [vmem:[#allocation6 + $0x140] sm:$0xf]
        %v382 = vld [vmem:[#allocation6 + $0x144] sm:$0xf]
        %v383 = vld [vmem:[#allocation6 + $0x148] sm:$0xf]
        %v384 = vld [vmem:[#allocation6 + $0x14c] sm:$0xf]
        %v385 = vld [vmem:[#allocation6 + $0x150] sm:$0xf]
        %v386 = vld [vmem:[#allocation6 + $0x154] sm:$0xf]
        %v387 = vld [vmem:[#allocation6 + $0x158] sm:$0xf]
        %v388 = vld [vmem:[#allocation6 + $0x15c] sm:$0xf]
        %v389 = vld [vmem:[#allocation6 + $0x160] sm:$0xf]
        %v390 = vld [vmem:[#allocation6 + $0x164] sm:$0xf]
        %v391 = vld [vmem:[#allocation6 + $0x168] sm:$0xf]
        %v392 = vld [vmem:[#allocation6 + $0x16c] sm:$0xf]
        %v393 = vld [vmem:[#allocation6 + $0x170] sm:$0xf]
        %v394 = vld [vmem:[#allocation6 + $0x174] sm:$0xf]
        %v395 = vld [vmem:[#allocation6 + $0x178] sm:$0xf]
        %v396 = vld [vmem:[#allocation6 + $0x17c] sm:$0xf]
        %v397 = vld [vmem:[#allocation6 + $0x180] sm:$0xf]
        %v398 = vld [vmem:[#allocation6 + $0x184] sm:$0xf]
        %v399 = vld [vmem:[#allocation6 + $0x188] sm:$0xf]
        %v400 = vld [vmem:[#allocation6 + $0x18c] sm:$0xf]
        %v401 = vld [vmem:[#allocation6 + $0x190] sm:$0xf]
        %v402 = vld [vmem:[#allocation6 + $0x194] sm:$0xf]
        %v403 = vld [vmem:[#allocation6 + $0x198] sm:$0xf]
        %v404 = vld [vmem:[#allocation6 + $0x19c] sm:$0xf]
        %v405 = vld [vmem:[#allocation6 + $0x1a0] sm:$0xf]
        %v406 = vld [vmem:[#allocation6 + $0x1a4] sm:$0xf]
        %v407 = vld [vmem:[#allocation6 + $0x1a8] sm:$0xf]
        %v408 = vld [vmem:[#allocation6 + $0x1ac] sm:$0xf]
        %v409 = vld [vmem:[#allocation6 + $0x1b0] sm:$0xf]
        %v410 = vld [vmem:[#allocation6 + $0x1b4] sm:$0xf]
        %v411 = vld [vmem:[#allocation6 + $0x1b8] sm:$0xf]
        %v412 = vld [vmem:[#allocation6 + $0x1bc] sm:$0xf]
        %v413 = vld [vmem:[#allocation6 + $0x1c0] sm:$0xf]
        %v414 = vld [vmem:[#allocation6 + $0x1c4] sm:$0xf]
        %v415 = vld [vmem:[#allocation6 + $0x1c8] sm:$0xf]
        %v416 = vld [vmem:[#allocation6 + $0x1cc] sm:$0xf]
        %v417 = vld [vmem:[#allocation6 + $0x1d0] sm:$0xf]
        %v418 = vld [vmem:[#allocation6 + $0x1d4] sm:$0xf]
        %v419 = vld [vmem:[#allocation6 + $0x1d8] sm:$0xf]
        %v420 = vld [vmem:[#allocation6 + $0x1dc] sm:$0xf]
        %v421 = vld [vmem:[#allocation6 + $0x1e0] sm:$0xf]
        %v422 = vld [vmem:[#allocation6 + $0x1e4] sm:$0xf]
        %v423 = vld [vmem:[#allocation6 + $0x1e8] sm:$0xf]
        %v424 = vld [vmem:[#allocation6 + $0x1ec] sm:$0xf]
        %v425 = vld [vmem:[#allocation6 + $0x1f0] sm:$0xf]
        %v426 = vld [vmem:[#allocation6 + $0x1f4] sm:$0xf]
        %v427 = vld [vmem:[#allocation6 + $0x1f8] sm:$0xf]
        %v428 = vld [vmem:[#allocation6 + $0x1fc] sm:$0xf]
        %v437 = vunpack.c.l.b16 %v293
        %v438 = vunpack.c.h.b16 %v293
        %v439 = vunpack.c.l.b16 %v294
        %v440 = vunpack.c.h.b16 %v294
        %v441 = vunpack.c.l.b16 %v295
        %v442 = vunpack.c.h.b16 %v295
        %v443 = vunpack.c.l.b16 %v296
        %v444 = vunpack.c.h.b16 %v296
        %v445 = vunpack.c.l.b16 %v297
        %v446 = vunpack.c.h.b16 %v297
        %v447 = vunpack.c.l.b16 %v298
        %v448 = vunpack.c.h.b16 %v298
        %v449 = vunpack.c.l.b16 %v299
        %v450 = vunpack.c.h.b16 %v299
        %v451 = vunpack.c.l.b16 %v300
        %v452 = vunpack.c.h.b16 %v300
        %v453 = vpack.c.b16 %v445, %v437
        %v454 = vpack.c.b16 %v446, %v438
        %v455 = vpack.c.b16 %v447, %v439
        %v456 = vpack.c.b16 %v448, %v440
        %v457 = vpack.c.b16 %v449, %v441
        %v458 = vpack.c.b16 %v450, %v442
        %v459 = vpack.c.b16 %v451, %v443
        %v460 = vpack.c.b16 %v452, %v444
        %v597 = vunpack.c.l.b16 %v301
        %v598 = vunpack.c.l.b16 %v302
        %v599 = vunpack.c.l.b16 %v303
        %v600 = vunpack.c.l.b16 %v304
        %v601 = vunpack.c.l.b16 %v305
        %v602 = vunpack.c.l.b16 %v306
        %v603 = vunpack.c.l.b16 %v307
        %v604 = vunpack.c.l.b16 %v308
        %v605 = vunpack.c.l.b16 %v309
        %v606 = vunpack.c.l.b16 %v310
        %v607 = vunpack.c.l.b16 %v311
        %v608 = vunpack.c.l.b16 %v312
        %v609 = vunpack.c.l.b16 %v313
        %v610 = vunpack.c.l.b16 %v314
        %v611 = vunpack.c.l.b16 %v315
        %v612 = vunpack.c.l.b16 %v316
        %v613 = vunpack.c.l.b16 %v317
        %v614 = vunpack.c.l.b16 %v318
        %v615 = vunpack.c.l.b16 %v319
        %v616 = vunpack.c.l.b16 %v320
        %v617 = vunpack.c.l.b16 %v321
        %v618 = vunpack.c.l.b16 %v322
        %v619 = vunpack.c.l.b16 %v323
        %v620 = vunpack.c.l.b16 %v324
        %v621 = vunpack.c.l.b16 %v325
        %v622 = vunpack.c.l.b16 %v326
        %v623 = vunpack.c.l.b16 %v327
        %v624 = vunpack.c.l.b16 %v328
        %v625 = vunpack.c.l.b16 %v329
        %v626 = vunpack.c.l.b16 %v330
        %v627 = vunpack.c.l.b16 %v331
        %v628 = vunpack.c.l.b16 %v332
        %v629 = vunpack.c.l.b16 %v333
        %v630 = vunpack.c.l.b16 %v334
        %v631 = vunpack.c.l.b16 %v335
        %v632 = vunpack.c.l.b16 %v336
        %v633 = vunpack.c.l.b16 %v337
        %v634 = vunpack.c.l.b16 %v338
        %v635 = vunpack.c.l.b16 %v339
        %v636 = vunpack.c.l.b16 %v340
        %v637 = vunpack.c.l.b16 %v341
        %v638 = vunpack.c.l.b16 %v342
        %v639 = vunpack.c.l.b16 %v343
        %v640 = vunpack.c.l.b16 %v344
        %v641 = vunpack.c.l.b16 %v345
        %v642 = vunpack.c.l.b16 %v346
        %v643 = vunpack.c.l.b16 %v347
        %v644 = vunpack.c.l.b16 %v348
        %v645 = vunpack.c.l.b16 %v349
        %v646 = vunpack.c.l.b16 %v350
        %v647 = vunpack.c.l.b16 %v351
        %v648 = vunpack.c.l.b16 %v352
        %v649 = vunpack.c.l.b16 %v353
        %v650 = vunpack.c.l.b16 %v354
        %v651 = vunpack.c.l.b16 %v355
        %v652 = vunpack.c.l.b16 %v356
        %v653 = vunpack.c.l.b16 %v357
        %v654 = vunpack.c.l.b16 %v358
        %v655 = vunpack.c.l.b16 %v359
        %v656 = vunpack.c.l.b16 %v360
        %v657 = vunpack.c.l.b16 %v361
        %v658 = vunpack.c.l.b16 %v362
        %v659 = vunpack.c.l.b16 %v363
        %v660 = vunpack.c.l.b16 %v364
        %v661 = vunpack.c.l.b16 %v365
        %v662 = vunpack.c.l.b16 %v366
        %v663 = vunpack.c.l.b16 %v367
        %v664 = vunpack.c.l.b16 %v368
        %v665 = vunpack.c.l.b16 %v369
        %v666 = vunpack.c.l.b16 %v370
        %v667 = vunpack.c.l.b16 %v371
        %v668 = vunpack.c.l.b16 %v372
        %v669 = vunpack.c.l.b16 %v373
        %v670 = vunpack.c.l.b16 %v374
        %v671 = vunpack.c.l.b16 %v375
        %v672 = vunpack.c.l.b16 %v376
        %v673 = vunpack.c.l.b16 %v377
        %v674 = vunpack.c.l.b16 %v378
        %v675 = vunpack.c.l.b16 %v379
        %v676 = vunpack.c.l.b16 %v380
        %v677 = vunpack.c.l.b16 %v381
        %v678 = vunpack.c.l.b16 %v382
        %v679 = vunpack.c.l.b16 %v383
        %v680 = vunpack.c.l.b16 %v384
        %v681 = vunpack.c.l.b16 %v385
        %v682 = vunpack.c.l.b16 %v386
        %v683 = vunpack.c.l.b16 %v387
        %v684 = vunpack.c.l.b16 %v388
        %v685 = vunpack.c.l.b16 %v389
        %v686 = vunpack.c.l.b16 %v390
        %v687 = vunpack.c.l.b16 %v391
        %v688 = vunpack.c.l.b16 %v392
        %v689 = vunpack.c.l.b16 %v393
        %v690 = vunpack.c.l.b16 %v394
        %v691 = vunpack.c.l.b16 %v395
        %v692 = vunpack.c.l.b16 %v396
        %v693 = vunpack.c.l.b16 %v397
        %v694 = vunpack.c.l.b16 %v398
        %v695 = vunpack.c.l.b16 %v399
        %v696 = vunpack.c.l.b16 %v400
        %v697 = vunpack.c.l.b16 %v401
        %v698 = vunpack.c.l.b16 %v402
        %v699 = vunpack.c.l.b16 %v403
        %v700 = vunpack.c.l.b16 %v404
        %v701 = vunpack.c.l.b16 %v405
        %v702 = vunpack.c.l.b16 %v406
        %v703 = vunpack.c.l.b16 %v407
        %v704 = vunpack.c.l.b16 %v408
        %v705 = vunpack.c.l.b16 %v409
        %v706 = vunpack.c.l.b16 %v410
        %v707 = vunpack.c.l.b16 %v411
        %v708 = vunpack.c.l.b16 %v412
        %v709 = vunpack.c.l.b16 %v413
        %v710 = vunpack.c.l.b16 %v414
        %v711 = vunpack.c.l.b16 %v415
        %v712 = vunpack.c.l.b16 %v416
        %v713 = vunpack.c.l.b16 %v417
        %v714 = vunpack.c.l.b16 %v418
        %v715 = vunpack.c.l.b16 %v419
        %v716 = vunpack.c.l.b16 %v420
        %v717 = vunpack.c.l.b16 %v421
        %v718 = vunpack.c.l.b16 %v422
        %v719 = vunpack.c.l.b16 %v423
        %v720 = vunpack.c.l.b16 %v424
        %v721 = vunpack.c.l.b16 %v425
        %v722 = vunpack.c.l.b16 %v426
        %v723 = vunpack.c.l.b16 %v427
        %v724 = vunpack.c.l.b16 %v428
        %v725 = vpack.c.b16 %v598, %v597
        %v726 = vpack.c.b16 %v600, %v599
        %v727 = vpack.c.b16 %v602, %v601
        %v728 = vpack.c.b16 %v604, %v603
        %v729 = vpack.c.b16 %v606, %v605
        %v730 = vpack.c.b16 %v608, %v607
        %v731 = vpack.c.b16 %v610, %v609
        %v732 = vpack.c.b16 %v612, %v611
        %v733 = vpack.c.b16 %v614, %v613
        %v734 = vpack.c.b16 %v616, %v615
        %v735 = vpack.c.b16 %v618, %v617
        %v736 = vpack.c.b16 %v620, %v619
        %v737 = vpack.c.b16 %v622, %v621
        %v738 = vpack.c.b16 %v624, %v623
        %v739 = vpack.c.b16 %v626, %v625
        %v740 = vpack.c.b16 %v628, %v627
        %v741 = vpack.c.b16 %v630, %v629
        %v742 = vpack.c.b16 %v632, %v631
        %v743 = vpack.c.b16 %v634, %v633
        %v744 = vpack.c.b16 %v636, %v635
        %v745 = vpack.c.b16 %v638, %v637
        %v746 = vpack.c.b16 %v640, %v639
        %v747 = vpack.c.b16 %v642, %v641
        %v748 = vpack.c.b16 %v644, %v643
        %v749 = vpack.c.b16 %v646, %v645
        %v750 = vpack.c.b16 %v648, %v647
        %v751 = vpack.c.b16 %v650, %v649
        %v752 = vpack.c.b16 %v652, %v651
        %v753 = vpack.c.b16 %v654, %v653
        %v754 = vpack.c.b16 %v656, %v655
        %v755 = vpack.c.b16 %v658, %v657
        %v756 = vpack.c.b16 %v660, %v659
        %v757 = vpack.c.b16 %v662, %v661
        %v758 = vpack.c.b16 %v664, %v663
        %v759 = vpack.c.b16 %v666, %v665
        %v760 = vpack.c.b16 %v668, %v667
        %v761 = vpack.c.b16 %v670, %v669
        %v762 = vpack.c.b16 %v672, %v671
        %v763 = vpack.c.b16 %v674, %v673
        %v764 = vpack.c.b16 %v676, %v675
        %v765 = vpack.c.b16 %v678, %v677
        %v766 = vpack.c.b16 %v680, %v679
        %v767 = vpack.c.b16 %v682, %v681
        %v768 = vpack.c.b16 %v684, %v683
        %v769 = vpack.c.b16 %v686, %v685
        %v770 = vpack.c.b16 %v688, %v687
        %v771 = vpack.c.b16 %v690, %v689
        %v772 = vpack.c.b16 %v692, %v691
        %v773 = vpack.c.b16 %v694, %v693
        %v774 = vpack.c.b16 %v696, %v695
        %v775 = vpack.c.b16 %v698, %v697
        %v776 = vpack.c.b16 %v700, %v699
        %v777 = vpack.c.b16 %v702, %v701
        %v778 = vpack.c.b16 %v704, %v703
        %v779 = vpack.c.b16 %v706, %v705
        %v780 = vpack.c.b16 %v708, %v707
        %v781 = vpack.c.b16 %v710, %v709
        %v782 = vpack.c.b16 %v712, %v711
        %v783 = vpack.c.b16 %v714, %v713
        %v784 = vpack.c.b16 %v716, %v715
        %v785 = vpack.c.b16 %v718, %v717
        %v786 = vpack.c.b16 %v720, %v719
        %v787 = vpack.c.b16 %v722, %v721
        %v788 = vpack.c.b16 %v724, %v723
        %853 = vmatprep.subr.bf16.mxu0 0
        %854 = vmatpush1.bf16.msra.mxu0 %v725
        %855 = vmatprep.subr.bf16.mxu0 0
        %856 = vmatpush1.bf16.msra.mxu0 %v726
        %857 = vmatprep.subr.bf16.mxu0 0
        %858 = vmatpush1.bf16.msra.mxu0 %v727
        %859 = vmatprep.subr.bf16.mxu0 0
        %860 = vmatpush1.bf16.msra.mxu0 %v728
        %861 = vmatprep.subr.bf16.mxu0 0
        %862 = vmatpush1.bf16.msra.mxu0 %v729
        %863 = vmatprep.subr.bf16.mxu0 0
        %864 = vmatpush1.bf16.msra.mxu0 %v730
        %865 = vmatprep.subr.bf16.mxu0 0
        %866 = vmatpush1.bf16.msra.mxu0 %v731
        %867 = vmatprep.subr.bf16.mxu0 0
        %868 = vmatpush1.bf16.msra.mxu0 %v732
        %869 = vmatprep.subr.bf16.mxu0 0
        %870 = vmatpush1.bf16.msra.mxu0 %v733
        %871 = vmatprep.subr.bf16.mxu0 0
        %872 = vmatpush1.bf16.msra.mxu0 %v734
        %873 = vmatprep.subr.bf16.mxu0 0
        %874 = vmatpush1.bf16.msra.mxu0 %v735
        %875 = vmatprep.subr.bf16.mxu0 0
        %876 = vmatpush1.bf16.msra.mxu0 %v736
        %877 = vmatprep.subr.bf16.mxu0 0
        %878 = vmatpush1.bf16.msra.mxu0 %v737
        %879 = vmatprep.subr.bf16.mxu0 0
        %880 = vmatpush1.bf16.msra.mxu0 %v738
        %881 = vmatprep.subr.bf16.mxu0 0
        %882 = vmatpush1.bf16.msra.mxu0 %v739
        %883 = vmatprep.subr.bf16.mxu0 0
        %884 = vmatpush1.bf16.msra.mxu0 %v740
        %885 = vmatprep.mubr.bf16.mxu0 %v454
        %886 = vmatmul.mubr.bf16.gmra.mrb[0].mxu0 %v453
        %v887 = vpop.f32.mrb[0].mxu0
        %v888 = vadd.f32 0.0, %v887
        %v889 = vpop.f32.mrb[0].mxu0
        %v890 = vpop.f32.mrb[0].mxu0
        %v891 = vadd.f32 0.0, %v890
        %v892 = vpop.f32.mrb[0].mxu0
        %893 = vdwg.mxu0
        %894 = vmatprep.subr.bf16.mxu0 0
        %895 = vmatpush1.bf16.msra.mxu0 %v741
        %896 = vmatprep.subr.bf16.mxu0 0
        %897 = vmatpush1.bf16.msra.mxu0 %v742
        %898 = vmatprep.subr.bf16.mxu0 0
        %899 = vmatpush1.bf16.msra.mxu0 %v743
        %900 = vmatprep.subr.bf16.mxu0 0
        %901 = vmatpush1.bf16.msra.mxu0 %v744
        %902 = vmatprep.subr.bf16.mxu0 0
        %903 = vmatpush1.bf16.msra.mxu0 %v745
        %904 = vmatprep.subr.bf16.mxu0 0
        %905 = vmatpush1.bf16.msra.mxu0 %v746
        %906 = vmatprep.subr.bf16.mxu0 0
        %907 = vmatpush1.bf16.msra.mxu0 %v747
        %908 = vmatprep.subr.bf16.mxu0 0
        %909 = vmatpush1.bf16.msra.mxu0 %v748
        %910 = vmatprep.subr.bf16.mxu0 0
        %911 = vmatpush1.bf16.msra.mxu0 %v749
        %912 = vmatprep.subr.bf16.mxu0 0
        %913 = vmatpush1.bf16.msra.mxu0 %v750
        %914 = vmatprep.subr.bf16.mxu0 0
        %915 = vmatpush1.bf16.msra.mxu0 %v751
        %916 = vmatprep.subr.bf16.mxu0 0
        %917 = vmatpush1.bf16.msra.mxu0 %v752
        %918 = vmatprep.subr.bf16.mxu0 0
        %919 = vmatpush1.bf16.msra.mxu0 %v753
        %920 = vmatprep.subr.bf16.mxu0 0
        %921 = vmatpush1.bf16.msra.mxu0 %v754
        %922 = vmatprep.subr.bf16.mxu0 0
        %923 = vmatpush1.bf16.msra.mxu0 %v755
        %924 = vmatprep.subr.bf16.mxu0 0
        %925 = vmatpush1.bf16.msra.mxu0 %v756
        %926 = vmatprep.mubr.bf16.mxu0 %v456
        %927 = vmatmul.mubr.bf16.gmra.mrb[0].mxu0 %v455
        %v928 = vpop.f32.mrb[0].mxu0
        %v929 = vadd.f32 %v888, %v928
        %v930 = vpop.f32.mrb[0].mxu0
        %v931 = vpop.f32.mrb[0].mxu0
        %v932 = vadd.f32 %v891, %v931
        %v933 = vpop.f32.mrb[0].mxu0
        %934 = vdwg.mxu0
        %935 = vmatprep.subr.bf16.mxu0 0
        %936 = vmatpush1.bf16.msra.mxu0 %v757
        %937 = vmatprep.subr.bf16.mxu0 0
        %938 = vmatpush1.bf16.msra.mxu0 %v758
        %939 = vmatprep.subr.bf16.mxu0 0
        %940 = vmatpush1.bf16.msra.mxu0 %v759
        %941 = vmatprep.subr.bf16.mxu0 0
        %942 = vmatpush1.bf16.msra.mxu0 %v760
        %943 = vmatprep.subr.bf16.mxu0 0
        %944 = vmatpush1.bf16.msra.mxu0 %v761
        %945 = vmatprep.subr.bf16.mxu0 0
        %946 = vmatpush1.bf16.msra.mxu0 %v762
        %947 = vmatprep.subr.bf16.mxu0 0
        %948 = vmatpush1.bf16.msra.mxu0 %v763
        %949 = vmatprep.subr.bf16.mxu0 0
        %950 = vmatpush1.bf16.msra.mxu0 %v764
        %951 = vmatprep.subr.bf16.mxu0 0
        %952 = vmatpush1.bf16.msra.mxu0 %v765
        %953 = vmatprep.subr.bf16.mxu0 0
        %954 = vmatpush1.bf16.msra.mxu0 %v766
        %955 = vmatprep.subr.bf16.mxu0 0
        %956 = vmatpush1.bf16.msra.mxu0 %v767
        %957 = vmatprep.subr.bf16.mxu0 0
        %958 = vmatpush1.bf16.msra.mxu0 %v768
        %959 = vmatprep.subr.bf16.mxu0 0
        %960 = vmatpush1.bf16.msra.mxu0 %v769
        %961 = vmatprep.subr.bf16.mxu0 0
        %962 = vmatpush1.bf16.msra.mxu0 %v770
        %963 = vmatprep.subr.bf16.mxu0 0
        %964 = vmatpush1.bf16.msra.mxu0 %v771
        %965 = vmatprep.subr.bf16.mxu0 0
        %966 = vmatpush1.bf16.msra.mxu0 %v772
        %967 = vmatprep.mubr.bf16.mxu0 %v458
        %968 = vmatmul.mubr.bf16.gmra.mrb[0].mxu0 %v457
        %v969 = vpop.f32.mrb[0].mxu0
        %v970 = vadd.f32 %v929, %v969
        %v971 = vpop.f32.mrb[0].mxu0
        %v972 = vpop.f32.mrb[0].mxu0
        %v973 = vadd.f32 %v932, %v972
        %v974 = vpop.f32.mrb[0].mxu0
        %975 = vdwg.mxu0
        %976 = vmatprep.subr.bf16.mxu0 0
        %977 = vmatpush1.bf16.msra.mxu0 %v773
        %978 = vmatprep.subr.bf16.mxu0 0
        %979 = vmatpush1.bf16.msra.mxu0 %v774
        %980 = vmatprep.subr.bf16.mxu0 0
        %981 = vmatpush1.bf16.msra.mxu0 %v775
        %982 = vmatprep.subr.bf16.mxu0 0
        %983 = vmatpush1.bf16.msra.mxu0 %v776
        %984 = vmatprep.subr.bf16.mxu0 0
        %985 = vmatpush1.bf16.msra.mxu0 %v777
        %986 = vmatprep.subr.bf16.mxu0 0
        %987 = vmatpush1.bf16.msra.mxu0 %v778
        %988 = vmatprep.subr.bf16.mxu0 0
        %989 = vmatpush1.bf16.msra.mxu0 %v779
        %990 = vmatprep.subr.bf16.mxu0 0
        %991 = vmatpush1.bf16.msra.mxu0 %v780
        %992 = vmatprep.subr.bf16.mxu0 0
        %993 = vmatpush1.bf16.msra.mxu0 %v781
        %994 = vmatprep.subr.bf16.mxu0 0
        %995 = vmatpush1.bf16.msra.mxu0 %v782
        %996 = vmatprep.subr.bf16.mxu0 0
        %997 = vmatpush1.bf16.msra.mxu0 %v783
        %998 = vmatprep.subr.bf16.mxu0 0
        %999 = vmatpush1.bf16.msra.mxu0 %v784
        %1000 = vmatprep.subr.bf16.mxu0 0
        %1001 = vmatpush1.bf16.msra.mxu0 %v785
        %1002 = vmatprep.subr.bf16.mxu0 0
        %1003 = vmatpush1.bf16.msra.mxu0 %v786
        %1004 = vmatprep.subr.bf16.mxu0 0
        %1005 = vmatpush1.bf16.msra.mxu0 %v787
        %1006 = vmatprep.subr.bf16.mxu0 0
        %1007 = vmatpush1.bf16.msra.mxu0 %v788
        %1008 = vmatprep.mubr.bf16.mxu0 %v460
        %1009 = vmatmul.mubr.bf16.gmra.mrb[0].mxu0 %v459
        %v1010 = vpop.f32.mrb[0].mxu0
        %v1011 = vadd.f32 %v970, %v1010
        %v1012 = vpop.f32.mrb[0].mxu0
        %v1013 = vpop.f32.mrb[0].mxu0
        %v1014 = vadd.f32 %v973, %v1013
        %v1015 = vpop.f32.mrb[0].mxu0
        %1016 = vdwg.mxu0
        %v1017 = vadd.f32 %v291, %v1011
        %v1018 = vadd.f32 %v292, %v1014
        %1019 = vst [vmem:[#allocation2] sm:$0xff] %v1017
        %1020 = vst [vmem:[#allocation2 + $0x8] sm:$0xff] %v1018
        // Predicated region
        $region49: #{autoencoder_forward.9} parent=31 // pred_check
          %p1021 = pneg %p285
        $region50: #{autoencoder_forward.9} parent=31 // pred_check_branch
          %1023 = sbr.rel (%p1021) target = $region52
        $region51: #{autoencoder_forward.9} parent=31 // pred_region
          %v1024 = vld [vmem:[#allocation2] sm:$0xff]
          %v1025 = vld [vmem:[#allocation2 + $0x8] sm:$0xff]
          %v1026 = vld [vmem:[#allocation8] sm:$0x1]
          %v1028 = vlaneseq
          %v1029 = vshrl.u32 %v1028, 7
          %v1030 = vsub.s32 0, %v1029
          %v1031 = vrot.slane %v1026, %v1030
          %v1033 = vadd.f32 %v1024, %v1031
          %v1034 = vadd.f32 %v1025, %v1031
          %v1035 = vmax.f32 %v1033, 0.0
          %v1036 = vmax.f32 %v1034, 0.0
          %v1037 = vpack.c.bf16 %v1036, %v1035
          %v1039 = vunpack.c.l.b16 %v1037
          %v1040 = vunpack.c.h.b16 %v1037
          %v1041 = vpack.c.b16 %v1039, %v1039
          %v1042 = vpack.c.b16 %v1040, %v1040
          %1045 = vst [vmem:[%s279] sm:$0xf] %v1041
          %1046 = vst [vmem:[%s279 + $0x4] sm:$0xf] %v1042
        $region52: #{autoencoder_forward.9} parent=31 // pred_fallthru
          _
        %s1047 = sand.u32 %s147, 1
        %s1048 = scalar_lea.sflag [#allocation5], %s1047
        %s1049 = sand.u32 %s147, 1
        %s1050 = smul.addr %s1049, 8
        %s1051 = scalar_lea.vmem [#allocation9], %s1050
        // Predicated region
        $region53: #{autoencoder_forward.9} parent=31 // pred_check
          %p1052 = pneg %p157
        $region54: #{autoencoder_forward.9} parent=31 // pred_check_branch
          %1054 = sbr.rel (%p1052) target = $region56
        $region55: #{autoencoder_forward.9} parent=31 // pred_region
          %s1055 = smul.u32 2, %s28
          %s1057 = ssub.s32 128, 128
          %1058 = vsyncadd %s1048, %s1057
          %s1059 = sadd.s32 %s29, %s1055
          %s1060 = smul.addr %s27, 4
          %s1061 = sadd.s32 %s1059, %s1060
          %s1062 = smul.addr %s1061, 64
          %s1063 = scalar_lea.hbm %s3, %s1062
          %s1064 = sshll.u32 %s1051, 4
          %s1065 = int_to_ptr.vmem [resolvable:$true] %s1064
          %1070 = dma.vmem_to_hbm [thread:$0]  %s1065, 128, %s1063, %s1048, 64, 64, 4
        $region56: #{autoencoder_forward.9} parent=31 // pred_fallthru
          _
      $region32: #{autoencoder_forward.9} parent=5 // pred_fallthru
        _
      %p1071 = scmp.le.s32.totalorder 2, %s16
      // Predicated region
      $region57: #{autoencoder_forward.9} parent=5 // pred_check
        %p1072 = pneg %p1071
      $region58: #{autoencoder_forward.9} parent=5 // pred_check_branch
        %1074 = sbr.rel (%p1072) target = $region60
      $region59: #{autoencoder_forward.9} parent=5 // pred_region
        %s1075 = ssub.s32 %s16, 2
        // Predicated region
        $region61: #{autoencoder_forward.9} parent=59 // pred_check
          %p1076 = pneg %p163
        $region62: #{autoencoder_forward.9} parent=59 // pred_check_branch
          %1078 = sbr.rel (%p1076) target = $region64
        $region63: #{autoencoder_forward.9} parent=59 // pred_region
          %s1079 = sand.u32 %s148, 1
          %s1080 = scalar_lea.sflag [#allocation5], %s1079
          %s1081 = sand.u32 %s148, 1
          %s1082 = smul.addr %s1081, 8
          %s1083 = scalar_lea.vmem [#allocation9], %s1082
          %1084 = dma.done %s1080, 128
        $region64: #{autoencoder_forward.9} parent=59 // pred_fallthru
          _
      $region60: #{autoencoder_forward.9} parent=5 // pred_fallthru
        _
    $region6: #{autoencoder_forward.9} parent=1 // loop_footer
      %s20 = sadd.s32 1, %s16
    $region7: #{autoencoder_forward.9} parent=1 // loop_footer_branch
      %15 = sbr.rel target = $region3
    $region8: #{autoencoder_forward.9} parent=1 // loop_exit
      _
    %1085 = vsyncpa [#allocation4], 1
    %s1086 = scalar_lea.sflag [#allocation4], 1
    %1087 = vsyncpa %s1086, 1
    %1088 = vsyncpa [#allocation7], 1
    %1089 = vsyncpa [#allocation5], 1
    %s1090 = scalar_lea.sflag [#allocation5], 1
    %1091 = vsyncpa %s1090, 1

// kernel: squeeze.7
$region0: #{squeeze.7}
  %s0 = inlined_call_operand.vmem [shape: bf16[1,8,512], index: 0, kind: input, shape index: {}]
  %s1 = inlined_call_operand.vmem [shape: bf16[1,2,2048], index: 1, kind: output, shape index: {}]
  $region1: #{squeeze.7} parent=0
    #allocation0 [shape = 'u8[65536]{0}', space=vmem, size = 0x10000, scoped, tag = 'scoped mem for output reshape']
    #allocation1 [shape = 'u8[16384]{0}', space=vmem, size = 0x4000, scoped, tag = 'scoped mem for input reshape']
    %s3 = smul.u32 4, 2
    %s4 = sshllo.u32 0, %s3
    %s5 = smul.addr 4, 3
    %s6 = scalar_lea.vmem %s0, %s5
    %s7 = sshrl.u32 %s4, 1
    %s8 = sor.u32 %s4, %s7
    %s9 = sand.u32 %s8, 85
    %s10 = sshrl.u32 %s9, 1
    %s11 = sor.u32 %s9, %s10
    %s12 = sand.u32 51, %s11
    %s13 = sshrl.u32 %s12, 2
    %s14 = sor.u32 %s12, %s13
    %s15 = sand.u32 15, %s14
    %v16 = vld [vmem:[%s6] sm:%s15]
    %v17 = vunpack.c.l.bf16 %v16
    %v18 = vunpack.c.h.bf16 %v16
    %s19 = scalar_lea.vmem [#allocation1], 24
    %20 = vst [vmem:[%s19] sm:%s4] %v17
    %s21 = smul.addr 4, 2
    %s22 = scalar_lea.vmem %s0, %s21
    %s23 = sshrl.u32 %s4, 1
    %s24 = sor.u32 %s4, %s23
    %s25 = sand.u32 %s24, 85
    %s26 = sshrl.u32 %s25, 1
    %s27 = sor.u32 %s25, %s26
    %s28 = sand.u32 51, %s27
    %s29 = sshrl.u32 %s28, 2
    %s30 = sor.u32 %s28, %s29
    %s31 = sand.u32 15, %s30
    %v32 = vld [vmem:[%s22] sm:%s31]
    %v33 = vunpack.c.l.bf16 %v32
    %v34 = vunpack.c.h.bf16 %v32
    %s35 = scalar_lea.vmem [#allocation1], 16
    %36 = vst [vmem:[%s35] sm:%s4] %v33
    %s37 = scalar_lea.vmem %s0, 4
    %s38 = sshrl.u32 %s4, 1
    %s39 = sor.u32 %s4, %s38
    %s40 = sand.u32 %s39, 85
    %s41 = sshrl.u32 %s40, 1
    %s42 = sor.u32 %s40, %s41
    %s43 = sand.u32 51, %s42
    %s44 = sshrl.u32 %s43, 2
    %s45 = sor.u32 %s43, %s44
    %s46 = sand.u32 15, %s45
    %v47 = vld [vmem:[%s37] sm:%s46]
    %v48 = vunpack.c.l.bf16 %v47
    %v49 = vunpack.c.h.bf16 %v47
    %s50 = scalar_lea.vmem [#allocation1], 8
    %51 = vst [vmem:[%s50] sm:%s4] %v48
    %s52 = sshrl.u32 %s4, 1
    %s53 = sor.u32 %s4, %s52
    %s54 = sand.u32 %s53, 85
    %s55 = sshrl.u32 %s54, 1
    %s56 = sor.u32 %s54, %s55
    %s57 = sand.u32 51, %s56
    %s58 = sshrl.u32 %s57, 2
    %s59 = sor.u32 %s57, %s58
    %s60 = sand.u32 15, %s59
    %v61 = vld [vmem:[%s0] sm:%s60]
    %v62 = vunpack.c.l.bf16 %v61
    %v63 = vunpack.c.h.bf16 %v61
    %64 = vst [vmem:[#allocation1] sm:%s4] %v62
    %v65 = vld [vmem:[#allocation1] sm:$0xff]
    %66 = vst [vmem:[#allocation0] sm:$0x1] %v65
    %s67 = scalar_lea.vmem [#allocation0], 31
    %68 = vst [vmem:[%s67] sm:$0x2] %v65
    %s69 = scalar_lea.vmem [#allocation0], 62
    %70 = vst [vmem:[%s69] sm:$0x4] %v65
    %s71 = scalar_lea.vmem [#allocation0], 381
    %72 = vst [vmem:[%s71] ss:$-95 sm:$0x18] %v65
    %s73 = scalar_lea.vmem [#allocation0], 28
    %74 = vst [vmem:[%s73] sm:$0x20] %v65
    %s75 = scalar_lea.vmem [#allocation0], 59
    %76 = vst [vmem:[%s75] sm:$0x40] %v65
    %s77 = scalar_lea.vmem [#allocation0], 90
    %78 = vst [vmem:[%s77] sm:$0x80] %v65
    %s79 = scalar_lea.vmem [#allocation1], 8
    %v80 = vld [vmem:[%s79] sm:$0xff]
    %s81 = scalar_lea.vmem [#allocation0], 8
    %82 = vst [vmem:[%s81] sm:$0x1] %v80
    %s83 = scalar_lea.vmem [#allocation0], 39
    %84 = vst [vmem:[%s83] sm:$0x2] %v80
    %s85 = scalar_lea.vmem [#allocation0], 70
    %86 = vst [vmem:[%s85] sm:$0x4] %v80
    %s87 = scalar_lea.vmem [#allocation0], 389
    %88 = vst [vmem:[%s87] ss:$-95 sm:$0x18] %v80
    %s89 = scalar_lea.vmem [#allocation0], 36
    %90 = vst [vmem:[%s89] sm:$0x20] %v80
    %s91 = scalar_lea.vmem [#allocation0], 67
    %92 = vst [vmem:[%s91] sm:$0x40] %v80
    %s93 = scalar_lea.vmem [#allocation0], 98
    %94 = vst [vmem:[%s93] sm:$0x80] %v80
    %s95 = scalar_lea.vmem [#allocation1], 16
    %v96 = vld [vmem:[%s95] sm:$0xff]
    %s97 = scalar_lea.vmem [#allocation0], 16
    %98 = vst [vmem:[%s97] sm:$0x1] %v96
    %s99 = scalar_lea.vmem [#allocation0], 47
    %100 = vst [vmem:[%s99] sm:$0x2] %v96
    %s101 = scalar_lea.vmem [#allocation0], 78
    %102 = vst [vmem:[%s101] sm:$0x4] %v96
    %s103 = scalar_lea.vmem [#allocation0], 397
    %104 = vst [vmem:[%s103] ss:$-95 sm:$0x18] %v96
    %s105 = scalar_lea.vmem [#allocation0], 44
    %106 = vst [vmem:[%s105] sm:$0x20] %v96
    %s107 = scalar_lea.vmem [#allocation0], 75
    %108 = vst [vmem:[%s107] sm:$0x40] %v96
    %s109 = scalar_lea.vmem [#allocation0], 106
    %110 = vst [vmem:[%s109] sm:$0x80] %v96
    %s111 = scalar_lea.vmem [#allocation1], 24
    %v112 = vld [vmem:[%s111] sm:$0xff]
    %s113 = scalar_lea.vmem [#allocation0], 24
    %114 = vst [vmem:[%s113] sm:$0x1] %v112
    %s115 = scalar_lea.vmem [#allocation0], 55
    %116 = vst [vmem:[%s115] sm:$0x2] %v112
    %s117 = scalar_lea.vmem [#allocation0], 86
    %118 = vst [vmem:[%s117] sm:$0x4] %v112
    %s119 = scalar_lea.vmem [#allocation0], 405
    %120 = vst [vmem:[%s119] ss:$-95 sm:$0x18] %v112
    %s121 = scalar_lea.vmem [#allocation0], 52
    %122 = vst [vmem:[%s121] sm:$0x20] %v112
    %s123 = scalar_lea.vmem [#allocation0], 83
    %124 = vst [vmem:[%s123] sm:$0x40] %v112
    %s125 = scalar_lea.vmem [#allocation0], 114
    %126 = vst [vmem:[%s125] sm:$0x80] %v112
    %s128 = smul.u32 1, 2
    %s129 = sshllo.u32 0, %s128
    %s130 = sshrl.u32 %s128, 1
    %v131 = vld [vmem:[#allocation0] sm:%s129]
    %v132 = vpack.c.bf16 0.0, %v131
    %s133 = sshllo.u32 0, %s130
    %134 = vst [vmem:[%s1] sm:%s133] %v132
    %s135 = scalar_lea.vmem [#allocation0], 8
    %v136 = vld [vmem:[%s135] sm:%s129]
    %v137 = vpack.c.bf16 0.0, %v136
    %s138 = sshllo.u32 0, %s130
    %s139 = scalar_lea.vmem %s1, 1
    %140 = vst [vmem:[%s139] sm:%s138] %v137
    %s141 = scalar_lea.vmem [#allocation0], 16
    %v142 = vld [vmem:[%s141] sm:%s129]
    %v143 = vpack.c.bf16 0.0, %v142
    %s144 = sshllo.u32 0, %s130
    %s145 = smul.addr 1, 2
    %s146 = scalar_lea.vmem %s1, %s145
    %147 = vst [vmem:[%s146] sm:%s144] %v143
    %s148 = scalar_lea.vmem [#allocation0], 24
    %v149 = vld [vmem:[%s148] sm:%s129]
    %v150 = vpack.c.bf16 0.0, %v149
    %s151 = sshllo.u32 0, %s130
    %s152 = smul.addr 1, 3
    %s153 = scalar_lea.vmem %s1, %s152
    %154 = vst [vmem:[%s153] sm:%s151] %v150
    %s155 = scalar_lea.vmem [#allocation0], 32
    %v156 = vld [vmem:[%s155] sm:%s129]
    %v157 = vpack.c.bf16 0.0, %v156
    %s158 = sshllo.u32 0, %s130
    %s159 = smul.addr 1, 4
    %s160 = scalar_lea.vmem %s1, %s159
    %161 = vst [vmem:[%s160] sm:%s158] %v157
    %s162 = scalar_lea.vmem [#allocation0], 40
    %v163 = vld [vmem:[%s162] sm:%s129]
    %v164 = vpack.c.bf16 0.0, %v163
    %s165 = sshllo.u32 0, %s130
    %s166 = smul.addr 1, 5
    %s167 = scalar_lea.vmem %s1, %s166
    %168 = vst [vmem:[%s167] sm:%s165] %v164
    %s169 = scalar_lea.vmem [#allocation0], 48
    %v170 = vld [vmem:[%s169] sm:%s129]
    %v171 = vpack.c.bf16 0.0, %v170
    %s172 = sshllo.u32 0, %s130
    %s173 = smul.addr 1, 6
    %s174 = scalar_lea.vmem %s1, %s173
    %175 = vst [vmem:[%s174] sm:%s172] %v171
    %s176 = scalar_lea.vmem [#allocation0], 56
    %v177 = vld [vmem:[%s176] sm:%s129]
    %v178 = vpack.c.bf16 0.0, %v177
    %s179 = sshllo.u32 0, %s130
    %s180 = smul.addr 1, 7
    %s181 = scalar_lea.vmem %s1, %s180
    %182 = vst [vmem:[%s181] sm:%s179] %v178
    %s183 = scalar_lea.vmem [#allocation0], 64
    %v184 = vld [vmem:[%s183] sm:%s129]
    %v185 = vpack.c.bf16 0.0, %v184
    %s186 = sshllo.u32 0, %s130
    %s187 = smul.addr 1, 8
    %s188 = scalar_lea.vmem %s1, %s187
    %189 = vst [vmem:[%s188] sm:%s186] %v185
    %s190 = scalar_lea.vmem [#allocation0], 72
    %v191 = vld [vmem:[%s190] sm:%s129]
    %v192 = vpack.c.bf16 0.0, %v191
    %s193 = sshllo.u32 0, %s130
    %s194 = smul.addr 1, 9
    %s195 = scalar_lea.vmem %s1, %s194
    %196 = vst [vmem:[%s195] sm:%s193] %v192
    %s197 = scalar_lea.vmem [#allocation0], 80
    %v198 = vld [vmem:[%s197] sm:%s129]
    %v199 = vpack.c.bf16 0.0, %v198
    %s200 = sshllo.u32 0, %s130
    %s201 = smul.addr 1, 10
    %s202 = scalar_lea.vmem %s1, %s201
    %203 = vst [vmem:[%s202] sm:%s200] %v199
    %s204 = scalar_lea.vmem [#allocation0], 88
    %v205 = vld [vmem:[%s204] sm:%s129]
    %v206 = vpack.c.bf16 0.0, %v205
    %s207 = sshllo.u32 0, %s130
    %s208 = smul.addr 1, 11
    %s209 = scalar_lea.vmem %s1, %s208
    %210 = vst [vmem:[%s209] sm:%s207] %v206
    %s211 = scalar_lea.vmem [#allocation0], 96
    %v212 = vld [vmem:[%s211] sm:%s129]
    %v213 = vpack.c.bf16 0.0, %v212
    %s214 = sshllo.u32 0, %s130
    %s215 = smul.addr 1, 12
    %s216 = scalar_lea.vmem %s1, %s215
    %217 = vst [vmem:[%s216] sm:%s214] %v213
    %s218 = scalar_lea.vmem [#allocation0], 104
    %v219 = vld [vmem:[%s218] sm:%s129]
    %v220 = vpack.c.bf16 0.0, %v219
    %s221 = sshllo.u32 0, %s130
    %s222 = smul.addr 1, 13
    %s223 = scalar_lea.vmem %s1, %s222
    %224 = vst [vmem:[%s223] sm:%s221] %v220
    %s225 = scalar_lea.vmem [#allocation0], 112
    %v226 = vld [vmem:[%s225] sm:%s129]
    %v227 = vpack.c.bf16 0.0, %v226
    %s228 = sshllo.u32 0, %s130
    %s229 = smul.addr 1, 14
    %s230 = scalar_lea.vmem %s1, %s229
    %231 = vst [vmem:[%s230] sm:%s228] %v227
    %s232 = scalar_lea.vmem [#allocation0], 120
    %v233 = vld [vmem:[%s232] sm:%s129]
    %v234 = vpack.c.bf16 0.0, %v233
    %s235 = sshllo.u32 0, %s130
    %s236 = smul.addr 1, 15
    %s237 = scalar_lea.vmem %s1, %s236
    %238 = vst [vmem:[%s237] sm:%s235] %v234

// kernel: squeeze.9
$region0: #{squeeze.9}
  %s0 = inlined_call_operand.vmem [shape: bf16[1,2,2048], index: 0, kind: input, shape index: {}]
  %s1 = inlined_call_operand.vmem [shape: bf16[2,2,2,512], index: 1, kind: output, shape index: {}]
  $region1: #{squeeze.9} parent=0
    #allocation0 [shape = 'u8[65536]{0}', space=vmem, size = 0x10000, scoped, tag = 'scoped mem for output reshape']
    #allocation1 [shape = 'u8[65536]{0}', space=vmem, size = 0x10000, scoped, tag = 'scoped mem for input reshape']
    %s3 = smul.u32 1, 2
    %s4 = sshllo.u32 0, %s3
    %s5 = smul.addr 1, 15
    %s6 = scalar_lea.vmem %s0, %s5
    %s7 = sshrl.u32 %s4, 1
    %s8 = sor.u32 %s4, %s7
    %s9 = sand.u32 %s8, 85
    %s10 = sshrl.u32 %s9, 1
    %s11 = sor.u32 %s9, %s10
    %s12 = sand.u32 51, %s11
    %s13 = sshrl.u32 %s12, 2
    %s14 = sor.u32 %s12, %s13
    %s15 = sand.u32 15, %s14
    %v16 = vld [vmem:[%s6] sm:%s15]
    %v17 = vunpack.c.l.bf16 %v16
    %v18 = vunpack.c.h.bf16 %v16
    %s19 = scalar_lea.vmem [#allocation1], 120
    %20 = vst [vmem:[%s19] sm:%s4] %v17
    %s21 = smul.addr 1, 14
    %s22 = scalar_lea.vmem %s0, %s21
    %s23 = sshrl.u32 %s4, 1
    %s24 = sor.u32 %s4, %s23
    %s25 = sand.u32 %s24, 85
    %s26 = sshrl.u32 %s25, 1
    %s27 = sor.u32 %s25, %s26
    %s28 = sand.u32 51, %s27
    %s29 = sshrl.u32 %s28, 2
    %s30 = sor.u32 %s28, %s29
    %s31 = sand.u32 15, %s30
    %v32 = vld [vmem:[%s22] sm:%s31]
    %v33 = vunpack.c.l.bf16 %v32
    %v34 = vunpack.c.h.bf16 %v32
    %s35 = scalar_lea.vmem [#allocation1], 112
    %36 = vst [vmem:[%s35] sm:%s4] %v33
    %s37 = smul.addr 1, 13
    %s38 = scalar_lea.vmem %s0, %s37
    %s39 = sshrl.u32 %s4, 1
    %s40 = sor.u32 %s4, %s39
    %s41 = sand.u32 %s40, 85
    %s42 = sshrl.u32 %s41, 1
    %s43 = sor.u32 %s41, %s42
    %s44 = sand.u32 51, %s43
    %s45 = sshrl.u32 %s44, 2
    %s46 = sor.u32 %s44, %s45
    %s47 = sand.u32 15, %s46
    %v48 = vld [vmem:[%s38] sm:%s47]
    %v49 = vunpack.c.l.bf16 %v48
    %v50 = vunpack.c.h.bf16 %v48
    %s51 = scalar_lea.vmem [#allocation1], 104
    %52 = vst [vmem:[%s51] sm:%s4] %v49
    %s53 = smul.addr 1, 12
    %s54 = scalar_lea.vmem %s0, %s53
    %s55 = sshrl.u32 %s4, 1
    %s56 = sor.u32 %s4, %s55
    %s57 = sand.u32 %s56, 85
    %s58 = sshrl.u32 %s57, 1
    %s59 = sor.u32 %s57, %s58
    %s60 = sand.u32 51, %s59
    %s61 = sshrl.u32 %s60, 2
    %s62 = sor.u32 %s60, %s61
    %s63 = sand.u32 15, %s62
    %v64 = vld [vmem:[%s54] sm:%s63]
    %v65 = vunpack.c.l.bf16 %v64
    %v66 = vunpack.c.h.bf16 %v64
    %s67 = scalar_lea.vmem [#allocation1], 96
    %68 = vst [vmem:[%s67] sm:%s4] %v65
    %s69 = smul.addr 1, 11
    %s70 = scalar_lea.vmem %s0, %s69
    %s71 = sshrl.u32 %s4, 1
    %s72 = sor.u32 %s4, %s71
    %s73 = sand.u32 %s72, 85
    %s74 = sshrl.u32 %s73, 1
    %s75 = sor.u32 %s73, %s74
    %s76 = sand.u32 51, %s75
    %s77 = sshrl.u32 %s76, 2
    %s78 = sor.u32 %s76, %s77
    %s79 = sand.u32 15, %s78
    %v80 = vld [vmem:[%s70] sm:%s79]
    %v81 = vunpack.c.l.bf16 %v80
    %v82 = vunpack.c.h.bf16 %v80
    %s83 = scalar_lea.vmem [#allocation1], 88
    %84 = vst [vmem:[%s83] sm:%s4] %v81
    %s85 = smul.addr 1, 10
    %s86 = scalar_lea.vmem %s0, %s85
    %s87 = sshrl.u32 %s4, 1
    %s88 = sor.u32 %s4, %s87
    %s89 = sand.u32 %s88, 85
    %s90 = sshrl.u32 %s89, 1
    %s91 = sor.u32 %s89, %s90
    %s92 = sand.u32 51, %s91
    %s93 = sshrl.u32 %s92, 2
    %s94 = sor.u32 %s92, %s93
    %s95 = sand.u32 15, %s94
    %v96 = vld [vmem:[%s86] sm:%s95]
    %v97 = vunpack.c.l.bf16 %v96
    %v98 = vunpack.c.h.bf16 %v96
    %s99 = scalar_lea.vmem [#allocation1], 80
    %100 = vst [vmem:[%s99] sm:%s4] %v97
    %s101 = smul.addr 1, 9
    %s102 = scalar_lea.vmem %s0, %s101
    %s103 = sshrl.u32 %s4, 1
    %s104 = sor.u32 %s4, %s103
    %s105 = sand.u32 %s104, 85
    %s106 = sshrl.u32 %s105, 1
    %s107 = sor.u32 %s105, %s106
    %s108 = sand.u32 51, %s107
    %s109 = sshrl.u32 %s108, 2
    %s110 = sor.u32 %s108, %s109
    %s111 = sand.u32 15, %s110
    %v112 = vld [vmem:[%s102] sm:%s111]
    %v113 = vunpack.c.l.bf16 %v112
    %v114 = vunpack.c.h.bf16 %v112
    %s115 = scalar_lea.vmem [#allocation1], 72
    %116 = vst [vmem:[%s115] sm:%s4] %v113
    %s117 = smul.addr 1, 8
    %s118 = scalar_lea.vmem %s0, %s117
    %s119 = sshrl.u32 %s4, 1
    %s120 = sor.u32 %s4, %s119
    %s121 = sand.u32 %s120, 85
    %s122 = sshrl.u32 %s121, 1
    %s123 = sor.u32 %s121, %s122
    %s124 = sand.u32 51, %s123
    %s125 = sshrl.u32 %s124, 2
    %s126 = sor.u32 %s124, %s125
    %s127 = sand.u32 15, %s126
    %v128 = vld [vmem:[%s118] sm:%s127]
    %v129 = vunpack.c.l.bf16 %v128
    %v130 = vunpack.c.h.bf16 %v128
    %s131 = scalar_lea.vmem [#allocation1], 64
    %132 = vst [vmem:[%s131] sm:%s4] %v129
    %s133 = smul.addr 1, 7
    %s134 = scalar_lea.vmem %s0, %s133
    %s135 = sshrl.u32 %s4, 1
    %s136 = sor.u32 %s4, %s135
    %s137 = sand.u32 %s136, 85
    %s138 = sshrl.u32 %s137, 1
    %s139 = sor.u32 %s137, %s138
    %s140 = sand.u32 51, %s139
    %s141 = sshrl.u32 %s140, 2
    %s142 = sor.u32 %s140, %s141
    %s143 = sand.u32 15, %s142
    %v144 = vld [vmem:[%s134] sm:%s143]
    %v145 = vunpack.c.l.bf16 %v144
    %v146 = vunpack.c.h.bf16 %v144
    %s147 = scalar_lea.vmem [#allocation1], 56
    %148 = vst [vmem:[%s147] sm:%s4] %v145
    %s149 = smul.addr 1, 6
    %s150 = scalar_lea.vmem %s0, %s149
    %s151 = sshrl.u32 %s4, 1
    %s152 = sor.u32 %s4, %s151
    %s153 = sand.u32 %s152, 85
    %s154 = sshrl.u32 %s153, 1
    %s155 = sor.u32 %s153, %s154
    %s156 = sand.u32 51, %s155
    %s157 = sshrl.u32 %s156, 2
    %s158 = sor.u32 %s156, %s157
    %s159 = sand.u32 15, %s158
    %v160 = vld [vmem:[%s150] sm:%s159]
    %v161 = vunpack.c.l.bf16 %v160
    %v162 = vunpack.c.h.bf16 %v160
    %s163 = scalar_lea.vmem [#allocation1], 48
    %164 = vst [vmem:[%s163] sm:%s4] %v161
    %s165 = smul.addr 1, 5
    %s166 = scalar_lea.vmem %s0, %s165
    %s167 = sshrl.u32 %s4, 1
    %s168 = sor.u32 %s4, %s167
    %s169 = sand.u32 %s168, 85
    %s170 = sshrl.u32 %s169, 1
    %s171 = sor.u32 %s169, %s170
    %s172 = sand.u32 51, %s171
    %s173 = sshrl.u32 %s172, 2
    %s174 = sor.u32 %s172, %s173
    %s175 = sand.u32 15, %s174
    %v176 = vld [vmem:[%s166] sm:%s175]
    %v177 = vunpack.c.l.bf16 %v176
    %v178 = vunpack.c.h.bf16 %v176
    %s179 = scalar_lea.vmem [#allocation1], 40
    %180 = vst [vmem:[%s179] sm:%s4] %v177
    %s181 = smul.addr 1, 4
    %s182 = scalar_lea.vmem %s0, %s181
    %s183 = sshrl.u32 %s4, 1
    %s184 = sor.u32 %s4, %s183
    %s185 = sand.u32 %s184, 85
    %s186 = sshrl.u32 %s185, 1
    %s187 = sor.u32 %s185, %s186
    %s188 = sand.u32 51, %s187
    %s189 = sshrl.u32 %s188, 2
    %s190 = sor.u32 %s188, %s189
    %s191 = sand.u32 15, %s190
    %v192 = vld [vmem:[%s182] sm:%s191]
    %v193 = vunpack.c.l.bf16 %v192
    %v194 = vunpack.c.h.bf16 %v192
    %s195 = scalar_lea.vmem [#allocation1], 32
    %196 = vst [vmem:[%s195] sm:%s4] %v193
    %s197 = smul.addr 1, 3
    %s198 = scalar_lea.vmem %s0, %s197
    %s199 = sshrl.u32 %s4, 1
    %s200 = sor.u32 %s4, %s199
    %s201 = sand.u32 %s200, 85
    %s202 = sshrl.u32 %s201, 1
    %s203 = sor.u32 %s201, %s202
    %s204 = sand.u32 51, %s203
    %s205 = sshrl.u32 %s204, 2
    %s206 = sor.u32 %s204, %s205
    %s207 = sand.u32 15, %s206
    %v208 = vld [vmem:[%s198] sm:%s207]
    %v209 = vunpack.c.l.bf16 %v208
    %v210 = vunpack.c.h.bf16 %v208
    %s211 = scalar_lea.vmem [#allocation1], 24
    %212 = vst [vmem:[%s211] sm:%s4] %v209
    %s213 = smul.addr 1, 2
    %s214 = scalar_lea.vmem %s0, %s213
    %s215 = sshrl.u32 %s4, 1
    %s216 = sor.u32 %s4, %s215
    %s217 = sand.u32 %s216, 85
    %s218 = sshrl.u32 %s217, 1
    %s219 = sor.u32 %s217, %s218
    %s220 = sand.u32 51, %s219
    %s221 = sshrl.u32 %s220, 2
    %s222 = sor.u32 %s220, %s221
    %s223 = sand.u32 15, %s222
    %v224 = vld [vmem:[%s214] sm:%s223]
    %v225 = vunpack.c.l.bf16 %v224
    %v226 = vunpack.c.h.bf16 %v224
    %s227 = scalar_lea.vmem [#allocation1], 16
    %228 = vst [vmem:[%s227] sm:%s4] %v225
    %s229 = scalar_lea.vmem %s0, 1
    %s230 = sshrl.u32 %s4, 1
    %s231 = sor.u32 %s4, %s230
    %s232 = sand.u32 %s231, 85
    %s233 = sshrl.u32 %s232, 1
    %s234 = sor.u32 %s232, %s233
    %s235 = sand.u32 51, %s234
    %s236 = sshrl.u32 %s235, 2
    %s237 = sor.u32 %s235, %s236
    %s238 = sand.u32 15, %s237
    %v239 = vld [vmem:[%s229] sm:%s238]
    %v240 = vunpack.c.l.bf16 %v239
    %v241 = vunpack.c.h.bf16 %v239
    %s242 = scalar_lea.vmem [#allocation1], 8
    %243 = vst [vmem:[%s242] sm:%s4] %v240
    %s244 = sshrl.u32 %s4, 1
    %s245 = sor.u32 %s4, %s244
    %s246 = sand.u32 %s245, 85
    %s247 = sshrl.u32 %s246, 1
    %s248 = sor.u32 %s246, %s247
    %s249 = sand.u32 51, %s248
    %s250 = sshrl.u32 %s249, 2
    %s251 = sor.u32 %s249, %s250
    %s252 = sand.u32 15, %s251
    %v253 = vld [vmem:[%s0] sm:%s252]
    %v254 = vunpack.c.l.bf16 %v253
    %v255 = vunpack.c.h.bf16 %v253
    %256 = vst [vmem:[#allocation1] sm:%s4] %v254
    %v257 = vld [vmem:[#allocation1] sm:$0x3]
    %258 = vst [vmem:[#allocation0] sm:$0x1] %v257
    %s259 = scalar_lea.vmem [#allocation0], 63
    %260 = vst [vmem:[%s259] sm:$0x2] %v257
    %s261 = scalar_lea.vmem [#allocation1], 8
    %v262 = vld [vmem:[%s261] sm:$0x3]
    %s263 = scalar_lea.vmem [#allocation0], 8
    %264 = vst [vmem:[%s263] sm:$0x1] %v262
    %s265 = scalar_lea.vmem [#allocation0], 71
    %266 = vst [vmem:[%s265] sm:$0x2] %v262
    %s267 = scalar_lea.vmem [#allocation1], 16
    %v268 = vld [vmem:[%s267] sm:$0x3]
    %s269 = scalar_lea.vmem [#allocation0], 16
    %270 = vst [vmem:[%s269] sm:$0x1] %v268
    %s271 = scalar_lea.vmem [#allocation0], 79
    %272 = vst [vmem:[%s271] sm:$0x2] %v268
    %s273 = scalar_lea.vmem [#allocation1], 24
    %v274 = vld [vmem:[%s273] sm:$0x3]
    %s275 = scalar_lea.vmem [#allocation0], 24
    %276 = vst [vmem:[%s275] sm:$0x1] %v274
    %s277 = scalar_lea.vmem [#allocation0], 87
    %278 = vst [vmem:[%s277] sm:$0x2] %v274
    %s279 = scalar_lea.vmem [#allocation1], 32
    %v280 = vld [vmem:[%s279] sm:$0x3]
    %s281 = scalar_lea.vmem [#allocation0], 1
    %282 = vst [vmem:[%s281] sm:$0x1] %v280
    %s283 = scalar_lea.vmem [#allocation0], 64
    %284 = vst [vmem:[%s283] sm:$0x2] %v280
    %s285 = scalar_lea.vmem [#allocation1], 40
    %v286 = vld [vmem:[%s285] sm:$0x3]
    %s287 = scalar_lea.vmem [#allocation0], 9
    %288 = vst [vmem:[%s287] sm:$0x1] %v286
    %s289 = scalar_lea.vmem [#allocation0], 72
    %290 = vst [vmem:[%s289] sm:$0x2] %v286
    %s291 = scalar_lea.vmem [#allocation1], 48
    %v292 = vld [vmem:[%s291] sm:$0x3]
    %s293 = scalar_lea.vmem [#allocation0], 17
    %294 = vst [vmem:[%s293] sm:$0x1] %v292
    %s295 = scalar_lea.vmem [#allocation0], 80
    %296 = vst [vmem:[%s295] sm:$0x2] %v292
    %s297 = scalar_lea.vmem [#allocation1], 56
    %v298 = vld [vmem:[%s297] sm:$0x3]
    %s299 = scalar_lea.vmem [#allocation0], 25
    %300 = vst [vmem:[%s299] sm:$0x1] %v298
    %s301 = scalar_lea.vmem [#allocation0], 88
    %302 = vst [vmem:[%s301] sm:$0x2] %v298
    %s303 = scalar_lea.vmem [#allocation1], 64
    %v304 = vld [vmem:[%s303] sm:$0x3]
    %s305 = scalar_lea.vmem [#allocation0], 32
    %306 = vst [vmem:[%s305] sm:$0x1] %v304
    %s307 = scalar_lea.vmem [#allocation0], 95
    %308 = vst [vmem:[%s307] sm:$0x2] %v304
    %s309 = scalar_lea.vmem [#allocation1], 72
    %v310 = vld [vmem:[%s309] sm:$0x3]
    %s311 = scalar_lea.vmem [#allocation0], 40
    %312 = vst [vmem:[%s311] sm:$0x1] %v310
    %s313 = scalar_lea.vmem [#allocation0], 103
    %314 = vst [vmem:[%s313] sm:$0x2] %v310
    %s315 = scalar_lea.vmem [#allocation1], 80
    %v316 = vld [vmem:[%s315] sm:$0x3]
    %s317 = scalar_lea.vmem [#allocation0], 48
    %318 = vst [vmem:[%s317] sm:$0x1] %v316
    %s319 = scalar_lea.vmem [#allocation0], 111
    %320 = vst [vmem:[%s319] sm:$0x2] %v316
    %s321 = scalar_lea.vmem [#allocation1], 88
    %v322 = vld [vmem:[%s321] sm:$0x3]
    %s323 = scalar_lea.vmem [#allocation0], 56
    %324 = vst [vmem:[%s323] sm:$0x1] %v322
    %s325 = scalar_lea.vmem [#allocation0], 119
    %326 = vst [vmem:[%s325] sm:$0x2] %v322
    %s327 = scalar_lea.vmem [#allocation1], 96
    %v328 = vld [vmem:[%s327] sm:$0x3]
    %s329 = scalar_lea.vmem [#allocation0], 33
    %330 = vst [vmem:[%s329] sm:$0x1] %v328
    %s331 = scalar_lea.vmem [#allocation0], 96
    %332 = vst [vmem:[%s331] sm:$0x2] %v328
    %s333 = scalar_lea.vmem [#allocation1], 104
    %v334 = vld [vmem:[%s333] sm:$0x3]
    %s335 = scalar_lea.vmem [#allocation0], 41
    %336 = vst [vmem:[%s335] sm:$0x1] %v334
    %s337 = scalar_lea.vmem [#allocation0], 104
    %338 = vst [vmem:[%s337] sm:$0x2] %v334
    %s339 = scalar_lea.vmem [#allocation1], 112
    %v340 = vld [vmem:[%s339] sm:$0x3]
    %s341 = scalar_lea.vmem [#allocation0], 49
    %342 = vst [vmem:[%s341] sm:$0x1] %v340
    %s343 = scalar_lea.vmem [#allocation0], 112
    %344 = vst [vmem:[%s343] sm:$0x2] %v340
    %s345 = scalar_lea.vmem [#allocation1], 120
    %v346 = vld [vmem:[%s345] sm:$0x3]
    %s347 = scalar_lea.vmem [#allocation0], 57
    %348 = vst [vmem:[%s347] sm:$0x1] %v346
    %s349 = scalar_lea.vmem [#allocation0], 120
    %350 = vst [vmem:[%s349] sm:$0x2] %v346
    %s352 = smul.u32 1, 2
    %s353 = sshllo.u32 0, %s352
    %s354 = sshrl.u32 %s352, 1
    %v355 = vld [vmem:[#allocation0] sm:%s353]
    %v356 = vpack.c.bf16 0.0, %v355
    %s357 = sshllo.u32 0, %s354
    %358 = vst [vmem:[%s1] sm:%s357] %v356
    %s359 = scalar_lea.vmem [#allocation0], 8
    %v360 = vld [vmem:[%s359] sm:%s353]
    %v361 = vpack.c.bf16 0.0, %v360
    %s362 = sshllo.u32 0, %s354
    %s363 = scalar_lea.vmem %s1, 1
    %364 = vst [vmem:[%s363] sm:%s362] %v361
    %s365 = scalar_lea.vmem [#allocation0], 16
    %v366 = vld [vmem:[%s365] sm:%s353]
    %v367 = vpack.c.bf16 0.0, %v366
    %s368 = sshllo.u32 0, %s354
    %s369 = smul.addr 1, 2
    %s370 = scalar_lea.vmem %s1, %s369
    %371 = vst [vmem:[%s370] sm:%s368] %v367
    %s372 = scalar_lea.vmem [#allocation0], 24
    %v373 = vld [vmem:[%s372] sm:%s353]
    %v374 = vpack.c.bf16 0.0, %v373
    %s375 = sshllo.u32 0, %s354
    %s376 = smul.addr 1, 3
    %s377 = scalar_lea.vmem %s1, %s376
    %378 = vst [vmem:[%s377] sm:%s375] %v374
    %s379 = scalar_lea.vmem [#allocation0], 32
    %v380 = vld [vmem:[%s379] sm:%s353]
    %v381 = vpack.c.bf16 0.0, %v380
    %s382 = sshllo.u32 0, %s354
    %s383 = smul.addr 1, 4
    %s384 = scalar_lea.vmem %s1, %s383
    %385 = vst [vmem:[%s384] sm:%s382] %v381
    %s386 = scalar_lea.vmem [#allocation0], 40
    %v387 = vld [vmem:[%s386] sm:%s353]
    %v388 = vpack.c.bf16 0.0, %v387
    %s389 = sshllo.u32 0, %s354
    %s390 = smul.addr 1, 5
    %s391 = scalar_lea.vmem %s1, %s390
    %392 = vst [vmem:[%s391] sm:%s389] %v388
    %s393 = scalar_lea.vmem [#allocation0], 48
    %v394 = vld [vmem:[%s393] sm:%s353]
    %v395 = vpack.c.bf16 0.0, %v394
    %s396 = sshllo.u32 0, %s354
    %s397 = smul.addr 1, 6
    %s398 = scalar_lea.vmem %s1, %s397
    %399 = vst [vmem:[%s398] sm:%s396] %v395
    %s400 = scalar_lea.vmem [#allocation0], 56
    %v401 = vld [vmem:[%s400] sm:%s353]
    %v402 = vpack.c.bf16 0.0, %v401
    %s403 = sshllo.u32 0, %s354
    %s404 = smul.addr 1, 7
    %s405 = scalar_lea.vmem %s1, %s404
    %406 = vst [vmem:[%s405] sm:%s403] %v402
    %s407 = scalar_lea.vmem [#allocation0], 64
    %v408 = vld [vmem:[%s407] sm:%s353]
    %v409 = vpack.c.bf16 0.0, %v408
    %s410 = sshllo.u32 0, %s354
    %s411 = smul.addr 1, 8
    %s412 = scalar_lea.vmem %s1, %s411
    %413 = vst [vmem:[%s412] sm:%s410] %v409
    %s414 = scalar_lea.vmem [#allocation0], 72
    %v415 = vld [vmem:[%s414] sm:%s353]
    %v416 = vpack.c.bf16 0.0, %v415
    %s417 = sshllo.u32 0, %s354
    %s418 = smul.addr 1, 9
    %s419 = scalar_lea.vmem %s1, %s418
    %420 = vst [vmem:[%s419] sm:%s417] %v416
    %s421 = scalar_lea.vmem [#allocation0], 80
    %v422 = vld [vmem:[%s421] sm:%s353]
    %v423 = vpack.c.bf16 0.0, %v422
    %s424 = sshllo.u32 0, %s354
    %s425 = smul.addr 1, 10
    %s426 = scalar_lea.vmem %s1, %s425
    %427 = vst [vmem:[%s426] sm:%s424] %v423
    %s428 = scalar_lea.vmem [#allocation0], 88
    %v429 = vld [vmem:[%s428] sm:%s353]
    %v430 = vpack.c.bf16 0.0, %v429
    %s431 = sshllo.u32 0, %s354
    %s432 = smul.addr 1, 11
    %s433 = scalar_lea.vmem %s1, %s432
    %434 = vst [vmem:[%s433] sm:%s431] %v430
    %s435 = scalar_lea.vmem [#allocation0], 96
    %v436 = vld [vmem:[%s435] sm:%s353]
    %v437 = vpack.c.bf16 0.0, %v436
    %s438 = sshllo.u32 0, %s354
    %s439 = smul.addr 1, 12
    %s440 = scalar_lea.vmem %s1, %s439
    %441 = vst [vmem:[%s440] sm:%s438] %v437
    %s442 = scalar_lea.vmem [#allocation0], 104
    %v443 = vld [vmem:[%s442] sm:%s353]
    %v444 = vpack.c.bf16 0.0, %v443
    %s445 = sshllo.u32 0, %s354
    %s446 = smul.addr 1, 13
    %s447 = scalar_lea.vmem %s1, %s446
    %448 = vst [vmem:[%s447] sm:%s445] %v444
    %s449 = scalar_lea.vmem [#allocation0], 112
    %v450 = vld [vmem:[%s449] sm:%s353]
    %v451 = vpack.c.bf16 0.0, %v450
    %s452 = sshllo.u32 0, %s354
    %s453 = smul.addr 1, 14
    %s454 = scalar_lea.vmem %s1, %s453
    %455 = vst [vmem:[%s454] sm:%s452] %v451
    %s456 = scalar_lea.vmem [#allocation0], 120
    %v457 = vld [vmem:[%s456] sm:%s353]
    %v458 = vpack.c.bf16 0.0, %v457
    %s459 = sshllo.u32 0, %s354
    %s460 = smul.addr 1, 15
    %s461 = scalar_lea.vmem %s1, %s460
    %462 = vst [vmem:[%s461] sm:%s459] %v458

// kernel: autoencoder_forward.12
$region0: #{autoencoder_forward.12}
  #allocation0 [shape = 'u32[]', space=smem, size = 0x4, offset = 0x4, fixed_abs, tag = 'smem constant byte address 0x4 - core index']
  #allocation1 [shape = 'u32[144,128]{1,0:T(1,128)}', space=vmem, size = 0x12000, scoped, tag = 'internal scratch']
  #allocation2 [shape = 'f32[16,256]{1,0:T(8,128)}', space=vmem, size = 0x4000, scoped, tag = 'scratch operand']
  %s0 = inlined_call_operand.hbm [shape: bf16[1,16,128], index: 0, kind: input, shape index: {}]
  %s1 = inlined_call_operand.hbm [shape: bf16[1,128,2048], index: 1, kind: input, shape index: {}]
  %s2 = inlined_call_operand.hbm [shape: f32[1,1,2048], index: 2, kind: input, shape index: {}]
  %s3 = inlined_call_operand.hbm [shape: bf16[1,16,2048], index: 3, kind: output, shape index: {}]
  %s4 = sld [smem:[#allocation0]]
  $region65: #{autoencoder_forward.12} parent=0
    _
  %s6 = ssub.s32 1, %s4
  %s7 = scalar_select 0, %s6, %s4
  $region1: #{autoencoder_forward.12} parent=0
    #allocation3 [shape = 'u8[4096]{0}', space=vmem, size = 0x1000, scoped, tag = 'input window, operand 0, single buffered']
    #allocation4 [shape = 's32[2]{0}', space=sflag, size = 0x8, scoped, tag = 'scoped memory for autoencoder_forward.12']
    #allocation5 [shape = 's32[2]{0}', space=sflag, size = 0x8, scoped, tag = 'scoped memory for autoencoder_forward.12']
    #allocation6 [shape = 'u8[131072]{0}', space=vmem, size = 0x20000, scoped, tag = 'input window, operand 1']
    #allocation7 [shape = 's32[2]{0}', space=sflag, size = 0x8, scoped, tag = 'scoped memory for autoencoder_forward.12']
    #allocation8 [shape = 'u8[2048]{0}', space=vmem, size = 0x800, scoped, tag = 'input window, operand 2']
    #allocation9 [shape = 'u8[16384]{0}', space=vmem, size = 0x4000, scoped, tag = 'output window, operand 0']
    %8 = vsyncpa [#allocation4], 0
    %9 = vsyncpa [#allocation7], 0
    %s10 = scalar_lea.sflag [#allocation7], 1
    %11 = vsyncpa %s10, 0
    %12 = vsyncpa [#allocation5], 0
    %s13 = scalar_lea.sflag [#allocation5], 1
    %14 = vsyncpa %s13, 0
    loop: start=0, step=1, limit=10
    $region2: #{autoencoder_forward.12} parent=1 // loop_pre_header
      _
    $region3: #{autoencoder_forward.12} parent=1 // loop_header
      %s16 = sphi 0, %s20
      %p17 = scmp.ge.s32.totalorder %s16, 10
      %s23 = sphi 0, %s49
      %s24 = sphi 0, %s45
      %s25 = sphi 0, %s41
      %s26 = sphi 0, %s37
      %s27 = sphi 0, %s23
      %s28 = sphi 0, %s24
      %s29 = sphi 0, %s25
      %s30 = sphi 0, %s26
      %s31 = sphi 0, %s27
      %s32 = sphi 0, %s28
      %s33 = sphi 0, %s29
      %s34 = sphi 0, %s30
      %s56 = sphi 0, %s58
      %s59 = sphi 0, %s56
      %s60 = sphi 0, %s59
      %s76 = sphi 0, %s60
      %s86 = sphi 0, %s88
      %s89 = sphi 0, %s86
      %s90 = sphi 0, %s89
      %s106 = sphi 0, %s90
      %s114 = sphi 0, %s116
      %s117 = sphi 0, %s114
      %s118 = sphi 0, %s117
      %s134 = sphi 0, %s118
      %s144 = sphi 0, %s146
      %s147 = sphi 0, %s144
      %s148 = sphi 0, %s147
      %s164 = sphi 0, %s148
    $region4: #{autoencoder_forward.12} parent=1 // loop_header_branch
      %19 = sbr.rel (%p17) target = $region8
    $region5: #{autoencoder_forward.12} parent=1 // loop_body
      %s21 = ssub.s32 %s16, 1
      %s22 = ssub.s32 %s16, 2
      %s35 = sadd.s32 1, %s26
      %p36 = scmp.ge.s32.totalorder %s35, 1
      %s37 = scalar_select %p36, 0, %s35
      %s38 = sadd.s32 1, %s25
      %s39 = scalar_select %p36, %s38, %s25
      %p40 = scmp.ge.s32.totalorder %s39, 8
      %s41 = scalar_select %p40, 0, %s39
      %s42 = sadd.s32 1, %s24
      %s43 = scalar_select %p40, %s42, %s24
      %p44 = scmp.ge.s32.totalorder %s43, 1
      %s45 = scalar_select %p44, 0, %s43
      %s46 = sadd.s32 1, %s23
      %s47 = scalar_select %p44, %s46, %s23
      %p48 = scmp.ge.s32.totalorder %s47, 1
      %s49 = scalar_select %p48, 0, %s47
      %s50 = ssub.s32 %s23, %s49
      %s51 = ssub.s32 %s24, %s45
      %s52 = sor.u32 %s50, %s51
      %s53 = ssub.s32 %s26, %s37
      %s54 = sor.u32 %s52, %s53
      %p55 = scmp.eq.s32.totalorder %s54, 0
      %s57 = sadd.s32 %s56, 1
      %s58 = scalar_select %p55, %s56, %s57
      %p61 = pneg %p55
      %p62 = scmp.eq.s32.totalorder %s16, 7
      %p63 = por %p61, %p62
      %p64 = scmp.ne.s32.totalorder %s56, %s59
      %p65 = scmp.eq.s32.totalorder %s16, 0
      %p66 = por %p64, %p65
      %p67 = scmp.ne.s32.totalorder %s56, %s59
      %p68 = scmp.eq.s32.totalorder %s21, 7
      %p69 = por %p67, %p68
      %p70 = scmp.ne.s32.totalorder %s59, %s60
      %p71 = scmp.eq.s32.totalorder %s21, 0
      %p72 = por %p70, %p71
      %p73 = scmp.ne.s32.totalorder %s59, %s60
      %p74 = scmp.eq.s32.totalorder %s22, 7
      %p75 = por %p73, %p74
      %p77 = scmp.ne.s32.totalorder %s60, %s76
      %p78 = scmp.eq.s32.totalorder %s22, 0
      %p79 = por %p77, %p78
      %s80 = ssub.s32 %s23, %s49
      %s81 = ssub.s32 %s26, %s37
      %s82 = sor.u32 %s80, %s81
      %s83 = ssub.s32 %s25, %s41
      %s84 = sor.u32 %s82, %s83
      %p85 = scmp.eq.s32.totalorder %s84, 0
      %s87 = sadd.s32 %s86, 1
      %s88 = scalar_select %p85, %s86, %s87
      %p91 = pneg %p85
      %p92 = scmp.eq.s32.totalorder %s16, 7
      %p93 = por %p91, %p92
      %p94 = scmp.ne.s32.totalorder %s86, %s89
      %p95 = scmp.eq.s32.totalorder %s16, 0
      %p96 = por %p94, %p95
      %p97 = scmp.ne.s32.totalorder %s86, %s89
      %p98 = scmp.eq.s32.totalorder %s21, 7
      %p99 = por %p97, %p98
      %p100 = scmp.ne.s32.totalorder %s89, %s90
      %p101 = scmp.eq.s32.totalorder %s21, 0
      %p102 = por %p100, %p101
      %p103 = scmp.ne.s32.totalorder %s89, %s90
      %p104 = scmp.eq.s32.totalorder %s22, 7
      %p105 = por %p103, %p104
      %p107 = scmp.ne.s32.totalorder %s90, %s106
      %p108 = scmp.eq.s32.totalorder %s22, 0
      %p109 = por %p107, %p108
      %s110 = ssub.s32 %s23, %s49
      %s111 = ssub.s32 %s25, %s41
      %s112 = sor.u32 %s110, %s111
      %p113 = scmp.eq.s32.totalorder %s112, 0
      %s115 = sadd.s32 %s114, 1
      %s116 = scalar_select %p113, %s114, %s115
      %p119 = pneg %p113
      %p120 = scmp.eq.s32.totalorder %s16, 7
      %p121 = por %p119, %p120
      %p122 = scmp.ne.s32.totalorder %s114, %s117
      %p123 = scmp.eq.s32.totalorder %s16, 0
      %p124 = por %p122, %p123
      %p125 = scmp.ne.s32.totalorder %s114, %s117
      %p126 = scmp.eq.s32.totalorder %s21, 7
      %p127 = por %p125, %p126
      %p128 = scmp.ne.s32.totalorder %s117, %s118
      %p129 = scmp.eq.s32.totalorder %s21, 0
      %p130 = por %p128, %p129
      %p131 = scmp.ne.s32.totalorder %s117, %s118
      %p132 = scmp.eq.s32.totalorder %s22, 7
      %p133 = por %p131, %p132
      %p135 = scmp.ne.s32.totalorder %s118, %s134
      %p136 = scmp.eq.s32.totalorder %s22, 0
      %p137 = por %p135, %p136
      %s138 = ssub.s32 %s23, %s49
      %s139 = ssub.s32 %s24, %s45
      %s140 = sor.u32 %s138, %s139
      %s141 = ssub.s32 %s25, %s41
      %s142 = sor.u32 %s140, %s141
      %p143 = scmp.eq.s32.totalorder %s142, 0
      %s145 = sadd.s32 %s144, 1
      %s146 = scalar_select %p143, %s144, %s145
      %p149 = pneg %p143
      %p150 = scmp.eq.s32.totalorder %s16, 7
      %p151 = por %p149, %p150
      %p152 = scmp.ne.s32.totalorder %s144, %s147
      %p153 = scmp.eq.s32.totalorder %s16, 0
      %p154 = por %p152, %p153
      %p155 = scmp.ne.s32.totalorder %s144, %s147
      %p156 = scmp.eq.s32.totalorder %s21, 7
      %p157 = por %p155, %p156
      %p158 = scmp.ne.s32.totalorder %s147, %s148
      %p159 = scmp.eq.s32.totalorder %s21, 0
      %p160 = por %p158, %p159
      %p161 = scmp.ne.s32.totalorder %s147, %s148
      %p162 = scmp.eq.s32.totalorder %s22, 7
      %p163 = por %p161, %p162
      %p165 = scmp.ne.s32.totalorder %s148, %s164
      %p166 = scmp.eq.s32.totalorder %s22, 0
      %p167 = por %p165, %p166
      %p168 = scmp.le.s32.totalorder 1, %s16
      %p169 = scmp.lt.s32.totalorder %s16, 9
      %p170 = pnand %p168, %p169
      %p171 = pneg %p170
      // Predicated region
      $region9: #{autoencoder_forward.12} parent=5 // pred_check
        _
      $region10: #{autoencoder_forward.12} parent=5 // pred_check_branch
        %173 = sbr.rel (%p170) target = $region12
      $region11: #{autoencoder_forward.12} parent=5 // pred_region
        %s174 = ssub.s32 %s16, 1
        // Predicated region
        $region13: #{autoencoder_forward.12} parent=11 // pred_check
          %p175 = pneg %p72
        $region14: #{autoencoder_forward.12} parent=11 // pred_check_branch
          %177 = sbr.rel (%p175) target = $region16
        $region15: #{autoencoder_forward.12} parent=11 // pred_region
          %s178 = smul.u32 2, %s28
          %s180 = ssub.s32 128, 128
          %181 = vsyncadd [#allocation4], %s180
          %s182 = sadd.s32 %s30, %s178
          %s183 = smul.addr %s27, 2
          %s184 = sadd.s32 %s182, %s183
          %s185 = smul.addr %s184, 64
          %s186 = scalar_lea.hbm %s0, %s185
          %s187 = sshll.u32 [#allocation3], 4
          %s188 = int_to_ptr.vmem [resolvable:$true] %s187
          %193 = dma.hbm_to_vmem [thread:$0]  %s186, 128, %s188, [#allocation4], 64, 64, 4
        $region16: #{autoencoder_forward.12} parent=11 // pred_fallthru
          _
      $region12: #{autoencoder_forward.12} parent=5 // pred_fallthru
        _
      %p194 = scmp.lt.s32.totalorder %s16, 8
      // Predicated region
      $region17: #{autoencoder_forward.12} parent=5 // pred_check
        %p195 = pneg %p194
      $region18: #{autoencoder_forward.12} parent=5 // pred_check_branch
        %197 = sbr.rel (%p195) target = $region20
      $region19: #{autoencoder_forward.12} parent=5 // pred_region
        // Predicated region
        $region21: #{autoencoder_forward.12} parent=19 // pred_check
          %p198 = pneg %p96
        $region22: #{autoencoder_forward.12} parent=19 // pred_check_branch
          %200 = sbr.rel (%p198) target = $region24
        $region23: #{autoencoder_forward.12} parent=19 // pred_region
          %s201 = sand.u32 %s16, 1
          %s202 = scalar_lea.sflag [#allocation7], %s201
          %s203 = sand.u32 %s86, 1
          %s204 = smul.addr %s203, 128
          %s205 = scalar_lea.vmem [#allocation6], %s204
          %s206 = smul.u32 16, %s26
          %s207 = smul.u32 2, %s25
          %s209 = ssub.s32 2048, 2048
          %210 = vsyncadd %s202, %s209
          %s211 = smul.addr %s206, 16
          %s212 = sadd.s32 %s207, %s211
          %s213 = smul.addr %s23, 256
          %s214 = sadd.s32 %s212, %s213
          %s215 = smul.addr %s214, 64
          %s216 = scalar_lea.hbm %s1, %s215
          %s217 = sshll.u32 %s205, 4
          %s218 = int_to_ptr.vmem [resolvable:$true] %s217
          %223 = dma.hbm_to_vmem [thread:$0]  %s216, 2048, %s218, %s202, 1024, 128, 8
        $region24: #{autoencoder_forward.12} parent=19 // pred_fallthru
          _
        // Predicated region
        $region25: #{autoencoder_forward.12} parent=19 // pred_check
          %p224 = pneg %p124
        $region26: #{autoencoder_forward.12} parent=19 // pred_check_branch
          %226 = sbr.rel (%p224) target = $region28
        $region27: #{autoencoder_forward.12} parent=19 // pred_region
          %s227 = sand.u32 %s16, 1
          %s228 = scalar_lea.sflag [#allocation7], %s227
          %s229 = sand.u32 %s114, 1
          %s230 = smul.addr %s229, 2
          %s231 = scalar_lea.vmem [#allocation8], %s230
          %s232 = smul.u32 2, %s25
          %s234 = ssub.s32 32, 32
          %235 = vsyncadd %s228, %s234
          %s236 = smul.addr %s23, 16
          %s237 = sadd.s32 %s232, %s236
          %s238 = smul.addr %s237, 16
          %s239 = scalar_lea.hbm %s2, %s238
          %s241 = sshll.u32 %s231, 4
          %s242 = int_to_ptr.vmem [resolvable:$true] %s241
          %244 = dma.hbm_to_vmem [thread:$0]  %s239, 32, %s242, %s228
        $region28: #{autoencoder_forward.12} parent=19 // pred_fallthru
          _
      $region20: #{autoencoder_forward.12} parent=5 // pred_fallthru
        _
      %p245 = scmp.le.s32.totalorder 1, %s16
      %p246 = scmp.lt.s32.totalorder %s16, 9
      %p247 = pnand %p245, %p246
      %p248 = pneg %p247
      // Predicated region
      $region29: #{autoencoder_forward.12} parent=5 // pred_check
        _
      $region30: #{autoencoder_forward.12} parent=5 // pred_check_branch
        %250 = sbr.rel (%p247) target = $region32
      $region31: #{autoencoder_forward.12} parent=5 // pred_region
        %s251 = ssub.s32 %s16, 1
        // Predicated region
        $region33: #{autoencoder_forward.12} parent=31 // pred_check
          %p252 = pneg %p72
        $region34: #{autoencoder_forward.12} parent=31 // pred_check_branch
          %254 = sbr.rel (%p252) target = $region36
        $region35: #{autoencoder_forward.12} parent=31 // pred_region
          %255 = dma.done [#allocation4], 128
        $region36: #{autoencoder_forward.12} parent=31 // pred_fallthru
          _
        %s256 = sand.u32 %s21, 1
        %s257 = scalar_lea.sflag [#allocation7], %s256
        %s258 = sand.u32 %s89, 1
        %s259 = smul.addr %s258, 128
        %s260 = scalar_lea.vmem [#allocation6], %s259
        // Predicated region
        $region37: #{autoencoder_forward.12} parent=31 // pred_check
          %p261 = pneg %p102
        $region38: #{autoencoder_forward.12} parent=31 // pred_check_branch
          %263 = sbr.rel (%p261) target = $region40
        $region39: #{autoencoder_forward.12} parent=31 // pred_region
          %264 = dma.done %s257, 2048
        $region40: #{autoencoder_forward.12} parent=31 // pred_fallthru
          _
        %s265 = sand.u32 %s21, 1
        %s266 = scalar_lea.sflag [#allocation7], %s265
        %s267 = sand.u32 %s117, 1
        %s268 = smul.addr %s267, 2
        %s269 = scalar_lea.vmem [#allocation8], %s268
        // Predicated region
        $region41: #{autoencoder_forward.12} parent=31 // pred_check
          %p270 = pneg %p130
        $region42: #{autoencoder_forward.12} parent=31 // pred_check_branch
          %272 = sbr.rel (%p270) target = $region44
        $region43: #{autoencoder_forward.12} parent=31 // pred_region
          %273 = dma.done %s266, 32
        $region44: #{autoencoder_forward.12} parent=31 // pred_fallthru
          _
        %p274 = pneg %p72
        %p275 = pneg %p69
        %s276 = sand.u32 %s21, 1
        %s277 = scalar_lea.sflag [#allocation7], %s276
        %s278 = sand.u32 %s89, 1
        %s279 = smul.addr %s278, 128
        %s280 = scalar_lea.vmem [#allocation6], %s279
        %p281 = pneg %p102
        %p282 = pneg %p99
        %s283 = sand.u32 %s21, 1
        %s284 = scalar_lea.sflag [#allocation7], %s283
        %s285 = sand.u32 %s117, 1
        %s286 = smul.addr %s285, 2
        %s287 = scalar_lea.vmem [#allocation8], %s286
        %p288 = pneg %p130
        %p289 = pneg %p127
        %p290 = pneg %p160
        %p291 = pneg %p157
        %s292 = sand.u32 %s147, 1
        %s293 = scalar_lea.sflag [#allocation5], %s292
        %s294 = sand.u32 %s147, 1
        %s295 = smul.addr %s294, 16
        %s296 = scalar_lea.vmem [#allocation9], %s295
        %s297 = smul.u32 2, %s28
        %s298 = smul.u32 16, %s30
        %s299 = smul.u32 2, %s29
        %s300 = smul.u32 2, %s29
        %s301 = smul.u32 2, %s28
        %s302 = smul.u32 2, %s29
        %p304 = scmp.eq.s32.totalorder %s30, 0
        // Predicated region
        $region45: #{autoencoder_forward.12} parent=31 // pred_check
          %p305 = pneg %p304
        $region46: #{autoencoder_forward.12} parent=31 // pred_check_branch
          %307 = sbr.rel (%p305) target = $region48
        $region47: #{autoencoder_forward.12} parent=31 // pred_region
          %308 = vst [vmem:[#allocation2] sm:$0xff] 0.0
          %309 = vst [vmem:[#allocation2 + $0x8] sm:$0xff] 0.0
          %310 = vst [vmem:[#allocation2 + $0x10] sm:$0xff] 0.0
          %311 = vst [vmem:[#allocation2 + $0x18] sm:$0xff] 0.0
        $region48: #{autoencoder_forward.12} parent=31 // pred_fallthru
          _
        %v312 = vld [vmem:[#allocation2] sm:$0xff]
        %v313 = vld [vmem:[#allocation2 + $0x8] sm:$0xff]
        %v314 = vld [vmem:[#allocation2 + $0x10] sm:$0xff]
        %v315 = vld [vmem:[#allocation2 + $0x18] sm:$0xff]
        %v316 = vld [vmem:[#allocation3] sm:$0xf]
        %v317 = vld [vmem:[#allocation3 + $0x4] sm:$0xf]
        %v318 = vld [vmem:[%s260] sm:$0xff]
        %v319 = vld [vmem:[%s260 + $0x8] sm:$0xff]
        %v320 = vld [vmem:[%s260 + $0x10] sm:$0xff]
        %v321 = vld [vmem:[%s260 + $0x18] sm:$0xff]
        %v322 = vld [vmem:[%s260 + $0x20] sm:$0xff]
        %v323 = vld [vmem:[%s260 + $0x28] sm:$0xff]
        %v324 = vld [vmem:[%s260 + $0x30] sm:$0xff]
        %v325 = vld [vmem:[%s260 + $0x38] sm:$0xff]
        %v326 = vld [vmem:[%s260 + $0x40] sm:$0xff]
        %v327 = vld [vmem:[%s260 + $0x48] sm:$0xff]
        %v328 = vld [vmem:[%s260 + $0x50] sm:$0xff]
        %v329 = vld [vmem:[%s260 + $0x58] sm:$0xff]
        %v330 = vld [vmem:[%s260 + $0x60] sm:$0xff]
        %v331 = vld [vmem:[%s260 + $0x68] sm:$0xff]
        %v332 = vld [vmem:[%s260 + $0x70] sm:$0xff]
        %v333 = vld [vmem:[%s260 + $0x78] sm:$0xff]
        %v336 = vunpack.c.l.b16 %v316
        %v337 = vunpack.c.l.b16 %v317
        %v338 = vpack.c.b16 %v337, %v336
        %v356 = vunpack.c.l.b16 %v318
        %v357 = vunpack.c.h.b16 %v318
        %v358 = vunpack.c.l.b16 %v319
        %v359 = vunpack.c.h.b16 %v319
        %v360 = vunpack.c.l.b16 %v320
        %v361 = vunpack.c.h.b16 %v320
        %v362 = vunpack.c.l.b16 %v321
        %v363 = vunpack.c.h.b16 %v321
        %v364 = vunpack.c.l.b16 %v322
        %v365 = vunpack.c.h.b16 %v322
        %v366 = vunpack.c.l.b16 %v323
        %v367 = vunpack.c.h.b16 %v323
        %v368 = vunpack.c.l.b16 %v324
        %v369 = vunpack.c.h.b16 %v324
        %v370 = vunpack.c.l.b16 %v325
        %v371 = vunpack.c.h.b16 %v325
        %v372 = vunpack.c.l.b16 %v326
        %v373 = vunpack.c.h.b16 %v326
        %v374 = vunpack.c.l.b16 %v327
        %v375 = vunpack.c.h.b16 %v327
        %v376 = vunpack.c.l.b16 %v328
        %v377 = vunpack.c.h.b16 %v328
        %v378 = vunpack.c.l.b16 %v329
        %v379 = vunpack.c.h.b16 %v329
        %v380 = vunpack.c.l.b16 %v330
        %v381 = vunpack.c.h.b16 %v330
        %v382 = vunpack.c.l.b16 %v331
        %v383 = vunpack.c.h.b16 %v331
        %v384 = vunpack.c.l.b16 %v332
        %v385 = vunpack.c.h.b16 %v332
        %v386 = vunpack.c.l.b16 %v333
        %v387 = vunpack.c.h.b16 %v333
        %v388 = vpack.c.b16 %v358, %v356
        %v389 = vpack.c.b16 %v359, %v357
        %v390 = vpack.c.b16 %v362, %v360
        %v391 = vpack.c.b16 %v363, %v361
        %v392 = vpack.c.b16 %v366, %v364
        %v393 = vpack.c.b16 %v367, %v365
        %v394 = vpack.c.b16 %v370, %v368
        %v395 = vpack.c.b16 %v371, %v369
        %v396 = vpack.c.b16 %v374, %v372
        %v397 = vpack.c.b16 %v375, %v373
        %v398 = vpack.c.b16 %v378, %v376
        %v399 = vpack.c.b16 %v379, %v377
        %v400 = vpack.c.b16 %v382, %v380
        %v401 = vpack.c.b16 %v383, %v381
        %v402 = vpack.c.b16 %v386, %v384
        %v403 = vpack.c.b16 %v387, %v385
        %420 = vmatprep.subr.bf16.mxu0 %v389
        %421 = vmatpush1.bf16.msra.mxu0 %v388
        %422 = vmatprep.subr.bf16.mxu0 %v391
        %423 = vmatpush1.bf16.msra.mxu0 %v390
        %424 = vmatprep.subr.bf16.mxu0 %v393
        %425 = vmatpush1.bf16.msra.mxu0 %v392
        %426 = vmatprep.subr.bf16.mxu0 %v395
        %427 = vmatpush1.bf16.msra.mxu0 %v394
        %428 = vmatprep.subr.bf16.mxu0 %v397
        %429 = vmatpush1.bf16.msra.mxu0 %v396
        %430 = vmatprep.subr.bf16.mxu0 %v399
        %431 = vmatpush1.bf16.msra.mxu0 %v398
        %432 = vmatprep.subr.bf16.mxu0 %v401
        %433 = vmatpush1.bf16.msra.mxu0 %v400
        %434 = vmatprep.subr.bf16.mxu0 %v403
        %435 = vmatpush1.bf16.msra.mxu0 %v402
        %436 = vmatprep.subr.bf16.mxu0 0
        %437 = vmatpush1.bf16.msra.mxu0 0
        %438 = vmatprep.subr.bf16.mxu0 0
        %439 = vmatpush1.bf16.msra.mxu0 0
        %440 = vmatprep.subr.bf16.mxu0 0
        %441 = vmatpush1.bf16.msra.mxu0 0
        %442 = vmatprep.subr.bf16.mxu0 0
        %443 = vmatpush1.bf16.msra.mxu0 0
        %444 = vmatprep.subr.bf16.mxu0 0
        %445 = vmatpush1.bf16.msra.mxu0 0
        %446 = vmatprep.subr.bf16.mxu0 0
        %447 = vmatpush1.bf16.msra.mxu0 0
        %448 = vmatprep.subr.bf16.mxu0 0
        %449 = vmatpush1.bf16.msra.mxu0 0
        %450 = vmatprep.subr.bf16.mxu0 0
        %451 = vmatpush1.bf16.msra.mxu0 0
        %452 = vmatprep.mubr.bf16.mxu0 0
        %453 = vmatmul.mubr.bf16.gmra.mrb[0].mxu0 %v338
        %v454 = vpop.f32.mrb[0].mxu0
        %v455 = vadd.f32 0.0, %v454
        %v456 = vpop.f32.mrb[0].mxu0
        %v457 = vadd.f32 0.0, %v456
        %v458 = vpop.f32.mrb[0].mxu0
        %v459 = vadd.f32 0.0, %v458
        %v460 = vpop.f32.mrb[0].mxu0
        %v461 = vadd.f32 0.0, %v460
        %462 = vdwg.mxu0
        %v463 = vadd.f32 %v312, %v455
        %v464 = vadd.f32 %v313, %v457
        %v465 = vadd.f32 %v314, %v459
        %v466 = vadd.f32 %v315, %v461
        %467 = vst [vmem:[#allocation2] sm:$0xff] %v463
        %468 = vst [vmem:[#allocation2 + $0x8] sm:$0xff] %v464
        %469 = vst [vmem:[#allocation2 + $0x10] sm:$0xff] %v465
        %470 = vst [vmem:[#allocation2 + $0x18] sm:$0xff] %v466
        // Predicated region
        $region49: #{autoencoder_forward.12} parent=31 // pred_check
          %p471 = pneg %p304
        $region50: #{autoencoder_forward.12} parent=31 // pred_check_branch
          %473 = sbr.rel (%p471) target = $region52
        $region51: #{autoencoder_forward.12} parent=31 // pred_region
          %v474 = vld [vmem:[#allocation2] sm:$0xff]
          %v475 = vld [vmem:[#allocation2 + $0x8] sm:$0xff]
          %v476 = vld [vmem:[#allocation2 + $0x10] sm:$0xff]
          %v477 = vld [vmem:[#allocation2 + $0x18] sm:$0xff]
          %v478 = vld [vmem:[%s269] sm:$0x3]
          %v480 = vlaneseq
          %v481 = vshrl.u32 %v480, 7
          %v482 = vsub.s32 0, %v481
          %v483 = vrot.slane %v478, %v482
          %v484 = vlaneseq
          %v485 = vshrl.u32 %v484, 7
          %v486 = vsub.s32 1, %v485
          %v487 = vrot.slane %v478, %v486
          %v490 = vadd.f32 %v474, %v483
          %v491 = vadd.f32 %v475, %v487
          %v492 = vadd.f32 %v476, %v483
          %v493 = vadd.f32 %v477, %v487
          %v494 = vpack.c.bf16 %v492, %v490
          %v495 = vpack.c.bf16 %v493, %v491
          %v498 = vunpack.c.l.b16 %v494
          %v499 = vunpack.c.l.b16 %v495
          %v500 = vunpack.c.h.b16 %v494
          %v501 = vunpack.c.h.b16 %v495
          %v502 = vpack.c.b16 %v499, %v498
          %v503 = vpack.c.b16 %v501, %v500
          %506 = vst [vmem:[%s296] sm:$0xff] %v502
          %507 = vst [vmem:[%s296 + $0x8] sm:$0xff] %v503
        $region52: #{autoencoder_forward.12} parent=31 // pred_fallthru
          _
        %s508 = sand.u32 %s147, 1
        %s509 = scalar_lea.sflag [#allocation5], %s508
        %s510 = sand.u32 %s147, 1
        %s511 = smul.addr %s510, 16
        %s512 = scalar_lea.vmem [#allocation9], %s511
        // Predicated region
        $region53: #{autoencoder_forward.12} parent=31 // pred_check
          %p513 = pneg %p157
        $region54: #{autoencoder_forward.12} parent=31 // pred_check_branch
          %515 = sbr.rel (%p513) target = $region56
        $region55: #{autoencoder_forward.12} parent=31 // pred_region
          %s516 = smul.u32 2, %s28
          %s517 = smul.u32 2, %s29
          %s519 = ssub.s32 256, 256
          %520 = vsyncadd %s509, %s519
          %s521 = smul.addr %s516, 16
          %s522 = sadd.s32 %s517, %s521
          %s523 = smul.addr %s27, 32
          %s524 = sadd.s32 %s522, %s523
          %s525 = smul.addr %s524, 64
          %s526 = scalar_lea.hbm %s3, %s525
          %s527 = sshll.u32 %s512, 4
          %s528 = int_to_ptr.vmem [resolvable:$true] %s527
          %533 = dma.vmem_to_hbm [thread:$0]  %s528, 256, %s526, %s509, 128, 1024, 8
        $region56: #{autoencoder_forward.12} parent=31 // pred_fallthru
          _
      $region32: #{autoencoder_forward.12} parent=5 // pred_fallthru
        _
      %p534 = scmp.le.s32.totalorder 2, %s16
      // Predicated region
      $region57: #{autoencoder_forward.12} parent=5 // pred_check
        %p535 = pneg %p534
      $region58: #{autoencoder_forward.12} parent=5 // pred_check_branch
        %537 = sbr.rel (%p535) target = $region60
      $region59: #{autoencoder_forward.12} parent=5 // pred_region
        %s538 = ssub.s32 %s16, 2
        // Predicated region
        $region61: #{autoencoder_forward.12} parent=59 // pred_check
          %p539 = pneg %p163
        $region62: #{autoencoder_forward.12} parent=59 // pred_check_branch
          %541 = sbr.rel (%p539) target = $region64
        $region63: #{autoencoder_forward.12} parent=59 // pred_region
          %s542 = sand.u32 %s148, 1
          %s543 = scalar_lea.sflag [#allocation5], %s542
          %s544 = sand.u32 %s148, 1
          %s545 = smul.addr %s544, 16
          %s546 = scalar_lea.vmem [#allocation9], %s545
          %547 = dma.done %s543, 256
        $region64: #{autoencoder_forward.12} parent=59 // pred_fallthru
          _
      $region60: #{autoencoder_forward.12} parent=5 // pred_fallthru
        _
    $region6: #{autoencoder_forward.12} parent=1 // loop_footer
      %s20 = sadd.s32 1, %s16
    $region7: #{autoencoder_forward.12} parent=1 // loop_footer_branch
      %15 = sbr.rel target = $region3
    $region8: #{autoencoder_forward.12} parent=1 // loop_exit
      _
    %548 = vsyncpa [#allocation4], 1
    %s549 = scalar_lea.sflag [#allocation4], 1
    %550 = vsyncpa %s549, 1
    %551 = vsyncpa [#allocation7], 1
    %s552 = scalar_lea.sflag [#allocation7], 1
    %553 = vsyncpa %s552, 1
    %554 = vsyncpa [#allocation5], 1
    %s555 = scalar_lea.sflag [#allocation5], 1
    %556 = vsyncpa %s555, 1

// kernel: autoencoder_forward.10
$region0: #{autoencoder_forward.10}
  #allocation0 [shape = 'u32[]', space=smem, size = 0x4, offset = 0x4, fixed_abs, tag = 'smem constant byte address 0x4 - core index']
  #allocation1 [shape = 'u32[144,128]{1,0:T(1,128)}', space=vmem, size = 0x12000, scoped, tag = 'internal scratch']
  #allocation2 [shape = 'f32[16,256]{1,0:T(8,128)}', space=vmem, size = 0x4000, scoped, tag = 'scratch operand']
  %s0 = inlined_call_operand.hbm [shape: bf16[1,16,2048], index: 0, kind: input, shape index: {}]
  %s1 = inlined_call_operand.hbm [shape: bf16[1,2048,512], index: 1, kind: input, shape index: {}]
  %s2 = inlined_call_operand.hbm [shape: f32[1,1,512], index: 2, kind: input, shape index: {}]
  %s3 = inlined_call_operand.hbm [shape: bf16[1,16,512], index: 3, kind: output, shape index: {}]
  %s4 = sld [smem:[#allocation0]]
  $region65: #{autoencoder_forward.10} parent=0
    _
  %s6 = ssub.s32 1, %s4
  %s7 = scalar_select 0, %s6, %s4
  $region1: #{autoencoder_forward.10} parent=0
    #allocation3 [shape = 'u8[65536]{0}', space=vmem, size = 0x10000, scoped, tag = 'input window, operand 0, single buffered']
    #allocation4 [shape = 's32[2]{0}', space=sflag, size = 0x8, scoped, tag = 'scoped memory for autoencoder_forward.10']
    #allocation5 [shape = 's32[2]{0}', space=sflag, size = 0x8, scoped, tag = 'scoped memory for autoencoder_forward.10']
    #allocation6 [shape = 'u8[2097152]{0}', space=vmem, size = 0x200000, scoped, tag = 'input window, operand 1']
    #allocation7 [shape = 's32[2]{0}', space=sflag, size = 0x8, scoped, tag = 'scoped memory for autoencoder_forward.10']
    #allocation8 [shape = 'u8[2048]{0}', space=vmem, size = 0x800, scoped, tag = 'input window, operand 2']
    #allocation9 [shape = 'u8[16384]{0}', space=vmem, size = 0x4000, scoped, tag = 'output window, operand 0']
    %8 = vsyncpa [#allocation4], 0
    %9 = vsyncpa [#allocation7], 0
    %s10 = scalar_lea.sflag [#allocation7], 1
    %11 = vsyncpa %s10, 0
    %12 = vsyncpa [#allocation5], 0
    %s13 = scalar_lea.sflag [#allocation5], 1
    %14 = vsyncpa %s13, 0
    loop: start=0, step=1, limit=4
    $region2: #{autoencoder_forward.10} parent=1 // loop_pre_header
      _
    $region3: #{autoencoder_forward.10} parent=1 // loop_header
      %s16 = sphi 0, %s20
      %p17 = scmp.ge.s32.totalorder %s16, 4
      %s23 = sphi 0, %s49
      %s24 = sphi 0, %s45
      %s25 = sphi 0, %s41
      %s26 = sphi 0, %s37
      %s27 = sphi 0, %s23
      %s28 = sphi 0, %s24
      %s29 = sphi 0, %s25
      %s30 = sphi 0, %s26
      %s31 = sphi 0, %s27
      %s32 = sphi 0, %s28
      %s33 = sphi 0, %s29
      %s34 = sphi 0, %s30
      %s56 = sphi 0, %s58
      %s59 = sphi 0, %s56
      %s60 = sphi 0, %s59
      %s76 = sphi 0, %s60
      %s86 = sphi 0, %s88
      %s89 = sphi 0, %s86
      %s90 = sphi 0, %s89
      %s106 = sphi 0, %s90
      %s114 = sphi 0, %s116
      %s117 = sphi 0, %s114
      %s118 = sphi 0, %s117
      %s134 = sphi 0, %s118
      %s144 = sphi 0, %s146
      %s147 = sphi 0, %s144
      %s148 = sphi 0, %s147
      %s164 = sphi 0, %s148
    $region4: #{autoencoder_forward.10} parent=1 // loop_header_branch
      %19 = sbr.rel (%p17) target = $region8
    $region5: #{autoencoder_forward.10} parent=1 // loop_body
      %s21 = ssub.s32 %s16, 1
      %s22 = ssub.s32 %s16, 2
      %s35 = sadd.s32 1, %s26
      %p36 = scmp.ge.s32.totalorder %s35, 1
      %s37 = scalar_select %p36, 0, %s35
      %s38 = sadd.s32 1, %s25
      %s39 = scalar_select %p36, %s38, %s25
      %p40 = scmp.ge.s32.totalorder %s39, 2
      %s41 = scalar_select %p40, 0, %s39
      %s42 = sadd.s32 1, %s24
      %s43 = scalar_select %p40, %s42, %s24
      %p44 = scmp.ge.s32.totalorder %s43, 1
      %s45 = scalar_select %p44, 0, %s43
      %s46 = sadd.s32 1, %s23
      %s47 = scalar_select %p44, %s46, %s23
      %p48 = scmp.ge.s32.totalorder %s47, 1
      %s49 = scalar_select %p48, 0, %s47
      %s50 = ssub.s32 %s23, %s49
      %s51 = ssub.s32 %s24, %s45
      %s52 = sor.u32 %s50, %s51
      %s53 = ssub.s32 %s26, %s37
      %s54 = sor.u32 %s52, %s53
      %p55 = scmp.eq.s32.totalorder %s54, 0
      %s57 = sadd.s32 %s56, 1
      %s58 = scalar_select %p55, %s56, %s57
      %p61 = pneg %p55
      %p62 = scmp.eq.s32.totalorder %s16, 1
      %p63 = por %p61, %p62
      %p64 = scmp.ne.s32.totalorder %s56, %s59
      %p65 = scmp.eq.s32.totalorder %s16, 0
      %p66 = por %p64, %p65
      %p67 = scmp.ne.s32.totalorder %s56, %s59
      %p68 = scmp.eq.s32.totalorder %s21, 1
      %p69 = por %p67, %p68
      %p70 = scmp.ne.s32.totalorder %s59, %s60
      %p71 = scmp.eq.s32.totalorder %s21, 0
      %p72 = por %p70, %p71
      %p73 = scmp.ne.s32.totalorder %s59, %s60
      %p74 = scmp.eq.s32.totalorder %s22, 1
      %p75 = por %p73, %p74
      %p77 = scmp.ne.s32.totalorder %s60, %s76
      %p78 = scmp.eq.s32.totalorder %s22, 0
      %p79 = por %p77, %p78
      %s80 = ssub.s32 %s23, %s49
      %s81 = ssub.s32 %s26, %s37
      %s82 = sor.u32 %s80, %s81
      %s83 = ssub.s32 %s25, %s41
      %s84 = sor.u32 %s82, %s83
      %p85 = scmp.eq.s32.totalorder %s84, 0
      %s87 = sadd.s32 %s86, 1
      %s88 = scalar_select %p85, %s86, %s87
      %p91 = pneg %p85
      %p92 = scmp.eq.s32.totalorder %s16, 1
      %p93 = por %p91, %p92
      %p94 = scmp.ne.s32.totalorder %s86, %s89
      %p95 = scmp.eq.s32.totalorder %s16, 0
      %p96 = por %p94, %p95
      %p97 = scmp.ne.s32.totalorder %s86, %s89
      %p98 = scmp.eq.s32.totalorder %s21, 1
      %p99 = por %p97, %p98
      %p100 = scmp.ne.s32.totalorder %s89, %s90
      %p101 = scmp.eq.s32.totalorder %s21, 0
      %p102 = por %p100, %p101
      %p103 = scmp.ne.s32.totalorder %s89, %s90
      %p104 = scmp.eq.s32.totalorder %s22, 1
      %p105 = por %p103, %p104
      %p107 = scmp.ne.s32.totalorder %s90, %s106
      %p108 = scmp.eq.s32.totalorder %s22, 0
      %p109 = por %p107, %p108
      %s110 = ssub.s32 %s23, %s49
      %s111 = ssub.s32 %s25, %s41
      %s112 = sor.u32 %s110, %s111
      %p113 = scmp.eq.s32.totalorder %s112, 0
      %s115 = sadd.s32 %s114, 1
      %s116 = scalar_select %p113, %s114, %s115
      %p119 = pneg %p113
      %p120 = scmp.eq.s32.totalorder %s16, 1
      %p121 = por %p119, %p120
      %p122 = scmp.ne.s32.totalorder %s114, %s117
      %p123 = scmp.eq.s32.totalorder %s16, 0
      %p124 = por %p122, %p123
      %p125 = scmp.ne.s32.totalorder %s114, %s117
      %p126 = scmp.eq.s32.totalorder %s21, 1
      %p127 = por %p125, %p126
      %p128 = scmp.ne.s32.totalorder %s117, %s118
      %p129 = scmp.eq.s32.totalorder %s21, 0
      %p130 = por %p128, %p129
      %p131 = scmp.ne.s32.totalorder %s117, %s118
      %p132 = scmp.eq.s32.totalorder %s22, 1
      %p133 = por %p131, %p132
      %p135 = scmp.ne.s32.totalorder %s118, %s134
      %p136 = scmp.eq.s32.totalorder %s22, 0
      %p137 = por %p135, %p136
      %s138 = ssub.s32 %s23, %s49
      %s139 = ssub.s32 %s24, %s45
      %s140 = sor.u32 %s138, %s139
      %s141 = ssub.s32 %s25, %s41
      %s142 = sor.u32 %s140, %s141
      %p143 = scmp.eq.s32.totalorder %s142, 0
      %s145 = sadd.s32 %s144, 1
      %s146 = scalar_select %p143, %s144, %s145
      %p149 = pneg %p143
      %p150 = scmp.eq.s32.totalorder %s16, 1
      %p151 = por %p149, %p150
      %p152 = scmp.ne.s32.totalorder %s144, %s147
      %p153 = scmp.eq.s32.totalorder %s16, 0
      %p154 = por %p152, %p153
      %p155 = scmp.ne.s32.totalorder %s144, %s147
      %p156 = scmp.eq.s32.totalorder %s21, 1
      %p157 = por %p155, %p156
      %p158 = scmp.ne.s32.totalorder %s147, %s148
      %p159 = scmp.eq.s32.totalorder %s21, 0
      %p160 = por %p158, %p159
      %p161 = scmp.ne.s32.totalorder %s147, %s148
      %p162 = scmp.eq.s32.totalorder %s22, 1
      %p163 = por %p161, %p162
      %p165 = scmp.ne.s32.totalorder %s148, %s164
      %p166 = scmp.eq.s32.totalorder %s22, 0
      %p167 = por %p165, %p166
      %p168 = scmp.le.s32.totalorder 1, %s16
      %p169 = scmp.lt.s32.totalorder %s16, 3
      %p170 = pnand %p168, %p169
      %p171 = pneg %p170
      // Predicated region
      $region9: #{autoencoder_forward.10} parent=5 // pred_check
        _
      $region10: #{autoencoder_forward.10} parent=5 // pred_check_branch
        %173 = sbr.rel (%p170) target = $region12
      $region11: #{autoencoder_forward.10} parent=5 // pred_region
        %s174 = ssub.s32 %s16, 1
        // Predicated region
        $region13: #{autoencoder_forward.10} parent=11 // pred_check
          %p175 = pneg %p72
        $region14: #{autoencoder_forward.10} parent=11 // pred_check_branch
          %177 = sbr.rel (%p175) target = $region16
        $region15: #{autoencoder_forward.10} parent=11 // pred_region
          %s178 = smul.u32 2, %s28
          %s179 = smul.u32 16, %s30
          %s181 = ssub.s32 2048, 2048
          %182 = vsyncadd [#allocation4], %s181
          %s183 = smul.addr %s178, 16
          %s184 = sadd.s32 %s179, %s183
          %s185 = smul.addr %s27, 32
          %s186 = sadd.s32 %s184, %s185
          %s187 = smul.addr %s186, 64
          %s188 = scalar_lea.hbm %s0, %s187
          %s189 = sshll.u32 [#allocation3], 4
          %s190 = int_to_ptr.vmem [resolvable:$true] %s189
          %195 = dma.hbm_to_vmem [thread:$0]  %s188, 2048, %s190, [#allocation4], 1024, 1024, 64
        $region16: #{autoencoder_forward.10} parent=11 // pred_fallthru
          _
      $region12: #{autoencoder_forward.10} parent=5 // pred_fallthru
        _
      %p196 = scmp.lt.s32.totalorder %s16, 2
      // Predicated region
      $region17: #{autoencoder_forward.10} parent=5 // pred_check
        %p197 = pneg %p196
      $region18: #{autoencoder_forward.10} parent=5 // pred_check_branch
        %199 = sbr.rel (%p197) target = $region20
      $region19: #{autoencoder_forward.10} parent=5 // pred_region
        // Predicated region
        $region21: #{autoencoder_forward.10} parent=19 // pred_check
          %p200 = pneg %p96
        $region22: #{autoencoder_forward.10} parent=19 // pred_check_branch
          %202 = sbr.rel (%p200) target = $region24
        $region23: #{autoencoder_forward.10} parent=19 // pred_region
          %s203 = sand.u32 %s16, 1
          %s204 = scalar_lea.sflag [#allocation7], %s203
          %s205 = sand.u32 %s86, 1
          %s206 = smul.addr %s205, 2048
          %s207 = scalar_lea.vmem [#allocation6], %s206
          %s208 = smul.u32 256, %s26
          %s209 = smul.u32 2, %s25
          %s211 = ssub.s32 32768, 32768
          %212 = vsyncadd %s204, %s211
          %s213 = smul.addr %s208, 4
          %s214 = sadd.s32 %s209, %s213
          %s215 = smul.addr %s23, 1024
          %s216 = sadd.s32 %s214, %s215
          %s217 = smul.addr %s216, 64
          %s218 = scalar_lea.hbm %s1, %s217
          %s219 = sshll.u32 %s207, 4
          %s220 = int_to_ptr.vmem [resolvable:$true] %s219
          %225 = dma.hbm_to_vmem [thread:$0]  %s218, 32768, %s220, %s204, 256, 128, 8
        $region24: #{autoencoder_forward.10} parent=19 // pred_fallthru
          _
        // Predicated region
        $region25: #{autoencoder_forward.10} parent=19 // pred_check
          %p226 = pneg %p124
        $region26: #{autoencoder_forward.10} parent=19 // pred_check_branch
          %228 = sbr.rel (%p226) target = $region28
        $region27: #{autoencoder_forward.10} parent=19 // pred_region
          %s229 = sand.u32 %s16, 1
          %s230 = scalar_lea.sflag [#allocation7], %s229
          %s231 = sand.u32 %s114, 1
          %s232 = smul.addr %s231, 2
          %s233 = scalar_lea.vmem [#allocation8], %s232
          %s234 = smul.u32 2, %s25
          %s236 = ssub.s32 32, 32
          %237 = vsyncadd %s230, %s236
          %s238 = smul.addr %s23, 4
          %s239 = sadd.s32 %s234, %s238
          %s240 = smul.addr %s239, 16
          %s241 = scalar_lea.hbm %s2, %s240
          %s243 = sshll.u32 %s233, 4
          %s244 = int_to_ptr.vmem [resolvable:$true] %s243
          %246 = dma.hbm_to_vmem [thread:$0]  %s241, 32, %s244, %s230
        $region28: #{autoencoder_forward.10} parent=19 // pred_fallthru
          _
      $region20: #{autoencoder_forward.10} parent=5 // pred_fallthru
        _
      %p247 = scmp.le.s32.totalorder 1, %s16
      %p248 = scmp.lt.s32.totalorder %s16, 3
      %p249 = pnand %p247, %p248
      %p250 = pneg %p249
      // Predicated region
      $region29: #{autoencoder_forward.10} parent=5 // pred_check
        _
      $region30: #{autoencoder_forward.10} parent=5 // pred_check_branch
        %252 = sbr.rel (%p249) target = $region32
      $region31: #{autoencoder_forward.10} parent=5 // pred_region
        %s253 = ssub.s32 %s16, 1
        // Predicated region
        $region33: #{autoencoder_forward.10} parent=31 // pred_check
          %p254 = pneg %p72
        $region34: #{autoencoder_forward.10} parent=31 // pred_check_branch
          %256 = sbr.rel (%p254) target = $region36
        $region35: #{autoencoder_forward.10} parent=31 // pred_region
          %257 = dma.done [#allocation4], 2048
        $region36: #{autoencoder_forward.10} parent=31 // pred_fallthru
          _
        %s258 = sand.u32 %s21, 1
        %s259 = scalar_lea.sflag [#allocation7], %s258
        %s260 = sand.u32 %s89, 1
        %s261 = smul.addr %s260, 2048
        %s262 = scalar_lea.vmem [#allocation6], %s261
        // Predicated region
        $region37: #{autoencoder_forward.10} parent=31 // pred_check
          %p263 = pneg %p102
        $region38: #{autoencoder_forward.10} parent=31 // pred_check_branch
          %265 = sbr.rel (%p263) target = $region40
        $region39: #{autoencoder_forward.10} parent=31 // pred_region
          %266 = dma.done %s259, 32768
        $region40: #{autoencoder_forward.10} parent=31 // pred_fallthru
          _
        %s267 = sand.u32 %s21, 1
        %s268 = scalar_lea.sflag [#allocation7], %s267
        %s269 = sand.u32 %s117, 1
        %s270 = smul.addr %s269, 2
        %s271 = scalar_lea.vmem [#allocation8], %s270
        // Predicated region
        $region41: #{autoencoder_forward.10} parent=31 // pred_check
          %p272 = pneg %p130
        $region42: #{autoencoder_forward.10} parent=31 // pred_check_branch
          %274 = sbr.rel (%p272) target = $region44
        $region43: #{autoencoder_forward.10} parent=31 // pred_region
          %275 = dma.done %s268, 32
        $region44: #{autoencoder_forward.10} parent=31 // pred_fallthru
          _
        %p276 = pneg %p72
        %p277 = pneg %p69
        %s278 = sand.u32 %s21, 1
        %s279 = scalar_lea.sflag [#allocation7], %s278
        %s280 = sand.u32 %s89, 1
        %s281 = smul.addr %s280, 2048
        %s282 = scalar_lea.vmem [#allocation6], %s281
        %p283 = pneg %p102
        %p284 = pneg %p99
        %s285 = sand.u32 %s21, 1
        %s286 = scalar_lea.sflag [#allocation7], %s285
        %s287 = sand.u32 %s117, 1
        %s288 = smul.addr %s287, 2
        %s289 = scalar_lea.vmem [#allocation8], %s288
        %p290 = pneg %p130
        %p291 = pneg %p127
        %p292 = pneg %p160
        %p293 = pneg %p157
        %s294 = sand.u32 %s147, 1
        %s295 = scalar_lea.sflag [#allocation5], %s294
        %s296 = sand.u32 %s147, 1
        %s297 = smul.addr %s296, 16
        %s298 = scalar_lea.vmem [#allocation9], %s297
        %s299 = smul.u32 2, %s28
        %s300 = smul.u32 16, %s30
        %s301 = smul.u32 256, %s30
        %s302 = smul.u32 2, %s29
        %s303 = smul.u32 2, %s29
        %s304 = smul.u32 2, %s28
        %s305 = smul.u32 2, %s29
        %p306 = scmp.eq.s32.totalorder %s30, 0
        // Predicated region
        $region45: #{autoencoder_forward.10} parent=31 // pred_check
          %p307 = pneg %p306
        $region46: #{autoencoder_forward.10} parent=31 // pred_check_branch
          %309 = sbr.rel (%p307) target = $region48
        $region47: #{autoencoder_forward.10} parent=31 // pred_region
          %310 = vst [vmem:[#allocation2] sm:$0xff] 0.0
          %311 = vst [vmem:[#allocation2 + $0x8] sm:$0xff] 0.0
          %312 = vst [vmem:[#allocation2 + $0x10] sm:$0xff] 0.0
          %313 = vst [vmem:[#allocation2 + $0x18] sm:$0xff] 0.0
        $region48: #{autoencoder_forward.10} parent=31 // pred_fallthru
          _
        %v314 = vld [vmem:[#allocation2] sm:$0xff]
        %v315 = vld [vmem:[#allocation2 + $0x8] sm:$0xff]
        %v316 = vld [vmem:[#allocation2 + $0x10] sm:$0xff]
        %v317 = vld [vmem:[#allocation2 + $0x18] sm:$0xff]
        %v318 = vld [vmem:[#allocation3] sm:$0xff]
        %v319 = vld [vmem:[#allocation3 + $0x8] sm:$0xff]
        %v320 = vld [vmem:[#allocation3 + $0x10] sm:$0xff]
        %v321 = vld [vmem:[#allocation3 + $0x18] sm:$0xff]
        %v322 = vld [vmem:[#allocation3 + $0x20] sm:$0xff]
        %v323 = vld [vmem:[#allocation3 + $0x28] sm:$0xff]
        %v324 = vld [vmem:[#allocation3 + $0x30] sm:$0xff]
        %v325 = vld [vmem:[#allocation3 + $0x38] sm:$0xff]
        %v326 = vld [vmem:[#allocation3 + $0x40] sm:$0xff]
        %v327 = vld [vmem:[#allocation3 + $0x48] sm:$0xff]
        %v328 = vld [vmem:[#allocation3 + $0x50] sm:$0xff]
        %v329 = vld [vmem:[#allocation3 + $0x58] sm:$0xff]
        %v330 = vld [vmem:[#allocation3 + $0x60] sm:$0xff]
        %v331 = vld [vmem:[#allocation3 + $0x68] sm:$0xff]
        %v332 = vld [vmem:[#allocation3 + $0x70] sm:$0xff]
        %v333 = vld [vmem:[#allocation3 + $0x78] sm:$0xff]
        %v334 = vld [vmem:[%s262] sm:$0xff]
        %v335 = vld [vmem:[%s262 + $0x8] sm:$0xff]
        %v336 = vld [vmem:[%s262 + $0x10] sm:$0xff]
        %v337 = vld [vmem:[%s262 + $0x18] sm:$0xff]
        %v338 = vld [vmem:[%s262 + $0x20] sm:$0xff]
        %v339 = vld [vmem:[%s262 + $0x28] sm:$0xff]
        %v340 = vld [vmem:[%s262 + $0x30] sm:$0xff]
        %v341 = vld [vmem:[%s262 + $0x38] sm:$0xff]
        %v342 = vld [vmem:[%s262 + $0x40] sm:$0xff]
        %v343 = vld [vmem:[%s262 + $0x48] sm:$0xff]
        %v344 = vld [vmem:[%s262 + $0x50] sm:$0xff]
        %v345 = vld [vmem:[%s262 + $0x58] sm:$0xff]
        %v346 = vld [vmem:[%s262 + $0x60] sm:$0xff]
        %v347 = vld [vmem:[%s262 + $0x68] sm:$0xff]
        %v348 = vld [vmem:[%s262 + $0x70] sm:$0xff]
        %v349 = vld [vmem:[%s262 + $0x78] sm:$0xff]
        %v350 = vld [vmem:[%s262 + $0x80] sm:$0xff]
        %v351 = vld [vmem:[%s262 + $0x88] sm:$0xff]
        %v352 = vld [vmem:[%s262 + $0x90] sm:$0xff]
        %v353 = vld [vmem:[%s262 + $0x98] sm:$0xff]
        %v354 = vld [vmem:[%s262 + $0xa0] sm:$0xff]
        %v355 = vld [vmem:[%s262 + $0xa8] sm:$0xff]
        %v356 = vld [vmem:[%s262 + $0xb0] sm:$0xff]
        %v357 = vld [vmem:[%s262 + $0xb8] sm:$0xff]
        %v358 = vld [vmem:[%s262 + $0xc0] sm:$0xff]
        %v359 = vld [vmem:[%s262 + $0xc8] sm:$0xff]
        %v360 = vld [vmem:[%s262 + $0xd0] sm:$0xff]
        %v361 = vld [vmem:[%s262 + $0xd8] sm:$0xff]
        %v362 = vld [vmem:[%s262 + $0xe0] sm:$0xff]
        %v363 = vld [vmem:[%s262 + $0xe8] sm:$0xff]
        %v364 = vld [vmem:[%s262 + $0xf0] sm:$0xff]
        %v365 = vld [vmem:[%s262 + $0xf8] sm:$0xff]
        %v366 = vld [vmem:[%s262 + $0x100] sm:$0xff]
        %v367 = vld [vmem:[%s262 + $0x108] sm:$0xff]
        %v368 = vld [vmem:[%s262 + $0x110] sm:$0xff]
        %v369 = vld [vmem:[%s262 + $0x118] sm:$0xff]
        %v370 = vld [vmem:[%s262 + $0x120] sm:$0xff]
        %v371 = vld [vmem:[%s262 + $0x128] sm:$0xff]
        %v372 = vld [vmem:[%s262 + $0x130] sm:$0xff]
        %v373 = vld [vmem:[%s262 + $0x138] sm:$0xff]
        %v374 = vld [vmem:[%s262 + $0x140] sm:$0xff]
        %v375 = vld [vmem:[%s262 + $0x148] sm:$0xff]
        %v376 = vld [vmem:[%s262 + $0x150] sm:$0xff]
        %v377 = vld [vmem:[%s262 + $0x158] sm:$0xff]
        %v378 = vld [vmem:[%s262 + $0x160] sm:$0xff]
        %v379 = vld [vmem:[%s262 + $0x168] sm:$0xff]
        %v380 = vld [vmem:[%s262 + $0x170] sm:$0xff]
        %v381 = vld [vmem:[%s262 + $0x178] sm:$0xff]
        %v382 = vld [vmem:[%s262 + $0x180] sm:$0xff]
        %v383 = vld [vmem:[%s262 + $0x188] sm:$0xff]
        %v384 = vld [vmem:[%s262 + $0x190] sm:$0xff]
        %v385 = vld [vmem:[%s262 + $0x198] sm:$0xff]
        %v386 = vld [vmem:[%s262 + $0x1a0] sm:$0xff]
        %v387 = vld [vmem:[%s262 + $0x1a8] sm:$0xff]
        %v388 = vld [vmem:[%s262 + $0x1b0] sm:$0xff]
        %v389 = vld [vmem:[%s262 + $0x1b8] sm:$0xff]
        %v390 = vld [vmem:[%s262 + $0x1c0] sm:$0xff]
        %v391 = vld [vmem:[%s262 + $0x1c8] sm:$0xff]
        %v392 = vld [vmem:[%s262 + $0x1d0] sm:$0xff]
        %v393 = vld [vmem:[%s262 + $0x1d8] sm:$0xff]
        %v394 = vld [vmem:[%s262 + $0x1e0] sm:$0xff]
        %v395 = vld [vmem:[%s262 + $0x1e8] sm:$0xff]
        %v396 = vld [vmem:[%s262 + $0x1f0] sm:$0xff]
        %v397 = vld [vmem:[%s262 + $0x1f8] sm:$0xff]
        %v398 = vld [vmem:[%s262 + $0x200] sm:$0xff]
        %v399 = vld [vmem:[%s262 + $0x208] sm:$0xff]
        %v400 = vld [vmem:[%s262 + $0x210] sm:$0xff]
        %v401 = vld [vmem:[%s262 + $0x218] sm:$0xff]
        %v402 = vld [vmem:[%s262 + $0x220] sm:$0xff]
        %v403 = vld [vmem:[%s262 + $0x228] sm:$0xff]
        %v404 = vld [vmem:[%s262 + $0x230] sm:$0xff]
        %v405 = vld [vmem:[%s262 + $0x238] sm:$0xff]
        %v406 = vld [vmem:[%s262 + $0x240] sm:$0xff]
        %v407 = vld [vmem:[%s262 + $0x248] sm:$0xff]
        %v408 = vld [vmem:[%s262 + $0x250] sm:$0xff]
        %v409 = vld [vmem:[%s262 + $0x258] sm:$0xff]
        %v410 = vld [vmem:[%s262 + $0x260] sm:$0xff]
        %v411 = vld [vmem:[%s262 + $0x268] sm:$0xff]
        %v412 = vld [vmem:[%s262 + $0x270] sm:$0xff]
        %v413 = vld [vmem:[%s262 + $0x278] sm:$0xff]
        %v414 = vld [vmem:[%s262 + $0x280] sm:$0xff]
        %v415 = vld [vmem:[%s262 + $0x288] sm:$0xff]
        %v416 = vld [vmem:[%s262 + $0x290] sm:$0xff]
        %v417 = vld [vmem:[%s262 + $0x298] sm:$0xff]
        %v418 = vld [vmem:[%s262 + $0x2a0] sm:$0xff]
        %v419 = vld [vmem:[%s262 + $0x2a8] sm:$0xff]
        %v420 = vld [vmem:[%s262 + $0x2b0] sm:$0xff]
        %v421 = vld [vmem:[%s262 + $0x2b8] sm:$0xff]
        %v422 = vld [vmem:[%s262 + $0x2c0] sm:$0xff]
        %v423 = vld [vmem:[%s262 + $0x2c8] sm:$0xff]
        %v424 = vld [vmem:[%s262 + $0x2d0] sm:$0xff]
        %v425 = vld [vmem:[%s262 + $0x2d8] sm:$0xff]
        %v426 = vld [vmem:[%s262 + $0x2e0] sm:$0xff]
        %v427 = vld [vmem:[%s262 + $0x2e8] sm:$0xff]
        %v428 = vld [vmem:[%s262 + $0x2f0] sm:$0xff]
        %v429 = vld [vmem:[%s262 + $0x2f8] sm:$0xff]
        %v430 = vld [vmem:[%s262 + $0x300] sm:$0xff]
        %v431 = vld [vmem:[%s262 + $0x308] sm:$0xff]
        %v432 = vld [vmem:[%s262 + $0x310] sm:$0xff]
        %v433 = vld [vmem:[%s262 + $0x318] sm:$0xff]
        %v434 = vld [vmem:[%s262 + $0x320] sm:$0xff]
        %v435 = vld [vmem:[%s262 + $0x328] sm:$0xff]
        %v436 = vld [vmem:[%s262 + $0x330] sm:$0xff]
        %v437 = vld [vmem:[%s262 + $0x338] sm:$0xff]
        %v438 = vld [vmem:[%s262 + $0x340] sm:$0xff]
        %v439 = vld [vmem:[%s262 + $0x348] sm:$0xff]
        %v440 = vld [vmem:[%s262 + $0x350] sm:$0xff]
        %v441 = vld [vmem:[%s262 + $0x358] sm:$0xff]
        %v442 = vld [vmem:[%s262 + $0x360] sm:$0xff]
        %v443 = vld [vmem:[%s262 + $0x368] sm:$0xff]
        %v444 = vld [vmem:[%s262 + $0x370] sm:$0xff]
        %v445 = vld [vmem:[%s262 + $0x378] sm:$0xff]
        %v446 = vld [vmem:[%s262 + $0x380] sm:$0xff]
        %v447 = vld [vmem:[%s262 + $0x388] sm:$0xff]
        %v448 = vld [vmem:[%s262 + $0x390] sm:$0xff]
        %v449 = vld [vmem:[%s262 + $0x398] sm:$0xff]
        %v450 = vld [vmem:[%s262 + $0x3a0] sm:$0xff]
        %v451 = vld [vmem:[%s262 + $0x3a8] sm:$0xff]
        %v452 = vld [vmem:[%s262 + $0x3b0] sm:$0xff]
        %v453 = vld [vmem:[%s262 + $0x3b8] sm:$0xff]
        %v454 = vld [vmem:[%s262 + $0x3c0] sm:$0xff]
        %v455 = vld [vmem:[%s262 + $0x3c8] sm:$0xff]
        %v456 = vld [vmem:[%s262 + $0x3d0] sm:$0xff]
        %v457 = vld [vmem:[%s262 + $0x3d8] sm:$0xff]
        %v458 = vld [vmem:[%s262 + $0x3e0] sm:$0xff]
        %v459 = vld [vmem:[%s262 + $0x3e8] sm:$0xff]
        %v460 = vld [vmem:[%s262 + $0x3f0] sm:$0xff]
        %v461 = vld [vmem:[%s262 + $0x3f8] sm:$0xff]
        %v462 = vld [vmem:[%s262 + $0x400] sm:$0xff]
        %v463 = vld [vmem:[%s262 + $0x408] sm:$0xff]
        %v464 = vld [vmem:[%s262 + $0x410] sm:$0xff]
        %v465 = vld [vmem:[%s262 + $0x418] sm:$0xff]
        %v466 = vld [vmem:[%s262 + $0x420] sm:$0xff]
        %v467 = vld [vmem:[%s262 + $0x428] sm:$0xff]
        %v468 = vld [vmem:[%s262 + $0x430] sm:$0xff]
        %v469 = vld [vmem:[%s262 + $0x438] sm:$0xff]
        %v470 = vld [vmem:[%s262 + $0x440] sm:$0xff]
        %v471 = vld [vmem:[%s262 + $0x448] sm:$0xff]
        %v472 = vld [vmem:[%s262 + $0x450] sm:$0xff]
        %v473 = vld [vmem:[%s262 + $0x458] sm:$0xff]
        %v474 = vld [vmem:[%s262 + $0x460] sm:$0xff]
        %v475 = vld [vmem:[%s262 + $0x468] sm:$0xff]
        %v476 = vld [vmem:[%s262 + $0x470] sm:$0xff]
        %v477 = vld [vmem:[%s262 + $0x478] sm:$0xff]
        %v478 = vld [vmem:[%s262 + $0x480] sm:$0xff]
        %v479 = vld [vmem:[%s262 + $0x488] sm:$0xff]
        %v480 = vld [vmem:[%s262 + $0x490] sm:$0xff]
        %v481 = vld [vmem:[%s262 + $0x498] sm:$0xff]
        %v482 = vld [vmem:[%s262 + $0x4a0] sm:$0xff]
        %v483 = vld [vmem:[%s262 + $0x4a8] sm:$0xff]
        %v484 = vld [vmem:[%s262 + $0x4b0] sm:$0xff]
        %v485 = vld [vmem:[%s262 + $0x4b8] sm:$0xff]
        %v486 = vld [vmem:[%s262 + $0x4c0] sm:$0xff]
        %v487 = vld [vmem:[%s262 + $0x4c8] sm:$0xff]
        %v488 = vld [vmem:[%s262 + $0x4d0] sm:$0xff]
        %v489 = vld [vmem:[%s262 + $0x4d8] sm:$0xff]
        %v490 = vld [vmem:[%s262 + $0x4e0] sm:$0xff]
        %v491 = vld [vmem:[%s262 + $0x4e8] sm:$0xff]
        %v492 = vld [vmem:[%s262 + $0x4f0] sm:$0xff]
        %v493 = vld [vmem:[%s262 + $0x4f8] sm:$0xff]
        %v494 = vld [vmem:[%s262 + $0x500] sm:$0xff]
        %v495 = vld [vmem:[%s262 + $0x508] sm:$0xff]
        %v496 = vld [vmem:[%s262 + $0x510] sm:$0xff]
        %v497 = vld [vmem:[%s262 + $0x518] sm:$0xff]
        %v498 = vld [vmem:[%s262 + $0x520] sm:$0xff]
        %v499 = vld [vmem:[%s262 + $0x528] sm:$0xff]
        %v500 = vld [vmem:[%s262 + $0x530] sm:$0xff]
        %v501 = vld [vmem:[%s262 + $0x538] sm:$0xff]
        %v502 = vld [vmem:[%s262 + $0x540] sm:$0xff]
        %v503 = vld [vmem:[%s262 + $0x548] sm:$0xff]
        %v504 = vld [vmem:[%s262 + $0x550] sm:$0xff]
        %v505 = vld [vmem:[%s262 + $0x558] sm:$0xff]
        %v506 = vld [vmem:[%s262 + $0x560] sm:$0xff]
        %v507 = vld [vmem:[%s262 + $0x568] sm:$0xff]
        %v508 = vld [vmem:[%s262 + $0x570] sm:$0xff]
        %v509 = vld [vmem:[%s262 + $0x578] sm:$0xff]
        %v510 = vld [vmem:[%s262 + $0x580] sm:$0xff]
        %v511 = vld [vmem:[%s262 + $0x588] sm:$0xff]
        %v512 = vld [vmem:[%s262 + $0x590] sm:$0xff]
        %v513 = vld [vmem:[%s262 + $0x598] sm:$0xff]
        %v514 = vld [vmem:[%s262 + $0x5a0] sm:$0xff]
        %v515 = vld [vmem:[%s262 + $0x5a8] sm:$0xff]
        %v516 = vld [vmem:[%s262 + $0x5b0] sm:$0xff]
        %v517 = vld [vmem:[%s262 + $0x5b8] sm:$0xff]
        %v518 = vld [vmem:[%s262 + $0x5c0] sm:$0xff]
        %v519 = vld [vmem:[%s262 + $0x5c8] sm:$0xff]
        %v520 = vld [vmem:[%s262 + $0x5d0] sm:$0xff]
        %v521 = vld [vmem:[%s262 + $0x5d8] sm:$0xff]
        %v522 = vld [vmem:[%s262 + $0x5e0] sm:$0xff]
        %v523 = vld [vmem:[%s262 + $0x5e8] sm:$0xff]
        %v524 = vld [vmem:[%s262 + $0x5f0] sm:$0xff]
        %v525 = vld [vmem:[%s262 + $0x5f8] sm:$0xff]
        %v526 = vld [vmem:[%s262 + $0x600] sm:$0xff]
        %v527 = vld [vmem:[%s262 + $0x608] sm:$0xff]
        %v528 = vld [vmem:[%s262 + $0x610] sm:$0xff]
        %v529 = vld [vmem:[%s262 + $0x618] sm:$0xff]
        %v530 = vld [vmem:[%s262 + $0x620] sm:$0xff]
        %v531 = vld [vmem:[%s262 + $0x628] sm:$0xff]
        %v532 = vld [vmem:[%s262 + $0x630] sm:$0xff]
        %v533 = vld [vmem:[%s262 + $0x638] sm:$0xff]
        %v534 = vld [vmem:[%s262 + $0x640] sm:$0xff]
        %v535 = vld [vmem:[%s262 + $0x648] sm:$0xff]
        %v536 = vld [vmem:[%s262 + $0x650] sm:$0xff]
        %v537 = vld [vmem:[%s262 + $0x658] sm:$0xff]
        %v538 = vld [vmem:[%s262 + $0x660] sm:$0xff]
        %v539 = vld [vmem:[%s262 + $0x668] sm:$0xff]
        %v540 = vld [vmem:[%s262 + $0x670] sm:$0xff]
        %v541 = vld [vmem:[%s262 + $0x678] sm:$0xff]
        %v542 = vld [vmem:[%s262 + $0x680] sm:$0xff]
        %v543 = vld [vmem:[%s262 + $0x688] sm:$0xff]
        %v544 = vld [vmem:[%s262 + $0x690] sm:$0xff]
        %v545 = vld [vmem:[%s262 + $0x698] sm:$0xff]
        %v546 = vld [vmem:[%s262 + $0x6a0] sm:$0xff]
        %v547 = vld [vmem:[%s262 + $0x6a8] sm:$0xff]
        %v548 = vld [vmem:[%s262 + $0x6b0] sm:$0xff]
        %v549 = vld [vmem:[%s262 + $0x6b8] sm:$0xff]
        %v550 = vld [vmem:[%s262 + $0x6c0] sm:$0xff]
        %v551 = vld [vmem:[%s262 + $0x6c8] sm:$0xff]
        %v552 = vld [vmem:[%s262 + $0x6d0] sm:$0xff]
        %v553 = vld [vmem:[%s262 + $0x6d8] sm:$0xff]
        %v554 = vld [vmem:[%s262 + $0x6e0] sm:$0xff]
        %v555 = vld [vmem:[%s262 + $0x6e8] sm:$0xff]
        %v556 = vld [vmem:[%s262 + $0x6f0] sm:$0xff]
        %v557 = vld [vmem:[%s262 + $0x6f8] sm:$0xff]
        %v558 = vld [vmem:[%s262 + $0x700] sm:$0xff]
        %v559 = vld [vmem:[%s262 + $0x708] sm:$0xff]
        %v560 = vld [vmem:[%s262 + $0x710] sm:$0xff]
        %v561 = vld [vmem:[%s262 + $0x718] sm:$0xff]
        %v562 = vld [vmem:[%s262 + $0x720] sm:$0xff]
        %v563 = vld [vmem:[%s262 + $0x728] sm:$0xff]
        %v564 = vld [vmem:[%s262 + $0x730] sm:$0xff]
        %v565 = vld [vmem:[%s262 + $0x738] sm:$0xff]
        %v566 = vld [vmem:[%s262 + $0x740] sm:$0xff]
        %v567 = vld [vmem:[%s262 + $0x748] sm:$0xff]
        %v568 = vld [vmem:[%s262 + $0x750] sm:$0xff]
        %v569 = vld [vmem:[%s262 + $0x758] sm:$0xff]
        %v570 = vld [vmem:[%s262 + $0x760] sm:$0xff]
        %v571 = vld [vmem:[%s262 + $0x768] sm:$0xff]
        %v572 = vld [vmem:[%s262 + $0x770] sm:$0xff]
        %v573 = vld [vmem:[%s262 + $0x778] sm:$0xff]
        %v574 = vld [vmem:[%s262 + $0x780] sm:$0xff]
        %v575 = vld [vmem:[%s262 + $0x788] sm:$0xff]
        %v576 = vld [vmem:[%s262 + $0x790] sm:$0xff]
        %v577 = vld [vmem:[%s262 + $0x798] sm:$0xff]
        %v578 = vld [vmem:[%s262 + $0x7a0] sm:$0xff]
        %v579 = vld [vmem:[%s262 + $0x7a8] sm:$0xff]
        %v580 = vld [vmem:[%s262 + $0x7b0] sm:$0xff]
        %v581 = vld [vmem:[%s262 + $0x7b8] sm:$0xff]
        %v582 = vld [vmem:[%s262 + $0x7c0] sm:$0xff]
        %v583 = vld [vmem:[%s262 + $0x7c8] sm:$0xff]
        %v584 = vld [vmem:[%s262 + $0x7d0] sm:$0xff]
        %v585 = vld [vmem:[%s262 + $0x7d8] sm:$0xff]
        %v586 = vld [vmem:[%s262 + $0x7e0] sm:$0xff]
        %v587 = vld [vmem:[%s262 + $0x7e8] sm:$0xff]
        %v588 = vld [vmem:[%s262 + $0x7f0] sm:$0xff]
        %v589 = vld [vmem:[%s262 + $0x7f8] sm:$0xff]
        %v606 = vunpack.c.l.b16 %v318
        %v607 = vunpack.c.h.b16 %v318
        %v608 = vunpack.c.l.b16 %v319
        %v609 = vunpack.c.h.b16 %v319
        %v610 = vunpack.c.l.b16 %v320
        %v611 = vunpack.c.h.b16 %v320
        %v612 = vunpack.c.l.b16 %v321
        %v613 = vunpack.c.h.b16 %v321
        %v614 = vunpack.c.l.b16 %v322
        %v615 = vunpack.c.h.b16 %v322
        %v616 = vunpack.c.l.b16 %v323
        %v617 = vunpack.c.h.b16 %v323
        %v618 = vunpack.c.l.b16 %v324
        %v619 = vunpack.c.h.b16 %v324
        %v620 = vunpack.c.l.b16 %v325
        %v621 = vunpack.c.h.b16 %v325
        %v622 = vunpack.c.l.b16 %v326
        %v623 = vunpack.c.h.b16 %v326
        %v624 = vunpack.c.l.b16 %v327
        %v625 = vunpack.c.h.b16 %v327
        %v626 = vunpack.c.l.b16 %v328
        %v627 = vunpack.c.h.b16 %v328
        %v628 = vunpack.c.l.b16 %v329
        %v629 = vunpack.c.h.b16 %v329
        %v630 = vunpack.c.l.b16 %v330
        %v631 = vunpack.c.h.b16 %v330
        %v632 = vunpack.c.l.b16 %v331
        %v633 = vunpack.c.h.b16 %v331
        %v634 = vunpack.c.l.b16 %v332
        %v635 = vunpack.c.h.b16 %v332
        %v636 = vunpack.c.l.b16 %v333
        %v637 = vunpack.c.h.b16 %v333
        %v638 = vpack.c.b16 %v622, %v606
        %v639 = vpack.c.b16 %v623, %v607
        %v640 = vpack.c.b16 %v624, %v608
        %v641 = vpack.c.b16 %v625, %v609
        %v642 = vpack.c.b16 %v626, %v610
        %v643 = vpack.c.b16 %v627, %v611
        %v644 = vpack.c.b16 %v628, %v612
        %v645 = vpack.c.b16 %v629, %v613
        %v646 = vpack.c.b16 %v630, %v614
        %v647 = vpack.c.b16 %v631, %v615
        %v648 = vpack.c.b16 %v632, %v616
        %v649 = vpack.c.b16 %v633, %v617
        %v650 = vpack.c.b16 %v634, %v618
        %v651 = vpack.c.b16 %v635, %v619
        %v652 = vpack.c.b16 %v636, %v620
        %v653 = vpack.c.b16 %v637, %v621
        %v926 = vunpack.c.l.b16 %v334
        %v927 = vunpack.c.h.b16 %v334
        %v928 = vunpack.c.l.b16 %v335
        %v929 = vunpack.c.h.b16 %v335
        %v930 = vunpack.c.l.b16 %v336
        %v931 = vunpack.c.h.b16 %v336
        %v932 = vunpack.c.l.b16 %v337
        %v933 = vunpack.c.h.b16 %v337
        %v934 = vunpack.c.l.b16 %v338
        %v935 = vunpack.c.h.b16 %v338
        %v936 = vunpack.c.l.b16 %v339
        %v937 = vunpack.c.h.b16 %v339
        %v938 = vunpack.c.l.b16 %v340
        %v939 = vunpack.c.h.b16 %v340
        %v940 = vunpack.c.l.b16 %v341
        %v941 = vunpack.c.h.b16 %v341
        %v942 = vunpack.c.l.b16 %v342
        %v943 = vunpack.c.h.b16 %v342
        %v944 = vunpack.c.l.b16 %v343
        %v945 = vunpack.c.h.b16 %v343
        %v946 = vunpack.c.l.b16 %v344
        %v947 = vunpack.c.h.b16 %v344
        %v948 = vunpack.c.l.b16 %v345
        %v949 = vunpack.c.h.b16 %v345
        %v950 = vunpack.c.l.b16 %v346
        %v951 = vunpack.c.h.b16 %v346
        %v952 = vunpack.c.l.b16 %v347
        %v953 = vunpack.c.h.b16 %v347
        %v954 = vunpack.c.l.b16 %v348
        %v955 = vunpack.c.h.b16 %v348
        %v956 = vunpack.c.l.b16 %v349
        %v957 = vunpack.c.h.b16 %v349
        %v958 = vunpack.c.l.b16 %v350
        %v959 = vunpack.c.h.b16 %v350
        %v960 = vunpack.c.l.b16 %v351
        %v961 = vunpack.c.h.b16 %v351
        %v962 = vunpack.c.l.b16 %v352
        %v963 = vunpack.c.h.b16 %v352
        %v964 = vunpack.c.l.b16 %v353
        %v965 = vunpack.c.h.b16 %v353
        %v966 = vunpack.c.l.b16 %v354
        %v967 = vunpack.c.h.b16 %v354
        %v968 = vunpack.c.l.b16 %v355
        %v969 = vunpack.c.h.b16 %v355
        %v970 = vunpack.c.l.b16 %v356
        %v971 = vunpack.c.h.b16 %v356
        %v972 = vunpack.c.l.b16 %v357
        %v973 = vunpack.c.h.b16 %v357
        %v974 = vunpack.c.l.b16 %v358
        %v975 = vunpack.c.h.b16 %v358
        %v976 = vunpack.c.l.b16 %v359
        %v977 = vunpack.c.h.b16 %v359
        %v978 = vunpack.c.l.b16 %v360
        %v979 = vunpack.c.h.b16 %v360
        %v980 = vunpack.c.l.b16 %v361
        %v981 = vunpack.c.h.b16 %v361
        %v982 = vunpack.c.l.b16 %v362
        %v983 = vunpack.c.h.b16 %v362
        %v984 = vunpack.c.l.b16 %v363
        %v985 = vunpack.c.h.b16 %v363
        %v986 = vunpack.c.l.b16 %v364
        %v987 = vunpack.c.h.b16 %v364
        %v988 = vunpack.c.l.b16 %v365
        %v989 = vunpack.c.h.b16 %v365
        %v990 = vunpack.c.l.b16 %v366
        %v991 = vunpack.c.h.b16 %v366
        %v992 = vunpack.c.l.b16 %v367
        %v993 = vunpack.c.h.b16 %v367
        %v994 = vunpack.c.l.b16 %v368
        %v995 = vunpack.c.h.b16 %v368
        %v996 = vunpack.c.l.b16 %v369
        %v997 = vunpack.c.h.b16 %v369
        %v998 = vunpack.c.l.b16 %v370
        %v999 = vunpack.c.h.b16 %v370
        %v1000 = vunpack.c.l.b16 %v371
        %v1001 = vunpack.c.h.b16 %v371
        %v1002 = vunpack.c.l.b16 %v372
        %v1003 = vunpack.c.h.b16 %v372
        %v1004 = vunpack.c.l.b16 %v373
        %v1005 = vunpack.c.h.b16 %v373
        %v1006 = vunpack.c.l.b16 %v374
        %v1007 = vunpack.c.h.b16 %v374
        %v1008 = vunpack.c.l.b16 %v375
        %v1009 = vunpack.c.h.b16 %v375
        %v1010 = vunpack.c.l.b16 %v376
        %v1011 = vunpack.c.h.b16 %v376
        %v1012 = vunpack.c.l.b16 %v377
        %v1013 = vunpack.c.h.b16 %v377
        %v1014 = vunpack.c.l.b16 %v378
        %v1015 = vunpack.c.h.b16 %v378
        %v1016 = vunpack.c.l.b16 %v379
        %v1017 = vunpack.c.h.b16 %v379
        %v1018 = vunpack.c.l.b16 %v380
        %v1019 = vunpack.c.h.b16 %v380
        %v1020 = vunpack.c.l.b16 %v381
        %v1021 = vunpack.c.h.b16 %v381
        %v1022 = vunpack.c.l.b16 %v382
        %v1023 = vunpack.c.h.b16 %v382
        %v1024 = vunpack.c.l.b16 %v383
        %v1025 = vunpack.c.h.b16 %v383
        %v1026 = vunpack.c.l.b16 %v384
        %v1027 = vunpack.c.h.b16 %v384
        %v1028 = vunpack.c.l.b16 %v385
        %v1029 = vunpack.c.h.b16 %v385
        %v1030 = vunpack.c.l.b16 %v386
        %v1031 = vunpack.c.h.b16 %v386
        %v1032 = vunpack.c.l.b16 %v387
        %v1033 = vunpack.c.h.b16 %v387
        %v1034 = vunpack.c.l.b16 %v388
        %v1035 = vunpack.c.h.b16 %v388
        %v1036 = vunpack.c.l.b16 %v389
        %v1037 = vunpack.c.h.b16 %v389
        %v1038 = vunpack.c.l.b16 %v390
        %v1039 = vunpack.c.h.b16 %v390
        %v1040 = vunpack.c.l.b16 %v391
        %v1041 = vunpack.c.h.b16 %v391
        %v1042 = vunpack.c.l.b16 %v392
        %v1043 = vunpack.c.h.b16 %v392
        %v1044 = vunpack.c.l.b16 %v393
        %v1045 = vunpack.c.h.b16 %v393
        %v1046 = vunpack.c.l.b16 %v394
        %v1047 = vunpack.c.h.b16 %v394
        %v1048 = vunpack.c.l.b16 %v395
        %v1049 = vunpack.c.h.b16 %v395
        %v1050 = vunpack.c.l.b16 %v396
        %v1051 = vunpack.c.h.b16 %v396
        %v1052 = vunpack.c.l.b16 %v397
        %v1053 = vunpack.c.h.b16 %v397
        %v1054 = vunpack.c.l.b16 %v398
        %v1055 = vunpack.c.h.b16 %v398
        %v1056 = vunpack.c.l.b16 %v399
        %v1057 = vunpack.c.h.b16 %v399
        %v1058 = vunpack.c.l.b16 %v400
        %v1059 = vunpack.c.h.b16 %v400
        %v1060 = vunpack.c.l.b16 %v401
        %v1061 = vunpack.c.h.b16 %v401
        %v1062 = vunpack.c.l.b16 %v402
        %v1063 = vunpack.c.h.b16 %v402
        %v1064 = vunpack.c.l.b16 %v403
        %v1065 = vunpack.c.h.b16 %v403
        %v1066 = vunpack.c.l.b16 %v404
        %v1067 = vunpack.c.h.b16 %v404
        %v1068 = vunpack.c.l.b16 %v405
        %v1069 = vunpack.c.h.b16 %v405
        %v1070 = vunpack.c.l.b16 %v406
        %v1071 = vunpack.c.h.b16 %v406
        %v1072 = vunpack.c.l.b16 %v407
        %v1073 = vunpack.c.h.b16 %v407
        %v1074 = vunpack.c.l.b16 %v408
        %v1075 = vunpack.c.h.b16 %v408
        %v1076 = vunpack.c.l.b16 %v409
        %v1077 = vunpack.c.h.b16 %v409
        %v1078 = vunpack.c.l.b16 %v410
        %v1079 = vunpack.c.h.b16 %v410
        %v1080 = vunpack.c.l.b16 %v411
        %v1081 = vunpack.c.h.b16 %v411
        %v1082 = vunpack.c.l.b16 %v412
        %v1083 = vunpack.c.h.b16 %v412
        %v1084 = vunpack.c.l.b16 %v413
        %v1085 = vunpack.c.h.b16 %v413
        %v1086 = vunpack.c.l.b16 %v414
        %v1087 = vunpack.c.h.b16 %v414
        %v1088 = vunpack.c.l.b16 %v415
        %v1089 = vunpack.c.h.b16 %v415
        %v1090 = vunpack.c.l.b16 %v416
        %v1091 = vunpack.c.h.b16 %v416
        %v1092 = vunpack.c.l.b16 %v417
        %v1093 = vunpack.c.h.b16 %v417
        %v1094 = vunpack.c.l.b16 %v418
        %v1095 = vunpack.c.h.b16 %v418
        %v1096 = vunpack.c.l.b16 %v419
        %v1097 = vunpack.c.h.b16 %v419
        %v1098 = vunpack.c.l.b16 %v420
        %v1099 = vunpack.c.h.b16 %v420
        %v1100 = vunpack.c.l.b16 %v421
        %v1101 = vunpack.c.h.b16 %v421
        %v1102 = vunpack.c.l.b16 %v422
        %v1103 = vunpack.c.h.b16 %v422
        %v1104 = vunpack.c.l.b16 %v423
        %v1105 = vunpack.c.h.b16 %v423
        %v1106 = vunpack.c.l.b16 %v424
        %v1107 = vunpack.c.h.b16 %v424
        %v1108 = vunpack.c.l.b16 %v425
        %v1109 = vunpack.c.h.b16 %v425
        %v1110 = vunpack.c.l.b16 %v426
        %v1111 = vunpack.c.h.b16 %v426
        %v1112 = vunpack.c.l.b16 %v427
        %v1113 = vunpack.c.h.b16 %v427
        %v1114 = vunpack.c.l.b16 %v428
        %v1115 = vunpack.c.h.b16 %v428
        %v1116 = vunpack.c.l.b16 %v429
        %v1117 = vunpack.c.h.b16 %v429
        %v1118 = vunpack.c.l.b16 %v430
        %v1119 = vunpack.c.h.b16 %v430
        %v1120 = vunpack.c.l.b16 %v431
        %v1121 = vunpack.c.h.b16 %v431
        %v1122 = vunpack.c.l.b16 %v432
        %v1123 = vunpack.c.h.b16 %v432
        %v1124 = vunpack.c.l.b16 %v433
        %v1125 = vunpack.c.h.b16 %v433
        %v1126 = vunpack.c.l.b16 %v434
        %v1127 = vunpack.c.h.b16 %v434
        %v1128 = vunpack.c.l.b16 %v435
        %v1129 = vunpack.c.h.b16 %v435
        %v1130 = vunpack.c.l.b16 %v436
        %v1131 = vunpack.c.h.b16 %v436
        %v1132 = vunpack.c.l.b16 %v437
        %v1133 = vunpack.c.h.b16 %v437
        %v1134 = vunpack.c.l.b16 %v438
        %v1135 = vunpack.c.h.b16 %v438
        %v1136 = vunpack.c.l.b16 %v439
        %v1137 = vunpack.c.h.b16 %v439
        %v1138 = vunpack.c.l.b16 %v440
        %v1139 = vunpack.c.h.b16 %v440
        %v1140 = vunpack.c.l.b16 %v441
        %v1141 = vunpack.c.h.b16 %v441
        %v1142 = vunpack.c.l.b16 %v442
        %v1143 = vunpack.c.h.b16 %v442
        %v1144 = vunpack.c.l.b16 %v443
        %v1145 = vunpack.c.h.b16 %v443
        %v1146 = vunpack.c.l.b16 %v444
        %v1147 = vunpack.c.h.b16 %v444
        %v1148 = vunpack.c.l.b16 %v445
        %v1149 = vunpack.c.h.b16 %v445
        %v1150 = vunpack.c.l.b16 %v446
        %v1151 = vunpack.c.h.b16 %v446
        %v1152 = vunpack.c.l.b16 %v447
        %v1153 = vunpack.c.h.b16 %v447
        %v1154 = vunpack.c.l.b16 %v448
        %v1155 = vunpack.c.h.b16 %v448
        %v1156 = vunpack.c.l.b16 %v449
        %v1157 = vunpack.c.h.b16 %v449
        %v1158 = vunpack.c.l.b16 %v450
        %v1159 = vunpack.c.h.b16 %v450
        %v1160 = vunpack.c.l.b16 %v451
        %v1161 = vunpack.c.h.b16 %v451
        %v1162 = vunpack.c.l.b16 %v452
        %v1163 = vunpack.c.h.b16 %v452
        %v1164 = vunpack.c.l.b16 %v453
        %v1165 = vunpack.c.h.b16 %v453
        %v1166 = vunpack.c.l.b16 %v454
        %v1167 = vunpack.c.h.b16 %v454
        %v1168 = vunpack.c.l.b16 %v455
        %v1169 = vunpack.c.h.b16 %v455
        %v1170 = vunpack.c.l.b16 %v456
        %v1171 = vunpack.c.h.b16 %v456
        %v1172 = vunpack.c.l.b16 %v457
        %v1173 = vunpack.c.h.b16 %v457
        %v1174 = vunpack.c.l.b16 %v458
        %v1175 = vunpack.c.h.b16 %v458
        %v1176 = vunpack.c.l.b16 %v459
        %v1177 = vunpack.c.h.b16 %v459
        %v1178 = vunpack.c.l.b16 %v460
        %v1179 = vunpack.c.h.b16 %v460
        %v1180 = vunpack.c.l.b16 %v461
        %v1181 = vunpack.c.h.b16 %v461
        %v1182 = vunpack.c.l.b16 %v462
        %v1183 = vunpack.c.h.b16 %v462
        %v1184 = vunpack.c.l.b16 %v463
        %v1185 = vunpack.c.h.b16 %v463
        %v1186 = vunpack.c.l.b16 %v464
        %v1187 = vunpack.c.h.b16 %v464
        %v1188 = vunpack.c.l.b16 %v465
        %v1189 = vunpack.c.h.b16 %v465
        %v1190 = vunpack.c.l.b16 %v466
        %v1191 = vunpack.c.h.b16 %v466
        %v1192 = vunpack.c.l.b16 %v467
        %v1193 = vunpack.c.h.b16 %v467
        %v1194 = vunpack.c.l.b16 %v468
        %v1195 = vunpack.c.h.b16 %v468
        %v1196 = vunpack.c.l.b16 %v469
        %v1197 = vunpack.c.h.b16 %v469
        %v1198 = vunpack.c.l.b16 %v470
        %v1199 = vunpack.c.h.b16 %v470
        %v1200 = vunpack.c.l.b16 %v471
        %v1201 = vunpack.c.h.b16 %v471
        %v1202 = vunpack.c.l.b16 %v472
        %v1203 = vunpack.c.h.b16 %v472
        %v1204 = vunpack.c.l.b16 %v473
        %v1205 = vunpack.c.h.b16 %v473
        %v1206 = vunpack.c.l.b16 %v474
        %v1207 = vunpack.c.h.b16 %v474
        %v1208 = vunpack.c.l.b16 %v475
        %v1209 = vunpack.c.h.b16 %v475
        %v1210 = vunpack.c.l.b16 %v476
        %v1211 = vunpack.c.h.b16 %v476
        %v1212 = vunpack.c.l.b16 %v477
        %v1213 = vunpack.c.h.b16 %v477
        %v1214 = vunpack.c.l.b16 %v478
        %v1215 = vunpack.c.h.b16 %v478
        %v1216 = vunpack.c.l.b16 %v479
        %v1217 = vunpack.c.h.b16 %v479
        %v1218 = vunpack.c.l.b16 %v480
        %v1219 = vunpack.c.h.b16 %v480
        %v1220 = vunpack.c.l.b16 %v481
        %v1221 = vunpack.c.h.b16 %v481
        %v1222 = vunpack.c.l.b16 %v482
        %v1223 = vunpack.c.h.b16 %v482
        %v1224 = vunpack.c.l.b16 %v483
        %v1225 = vunpack.c.h.b16 %v483
        %v1226 = vunpack.c.l.b16 %v484
        %v1227 = vunpack.c.h.b16 %v484
        %v1228 = vunpack.c.l.b16 %v485
        %v1229 = vunpack.c.h.b16 %v485
        %v1230 = vunpack.c.l.b16 %v486
        %v1231 = vunpack.c.h.b16 %v486
        %v1232 = vunpack.c.l.b16 %v487
        %v1233 = vunpack.c.h.b16 %v487
        %v1234 = vunpack.c.l.b16 %v488
        %v1235 = vunpack.c.h.b16 %v488
        %v1236 = vunpack.c.l.b16 %v489
        %v1237 = vunpack.c.h.b16 %v489
        %v1238 = vunpack.c.l.b16 %v490
        %v1239 = vunpack.c.h.b16 %v490
        %v1240 = vunpack.c.l.b16 %v491
        %v1241 = vunpack.c.h.b16 %v491
        %v1242 = vunpack.c.l.b16 %v492
        %v1243 = vunpack.c.h.b16 %v492
        %v1244 = vunpack.c.l.b16 %v493
        %v1245 = vunpack.c.h.b16 %v493
        %v1246 = vunpack.c.l.b16 %v494
        %v1247 = vunpack.c.h.b16 %v494
        %v1248 = vunpack.c.l.b16 %v495
        %v1249 = vunpack.c.h.b16 %v495
        %v1250 = vunpack.c.l.b16 %v496
        %v1251 = vunpack.c.h.b16 %v496
        %v1252 = vunpack.c.l.b16 %v497
        %v1253 = vunpack.c.h.b16 %v497
        %v1254 = vunpack.c.l.b16 %v498
        %v1255 = vunpack.c.h.b16 %v498
        %v1256 = vunpack.c.l.b16 %v499
        %v1257 = vunpack.c.h.b16 %v499
        %v1258 = vunpack.c.l.b16 %v500
        %v1259 = vunpack.c.h.b16 %v500
        %v1260 = vunpack.c.l.b16 %v501
        %v1261 = vunpack.c.h.b16 %v501
        %v1262 = vunpack.c.l.b16 %v502
        %v1263 = vunpack.c.h.b16 %v502
        %v1264 = vunpack.c.l.b16 %v503
        %v1265 = vunpack.c.h.b16 %v503
        %v1266 = vunpack.c.l.b16 %v504
        %v1267 = vunpack.c.h.b16 %v504
        %v1268 = vunpack.c.l.b16 %v505
        %v1269 = vunpack.c.h.b16 %v505
        %v1270 = vunpack.c.l.b16 %v506
        %v1271 = vunpack.c.h.b16 %v506
        %v1272 = vunpack.c.l.b16 %v507
        %v1273 = vunpack.c.h.b16 %v507
        %v1274 = vunpack.c.l.b16 %v508
        %v1275 = vunpack.c.h.b16 %v508
        %v1276 = vunpack.c.l.b16 %v509
        %v1277 = vunpack.c.h.b16 %v509
        %v1278 = vunpack.c.l.b16 %v510
        %v1279 = vunpack.c.h.b16 %v510
        %v1280 = vunpack.c.l.b16 %v511
        %v1281 = vunpack.c.h.b16 %v511
        %v1282 = vunpack.c.l.b16 %v512
        %v1283 = vunpack.c.h.b16 %v512
        %v1284 = vunpack.c.l.b16 %v513
        %v1285 = vunpack.c.h.b16 %v513
        %v1286 = vunpack.c.l.b16 %v514
        %v1287 = vunpack.c.h.b16 %v514
        %v1288 = vunpack.c.l.b16 %v515
        %v1289 = vunpack.c.h.b16 %v515
        %v1290 = vunpack.c.l.b16 %v516
        %v1291 = vunpack.c.h.b16 %v516
        %v1292 = vunpack.c.l.b16 %v517
        %v1293 = vunpack.c.h.b16 %v517
        %v1294 = vunpack.c.l.b16 %v518
        %v1295 = vunpack.c.h.b16 %v518
        %v1296 = vunpack.c.l.b16 %v519
        %v1297 = vunpack.c.h.b16 %v519
        %v1298 = vunpack.c.l.b16 %v520
        %v1299 = vunpack.c.h.b16 %v520
        %v1300 = vunpack.c.l.b16 %v521
        %v1301 = vunpack.c.h.b16 %v521
        %v1302 = vunpack.c.l.b16 %v522
        %v1303 = vunpack.c.h.b16 %v522
        %v1304 = vunpack.c.l.b16 %v523
        %v1305 = vunpack.c.h.b16 %v523
        %v1306 = vunpack.c.l.b16 %v524
        %v1307 = vunpack.c.h.b16 %v524
        %v1308 = vunpack.c.l.b16 %v525
        %v1309 = vunpack.c.h.b16 %v525
        %v1310 = vunpack.c.l.b16 %v526
        %v1311 = vunpack.c.h.b16 %v526
        %v1312 = vunpack.c.l.b16 %v527
        %v1313 = vunpack.c.h.b16 %v527
        %v1314 = vunpack.c.l.b16 %v528
        %v1315 = vunpack.c.h.b16 %v528
        %v1316 = vunpack.c.l.b16 %v529
        %v1317 = vunpack.c.h.b16 %v529
        %v1318 = vunpack.c.l.b16 %v530
        %v1319 = vunpack.c.h.b16 %v530
        %v1320 = vunpack.c.l.b16 %v531
        %v1321 = vunpack.c.h.b16 %v531
        %v1322 = vunpack.c.l.b16 %v532
        %v1323 = vunpack.c.h.b16 %v532
        %v1324 = vunpack.c.l.b16 %v533
        %v1325 = vunpack.c.h.b16 %v533
        %v1326 = vunpack.c.l.b16 %v534
        %v1327 = vunpack.c.h.b16 %v534
        %v1328 = vunpack.c.l.b16 %v535
        %v1329 = vunpack.c.h.b16 %v535
        %v1330 = vunpack.c.l.b16 %v536
        %v1331 = vunpack.c.h.b16 %v536
        %v1332 = vunpack.c.l.b16 %v537
        %v1333 = vunpack.c.h.b16 %v537
        %v1334 = vunpack.c.l.b16 %v538
        %v1335 = vunpack.c.h.b16 %v538
        %v1336 = vunpack.c.l.b16 %v539
        %v1337 = vunpack.c.h.b16 %v539
        %v1338 = vunpack.c.l.b16 %v540
        %v1339 = vunpack.c.h.b16 %v540
        %v1340 = vunpack.c.l.b16 %v541
        %v1341 = vunpack.c.h.b16 %v541
        %v1342 = vunpack.c.l.b16 %v542
        %v1343 = vunpack.c.h.b16 %v542
        %v1344 = vunpack.c.l.b16 %v543
        %v1345 = vunpack.c.h.b16 %v543
        %v1346 = vunpack.c.l.b16 %v544
        %v1347 = vunpack.c.h.b16 %v544
        %v1348 = vunpack.c.l.b16 %v545
        %v1349 = vunpack.c.h.b16 %v545
        %v1350 = vunpack.c.l.b16 %v546
        %v1351 = vunpack.c.h.b16 %v546
        %v1352 = vunpack.c.l.b16 %v547
        %v1353 = vunpack.c.h.b16 %v547
        %v1354 = vunpack.c.l.b16 %v548
        %v1355 = vunpack.c.h.b16 %v548
        %v1356 = vunpack.c.l.b16 %v549
        %v1357 = vunpack.c.h.b16 %v549
        %v1358 = vunpack.c.l.b16 %v550
        %v1359 = vunpack.c.h.b16 %v550
        %v1360 = vunpack.c.l.b16 %v551
        %v1361 = vunpack.c.h.b16 %v551
        %v1362 = vunpack.c.l.b16 %v552
        %v1363 = vunpack.c.h.b16 %v552
        %v1364 = vunpack.c.l.b16 %v553
        %v1365 = vunpack.c.h.b16 %v553
        %v1366 = vunpack.c.l.b16 %v554
        %v1367 = vunpack.c.h.b16 %v554
        %v1368 = vunpack.c.l.b16 %v555
        %v1369 = vunpack.c.h.b16 %v555
        %v1370 = vunpack.c.l.b16 %v556
        %v1371 = vunpack.c.h.b16 %v556
        %v1372 = vunpack.c.l.b16 %v557
        %v1373 = vunpack.c.h.b16 %v557
        %v1374 = vunpack.c.l.b16 %v558
        %v1375 = vunpack.c.h.b16 %v558
        %v1376 = vunpack.c.l.b16 %v559
        %v1377 = vunpack.c.h.b16 %v559
        %v1378 = vunpack.c.l.b16 %v560
        %v1379 = vunpack.c.h.b16 %v560
        %v1380 = vunpack.c.l.b16 %v561
        %v1381 = vunpack.c.h.b16 %v561
        %v1382 = vunpack.c.l.b16 %v562
        %v1383 = vunpack.c.h.b16 %v562
        %v1384 = vunpack.c.l.b16 %v563
        %v1385 = vunpack.c.h.b16 %v563
        %v1386 = vunpack.c.l.b16 %v564
        %v1387 = vunpack.c.h.b16 %v564
        %v1388 = vunpack.c.l.b16 %v565
        %v1389 = vunpack.c.h.b16 %v565
        %v1390 = vunpack.c.l.b16 %v566
        %v1391 = vunpack.c.h.b16 %v566
        %v1392 = vunpack.c.l.b16 %v567
        %v1393 = vunpack.c.h.b16 %v567
        %v1394 = vunpack.c.l.b16 %v568
        %v1395 = vunpack.c.h.b16 %v568
        %v1396 = vunpack.c.l.b16 %v569
        %v1397 = vunpack.c.h.b16 %v569
        %v1398 = vunpack.c.l.b16 %v570
        %v1399 = vunpack.c.h.b16 %v570
        %v1400 = vunpack.c.l.b16 %v571
        %v1401 = vunpack.c.h.b16 %v571
        %v1402 = vunpack.c.l.b16 %v572
        %v1403 = vunpack.c.h.b16 %v572
        %v1404 = vunpack.c.l.b16 %v573
        %v1405 = vunpack.c.h.b16 %v573
        %v1406 = vunpack.c.l.b16 %v574
        %v1407 = vunpack.c.h.b16 %v574
        %v1408 = vunpack.c.l.b16 %v575
        %v1409 = vunpack.c.h.b16 %v575
        %v1410 = vunpack.c.l.b16 %v576
        %v1411 = vunpack.c.h.b16 %v576
        %v1412 = vunpack.c.l.b16 %v577
        %v1413 = vunpack.c.h.b16 %v577
        %v1414 = vunpack.c.l.b16 %v578
        %v1415 = vunpack.c.h.b16 %v578
        %v1416 = vunpack.c.l.b16 %v579
        %v1417 = vunpack.c.h.b16 %v579
        %v1418 = vunpack.c.l.b16 %v580
        %v1419 = vunpack.c.h.b16 %v580
        %v1420 = vunpack.c.l.b16 %v581
        %v1421 = vunpack.c.h.b16 %v581
        %v1422 = vunpack.c.l.b16 %v582
        %v1423 = vunpack.c.h.b16 %v582
        %v1424 = vunpack.c.l.b16 %v583
        %v1425 = vunpack.c.h.b16 %v583
        %v1426 = vunpack.c.l.b16 %v584
        %v1427 = vunpack.c.h.b16 %v584
        %v1428 = vunpack.c.l.b16 %v585
        %v1429 = vunpack.c.h.b16 %v585
        %v1430 = vunpack.c.l.b16 %v586
        %v1431 = vunpack.c.h.b16 %v586
        %v1432 = vunpack.c.l.b16 %v587
        %v1433 = vunpack.c.h.b16 %v587
        %v1434 = vunpack.c.l.b16 %v588
        %v1435 = vunpack.c.h.b16 %v588
        %v1436 = vunpack.c.l.b16 %v589
        %v1437 = vunpack.c.h.b16 %v589
        %v1438 = vpack.c.b16 %v928, %v926
        %v1439 = vpack.c.b16 %v929, %v927
        %v1440 = vpack.c.b16 %v932, %v930
        %v1441 = vpack.c.b16 %v933, %v931
        %v1442 = vpack.c.b16 %v936, %v934
        %v1443 = vpack.c.b16 %v937, %v935
        %v1444 = vpack.c.b16 %v940, %v938
        %v1445 = vpack.c.b16 %v941, %v939
        %v1446 = vpack.c.b16 %v944, %v942
        %v1447 = vpack.c.b16 %v945, %v943
        %v1448 = vpack.c.b16 %v948, %v946
        %v1449 = vpack.c.b16 %v949, %v947
        %v1450 = vpack.c.b16 %v952, %v950
        %v1451 = vpack.c.b16 %v953, %v951
        %v1452 = vpack.c.b16 %v956, %v954
        %v1453 = vpack.c.b16 %v957, %v955
        %v1454 = vpack.c.b16 %v960, %v958
        %v1455 = vpack.c.b16 %v961, %v959
        %v1456 = vpack.c.b16 %v964, %v962
        %v1457 = vpack.c.b16 %v965, %v963
        %v1458 = vpack.c.b16 %v968, %v966
        %v1459 = vpack.c.b16 %v969, %v967
        %v1460 = vpack.c.b16 %v972, %v970
        %v1461 = vpack.c.b16 %v973, %v971
        %v1462 = vpack.c.b16 %v976, %v974
        %v1463 = vpack.c.b16 %v977, %v975
        %v1464 = vpack.c.b16 %v980, %v978
        %v1465 = vpack.c.b16 %v981, %v979
        %v1466 = vpack.c.b16 %v984, %v982
        %v1467 = vpack.c.b16 %v985, %v983
        %v1468 = vpack.c.b16 %v988, %v986
        %v1469 = vpack.c.b16 %v989, %v987
        %v1470 = vpack.c.b16 %v992, %v990
        %v1471 = vpack.c.b16 %v993, %v991
        %v1472 = vpack.c.b16 %v996, %v994
        %v1473 = vpack.c.b16 %v997, %v995
        %v1474 = vpack.c.b16 %v1000, %v998
        %v1475 = vpack.c.b16 %v1001, %v999
        %v1476 = vpack.c.b16 %v1004, %v1002
        %v1477 = vpack.c.b16 %v1005, %v1003
        %v1478 = vpack.c.b16 %v1008, %v1006
        %v1479 = vpack.c.b16 %v1009, %v1007
        %v1480 = vpack.c.b16 %v1012, %v1010
        %v1481 = vpack.c.b16 %v1013, %v1011
        %v1482 = vpack.c.b16 %v1016, %v1014
        %v1483 = vpack.c.b16 %v1017, %v1015
        %v1484 = vpack.c.b16 %v1020, %v1018
        %v1485 = vpack.c.b16 %v1021, %v1019
        %v1486 = vpack.c.b16 %v1024, %v1022
        %v1487 = vpack.c.b16 %v1025, %v1023
        %v1488 = vpack.c.b16 %v1028, %v1026
        %v1489 = vpack.c.b16 %v1029, %v1027
        %v1490 = vpack.c.b16 %v1032, %v1030
        %v1491 = vpack.c.b16 %v1033, %v1031
        %v1492 = vpack.c.b16 %v1036, %v1034
        %v1493 = vpack.c.b16 %v1037, %v1035
        %v1494 = vpack.c.b16 %v1040, %v1038
        %v1495 = vpack.c.b16 %v1041, %v1039
        %v1496 = vpack.c.b16 %v1044, %v1042
        %v1497 = vpack.c.b16 %v1045, %v1043
        %v1498 = vpack.c.b16 %v1048, %v1046
        %v1499 = vpack.c.b16 %v1049, %v1047
        %v1500 = vpack.c.b16 %v1052, %v1050
        %v1501 = vpack.c.b16 %v1053, %v1051
        %v1502 = vpack.c.b16 %v1056, %v1054
        %v1503 = vpack.c.b16 %v1057, %v1055
        %v1504 = vpack.c.b16 %v1060, %v1058
        %v1505 = vpack.c.b16 %v1061, %v1059
        %v1506 = vpack.c.b16 %v1064, %v1062
        %v1507 = vpack.c.b16 %v1065, %v1063
        %v1508 = vpack.c.b16 %v1068, %v1066
        %v1509 = vpack.c.b16 %v1069, %v1067
        %v1510 = vpack.c.b16 %v1072, %v1070
        %v1511 = vpack.c.b16 %v1073, %v1071
        %v1512 = vpack.c.b16 %v1076, %v1074
        %v1513 = vpack.c.b16 %v1077, %v1075
        %v1514 = vpack.c.b16 %v1080, %v1078
        %v1515 = vpack.c.b16 %v1081, %v1079
        %v1516 = vpack.c.b16 %v1084, %v1082
        %v1517 = vpack.c.b16 %v1085, %v1083
        %v1518 = vpack.c.b16 %v1088, %v1086
        %v1519 = vpack.c.b16 %v1089, %v1087
        %v1520 = vpack.c.b16 %v1092, %v1090
        %v1521 = vpack.c.b16 %v1093, %v1091
        %v1522 = vpack.c.b16 %v1096, %v1094
        %v1523 = vpack.c.b16 %v1097, %v1095
        %v1524 = vpack.c.b16 %v1100, %v1098
        %v1525 = vpack.c.b16 %v1101, %v1099
        %v1526 = vpack.c.b16 %v1104, %v1102
        %v1527 = vpack.c.b16 %v1105, %v1103
        %v1528 = vpack.c.b16 %v1108, %v1106
        %v1529 = vpack.c.b16 %v1109, %v1107
        %v1530 = vpack.c.b16 %v1112, %v1110
        %v1531 = vpack.c.b16 %v1113, %v1111
        %v1532 = vpack.c.b16 %v1116, %v1114
        %v1533 = vpack.c.b16 %v1117, %v1115
        %v1534 = vpack.c.b16 %v1120, %v1118
        %v1535 = vpack.c.b16 %v1121, %v1119
        %v1536 = vpack.c.b16 %v1124, %v1122
        %v1537 = vpack.c.b16 %v1125, %v1123
        %v1538 = vpack.c.b16 %v1128, %v1126
        %v1539 = vpack.c.b16 %v1129, %v1127
        %v1540 = vpack.c.b16 %v1132, %v1130
        %v1541 = vpack.c.b16 %v1133, %v1131
        %v1542 = vpack.c.b16 %v1136, %v1134
        %v1543 = vpack.c.b16 %v1137, %v1135
        %v1544 = vpack.c.b16 %v1140, %v1138
        %v1545 = vpack.c.b16 %v1141, %v1139
        %v1546 = vpack.c.b16 %v1144, %v1142
        %v1547 = vpack.c.b16 %v1145, %v1143
        %v1548 = vpack.c.b16 %v1148, %v1146
        %v1549 = vpack.c.b16 %v1149, %v1147
        %v1550 = vpack.c.b16 %v1152, %v1150
        %v1551 = vpack.c.b16 %v1153, %v1151
        %v1552 = vpack.c.b16 %v1156, %v1154
        %v1553 = vpack.c.b16 %v1157, %v1155
        %v1554 = vpack.c.b16 %v1160, %v1158
        %v1555 = vpack.c.b16 %v1161, %v1159
        %v1556 = vpack.c.b16 %v1164, %v1162
        %v1557 = vpack.c.b16 %v1165, %v1163
        %v1558 = vpack.c.b16 %v1168, %v1166
        %v1559 = vpack.c.b16 %v1169, %v1167
        %v1560 = vpack.c.b16 %v1172, %v1170
        %v1561 = vpack.c.b16 %v1173, %v1171
        %v1562 = vpack.c.b16 %v1176, %v1174
        %v1563 = vpack.c.b16 %v1177, %v1175
        %v1564 = vpack.c.b16 %v1180, %v1178
        %v1565 = vpack.c.b16 %v1181, %v1179
        %v1566 = vpack.c.b16 %v1184, %v1182
        %v1567 = vpack.c.b16 %v1185, %v1183
        %v1568 = vpack.c.b16 %v1188, %v1186
        %v1569 = vpack.c.b16 %v1189, %v1187
        %v1570 = vpack.c.b16 %v1192, %v1190
        %v1571 = vpack.c.b16 %v1193, %v1191
        %v1572 = vpack.c.b16 %v1196, %v1194
        %v1573 = vpack.c.b16 %v1197, %v1195
        %v1574 = vpack.c.b16 %v1200, %v1198
        %v1575 = vpack.c.b16 %v1201, %v1199
        %v1576 = vpack.c.b16 %v1204, %v1202
        %v1577 = vpack.c.b16 %v1205, %v1203
        %v1578 = vpack.c.b16 %v1208, %v1206
        %v1579 = vpack.c.b16 %v1209, %v1207
        %v1580 = vpack.c.b16 %v1212, %v1210
        %v1581 = vpack.c.b16 %v1213, %v1211
        %v1582 = vpack.c.b16 %v1216, %v1214
        %v1583 = vpack.c.b16 %v1217, %v1215
        %v1584 = vpack.c.b16 %v1220, %v1218
        %v1585 = vpack.c.b16 %v1221, %v1219
        %v1586 = vpack.c.b16 %v1224, %v1222
        %v1587 = vpack.c.b16 %v1225, %v1223
        %v1588 = vpack.c.b16 %v1228, %v1226
        %v1589 = vpack.c.b16 %v1229, %v1227
        %v1590 = vpack.c.b16 %v1232, %v1230
        %v1591 = vpack.c.b16 %v1233, %v1231
        %v1592 = vpack.c.b16 %v1236, %v1234
        %v1593 = vpack.c.b16 %v1237, %v1235
        %v1594 = vpack.c.b16 %v1240, %v1238
        %v1595 = vpack.c.b16 %v1241, %v1239
        %v1596 = vpack.c.b16 %v1244, %v1242
        %v1597 = vpack.c.b16 %v1245, %v1243
        %v1598 = vpack.c.b16 %v1248, %v1246
        %v1599 = vpack.c.b16 %v1249, %v1247
        %v1600 = vpack.c.b16 %v1252, %v1250
        %v1601 = vpack.c.b16 %v1253, %v1251
        %v1602 = vpack.c.b16 %v1256, %v1254
        %v1603 = vpack.c.b16 %v1257, %v1255
        %v1604 = vpack.c.b16 %v1260, %v1258
        %v1605 = vpack.c.b16 %v1261, %v1259
        %v1606 = vpack.c.b16 %v1264, %v1262
        %v1607 = vpack.c.b16 %v1265, %v1263
        %v1608 = vpack.c.b16 %v1268, %v1266
        %v1609 = vpack.c.b16 %v1269, %v1267
        %v1610 = vpack.c.b16 %v1272, %v1270
        %v1611 = vpack.c.b16 %v1273, %v1271
        %v1612 = vpack.c.b16 %v1276, %v1274
        %v1613 = vpack.c.b16 %v1277, %v1275
        %v1614 = vpack.c.b16 %v1280, %v1278
        %v1615 = vpack.c.b16 %v1281, %v1279
        %v1616 = vpack.c.b16 %v1284, %v1282
        %v1617 = vpack.c.b16 %v1285, %v1283
        %v1618 = vpack.c.b16 %v1288, %v1286
        %v1619 = vpack.c.b16 %v1289, %v1287
        %v1620 = vpack.c.b16 %v1292, %v1290
        %v1621 = vpack.c.b16 %v1293, %v1291
        %v1622 = vpack.c.b16 %v1296, %v1294
        %v1623 = vpack.c.b16 %v1297, %v1295
        %v1624 = vpack.c.b16 %v1300, %v1298
        %v1625 = vpack.c.b16 %v1301, %v1299
        %v1626 = vpack.c.b16 %v1304, %v1302
        %v1627 = vpack.c.b16 %v1305, %v1303
        %v1628 = vpack.c.b16 %v1308, %v1306
        %v1629 = vpack.c.b16 %v1309, %v1307
        %v1630 = vpack.c.b16 %v1312, %v1310
        %v1631 = vpack.c.b16 %v1313, %v1311
        %v1632 = vpack.c.b16 %v1316, %v1314
        %v1633 = vpack.c.b16 %v1317, %v1315
        %v1634 = vpack.c.b16 %v1320, %v1318
        %v1635 = vpack.c.b16 %v1321, %v1319
        %v1636 = vpack.c.b16 %v1324, %v1322
        %v1637 = vpack.c.b16 %v1325, %v1323
        %v1638 = vpack.c.b16 %v1328, %v1326
        %v1639 = vpack.c.b16 %v1329, %v1327
        %v1640 = vpack.c.b16 %v1332, %v1330
        %v1641 = vpack.c.b16 %v1333, %v1331
        %v1642 = vpack.c.b16 %v1336, %v1334
        %v1643 = vpack.c.b16 %v1337, %v1335
        %v1644 = vpack.c.b16 %v1340, %v1338
        %v1645 = vpack.c.b16 %v1341, %v1339
        %v1646 = vpack.c.b16 %v1344, %v1342
        %v1647 = vpack.c.b16 %v1345, %v1343
        %v1648 = vpack.c.b16 %v1348, %v1346
        %v1649 = vpack.c.b16 %v1349, %v1347
        %v1650 = vpack.c.b16 %v1352, %v1350
        %v1651 = vpack.c.b16 %v1353, %v1351
        %v1652 = vpack.c.b16 %v1356, %v1354
        %v1653 = vpack.c.b16 %v1357, %v1355
        %v1654 = vpack.c.b16 %v1360, %v1358
        %v1655 = vpack.c.b16 %v1361, %v1359
        %v1656 = vpack.c.b16 %v1364, %v1362
        %v1657 = vpack.c.b16 %v1365, %v1363
        %v1658 = vpack.c.b16 %v1368, %v1366
        %v1659 = vpack.c.b16 %v1369, %v1367
        %v1660 = vpack.c.b16 %v1372, %v1370
        %v1661 = vpack.c.b16 %v1373, %v1371
        %v1662 = vpack.c.b16 %v1376, %v1374
        %v1663 = vpack.c.b16 %v1377, %v1375
        %v1664 = vpack.c.b16 %v1380, %v1378
        %v1665 = vpack.c.b16 %v1381, %v1379
        %v1666 = vpack.c.b16 %v1384, %v1382
        %v1667 = vpack.c.b16 %v1385, %v1383
        %v1668 = vpack.c.b16 %v1388, %v1386
        %v1669 = vpack.c.b16 %v1389, %v1387
        %v1670 = vpack.c.b16 %v1392, %v1390
        %v1671 = vpack.c.b16 %v1393, %v1391
        %v1672 = vpack.c.b16 %v1396, %v1394
        %v1673 = vpack.c.b16 %v1397, %v1395
        %v1674 = vpack.c.b16 %v1400, %v1398
        %v1675 = vpack.c.b16 %v1401, %v1399
        %v1676 = vpack.c.b16 %v1404, %v1402
        %v1677 = vpack.c.b16 %v1405, %v1403
        %v1678 = vpack.c.b16 %v1408, %v1406
        %v1679 = vpack.c.b16 %v1409, %v1407
        %v1680 = vpack.c.b16 %v1412, %v1410
        %v1681 = vpack.c.b16 %v1413, %v1411
        %v1682 = vpack.c.b16 %v1416, %v1414
        %v1683 = vpack.c.b16 %v1417, %v1415
        %v1684 = vpack.c.b16 %v1420, %v1418
        %v1685 = vpack.c.b16 %v1421, %v1419
        %v1686 = vpack.c.b16 %v1424, %v1422
        %v1687 = vpack.c.b16 %v1425, %v1423
        %v1688 = vpack.c.b16 %v1428, %v1426
        %v1689 = vpack.c.b16 %v1429, %v1427
        %v1690 = vpack.c.b16 %v1432, %v1430
        %v1691 = vpack.c.b16 %v1433, %v1431
        %v1692 = vpack.c.b16 %v1436, %v1434
        %v1693 = vpack.c.b16 %v1437, %v1435
        %1950 = vmatprep.subr.bf16.mxu0 %v1439
        %1951 = vmatpush1.bf16.msra.mxu0 %v1438
        %1952 = vmatprep.subr.bf16.mxu0 %v1441
        %1953 = vmatpush1.bf16.msra.mxu0 %v1440
        %1954 = vmatprep.subr.bf16.mxu0 %v1443
        %1955 = vmatpush1.bf16.msra.mxu0 %v1442
        %1956 = vmatprep.subr.bf16.mxu0 %v1445
        %1957 = vmatpush1.bf16.msra.mxu0 %v1444
        %1958 = vmatprep.subr.bf16.mxu0 %v1447
        %1959 = vmatpush1.bf16.msra.mxu0 %v1446
        %1960 = vmatprep.subr.bf16.mxu0 %v1449
        %1961 = vmatpush1.bf16.msra.mxu0 %v1448
        %1962 = vmatprep.subr.bf16.mxu0 %v1451
        %1963 = vmatpush1.bf16.msra.mxu0 %v1450
        %1964 = vmatprep.subr.bf16.mxu0 %v1453
        %1965 = vmatpush1.bf16.msra.mxu0 %v1452
        %1966 = vmatprep.subr.bf16.mxu0 %v1455
        %1967 = vmatpush1.bf16.msra.mxu0 %v1454
        %1968 = vmatprep.subr.bf16.mxu0 %v1457
        %1969 = vmatpush1.bf16.msra.mxu0 %v1456
        %1970 = vmatprep.subr.bf16.mxu0 %v1459
        %1971 = vmatpush1.bf16.msra.mxu0 %v1458
        %1972 = vmatprep.subr.bf16.mxu0 %v1461
        %1973 = vmatpush1.bf16.msra.mxu0 %v1460
        %1974 = vmatprep.subr.bf16.mxu0 %v1463
        %1975 = vmatpush1.bf16.msra.mxu0 %v1462
        %1976 = vmatprep.subr.bf16.mxu0 %v1465
        %1977 = vmatpush1.bf16.msra.mxu0 %v1464
        %1978 = vmatprep.subr.bf16.mxu0 %v1467
        %1979 = vmatpush1.bf16.msra.mxu0 %v1466
        %1980 = vmatprep.subr.bf16.mxu0 %v1469
        %1981 = vmatpush1.bf16.msra.mxu0 %v1468
        %1982 = vmatprep.mubr.bf16.mxu0 %v639
        %1983 = vmatmul.mubr.bf16.gmra.mrb[0].mxu0 %v638
        %v1984 = vpop.f32.mrb[0].mxu0
        %v1985 = vadd.f32 0.0, %v1984
        %v1986 = vpop.f32.mrb[0].mxu0
        %v1987 = vadd.f32 0.0, %v1986
        %v1988 = vpop.f32.mrb[0].mxu0
        %v1989 = vadd.f32 0.0, %v1988
        %v1990 = vpop.f32.mrb[0].mxu0
        %v1991 = vadd.f32 0.0, %v1990
        %1992 = vdwg.mxu0
        %1993 = vmatprep.subr.bf16.mxu0 %v1471
        %1994 = vmatpush1.bf16.msra.mxu0 %v1470
        %1995 = vmatprep.subr.bf16.mxu0 %v1473
        %1996 = vmatpush1.bf16.msra.mxu0 %v1472
        %1997 = vmatprep.subr.bf16.mxu0 %v1475
        %1998 = vmatpush1.bf16.msra.mxu0 %v1474
        %1999 = vmatprep.subr.bf16.mxu0 %v1477
        %2000 = vmatpush1.bf16.msra.mxu0 %v1476
        %2001 = vmatprep.subr.bf16.mxu0 %v1479
        %2002 = vmatpush1.bf16.msra.mxu0 %v1478
        %2003 = vmatprep.subr.bf16.mxu0 %v1481
        %2004 = vmatpush1.bf16.msra.mxu0 %v1480
        %2005 = vmatprep.subr.bf16.mxu0 %v1483
        %2006 = vmatpush1.bf16.msra.mxu0 %v1482
        %2007 = vmatprep.subr.bf16.mxu0 %v1485
        %2008 = vmatpush1.bf16.msra.mxu0 %v1484
        %2009 = vmatprep.subr.bf16.mxu0 %v1487
        %2010 = vmatpush1.bf16.msra.mxu0 %v1486
        %2011 = vmatprep.subr.bf16.mxu0 %v1489
        %2012 = vmatpush1.bf16.msra.mxu0 %v1488
        %2013 = vmatprep.subr.bf16.mxu0 %v1491
        %2014 = vmatpush1.bf16.msra.mxu0 %v1490
        %2015 = vmatprep.subr.bf16.mxu0 %v1493
        %2016 = vmatpush1.bf16.msra.mxu0 %v1492
        %2017 = vmatprep.subr.bf16.mxu0 %v1495
        %2018 = vmatpush1.bf16.msra.mxu0 %v1494
        %2019 = vmatprep.subr.bf16.mxu0 %v1497
        %2020 = vmatpush1.bf16.msra.mxu0 %v1496
        %2021 = vmatprep.subr.bf16.mxu0 %v1499
        %2022 = vmatpush1.bf16.msra.mxu0 %v1498
        %2023 = vmatprep.subr.bf16.mxu0 %v1501
        %2024 = vmatpush1.bf16.msra.mxu0 %v1500
        %2025 = vmatprep.mubr.bf16.mxu0 %v641
        %2026 = vmatmul.mubr.bf16.gmra.mrb[0].mxu0 %v640
        %v2027 = vpop.f32.mrb[0].mxu0
        %v2028 = vadd.f32 %v1985, %v2027
        %v2029 = vpop.f32.mrb[0].mxu0
        %v2030 = vadd.f32 %v1987, %v2029
        %v2031 = vpop.f32.mrb[0].mxu0
        %v2032 = vadd.f32 %v1989, %v2031
        %v2033 = vpop.f32.mrb[0].mxu0
        %v2034 = vadd.f32 %v1991, %v2033
        %2035 = vdwg.mxu0
        %2036 = vmatprep.subr.bf16.mxu0 %v1503
        %2037 = vmatpush1.bf16.msra.mxu0 %v1502
        %2038 = vmatprep.subr.bf16.mxu0 %v1505
        %2039 = vmatpush1.bf16.msra.mxu0 %v1504
        %2040 = vmatprep.subr.bf16.mxu0 %v1507
        %2041 = vmatpush1.bf16.msra.mxu0 %v1506
        %2042 = vmatprep.subr.bf16.mxu0 %v1509
        %2043 = vmatpush1.bf16.msra.mxu0 %v1508
        %2044 = vmatprep.subr.bf16.mxu0 %v1511
        %2045 = vmatpush1.bf16.msra.mxu0 %v1510
        %2046 = vmatprep.subr.bf16.mxu0 %v1513
        %2047 = vmatpush1.bf16.msra.mxu0 %v1512
        %2048 = vmatprep.subr.bf16.mxu0 %v1515
        %2049 = vmatpush1.bf16.msra.mxu0 %v1514
        %2050 = vmatprep.subr.bf16.mxu0 %v1517
        %2051 = vmatpush1.bf16.msra.mxu0 %v1516
        %2052 = vmatprep.subr.bf16.mxu0 %v1519
        %2053 = vmatpush1.bf16.msra.mxu0 %v1518
        %2054 = vmatprep.subr.bf16.mxu0 %v1521
        %2055 = vmatpush1.bf16.msra.mxu0 %v1520
        %2056 = vmatprep.subr.bf16.mxu0 %v1523
        %2057 = vmatpush1.bf16.msra.mxu0 %v1522
        %2058 = vmatprep.subr.bf16.mxu0 %v1525
        %2059 = vmatpush1.bf16.msra.mxu0 %v1524
        %2060 = vmatprep.subr.bf16.mxu0 %v1527
        %2061 = vmatpush1.bf16.msra.mxu0 %v1526
        %2062 = vmatprep.subr.bf16.mxu0 %v1529
        %2063 = vmatpush1.bf16.msra.mxu0 %v1528
        %2064 = vmatprep.subr.bf16.mxu0 %v1531
        %2065 = vmatpush1.bf16.msra.mxu0 %v1530
        %2066 = vmatprep.subr.bf16.mxu0 %v1533
        %2067 = vmatpush1.bf16.msra.mxu0 %v1532
        %2068 = vmatprep.mubr.bf16.mxu0 %v643
        %2069 = vmatmul.mubr.bf16.gmra.mrb[0].mxu0 %v642
        %v2070 = vpop.f32.mrb[0].mxu0
        %v2071 = vadd.f32 %v2028, %v2070
        %v2072 = vpop.f32.mrb[0].mxu0
        %v2073 = vadd.f32 %v2030, %v2072
        %v2074 = vpop.f32.mrb[0].mxu0
        %v2075 = vadd.f32 %v2032, %v2074
        %v2076 = vpop.f32.mrb[0].mxu0
        %v2077 = vadd.f32 %v2034, %v2076
        %2078 = vdwg.mxu0
        %2079 = vmatprep.subr.bf16.mxu0 %v1535
        %2080 = vmatpush1.bf16.msra.mxu0 %v1534
        %2081 = vmatprep.subr.bf16.mxu0 %v1537
        %2082 = vmatpush1.bf16.msra.mxu0 %v1536
        %2083 = vmatprep.subr.bf16.mxu0 %v1539
        %2084 = vmatpush1.bf16.msra.mxu0 %v1538
        %2085 = vmatprep.subr.bf16.mxu0 %v1541
        %2086 = vmatpush1.bf16.msra.mxu0 %v1540
        %2087 = vmatprep.subr.bf16.mxu0 %v1543
        %2088 = vmatpush1.bf16.msra.mxu0 %v1542
        %2089 = vmatprep.subr.bf16.mxu0 %v1545
        %2090 = vmatpush1.bf16.msra.mxu0 %v1544
        %2091 = vmatprep.subr.bf16.mxu0 %v1547
        %2092 = vmatpush1.bf16.msra.mxu0 %v1546
        %2093 = vmatprep.subr.bf16.mxu0 %v1549
        %2094 = vmatpush1.bf16.msra.mxu0 %v1548
        %2095 = vmatprep.subr.bf16.mxu0 %v1551
        %2096 = vmatpush1.bf16.msra.mxu0 %v1550
        %2097 = vmatprep.subr.bf16.mxu0 %v1553
        %2098 = vmatpush1.bf16.msra.mxu0 %v1552
        %2099 = vmatprep.subr.bf16.mxu0 %v1555
        %2100 = vmatpush1.bf16.msra.mxu0 %v1554
        %2101 = vmatprep.subr.bf16.mxu0 %v1557
        %2102 = vmatpush1.bf16.msra.mxu0 %v1556
        %2103 = vmatprep.subr.bf16.mxu0 %v1559
        %2104 = vmatpush1.bf16.msra.mxu0 %v1558
        %2105 = vmatprep.subr.bf16.mxu0 %v1561
        %2106 = vmatpush1.bf16.msra.mxu0 %v1560
        %2107 = vmatprep.subr.bf16.mxu0 %v1563
        %2108 = vmatpush1.bf16.msra.mxu0 %v1562
        %2109 = vmatprep.subr.bf16.mxu0 %v1565
        %2110 = vmatpush1.bf16.msra.mxu0 %v1564
        %2111 = vmatprep.mubr.bf16.mxu0 %v645
        %2112 = vmatmul.mubr.bf16.gmra.mrb[0].mxu0 %v644
        %v2113 = vpop.f32.mrb[0].mxu0
        %v2114 = vadd.f32 %v2071, %v2113
        %v2115 = vpop.f32.mrb[0].mxu0
        %v2116 = vadd.f32 %v2073, %v2115
        %v2117 = vpop.f32.mrb[0].mxu0
        %v2118 = vadd.f32 %v2075, %v2117
        %v2119 = vpop.f32.mrb[0].mxu0
        %v2120 = vadd.f32 %v2077, %v2119
        %2121 = vdwg.mxu0
        %2122 = vmatprep.subr.bf16.mxu0 %v1567
        %2123 = vmatpush1.bf16.msra.mxu0 %v1566
        %2124 = vmatprep.subr.bf16.mxu0 %v1569
        %2125 = vmatpush1.bf16.msra.mxu0 %v1568
        %2126 = vmatprep.subr.bf16.mxu0 %v1571
        %2127 = vmatpush1.bf16.msra.mxu0 %v1570
        %2128 = vmatprep.subr.bf16.mxu0 %v1573
        %2129 = vmatpush1.bf16.msra.mxu0 %v1572
        %2130 = vmatprep.subr.bf16.mxu0 %v1575
        %2131 = vmatpush1.bf16.msra.mxu0 %v1574
        %2132 = vmatprep.subr.bf16.mxu0 %v1577
        %2133 = vmatpush1.bf16.msra.mxu0 %v1576
        %2134 = vmatprep.subr.bf16.mxu0 %v1579
        %2135 = vmatpush1.bf16.msra.mxu0 %v1578
        %2136 = vmatprep.subr.bf16.mxu0 %v1581
        %2137 = vmatpush1.bf16.msra.mxu0 %v1580
        %2138 = vmatprep.subr.bf16.mxu0 %v1583
        %2139 = vmatpush1.bf16.msra.mxu0 %v1582
        %2140 = vmatprep.subr.bf16.mxu0 %v1585
        %2141 = vmatpush1.bf16.msra.mxu0 %v1584
        %2142 = vmatprep.subr.bf16.mxu0 %v1587
        %2143 = vmatpush1.bf16.msra.mxu0 %v1586
        %2144 = vmatprep.subr.bf16.mxu0 %v1589
        %2145 = vmatpush1.bf16.msra.mxu0 %v1588
        %2146 = vmatprep.subr.bf16.mxu0 %v1591
        %2147 = vmatpush1.bf16.msra.mxu0 %v1590
        %2148 = vmatprep.subr.bf16.mxu0 %v1593
        %2149 = vmatpush1.bf16.msra.mxu0 %v1592
        %2150 = vmatprep.subr.bf16.mxu0 %v1595
        %2151 = vmatpush1.bf16.msra.mxu0 %v1594
        %2152 = vmatprep.subr.bf16.mxu0 %v1597
        %2153 = vmatpush1.bf16.msra.mxu0 %v1596
        %2154 = vmatprep.mubr.bf16.mxu0 %v647
        %2155 = vmatmul.mubr.bf16.gmra.mrb[0].mxu0 %v646
        %v2156 = vpop.f32.mrb[0].mxu0
        %v2157 = vadd.f32 %v2114, %v2156
        %v2158 = vpop.f32.mrb[0].mxu0
        %v2159 = vadd.f32 %v2116, %v2158
        %v2160 = vpop.f32.mrb[0].mxu0
        %v2161 = vadd.f32 %v2118, %v2160
        %v2162 = vpop.f32.mrb[0].mxu0
        %v2163 = vadd.f32 %v2120, %v2162
        %2164 = vdwg.mxu0
        %2165 = vmatprep.subr.bf16.mxu0 %v1599
        %2166 = vmatpush1.bf16.msra.mxu0 %v1598
        %2167 = vmatprep.subr.bf16.mxu0 %v1601
        %2168 = vmatpush1.bf16.msra.mxu0 %v1600
        %2169 = vmatprep.subr.bf16.mxu0 %v1603
        %2170 = vmatpush1.bf16.msra.mxu0 %v1602
        %2171 = vmatprep.subr.bf16.mxu0 %v1605
        %2172 = vmatpush1.bf16.msra.mxu0 %v1604
        %2173 = vmatprep.subr.bf16.mxu0 %v1607
        %2174 = vmatpush1.bf16.msra.mxu0 %v1606
        %2175 = vmatprep.subr.bf16.mxu0 %v1609
        %2176 = vmatpush1.bf16.msra.mxu0 %v1608
        %2177 = vmatprep.subr.bf16.mxu0 %v1611
        %2178 = vmatpush1.bf16.msra.mxu0 %v1610
        %2179 = vmatprep.subr.bf16.mxu0 %v1613
        %2180 = vmatpush1.bf16.msra.mxu0 %v1612
        %2181 = vmatprep.subr.bf16.mxu0 %v1615
        %2182 = vmatpush1.bf16.msra.mxu0 %v1614
        %2183 = vmatprep.subr.bf16.mxu0 %v1617
        %2184 = vmatpush1.bf16.msra.mxu0 %v1616
        %2185 = vmatprep.subr.bf16.mxu0 %v1619
        %2186 = vmatpush1.bf16.msra.mxu0 %v1618
        %2187 = vmatprep.subr.bf16.mxu0 %v1621
        %2188 = vmatpush1.bf16.msra.mxu0 %v1620
        %2189 = vmatprep.subr.bf16.mxu0 %v1623
        %2190 = vmatpush1.bf16.msra.mxu0 %v1622
        %2191 = vmatprep.subr.bf16.mxu0 %v1625
        %2192 = vmatpush1.bf16.msra.mxu0 %v1624
        %2193 = vmatprep.subr.bf16.mxu0 %v1627
        %2194 = vmatpush1.bf16.msra.mxu0 %v1626
        %2195 = vmatprep.subr.bf16.mxu0 %v1629
        %2196 = vmatpush1.bf16.msra.mxu0 %v1628
        %2197 = vmatprep.mubr.bf16.mxu0 %v649
        %2198 = vmatmul.mubr.bf16.gmra.mrb[0].mxu0 %v648
        %v2199 = vpop.f32.mrb[0].mxu0
        %v2200 = vadd.f32 %v2157, %v2199
        %v2201 = vpop.f32.mrb[0].mxu0
        %v2202 = vadd.f32 %v2159, %v2201
        %v2203 = vpop.f32.mrb[0].mxu0
        %v2204 = vadd.f32 %v2161, %v2203
        %v2205 = vpop.f32.mrb[0].mxu0
        %v2206 = vadd.f32 %v2163, %v2205
        %2207 = vdwg.mxu0
        %2208 = vmatprep.subr.bf16.mxu0 %v1631
        %2209 = vmatpush1.bf16.msra.mxu0 %v1630
        %2210 = vmatprep.subr.bf16.mxu0 %v1633
        %2211 = vmatpush1.bf16.msra.mxu0 %v1632
        %2212 = vmatprep.subr.bf16.mxu0 %v1635
        %2213 = vmatpush1.bf16.msra.mxu0 %v1634
        %2214 = vmatprep.subr.bf16.mxu0 %v1637
        %2215 = vmatpush1.bf16.msra.mxu0 %v1636
        %2216 = vmatprep.subr.bf16.mxu0 %v1639
        %2217 = vmatpush1.bf16.msra.mxu0 %v1638
        %2218 = vmatprep.subr.bf16.mxu0 %v1641
        %2219 = vmatpush1.bf16.msra.mxu0 %v1640
        %2220 = vmatprep.subr.bf16.mxu0 %v1643
        %2221 = vmatpush1.bf16.msra.mxu0 %v1642
        %2222 = vmatprep.subr.bf16.mxu0 %v1645
        %2223 = vmatpush1.bf16.msra.mxu0 %v1644
        %2224 = vmatprep.subr.bf16.mxu0 %v1647
        %2225 = vmatpush1.bf16.msra.mxu0 %v1646
        %2226 = vmatprep.subr.bf16.mxu0 %v1649
        %2227 = vmatpush1.bf16.msra.mxu0 %v1648
        %2228 = vmatprep.subr.bf16.mxu0 %v1651
        %2229 = vmatpush1.bf16.msra.mxu0 %v1650
        %2230 = vmatprep.subr.bf16.mxu0 %v1653
        %2231 = vmatpush1.bf16.msra.mxu0 %v1652
        %2232 = vmatprep.subr.bf16.mxu0 %v1655
        %2233 = vmatpush1.bf16.msra.mxu0 %v1654
        %2234 = vmatprep.subr.bf16.mxu0 %v1657
        %2235 = vmatpush1.bf16.msra.mxu0 %v1656
        %2236 = vmatprep.subr.bf16.mxu0 %v1659
        %2237 = vmatpush1.bf16.msra.mxu0 %v1658
        %2238 = vmatprep.subr.bf16.mxu0 %v1661
        %2239 = vmatpush1.bf16.msra.mxu0 %v1660
        %2240 = vmatprep.mubr.bf16.mxu0 %v651
        %2241 = vmatmul.mubr.bf16.gmra.mrb[0].mxu0 %v650
        %v2242 = vpop.f32.mrb[0].mxu0
        %v2243 = vadd.f32 %v2200, %v2242
        %v2244 = vpop.f32.mrb[0].mxu0
        %v2245 = vadd.f32 %v2202, %v2244
        %v2246 = vpop.f32.mrb[0].mxu0
        %v2247 = vadd.f32 %v2204, %v2246
        %v2248 = vpop.f32.mrb[0].mxu0
        %v2249 = vadd.f32 %v2206, %v2248
        %2250 = vdwg.mxu0
        %2251 = vmatprep.subr.bf16.mxu0 %v1663
        %2252 = vmatpush1.bf16.msra.mxu0 %v1662
        %2253 = vmatprep.subr.bf16.mxu0 %v1665
        %2254 = vmatpush1.bf16.msra.mxu0 %v1664
        %2255 = vmatprep.subr.bf16.mxu0 %v1667
        %2256 = vmatpush1.bf16.msra.mxu0 %v1666
        %2257 = vmatprep.subr.bf16.mxu0 %v1669
        %2258 = vmatpush1.bf16.msra.mxu0 %v1668
        %2259 = vmatprep.subr.bf16.mxu0 %v1671
        %2260 = vmatpush1.bf16.msra.mxu0 %v1670
        %2261 = vmatprep.subr.bf16.mxu0 %v1673
        %2262 = vmatpush1.bf16.msra.mxu0 %v1672
        %2263 = vmatprep.subr.bf16.mxu0 %v1675
        %2264 = vmatpush1.bf16.msra.mxu0 %v1674
        %2265 = vmatprep.subr.bf16.mxu0 %v1677
        %2266 = vmatpush1.bf16.msra.mxu0 %v1676
        %2267 = vmatprep.subr.bf16.mxu0 %v1679
        %2268 = vmatpush1.bf16.msra.mxu0 %v1678
        %2269 = vmatprep.subr.bf16.mxu0 %v1681
        %2270 = vmatpush1.bf16.msra.mxu0 %v1680
        %2271 = vmatprep.subr.bf16.mxu0 %v1683
        %2272 = vmatpush1.bf16.msra.mxu0 %v1682
        %2273 = vmatprep.subr.bf16.mxu0 %v1685
        %2274 = vmatpush1.bf16.msra.mxu0 %v1684
        %2275 = vmatprep.subr.bf16.mxu0 %v1687
        %2276 = vmatpush1.bf16.msra.mxu0 %v1686
        %2277 = vmatprep.subr.bf16.mxu0 %v1689
        %2278 = vmatpush1.bf16.msra.mxu0 %v1688
        %2279 = vmatprep.subr.bf16.mxu0 %v1691
        %2280 = vmatpush1.bf16.msra.mxu0 %v1690
        %2281 = vmatprep.subr.bf16.mxu0 %v1693
        %2282 = vmatpush1.bf16.msra.mxu0 %v1692
        %2283 = vmatprep.mubr.bf16.mxu0 %v653
        %2284 = vmatmul.mubr.bf16.gmra.mrb[0].mxu0 %v652
        %v2285 = vpop.f32.mrb[0].mxu0
        %v2286 = vadd.f32 %v2243, %v2285
        %v2287 = vpop.f32.mrb[0].mxu0
        %v2288 = vadd.f32 %v2245, %v2287
        %v2289 = vpop.f32.mrb[0].mxu0
        %v2290 = vadd.f32 %v2247, %v2289
        %v2291 = vpop.f32.mrb[0].mxu0
        %v2292 = vadd.f32 %v2249, %v2291
        %2293 = vdwg.mxu0
        %v2294 = vadd.f32 %v314, %v2286
        %v2295 = vadd.f32 %v315, %v2288
        %v2296 = vadd.f32 %v316, %v2290
        %v2297 = vadd.f32 %v317, %v2292
        %2298 = vst [vmem:[#allocation2] sm:$0xff] %v2294
        %2299 = vst [vmem:[#allocation2 + $0x8] sm:$0xff] %v2295
        %2300 = vst [vmem:[#allocation2 + $0x10] sm:$0xff] %v2296
        %2301 = vst [vmem:[#allocation2 + $0x18] sm:$0xff] %v2297
        // Predicated region
        $region49: #{autoencoder_forward.10} parent=31 // pred_check
          %p2302 = pneg %p306
        $region50: #{autoencoder_forward.10} parent=31 // pred_check_branch
          %2304 = sbr.rel (%p2302) target = $region52
        $region51: #{autoencoder_forward.10} parent=31 // pred_region
          %v2305 = vld [vmem:[#allocation2] sm:$0xff]
          %v2306 = vld [vmem:[#allocation2 + $0x8] sm:$0xff]
          %v2307 = vld [vmem:[#allocation2 + $0x10] sm:$0xff]
          %v2308 = vld [vmem:[#allocation2 + $0x18] sm:$0xff]
          %v2309 = vld [vmem:[%s271] sm:$0x3]
          %v2311 = vlaneseq
          %v2312 = vshrl.u32 %v2311, 7
          %v2313 = vsub.s32 0, %v2312
          %v2314 = vrot.slane %v2309, %v2313
          %v2315 = vlaneseq
          %v2316 = vshrl.u32 %v2315, 7
          %v2317 = vsub.s32 1, %v2316
          %v2318 = vrot.slane %v2309, %v2317
          %v2321 = vadd.f32 %v2305, %v2314
          %v2322 = vadd.f32 %v2306, %v2318
          %v2323 = vadd.f32 %v2307, %v2314
          %v2324 = vadd.f32 %v2308, %v2318
          %v2325 = vmax.f32 %v2321, 0.0
          %v2326 = vmax.f32 %v2322, 0.0
          %v2327 = vmax.f32 %v2323, 0.0
          %v2328 = vmax.f32 %v2324, 0.0
          %v2329 = vpack.c.bf16 %v2327, %v2325
          %v2330 = vpack.c.bf16 %v2328, %v2326
          %v2333 = vunpack.c.l.b16 %v2329
          %v2334 = vunpack.c.l.b16 %v2330
          %v2335 = vunpack.c.h.b16 %v2329
          %v2336 = vunpack.c.h.b16 %v2330
          %v2337 = vpack.c.b16 %v2334, %v2333
          %v2338 = vpack.c.b16 %v2336, %v2335
          %2341 = vst [vmem:[%s298] sm:$0xff] %v2337
          %2342 = vst [vmem:[%s298 + $0x8] sm:$0xff] %v2338
        $region52: #{autoencoder_forward.10} parent=31 // pred_fallthru
          _
        %s2343 = sand.u32 %s147, 1
        %s2344 = scalar_lea.sflag [#allocation5], %s2343
        %s2345 = sand.u32 %s147, 1
        %s2346 = smul.addr %s2345, 16
        %s2347 = scalar_lea.vmem [#allocation9], %s2346
        // Predicated region
        $region53: #{autoencoder_forward.10} parent=31 // pred_check
          %p2348 = pneg %p157
        $region54: #{autoencoder_forward.10} parent=31 // pred_check_branch
          %2350 = sbr.rel (%p2348) target = $region56
        $region55: #{autoencoder_forward.10} parent=31 // pred_region
          %s2351 = smul.u32 2, %s28
          %s2352 = smul.u32 2, %s29
          %s2354 = ssub.s32 256, 256
          %2355 = vsyncadd %s2344, %s2354
          %s2356 = smul.addr %s2351, 4
          %s2357 = sadd.s32 %s2352, %s2356
          %s2358 = smul.addr %s27, 8
          %s2359 = sadd.s32 %s2357, %s2358
          %s2360 = smul.addr %s2359, 64
          %s2361 = scalar_lea.hbm %s3, %s2360
          %s2362 = sshll.u32 %s2347, 4
          %s2363 = int_to_ptr.vmem [resolvable:$true] %s2362
          %2368 = dma.vmem_to_hbm [thread:$0]  %s2363, 256, %s2361, %s2344, 128, 256, 8
        $region56: #{autoencoder_forward.10} parent=31 // pred_fallthru
          _
      $region32: #{autoencoder_forward.10} parent=5 // pred_fallthru
        _
      %p2369 = scmp.le.s32.totalorder 2, %s16
      // Predicated region
      $region57: #{autoencoder_forward.10} parent=5 // pred_check
        %p2370 = pneg %p2369
      $region58: #{autoencoder_forward.10} parent=5 // pred_check_branch
        %2372 = sbr.rel (%p2370) target = $region60
      $region59: #{autoencoder_forward.10} parent=5 // pred_region
        %s2373 = ssub.s32 %s16, 2
        // Predicated region
        $region61: #{autoencoder_forward.10} parent=59 // pred_check
          %p2374 = pneg %p163
        $region62: #{autoencoder_forward.10} parent=59 // pred_check_branch
          %2376 = sbr.rel (%p2374) target = $region64
        $region63: #{autoencoder_forward.10} parent=59 // pred_region
          %s2377 = sand.u32 %s148, 1
          %s2378 = scalar_lea.sflag [#allocation5], %s2377
          %s2379 = sand.u32 %s148, 1
          %s2380 = smul.addr %s2379, 16
          %s2381 = scalar_lea.vmem [#allocation9], %s2380
          %2382 = dma.done %s2378, 256
        $region64: #{autoencoder_forward.10} parent=59 // pred_fallthru
          _
      $region60: #{autoencoder_forward.10} parent=5 // pred_fallthru
        _
    $region6: #{autoencoder_forward.10} parent=1 // loop_footer
      %s20 = sadd.s32 1, %s16
    $region7: #{autoencoder_forward.10} parent=1 // loop_footer_branch
      %15 = sbr.rel target = $region3
    $region8: #{autoencoder_forward.10} parent=1 // loop_exit
      _
    %2383 = vsyncpa [#allocation4], 1
    %s2384 = scalar_lea.sflag [#allocation4], 1
    %2385 = vsyncpa %s2384, 1
    %2386 = vsyncpa [#allocation7], 1
    %s2387 = scalar_lea.sflag [#allocation7], 1
    %2388 = vsyncpa %s2387, 1
    %2389 = vsyncpa [#allocation5], 1
    %s2390 = scalar_lea.sflag [#allocation5], 1
    %2391 = vsyncpa %s2390, 1

// kernel: autoencoder_forward.11
$region0: #{autoencoder_forward.11}
  #allocation0 [shape = 'u32[]', space=smem, size = 0x4, offset = 0x4, fixed_abs, tag = 'smem constant byte address 0x4 - core index']
  #allocation1 [shape = 'u32[144,128]{1,0:T(1,128)}', space=vmem, size = 0x12000, scoped, tag = 'internal scratch']
  #allocation2 [shape = 'f32[16,128]{1,0:T(8,128)}', space=vmem, size = 0x2000, scoped, tag = 'scratch operand']
  %s0 = inlined_call_operand.hbm [shape: bf16[1,16,2048], index: 0, kind: input, shape index: {}]
  %s1 = inlined_call_operand.hbm [shape: bf16[1,2048,128], index: 1, kind: input, shape index: {}]
  %s2 = inlined_call_operand.hbm [shape: f32[1,1,128], index: 2, kind: input, shape index: {}]
  %s3 = inlined_call_operand.hbm [shape: f32[1,16,128], index: 3, kind: output, shape index: {}]
  %s4 = sld [smem:[#allocation0]]
  $region42: #{autoencoder_forward.11} parent=0
    _
  %s6 = ssub.s32 1, %s4
  %s7 = scalar_select 0, %s6, %s4
  $region1: #{autoencoder_forward.11} parent=0
    #allocation3 [shape = 'u8[65536]{0}', space=vmem, size = 0x10000, scoped, tag = 'input window, operand 0, single buffered']
    #allocation4 [shape = 's32[1]{0}', space=sflag, size = 0x4, scoped, tag = 'scoped memory for autoencoder_forward.11']
    #allocation5 [shape = 's32[1]{0}', space=sflag, size = 0x4, scoped, tag = 'scoped memory for autoencoder_forward.11']
    #allocation6 [shape = 'u8[524288]{0}', space=vmem, size = 0x80000, scoped, tag = 'input window, operand 1, single buffered']
    #allocation7 [shape = 's32[1]{0}', space=sflag, size = 0x4, scoped, tag = 'scoped memory for autoencoder_forward.11']
    #allocation8 [shape = 'u8[512]{0}', space=vmem, size = 0x400, scoped, tag = 'input window, operand 2, single buffered']
    #allocation9 [shape = 'u8[8192]{0}', space=vmem, size = 0x2000, scoped, tag = 'output window, operand 0, single buffered']
    %8 = vsyncpa [#allocation4], 0
    %9 = vsyncpa [#allocation7], 0
    %10 = vsyncpa [#allocation5], 0
    // Predicated region
    $region2: #{autoencoder_forward.11} parent=1 // pred_check
      _
    $region3: #{autoencoder_forward.11} parent=1 // pred_check_branch
      %12 = sbr.rel (0) target = $region5
    $region4: #{autoencoder_forward.11} parent=1 // pred_region
      %s14 = ssub.s32 2048, 2048
      %15 = vsyncadd [#allocation4], %s14
      %s16 = sshll.u32 [#allocation3], 4
      %s17 = int_to_ptr.vmem [resolvable:$true] %s16
      %22 = dma.hbm_to_vmem [thread:$0]  %s0, 2048, %s17, [#allocation4], 1024, 1024, 64
    $region5: #{autoencoder_forward.11} parent=1 // pred_fallthru
      _
    // Predicated region
    $region6: #{autoencoder_forward.11} parent=1 // pred_check
      _
    $region7: #{autoencoder_forward.11} parent=1 // pred_check_branch
      %24 = sbr.rel (0) target = $region9
    $region8: #{autoencoder_forward.11} parent=1 // pred_region
      %s26 = ssub.s32 16384, 16384
      %27 = vsyncadd [#allocation7], %s26
      %s28 = sshll.u32 [#allocation6], 4
      %s29 = int_to_ptr.vmem [resolvable:$true] %s28
      %34 = dma.hbm_to_vmem [thread:$0]  %s1, 16384, %s29, [#allocation7], 64, 64, 4
    $region9: #{autoencoder_forward.11} parent=1 // pred_fallthru
      _
    // Predicated region
    $region10: #{autoencoder_forward.11} parent=1 // pred_check
      _
    $region11: #{autoencoder_forward.11} parent=1 // pred_check_branch
      %36 = sbr.rel (0) target = $region13
    $region12: #{autoencoder_forward.11} parent=1 // pred_region
      %s38 = ssub.s32 16, 16
      %39 = vsyncadd [#allocation7], %s38
      %s41 = sshll.u32 [#allocation8], 4
      %s42 = int_to_ptr.vmem [resolvable:$true] %s41
      %44 = dma.hbm_to_vmem [thread:$0]  %s2, 16, %s42, [#allocation7]
    $region13: #{autoencoder_forward.11} parent=1 // pred_fallthru
      _
    // Predicated region
    $region14: #{autoencoder_forward.11} parent=1 // pred_check
      _
    $region15: #{autoencoder_forward.11} parent=1 // pred_check_branch
      %46 = sbr.rel (0) target = $region17
    $region16: #{autoencoder_forward.11} parent=1 // pred_region
      %47 = dma.done [#allocation4], 2048
    $region17: #{autoencoder_forward.11} parent=1 // pred_fallthru
      _
    // Predicated region
    $region18: #{autoencoder_forward.11} parent=1 // pred_check
      _
    $region19: #{autoencoder_forward.11} parent=1 // pred_check_branch
      %49 = sbr.rel (0) target = $region21
    $region20: #{autoencoder_forward.11} parent=1 // pred_region
      %50 = dma.done [#allocation7], 16384
    $region21: #{autoencoder_forward.11} parent=1 // pred_fallthru
      _
    // Predicated region
    $region22: #{autoencoder_forward.11} parent=1 // pred_check
      _
    $region23: #{autoencoder_forward.11} parent=1 // pred_check_branch
      %52 = sbr.rel (0) target = $region25
    $region24: #{autoencoder_forward.11} parent=1 // pred_region
      %53 = dma.done [#allocation7], 16
    $region25: #{autoencoder_forward.11} parent=1 // pred_fallthru
      _
    %p55 = scmp.eq.s32.totalorder 0, 0
    // Predicated region
    $region26: #{autoencoder_forward.11} parent=1 // pred_check
      %p56 = pneg %p55
    $region27: #{autoencoder_forward.11} parent=1 // pred_check_branch
      %58 = sbr.rel (%p56) target = $region29
    $region28: #{autoencoder_forward.11} parent=1 // pred_region
      %59 = vst [vmem:[#allocation2] sm:$0xff] 0.0
      %60 = vst [vmem:[#allocation2 + $0x8] sm:$0xff] 0.0
    $region29: #{autoencoder_forward.11} parent=1 // pred_fallthru
      _
    %v61 = vld [vmem:[#allocation2] sm:$0xff]
    %v62 = vld [vmem:[#allocation2 + $0x8] sm:$0xff]
    %v63 = vld [vmem:[#allocation3] sm:$0xff]
    %v64 = vld [vmem:[#allocation3 + $0x8] sm:$0xff]
    %v65 = vld [vmem:[#allocation3 + $0x10] sm:$0xff]
    %v66 = vld [vmem:[#allocation3 + $0x18] sm:$0xff]
    %v67 = vld [vmem:[#allocation3 + $0x20] sm:$0xff]
    %v68 = vld [vmem:[#allocation3 + $0x28] sm:$0xff]
    %v69 = vld [vmem:[#allocation3 + $0x30] sm:$0xff]
    %v70 = vld [vmem:[#allocation3 + $0x38] sm:$0xff]
    %v71 = vld [vmem:[#allocation3 + $0x40] sm:$0xff]
    %v72 = vld [vmem:[#allocation3 + $0x48] sm:$0xff]
    %v73 = vld [vmem:[#allocation3 + $0x50] sm:$0xff]
    %v74 = vld [vmem:[#allocation3 + $0x58] sm:$0xff]
    %v75 = vld [vmem:[#allocation3 + $0x60] sm:$0xff]
    %v76 = vld [vmem:[#allocation3 + $0x68] sm:$0xff]
    %v77 = vld [vmem:[#allocation3 + $0x70] sm:$0xff]
    %v78 = vld [vmem:[#allocation3 + $0x78] sm:$0xff]
    %v79 = vld [vmem:[#allocation6] sm:$0xf]
    %v80 = vld [vmem:[#allocation6 + $0x4] sm:$0xf]
    %v81 = vld [vmem:[#allocation6 + $0x8] sm:$0xf]
    %v82 = vld [vmem:[#allocation6 + $0xc] sm:$0xf]
    %v83 = vld [vmem:[#allocation6 + $0x10] sm:$0xf]
    %v84 = vld [vmem:[#allocation6 + $0x14] sm:$0xf]
    %v85 = vld [vmem:[#allocation6 + $0x18] sm:$0xf]
    %v86 = vld [vmem:[#allocation6 + $0x1c] sm:$0xf]
    %v87 = vld [vmem:[#allocation6 + $0x20] sm:$0xf]
    %v88 = vld [vmem:[#allocation6 + $0x24] sm:$0xf]
    %v89 = vld [vmem:[#allocation6 + $0x28] sm:$0xf]
    %v90 = vld [vmem:[#allocation6 + $0x2c] sm:$0xf]
    %v91 = vld [vmem:[#allocation6 + $0x30] sm:$0xf]
    %v92 = vld [vmem:[#allocation6 + $0x34] sm:$0xf]
    %v93 = vld [vmem:[#allocation6 + $0x38] sm:$0xf]
    %v94 = vld [vmem:[#allocation6 + $0x3c] sm:$0xf]
    %v95 = vld [vmem:[#allocation6 + $0x40] sm:$0xf]
    %v96 = vld [vmem:[#allocation6 + $0x44] sm:$0xf]
    %v97 = vld [vmem:[#allocation6 + $0x48] sm:$0xf]
    %v98 = vld [vmem:[#allocation6 + $0x4c] sm:$0xf]
    %v99 = vld [vmem:[#allocation6 + $0x50] sm:$0xf]
    %v100 = vld [vmem:[#allocation6 + $0x54] sm:$0xf]
    %v101 = vld [vmem:[#allocation6 + $0x58] sm:$0xf]
    %v102 = vld [vmem:[#allocation6 + $0x5c] sm:$0xf]
    %v103 = vld [vmem:[#allocation6 + $0x60] sm:$0xf]
    %v104 = vld [vmem:[#allocation6 + $0x64] sm:$0xf]
    %v105 = vld [vmem:[#allocation6 + $0x68] sm:$0xf]
    %v106 = vld [vmem:[#allocation6 + $0x6c] sm:$0xf]
    %v107 = vld [vmem:[#allocation6 + $0x70] sm:$0xf]
    %v108 = vld [vmem:[#allocation6 + $0x74] sm:$0xf]
    %v109 = vld [vmem:[#allocation6 + $0x78] sm:$0xf]
    %v110 = vld [vmem:[#allocation6 + $0x7c] sm:$0xf]
    %v111 = vld [vmem:[#allocation6 + $0x80] sm:$0xf]
    %v112 = vld [vmem:[#allocation6 + $0x84] sm:$0xf]
    %v113 = vld [vmem:[#allocation6 + $0x88] sm:$0xf]
    %v114 = vld [vmem:[#allocation6 + $0x8c] sm:$0xf]
    %v115 = vld [vmem:[#allocation6 + $0x90] sm:$0xf]
    %v116 = vld [vmem:[#allocation6 + $0x94] sm:$0xf]
    %v117 = vld [vmem:[#allocation6 + $0x98] sm:$0xf]
    %v118 = vld [vmem:[#allocation6 + $0x9c] sm:$0xf]
    %v119 = vld [vmem:[#allocation6 + $0xa0] sm:$0xf]
    %v120 = vld [vmem:[#allocation6 + $0xa4] sm:$0xf]
    %v121 = vld [vmem:[#allocation6 + $0xa8] sm:$0xf]
    %v122 = vld [vmem:[#allocation6 + $0xac] sm:$0xf]
    %v123 = vld [vmem:[#allocation6 + $0xb0] sm:$0xf]
    %v124 = vld [vmem:[#allocation6 + $0xb4] sm:$0xf]
    %v125 = vld [vmem:[#allocation6 + $0xb8] sm:$0xf]
    %v126 = vld [vmem:[#allocation6 + $0xbc] sm:$0xf]
    %v127 = vld [vmem:[#allocation6 + $0xc0] sm:$0xf]
    %v128 = vld [vmem:[#allocation6 + $0xc4] sm:$0xf]
    %v129 = vld [vmem:[#allocation6 + $0xc8] sm:$0xf]
    %v130 = vld [vmem:[#allocation6 + $0xcc] sm:$0xf]
    %v131 = vld [vmem:[#allocation6 + $0xd0] sm:$0xf]
    %v132 = vld [vmem:[#allocation6 + $0xd4] sm:$0xf]
    %v133 = vld [vmem:[#allocation6 + $0xd8] sm:$0xf]
    %v134 = vld [vmem:[#allocation6 + $0xdc] sm:$0xf]
    %v135 = vld [vmem:[#allocation6 + $0xe0] sm:$0xf]
    %v136 = vld [vmem:[#allocation6 + $0xe4] sm:$0xf]
    %v137 = vld [vmem:[#allocation6 + $0xe8] sm:$0xf]
    %v138 = vld [vmem:[#allocation6 + $0xec] sm:$0xf]
    %v139 = vld [vmem:[#allocation6 + $0xf0] sm:$0xf]
    %v140 = vld [vmem:[#allocation6 + $0xf4] sm:$0xf]
    %v141 = vld [vmem:[#allocation6 + $0xf8] sm:$0xf]
    %v142 = vld [vmem:[#allocation6 + $0xfc] sm:$0xf]
    %v143 = vld [vmem:[#allocation6 + $0x100] sm:$0xf]
    %v144 = vld [vmem:[#allocation6 + $0x104] sm:$0xf]
    %v145 = vld [vmem:[#allocation6 + $0x108] sm:$0xf]
    %v146 = vld [vmem:[#allocation6 + $0x10c] sm:$0xf]
    %v147 = vld [vmem:[#allocation6 + $0x110] sm:$0xf]
    %v148 = vld [vmem:[#allocation6 + $0x114] sm:$0xf]
    %v149 = vld [vmem:[#allocation6 + $0x118] sm:$0xf]
    %v150 = vld [vmem:[#allocation6 + $0x11c] sm:$0xf]
    %v151 = vld [vmem:[#allocation6 + $0x120] sm:$0xf]
    %v152 = vld [vmem:[#allocation6 + $0x124] sm:$0xf]
    %v153 = vld [vmem:[#allocation6 + $0x128] sm:$0xf]
    %v154 = vld [vmem:[#allocation6 + $0x12c] sm:$0xf]
    %v155 = vld [vmem:[#allocation6 + $0x130] sm:$0xf]
    %v156 = vld [vmem:[#allocation6 + $0x134] sm:$0xf]
    %v157 = vld [vmem:[#allocation6 + $0x138] sm:$0xf]
    %v158 = vld [vmem:[#allocation6 + $0x13c] sm:$0xf]
    %v159 = vld [vmem:[#allocation6 + $0x140] sm:$0xf]
    %v160 = vld [vmem:[#allocation6 + $0x144] sm:$0xf]
    %v161 = vld [vmem:[#allocation6 + $0x148] sm:$0xf]
    %v162 = vld [vmem:[#allocation6 + $0x14c] sm:$0xf]
    %v163 = vld [vmem:[#allocation6 + $0x150] sm:$0xf]
    %v164 = vld [vmem:[#allocation6 + $0x154] sm:$0xf]
    %v165 = vld [vmem:[#allocation6 + $0x158] sm:$0xf]
    %v166 = vld [vmem:[#allocation6 + $0x15c] sm:$0xf]
    %v167 = vld [vmem:[#allocation6 + $0x160] sm:$0xf]
    %v168 = vld [vmem:[#allocation6 + $0x164] sm:$0xf]
    %v169 = vld [vmem:[#allocation6 + $0x168] sm:$0xf]
    %v170 = vld [vmem:[#allocation6 + $0x16c] sm:$0xf]
    %v171 = vld [vmem:[#allocation6 + $0x170] sm:$0xf]
    %v172 = vld [vmem:[#allocation6 + $0x174] sm:$0xf]
    %v173 = vld [vmem:[#allocation6 + $0x178] sm:$0xf]
    %v174 = vld [vmem:[#allocation6 + $0x17c] sm:$0xf]
    %v175 = vld [vmem:[#allocation6 + $0x180] sm:$0xf]
    %v176 = vld [vmem:[#allocation6 + $0x184] sm:$0xf]
    %v177 = vld [vmem:[#allocation6 + $0x188] sm:$0xf]
    %v178 = vld [vmem:[#allocation6 + $0x18c] sm:$0xf]
    %v179 = vld [vmem:[#allocation6 + $0x190] sm:$0xf]
    %v180 = vld [vmem:[#allocation6 + $0x194] sm:$0xf]
    %v181 = vld [vmem:[#allocation6 + $0x198] sm:$0xf]
    %v182 = vld [vmem:[#allocation6 + $0x19c] sm:$0xf]
    %v183 = vld [vmem:[#allocation6 + $0x1a0] sm:$0xf]
    %v184 = vld [vmem:[#allocation6 + $0x1a4] sm:$0xf]
    %v185 = vld [vmem:[#allocation6 + $0x1a8] sm:$0xf]
    %v186 = vld [vmem:[#allocation6 + $0x1ac] sm:$0xf]
    %v187 = vld [vmem:[#allocation6 + $0x1b0] sm:$0xf]
    %v188 = vld [vmem:[#allocation6 + $0x1b4] sm:$0xf]
    %v189 = vld [vmem:[#allocation6 + $0x1b8] sm:$0xf]
    %v190 = vld [vmem:[#allocation6 + $0x1bc] sm:$0xf]
    %v191 = vld [vmem:[#allocation6 + $0x1c0] sm:$0xf]
    %v192 = vld [vmem:[#allocation6 + $0x1c4] sm:$0xf]
    %v193 = vld [vmem:[#allocation6 + $0x1c8] sm:$0xf]
    %v194 = vld [vmem:[#allocation6 + $0x1cc] sm:$0xf]
    %v195 = vld [vmem:[#allocation6 + $0x1d0] sm:$0xf]
    %v196 = vld [vmem:[#allocation6 + $0x1d4] sm:$0xf]
    %v197 = vld [vmem:[#allocation6 + $0x1d8] sm:$0xf]
    %v198 = vld [vmem:[#allocation6 + $0x1dc] sm:$0xf]
    %v199 = vld [vmem:[#allocation6 + $0x1e0] sm:$0xf]
    %v200 = vld [vmem:[#allocation6 + $0x1e4] sm:$0xf]
    %v201 = vld [vmem:[#allocation6 + $0x1e8] sm:$0xf]
    %v202 = vld [vmem:[#allocation6 + $0x1ec] sm:$0xf]
    %v203 = vld [vmem:[#allocation6 + $0x1f0] sm:$0xf]
    %v204 = vld [vmem:[#allocation6 + $0x1f4] sm:$0xf]
    %v205 = vld [vmem:[#allocation6 + $0x1f8] sm:$0xf]
    %v206 = vld [vmem:[#allocation6 + $0x1fc] sm:$0xf]
    %v207 = vld [vmem:[#allocation6 + $0x200] sm:$0xf]
    %v208 = vld [vmem:[#allocation6 + $0x204] sm:$0xf]
    %v209 = vld [vmem:[#allocation6 + $0x208] sm:$0xf]
    %v210 = vld [vmem:[#allocation6 + $0x20c] sm:$0xf]
    %v211 = vld [vmem:[#allocation6 + $0x210] sm:$0xf]
    %v212 = vld [vmem:[#allocation6 + $0x214] sm:$0xf]
    %v213 = vld [vmem:[#allocation6 + $0x218] sm:$0xf]
    %v214 = vld [vmem:[#allocation6 + $0x21c] sm:$0xf]
    %v215 = vld [vmem:[#allocation6 + $0x220] sm:$0xf]
    %v216 = vld [vmem:[#allocation6 + $0x224] sm:$0xf]
    %v217 = vld [vmem:[#allocation6 + $0x228] sm:$0xf]
    %v218 = vld [vmem:[#allocation6 + $0x22c] sm:$0xf]
    %v219 = vld [vmem:[#allocation6 + $0x230] sm:$0xf]
    %v220 = vld [vmem:[#allocation6 + $0x234] sm:$0xf]
    %v221 = vld [vmem:[#allocation6 + $0x238] sm:$0xf]
    %v222 = vld [vmem:[#allocation6 + $0x23c] sm:$0xf]
    %v223 = vld [vmem:[#allocation6 + $0x240] sm:$0xf]
    %v224 = vld [vmem:[#allocation6 + $0x244] sm:$0xf]
    %v225 = vld [vmem:[#allocation6 + $0x248] sm:$0xf]
    %v226 = vld [vmem:[#allocation6 + $0x24c] sm:$0xf]
    %v227 = vld [vmem:[#allocation6 + $0x250] sm:$0xf]
    %v228 = vld [vmem:[#allocation6 + $0x254] sm:$0xf]
    %v229 = vld [vmem:[#allocation6 + $0x258] sm:$0xf]
    %v230 = vld [vmem:[#allocation6 + $0x25c] sm:$0xf]
    %v231 = vld [vmem:[#allocation6 + $0x260] sm:$0xf]
    %v232 = vld [vmem:[#allocation6 + $0x264] sm:$0xf]
    %v233 = vld [vmem:[#allocation6 + $0x268] sm:$0xf]
    %v234 = vld [vmem:[#allocation6 + $0x26c] sm:$0xf]
    %v235 = vld [vmem:[#allocation6 + $0x270] sm:$0xf]
    %v236 = vld [vmem:[#allocation6 + $0x274] sm:$0xf]
    %v237 = vld [vmem:[#allocation6 + $0x278] sm:$0xf]
    %v238 = vld [vmem:[#allocation6 + $0x27c] sm:$0xf]
    %v239 = vld [vmem:[#allocation6 + $0x280] sm:$0xf]
    %v240 = vld [vmem:[#allocation6 + $0x284] sm:$0xf]
    %v241 = vld [vmem:[#allocation6 + $0x288] sm:$0xf]
    %v242 = vld [vmem:[#allocation6 + $0x28c] sm:$0xf]
    %v243 = vld [vmem:[#allocation6 + $0x290] sm:$0xf]
    %v244 = vld [vmem:[#allocation6 + $0x294] sm:$0xf]
    %v245 = vld [vmem:[#allocation6 + $0x298] sm:$0xf]
    %v246 = vld [vmem:[#allocation6 + $0x29c] sm:$0xf]
    %v247 = vld [vmem:[#allocation6 + $0x2a0] sm:$0xf]
    %v248 = vld [vmem:[#allocation6 + $0x2a4] sm:$0xf]
    %v249 = vld [vmem:[#allocation6 + $0x2a8] sm:$0xf]
    %v250 = vld [vmem:[#allocation6 + $0x2ac] sm:$0xf]
    %v251 = vld [vmem:[#allocation6 + $0x2b0] sm:$0xf]
    %v252 = vld [vmem:[#allocation6 + $0x2b4] sm:$0xf]
    %v253 = vld [vmem:[#allocation6 + $0x2b8] sm:$0xf]
    %v254 = vld [vmem:[#allocation6 + $0x2bc] sm:$0xf]
    %v255 = vld [vmem:[#allocation6 + $0x2c0] sm:$0xf]
    %v256 = vld [vmem:[#allocation6 + $0x2c4] sm:$0xf]
    %v257 = vld [vmem:[#allocation6 + $0x2c8] sm:$0xf]
    %v258 = vld [vmem:[#allocation6 + $0x2cc] sm:$0xf]
    %v259 = vld [vmem:[#allocation6 + $0x2d0] sm:$0xf]
    %v260 = vld [vmem:[#allocation6 + $0x2d4] sm:$0xf]
    %v261 = vld [vmem:[#allocation6 + $0x2d8] sm:$0xf]
    %v262 = vld [vmem:[#allocation6 + $0x2dc] sm:$0xf]
    %v263 = vld [vmem:[#allocation6 + $0x2e0] sm:$0xf]
    %v264 = vld [vmem:[#allocation6 + $0x2e4] sm:$0xf]
    %v265 = vld [vmem:[#allocation6 + $0x2e8] sm:$0xf]
    %v266 = vld [vmem:[#allocation6 + $0x2ec] sm:$0xf]
    %v267 = vld [vmem:[#allocation6 + $0x2f0] sm:$0xf]
    %v268 = vld [vmem:[#allocation6 + $0x2f4] sm:$0xf]
    %v269 = vld [vmem:[#allocation6 + $0x2f8] sm:$0xf]
    %v270 = vld [vmem:[#allocation6 + $0x2fc] sm:$0xf]
    %v271 = vld [vmem:[#allocation6 + $0x300] sm:$0xf]
    %v272 = vld [vmem:[#allocation6 + $0x304] sm:$0xf]
    %v273 = vld [vmem:[#allocation6 + $0x308] sm:$0xf]
    %v274 = vld [vmem:[#allocation6 + $0x30c] sm:$0xf]
    %v275 = vld [vmem:[#allocation6 + $0x310] sm:$0xf]
    %v276 = vld [vmem:[#allocation6 + $0x314] sm:$0xf]
    %v277 = vld [vmem:[#allocation6 + $0x318] sm:$0xf]
    %v278 = vld [vmem:[#allocation6 + $0x31c] sm:$0xf]
    %v279 = vld [vmem:[#allocation6 + $0x320] sm:$0xf]
    %v280 = vld [vmem:[#allocation6 + $0x324] sm:$0xf]
    %v281 = vld [vmem:[#allocation6 + $0x328] sm:$0xf]
    %v282 = vld [vmem:[#allocation6 + $0x32c] sm:$0xf]
    %v283 = vld [vmem:[#allocation6 + $0x330] sm:$0xf]
    %v284 = vld [vmem:[#allocation6 + $0x334] sm:$0xf]
    %v285 = vld [vmem:[#allocation6 + $0x338] sm:$0xf]
    %v286 = vld [vmem:[#allocation6 + $0x33c] sm:$0xf]
    %v287 = vld [vmem:[#allocation6 + $0x340] sm:$0xf]
    %v288 = vld [vmem:[#allocation6 + $0x344] sm:$0xf]
    %v289 = vld [vmem:[#allocation6 + $0x348] sm:$0xf]
    %v290 = vld [vmem:[#allocation6 + $0x34c] sm:$0xf]
    %v291 = vld [vmem:[#allocation6 + $0x350] sm:$0xf]
    %v292 = vld [vmem:[#allocation6 + $0x354] sm:$0xf]
    %v293 = vld [vmem:[#allocation6 + $0x358] sm:$0xf]
    %v294 = vld [vmem:[#allocation6 + $0x35c] sm:$0xf]
    %v295 = vld [vmem:[#allocation6 + $0x360] sm:$0xf]
    %v296 = vld [vmem:[#allocation6 + $0x364] sm:$0xf]
    %v297 = vld [vmem:[#allocation6 + $0x368] sm:$0xf]
    %v298 = vld [vmem:[#allocation6 + $0x36c] sm:$0xf]
    %v299 = vld [vmem:[#allocation6 + $0x370] sm:$0xf]
    %v300 = vld [vmem:[#allocation6 + $0x374] sm:$0xf]
    %v301 = vld [vmem:[#allocation6 + $0x378] sm:$0xf]
    %v302 = vld [vmem:[#allocation6 + $0x37c] sm:$0xf]
    %v303 = vld [vmem:[#allocation6 + $0x380] sm:$0xf]
    %v304 = vld [vmem:[#allocation6 + $0x384] sm:$0xf]
    %v305 = vld [vmem:[#allocation6 + $0x388] sm:$0xf]
    %v306 = vld [vmem:[#allocation6 + $0x38c] sm:$0xf]
    %v307 = vld [vmem:[#allocation6 + $0x390] sm:$0xf]
    %v308 = vld [vmem:[#allocation6 + $0x394] sm:$0xf]
    %v309 = vld [vmem:[#allocation6 + $0x398] sm:$0xf]
    %v310 = vld [vmem:[#allocation6 + $0x39c] sm:$0xf]
    %v311 = vld [vmem:[#allocation6 + $0x3a0] sm:$0xf]
    %v312 = vld [vmem:[#allocation6 + $0x3a4] sm:$0xf]
    %v313 = vld [vmem:[#allocation6 + $0x3a8] sm:$0xf]
    %v314 = vld [vmem:[#allocation6 + $0x3ac] sm:$0xf]
    %v315 = vld [vmem:[#allocation6 + $0x3b0] sm:$0xf]
    %v316 = vld [vmem:[#allocation6 + $0x3b4] sm:$0xf]
    %v317 = vld [vmem:[#allocation6 + $0x3b8] sm:$0xf]
    %v318 = vld [vmem:[#allocation6 + $0x3bc] sm:$0xf]
    %v319 = vld [vmem:[#allocation6 + $0x3c0] sm:$0xf]
    %v320 = vld [vmem:[#allocation6 + $0x3c4] sm:$0xf]
    %v321 = vld [vmem:[#allocation6 + $0x3c8] sm:$0xf]
    %v322 = vld [vmem:[#allocation6 + $0x3cc] sm:$0xf]
    %v323 = vld [vmem:[#allocation6 + $0x3d0] sm:$0xf]
    %v324 = vld [vmem:[#allocation6 + $0x3d4] sm:$0xf]
    %v325 = vld [vmem:[#allocation6 + $0x3d8] sm:$0xf]
    %v326 = vld [vmem:[#allocation6 + $0x3dc] sm:$0xf]
    %v327 = vld [vmem:[#allocation6 + $0x3e0] sm:$0xf]
    %v328 = vld [vmem:[#allocation6 + $0x3e4] sm:$0xf]
    %v329 = vld [vmem:[#allocation6 + $0x3e8] sm:$0xf]
    %v330 = vld [vmem:[#allocation6 + $0x3ec] sm:$0xf]
    %v331 = vld [vmem:[#allocation6 + $0x3f0] sm:$0xf]
    %v332 = vld [vmem:[#allocation6 + $0x3f4] sm:$0xf]
    %v333 = vld [vmem:[#allocation6 + $0x3f8] sm:$0xf]
    %v334 = vld [vmem:[#allocation6 + $0x3fc] sm:$0xf]
    %v351 = vunpack.c.l.b16 %v63
    %v352 = vunpack.c.h.b16 %v63
    %v353 = vunpack.c.l.b16 %v64
    %v354 = vunpack.c.h.b16 %v64
    %v355 = vunpack.c.l.b16 %v65
    %v356 = vunpack.c.h.b16 %v65
    %v357 = vunpack.c.l.b16 %v66
    %v358 = vunpack.c.h.b16 %v66
    %v359 = vunpack.c.l.b16 %v67
    %v360 = vunpack.c.h.b16 %v67
    %v361 = vunpack.c.l.b16 %v68
    %v362 = vunpack.c.h.b16 %v68
    %v363 = vunpack.c.l.b16 %v69
    %v364 = vunpack.c.h.b16 %v69
    %v365 = vunpack.c.l.b16 %v70
    %v366 = vunpack.c.h.b16 %v70
    %v367 = vunpack.c.l.b16 %v71
    %v368 = vunpack.c.h.b16 %v71
    %v369 = vunpack.c.l.b16 %v72
    %v370 = vunpack.c.h.b16 %v72
    %v371 = vunpack.c.l.b16 %v73
    %v372 = vunpack.c.h.b16 %v73
    %v373 = vunpack.c.l.b16 %v74
    %v374 = vunpack.c.h.b16 %v74
    %v375 = vunpack.c.l.b16 %v75
    %v376 = vunpack.c.h.b16 %v75
    %v377 = vunpack.c.l.b16 %v76
    %v378 = vunpack.c.h.b16 %v76
    %v379 = vunpack.c.l.b16 %v77
    %v380 = vunpack.c.h.b16 %v77
    %v381 = vunpack.c.l.b16 %v78
    %v382 = vunpack.c.h.b16 %v78
    %v383 = vpack.c.b16 %v367, %v351
    %v384 = vpack.c.b16 %v368, %v352
    %v385 = vpack.c.b16 %v369, %v353
    %v386 = vpack.c.b16 %v370, %v354
    %v387 = vpack.c.b16 %v371, %v355
    %v388 = vpack.c.b16 %v372, %v356
    %v389 = vpack.c.b16 %v373, %v357
    %v390 = vpack.c.b16 %v374, %v358
    %v391 = vpack.c.b16 %v375, %v359
    %v392 = vpack.c.b16 %v376, %v360
    %v393 = vpack.c.b16 %v377, %v361
    %v394 = vpack.c.b16 %v378, %v362
    %v395 = vpack.c.b16 %v379, %v363
    %v396 = vpack.c.b16 %v380, %v364
    %v397 = vpack.c.b16 %v381, %v365
    %v398 = vpack.c.b16 %v382, %v366
    %v671 = vunpack.c.l.b16 %v79
    %v672 = vunpack.c.l.b16 %v80
    %v673 = vunpack.c.l.b16 %v81
    %v674 = vunpack.c.l.b16 %v82
    %v675 = vunpack.c.l.b16 %v83
    %v676 = vunpack.c.l.b16 %v84
    %v677 = vunpack.c.l.b16 %v85
    %v678 = vunpack.c.l.b16 %v86
    %v679 = vunpack.c.l.b16 %v87
    %v680 = vunpack.c.l.b16 %v88
    %v681 = vunpack.c.l.b16 %v89
    %v682 = vunpack.c.l.b16 %v90
    %v683 = vunpack.c.l.b16 %v91
    %v684 = vunpack.c.l.b16 %v92
    %v685 = vunpack.c.l.b16 %v93
    %v686 = vunpack.c.l.b16 %v94
    %v687 = vunpack.c.l.b16 %v95
    %v688 = vunpack.c.l.b16 %v96
    %v689 = vunpack.c.l.b16 %v97
    %v690 = vunpack.c.l.b16 %v98
    %v691 = vunpack.c.l.b16 %v99
    %v692 = vunpack.c.l.b16 %v100
    %v693 = vunpack.c.l.b16 %v101
    %v694 = vunpack.c.l.b16 %v102
    %v695 = vunpack.c.l.b16 %v103
    %v696 = vunpack.c.l.b16 %v104
    %v697 = vunpack.c.l.b16 %v105
    %v698 = vunpack.c.l.b16 %v106
    %v699 = vunpack.c.l.b16 %v107
    %v700 = vunpack.c.l.b16 %v108
    %v701 = vunpack.c.l.b16 %v109
    %v702 = vunpack.c.l.b16 %v110
    %v703 = vunpack.c.l.b16 %v111
    %v704 = vunpack.c.l.b16 %v112
    %v705 = vunpack.c.l.b16 %v113
    %v706 = vunpack.c.l.b16 %v114
    %v707 = vunpack.c.l.b16 %v115
    %v708 = vunpack.c.l.b16 %v116
    %v709 = vunpack.c.l.b16 %v117
    %v710 = vunpack.c.l.b16 %v118
    %v711 = vunpack.c.l.b16 %v119
    %v712 = vunpack.c.l.b16 %v120
    %v713 = vunpack.c.l.b16 %v121
    %v714 = vunpack.c.l.b16 %v122
    %v715 = vunpack.c.l.b16 %v123
    %v716 = vunpack.c.l.b16 %v124
    %v717 = vunpack.c.l.b16 %v125
    %v718 = vunpack.c.l.b16 %v126
    %v719 = vunpack.c.l.b16 %v127
    %v720 = vunpack.c.l.b16 %v128
    %v721 = vunpack.c.l.b16 %v129
    %v722 = vunpack.c.l.b16 %v130
    %v723 = vunpack.c.l.b16 %v131
    %v724 = vunpack.c.l.b16 %v132
    %v725 = vunpack.c.l.b16 %v133
    %v726 = vunpack.c.l.b16 %v134
    %v727 = vunpack.c.l.b16 %v135
    %v728 = vunpack.c.l.b16 %v136
    %v729 = vunpack.c.l.b16 %v137
    %v730 = vunpack.c.l.b16 %v138
    %v731 = vunpack.c.l.b16 %v139
    %v732 = vunpack.c.l.b16 %v140
    %v733 = vunpack.c.l.b16 %v141
    %v734 = vunpack.c.l.b16 %v142
    %v735 = vunpack.c.l.b16 %v143
    %v736 = vunpack.c.l.b16 %v144
    %v737 = vunpack.c.l.b16 %v145
    %v738 = vunpack.c.l.b16 %v146
    %v739 = vunpack.c.l.b16 %v147
    %v740 = vunpack.c.l.b16 %v148
    %v741 = vunpack.c.l.b16 %v149
    %v742 = vunpack.c.l.b16 %v150
    %v743 = vunpack.c.l.b16 %v151
    %v744 = vunpack.c.l.b16 %v152
    %v745 = vunpack.c.l.b16 %v153
    %v746 = vunpack.c.l.b16 %v154
    %v747 = vunpack.c.l.b16 %v155
    %v748 = vunpack.c.l.b16 %v156
    %v749 = vunpack.c.l.b16 %v157
    %v750 = vunpack.c.l.b16 %v158
    %v751 = vunpack.c.l.b16 %v159
    %v752 = vunpack.c.l.b16 %v160
    %v753 = vunpack.c.l.b16 %v161
    %v754 = vunpack.c.l.b16 %v162
    %v755 = vunpack.c.l.b16 %v163
    %v756 = vunpack.c.l.b16 %v164
    %v757 = vunpack.c.l.b16 %v165
    %v758 = vunpack.c.l.b16 %v166
    %v759 = vunpack.c.l.b16 %v167
    %v760 = vunpack.c.l.b16 %v168
    %v761 = vunpack.c.l.b16 %v169
    %v762 = vunpack.c.l.b16 %v170
    %v763 = vunpack.c.l.b16 %v171
    %v764 = vunpack.c.l.b16 %v172
    %v765 = vunpack.c.l.b16 %v173
    %v766 = vunpack.c.l.b16 %v174
    %v767 = vunpack.c.l.b16 %v175
    %v768 = vunpack.c.l.b16 %v176
    %v769 = vunpack.c.l.b16 %v177
    %v770 = vunpack.c.l.b16 %v178
    %v771 = vunpack.c.l.b16 %v179
    %v772 = vunpack.c.l.b16 %v180
    %v773 = vunpack.c.l.b16 %v181
    %v774 = vunpack.c.l.b16 %v182
    %v775 = vunpack.c.l.b16 %v183
    %v776 = vunpack.c.l.b16 %v184
    %v777 = vunpack.c.l.b16 %v185
    %v778 = vunpack.c.l.b16 %v186
    %v779 = vunpack.c.l.b16 %v187
    %v780 = vunpack.c.l.b16 %v188
    %v781 = vunpack.c.l.b16 %v189
    %v782 = vunpack.c.l.b16 %v190
    %v783 = vunpack.c.l.b16 %v191
    %v784 = vunpack.c.l.b16 %v192
    %v785 = vunpack.c.l.b16 %v193
    %v786 = vunpack.c.l.b16 %v194
    %v787 = vunpack.c.l.b16 %v195
    %v788 = vunpack.c.l.b16 %v196
    %v789 = vunpack.c.l.b16 %v197
    %v790 = vunpack.c.l.b16 %v198
    %v791 = vunpack.c.l.b16 %v199
    %v792 = vunpack.c.l.b16 %v200
    %v793 = vunpack.c.l.b16 %v201
    %v794 = vunpack.c.l.b16 %v202
    %v795 = vunpack.c.l.b16 %v203
    %v796 = vunpack.c.l.b16 %v204
    %v797 = vunpack.c.l.b16 %v205
    %v798 = vunpack.c.l.b16 %v206
    %v799 = vunpack.c.l.b16 %v207
    %v800 = vunpack.c.l.b16 %v208
    %v801 = vunpack.c.l.b16 %v209
    %v802 = vunpack.c.l.b16 %v210
    %v803 = vunpack.c.l.b16 %v211
    %v804 = vunpack.c.l.b16 %v212
    %v805 = vunpack.c.l.b16 %v213
    %v806 = vunpack.c.l.b16 %v214
    %v807 = vunpack.c.l.b16 %v215
    %v808 = vunpack.c.l.b16 %v216
    %v809 = vunpack.c.l.b16 %v217
    %v810 = vunpack.c.l.b16 %v218
    %v811 = vunpack.c.l.b16 %v219
    %v812 = vunpack.c.l.b16 %v220
    %v813 = vunpack.c.l.b16 %v221
    %v814 = vunpack.c.l.b16 %v222
    %v815 = vunpack.c.l.b16 %v223
    %v816 = vunpack.c.l.b16 %v224
    %v817 = vunpack.c.l.b16 %v225
    %v818 = vunpack.c.l.b16 %v226
    %v819 = vunpack.c.l.b16 %v227
    %v820 = vunpack.c.l.b16 %v228
    %v821 = vunpack.c.l.b16 %v229
    %v822 = vunpack.c.l.b16 %v230
    %v823 = vunpack.c.l.b16 %v231
    %v824 = vunpack.c.l.b16 %v232
    %v825 = vunpack.c.l.b16 %v233
    %v826 = vunpack.c.l.b16 %v234
    %v827 = vunpack.c.l.b16 %v235
    %v828 = vunpack.c.l.b16 %v236
    %v829 = vunpack.c.l.b16 %v237
    %v830 = vunpack.c.l.b16 %v238
    %v831 = vunpack.c.l.b16 %v239
    %v832 = vunpack.c.l.b16 %v240
    %v833 = vunpack.c.l.b16 %v241
    %v834 = vunpack.c.l.b16 %v242
    %v835 = vunpack.c.l.b16 %v243
    %v836 = vunpack.c.l.b16 %v244
    %v837 = vunpack.c.l.b16 %v245
    %v838 = vunpack.c.l.b16 %v246
    %v839 = vunpack.c.l.b16 %v247
    %v840 = vunpack.c.l.b16 %v248
    %v841 = vunpack.c.l.b16 %v249
    %v842 = vunpack.c.l.b16 %v250
    %v843 = vunpack.c.l.b16 %v251
    %v844 = vunpack.c.l.b16 %v252
    %v845 = vunpack.c.l.b16 %v253
    %v846 = vunpack.c.l.b16 %v254
    %v847 = vunpack.c.l.b16 %v255
    %v848 = vunpack.c.l.b16 %v256
    %v849 = vunpack.c.l.b16 %v257
    %v850 = vunpack.c.l.b16 %v258
    %v851 = vunpack.c.l.b16 %v259
    %v852 = vunpack.c.l.b16 %v260
    %v853 = vunpack.c.l.b16 %v261
    %v854 = vunpack.c.l.b16 %v262
    %v855 = vunpack.c.l.b16 %v263
    %v856 = vunpack.c.l.b16 %v264
    %v857 = vunpack.c.l.b16 %v265
    %v858 = vunpack.c.l.b16 %v266
    %v859 = vunpack.c.l.b16 %v267
    %v860 = vunpack.c.l.b16 %v268
    %v861 = vunpack.c.l.b16 %v269
    %v862 = vunpack.c.l.b16 %v270
    %v863 = vunpack.c.l.b16 %v271
    %v864 = vunpack.c.l.b16 %v272
    %v865 = vunpack.c.l.b16 %v273
    %v866 = vunpack.c.l.b16 %v274
    %v867 = vunpack.c.l.b16 %v275
    %v868 = vunpack.c.l.b16 %v276
    %v869 = vunpack.c.l.b16 %v277
    %v870 = vunpack.c.l.b16 %v278
    %v871 = vunpack.c.l.b16 %v279
    %v872 = vunpack.c.l.b16 %v280
    %v873 = vunpack.c.l.b16 %v281
    %v874 = vunpack.c.l.b16 %v282
    %v875 = vunpack.c.l.b16 %v283
    %v876 = vunpack.c.l.b16 %v284
    %v877 = vunpack.c.l.b16 %v285
    %v878 = vunpack.c.l.b16 %v286
    %v879 = vunpack.c.l.b16 %v287
    %v880 = vunpack.c.l.b16 %v288
    %v881 = vunpack.c.l.b16 %v289
    %v882 = vunpack.c.l.b16 %v290
    %v883 = vunpack.c.l.b16 %v291
    %v884 = vunpack.c.l.b16 %v292
    %v885 = vunpack.c.l.b16 %v293
    %v886 = vunpack.c.l.b16 %v294
    %v887 = vunpack.c.l.b16 %v295
    %v888 = vunpack.c.l.b16 %v296
    %v889 = vunpack.c.l.b16 %v297
    %v890 = vunpack.c.l.b16 %v298
    %v891 = vunpack.c.l.b16 %v299
    %v892 = vunpack.c.l.b16 %v300
    %v893 = vunpack.c.l.b16 %v301
    %v894 = vunpack.c.l.b16 %v302
    %v895 = vunpack.c.l.b16 %v303
    %v896 = vunpack.c.l.b16 %v304
    %v897 = vunpack.c.l.b16 %v305
    %v898 = vunpack.c.l.b16 %v306
    %v899 = vunpack.c.l.b16 %v307
    %v900 = vunpack.c.l.b16 %v308
    %v901 = vunpack.c.l.b16 %v309
    %v902 = vunpack.c.l.b16 %v310
    %v903 = vunpack.c.l.b16 %v311
    %v904 = vunpack.c.l.b16 %v312
    %v905 = vunpack.c.l.b16 %v313
    %v906 = vunpack.c.l.b16 %v314
    %v907 = vunpack.c.l.b16 %v315
    %v908 = vunpack.c.l.b16 %v316
    %v909 = vunpack.c.l.b16 %v317
    %v910 = vunpack.c.l.b16 %v318
    %v911 = vunpack.c.l.b16 %v319
    %v912 = vunpack.c.l.b16 %v320
    %v913 = vunpack.c.l.b16 %v321
    %v914 = vunpack.c.l.b16 %v322
    %v915 = vunpack.c.l.b16 %v323
    %v916 = vunpack.c.l.b16 %v324
    %v917 = vunpack.c.l.b16 %v325
    %v918 = vunpack.c.l.b16 %v326
    %v919 = vunpack.c.l.b16 %v327
    %v920 = vunpack.c.l.b16 %v328
    %v921 = vunpack.c.l.b16 %v329
    %v922 = vunpack.c.l.b16 %v330
    %v923 = vunpack.c.l.b16 %v331
    %v924 = vunpack.c.l.b16 %v332
    %v925 = vunpack.c.l.b16 %v333
    %v926 = vunpack.c.l.b16 %v334
    %v927 = vpack.c.b16 %v672, %v671
    %v928 = vpack.c.b16 %v674, %v673
    %v929 = vpack.c.b16 %v676, %v675
    %v930 = vpack.c.b16 %v678, %v677
    %v931 = vpack.c.b16 %v680, %v679
    %v932 = vpack.c.b16 %v682, %v681
    %v933 = vpack.c.b16 %v684, %v683
    %v934 = vpack.c.b16 %v686, %v685
    %v935 = vpack.c.b16 %v688, %v687
    %v936 = vpack.c.b16 %v690, %v689
    %v937 = vpack.c.b16 %v692, %v691
    %v938 = vpack.c.b16 %v694, %v693
    %v939 = vpack.c.b16 %v696, %v695
    %v940 = vpack.c.b16 %v698, %v697
    %v941 = vpack.c.b16 %v700, %v699
    %v942 = vpack.c.b16 %v702, %v701
    %v943 = vpack.c.b16 %v704, %v703
    %v944 = vpack.c.b16 %v706, %v705
    %v945 = vpack.c.b16 %v708, %v707
    %v946 = vpack.c.b16 %v710, %v709
    %v947 = vpack.c.b16 %v712, %v711
    %v948 = vpack.c.b16 %v714, %v713
    %v949 = vpack.c.b16 %v716, %v715
    %v950 = vpack.c.b16 %v718, %v717
    %v951 = vpack.c.b16 %v720, %v719
    %v952 = vpack.c.b16 %v722, %v721
    %v953 = vpack.c.b16 %v724, %v723
    %v954 = vpack.c.b16 %v726, %v725
    %v955 = vpack.c.b16 %v728, %v727
    %v956 = vpack.c.b16 %v730, %v729
    %v957 = vpack.c.b16 %v732, %v731
    %v958 = vpack.c.b16 %v734, %v733
    %v959 = vpack.c.b16 %v736, %v735
    %v960 = vpack.c.b16 %v738, %v737
    %v961 = vpack.c.b16 %v740, %v739
    %v962 = vpack.c.b16 %v742, %v741
    %v963 = vpack.c.b16 %v744, %v743
    %v964 = vpack.c.b16 %v746, %v745
    %v965 = vpack.c.b16 %v748, %v747
    %v966 = vpack.c.b16 %v750, %v749
    %v967 = vpack.c.b16 %v752, %v751
    %v968 = vpack.c.b16 %v754, %v753
    %v969 = vpack.c.b16 %v756, %v755
    %v970 = vpack.c.b16 %v758, %v757
    %v971 = vpack.c.b16 %v760, %v759
    %v972 = vpack.c.b16 %v762, %v761
    %v973 = vpack.c.b16 %v764, %v763
    %v974 = vpack.c.b16 %v766, %v765
    %v975 = vpack.c.b16 %v768, %v767
    %v976 = vpack.c.b16 %v770, %v769
    %v977 = vpack.c.b16 %v772, %v771
    %v978 = vpack.c.b16 %v774, %v773
    %v979 = vpack.c.b16 %v776, %v775
    %v980 = vpack.c.b16 %v778, %v777
    %v981 = vpack.c.b16 %v780, %v779
    %v982 = vpack.c.b16 %v782, %v781
    %v983 = vpack.c.b16 %v784, %v783
    %v984 = vpack.c.b16 %v786, %v785
    %v985 = vpack.c.b16 %v788, %v787
    %v986 = vpack.c.b16 %v790, %v789
    %v987 = vpack.c.b16 %v792, %v791
    %v988 = vpack.c.b16 %v794, %v793
    %v989 = vpack.c.b16 %v796, %v795
    %v990 = vpack.c.b16 %v798, %v797
    %v991 = vpack.c.b16 %v800, %v799
    %v992 = vpack.c.b16 %v802, %v801
    %v993 = vpack.c.b16 %v804, %v803
    %v994 = vpack.c.b16 %v806, %v805
    %v995 = vpack.c.b16 %v808, %v807
    %v996 = vpack.c.b16 %v810, %v809
    %v997 = vpack.c.b16 %v812, %v811
    %v998 = vpack.c.b16 %v814, %v813
    %v999 = vpack.c.b16 %v816, %v815
    %v1000 = vpack.c.b16 %v818, %v817
    %v1001 = vpack.c.b16 %v820, %v819
    %v1002 = vpack.c.b16 %v822, %v821
    %v1003 = vpack.c.b16 %v824, %v823
    %v1004 = vpack.c.b16 %v826, %v825
    %v1005 = vpack.c.b16 %v828, %v827
    %v1006 = vpack.c.b16 %v830, %v829
    %v1007 = vpack.c.b16 %v832, %v831
    %v1008 = vpack.c.b16 %v834, %v833
    %v1009 = vpack.c.b16 %v836, %v835
    %v1010 = vpack.c.b16 %v838, %v837
    %v1011 = vpack.c.b16 %v840, %v839
    %v1012 = vpack.c.b16 %v842, %v841
    %v1013 = vpack.c.b16 %v844, %v843
    %v1014 = vpack.c.b16 %v846, %v845
    %v1015 = vpack.c.b16 %v848, %v847
    %v1016 = vpack.c.b16 %v850, %v849
    %v1017 = vpack.c.b16 %v852, %v851
    %v1018 = vpack.c.b16 %v854, %v853
    %v1019 = vpack.c.b16 %v856, %v855
    %v1020 = vpack.c.b16 %v858, %v857
    %v1021 = vpack.c.b16 %v860, %v859
    %v1022 = vpack.c.b16 %v862, %v861
    %v1023 = vpack.c.b16 %v864, %v863
    %v1024 = vpack.c.b16 %v866, %v865
    %v1025 = vpack.c.b16 %v868, %v867
    %v1026 = vpack.c.b16 %v870, %v869
    %v1027 = vpack.c.b16 %v872, %v871
    %v1028 = vpack.c.b16 %v874, %v873
    %v1029 = vpack.c.b16 %v876, %v875
    %v1030 = vpack.c.b16 %v878, %v877
    %v1031 = vpack.c.b16 %v880, %v879
    %v1032 = vpack.c.b16 %v882, %v881
    %v1033 = vpack.c.b16 %v884, %v883
    %v1034 = vpack.c.b16 %v886, %v885
    %v1035 = vpack.c.b16 %v888, %v887
    %v1036 = vpack.c.b16 %v890, %v889
    %v1037 = vpack.c.b16 %v892, %v891
    %v1038 = vpack.c.b16 %v894, %v893
    %v1039 = vpack.c.b16 %v896, %v895
    %v1040 = vpack.c.b16 %v898, %v897
    %v1041 = vpack.c.b16 %v900, %v899
    %v1042 = vpack.c.b16 %v902, %v901
    %v1043 = vpack.c.b16 %v904, %v903
    %v1044 = vpack.c.b16 %v906, %v905
    %v1045 = vpack.c.b16 %v908, %v907
    %v1046 = vpack.c.b16 %v910, %v909
    %v1047 = vpack.c.b16 %v912, %v911
    %v1048 = vpack.c.b16 %v914, %v913
    %v1049 = vpack.c.b16 %v916, %v915
    %v1050 = vpack.c.b16 %v918, %v917
    %v1051 = vpack.c.b16 %v920, %v919
    %v1052 = vpack.c.b16 %v922, %v921
    %v1053 = vpack.c.b16 %v924, %v923
    %v1054 = vpack.c.b16 %v926, %v925
    %1183 = vmatprep.subr.bf16.mxu0 0
    %1184 = vmatpush1.bf16.msra.mxu0 %v927
    %1185 = vmatprep.subr.bf16.mxu0 0
    %1186 = vmatpush1.bf16.msra.mxu0 %v928
    %1187 = vmatprep.subr.bf16.mxu0 0
    %1188 = vmatpush1.bf16.msra.mxu0 %v929
    %1189 = vmatprep.subr.bf16.mxu0 0
    %1190 = vmatpush1.bf16.msra.mxu0 %v930
    %1191 = vmatprep.subr.bf16.mxu0 0
    %1192 = vmatpush1.bf16.msra.mxu0 %v931
    %1193 = vmatprep.subr.bf16.mxu0 0
    %1194 = vmatpush1.bf16.msra.mxu0 %v932
    %1195 = vmatprep.subr.bf16.mxu0 0
    %1196 = vmatpush1.bf16.msra.mxu0 %v933
    %1197 = vmatprep.subr.bf16.mxu0 0
    %1198 = vmatpush1.bf16.msra.mxu0 %v934
    %1199 = vmatprep.subr.bf16.mxu0 0
    %1200 = vmatpush1.bf16.msra.mxu0 %v935
    %1201 = vmatprep.subr.bf16.mxu0 0
    %1202 = vmatpush1.bf16.msra.mxu0 %v936
    %1203 = vmatprep.subr.bf16.mxu0 0
    %1204 = vmatpush1.bf16.msra.mxu0 %v937
    %1205 = vmatprep.subr.bf16.mxu0 0
    %1206 = vmatpush1.bf16.msra.mxu0 %v938
    %1207 = vmatprep.subr.bf16.mxu0 0
    %1208 = vmatpush1.bf16.msra.mxu0 %v939
    %1209 = vmatprep.subr.bf16.mxu0 0
    %1210 = vmatpush1.bf16.msra.mxu0 %v940
    %1211 = vmatprep.subr.bf16.mxu0 0
    %1212 = vmatpush1.bf16.msra.mxu0 %v941
    %1213 = vmatprep.subr.bf16.mxu0 0
    %1214 = vmatpush1.bf16.msra.mxu0 %v942
    %1215 = vmatprep.mubr.bf16.mxu0 %v384
    %1216 = vmatmul.mubr.bf16.gmra.mrb[0].mxu0 %v383
    %v1217 = vpop.f32.mrb[0].mxu0
    %v1218 = vadd.f32 0.0, %v1217
    %v1219 = vpop.f32.mrb[0].mxu0
    %v1220 = vpop.f32.mrb[0].mxu0
    %v1221 = vadd.f32 0.0, %v1220
    %v1222 = vpop.f32.mrb[0].mxu0
    %1223 = vdwg.mxu0
    %1224 = vmatprep.subr.bf16.mxu0 0
    %1225 = vmatpush1.bf16.msra.mxu0 %v943
    %1226 = vmatprep.subr.bf16.mxu0 0
    %1227 = vmatpush1.bf16.msra.mxu0 %v944
    %1228 = vmatprep.subr.bf16.mxu0 0
    %1229 = vmatpush1.bf16.msra.mxu0 %v945
    %1230 = vmatprep.subr.bf16.mxu0 0
    %1231 = vmatpush1.bf16.msra.mxu0 %v946
    %1232 = vmatprep.subr.bf16.mxu0 0
    %1233 = vmatpush1.bf16.msra.mxu0 %v947
    %1234 = vmatprep.subr.bf16.mxu0 0
    %1235 = vmatpush1.bf16.msra.mxu0 %v948
    %1236 = vmatprep.subr.bf16.mxu0 0
    %1237 = vmatpush1.bf16.msra.mxu0 %v949
    %1238 = vmatprep.subr.bf16.mxu0 0
    %1239 = vmatpush1.bf16.msra.mxu0 %v950
    %1240 = vmatprep.subr.bf16.mxu0 0
    %1241 = vmatpush1.bf16.msra.mxu0 %v951
    %1242 = vmatprep.subr.bf16.mxu0 0
    %1243 = vmatpush1.bf16.msra.mxu0 %v952
    %1244 = vmatprep.subr.bf16.mxu0 0
    %1245 = vmatpush1.bf16.msra.mxu0 %v953
    %1246 = vmatprep.subr.bf16.mxu0 0
    %1247 = vmatpush1.bf16.msra.mxu0 %v954
    %1248 = vmatprep.subr.bf16.mxu0 0
    %1249 = vmatpush1.bf16.msra.mxu0 %v955
    %1250 = vmatprep.subr.bf16.mxu0 0
    %1251 = vmatpush1.bf16.msra.mxu0 %v956
    %1252 = vmatprep.subr.bf16.mxu0 0
    %1253 = vmatpush1.bf16.msra.mxu0 %v957
    %1254 = vmatprep.subr.bf16.mxu0 0
    %1255 = vmatpush1.bf16.msra.mxu0 %v958
    %1256 = vmatprep.mubr.bf16.mxu0 %v386
    %1257 = vmatmul.mubr.bf16.gmra.mrb[0].mxu0 %v385
    %v1258 = vpop.f32.mrb[0].mxu0
    %v1259 = vadd.f32 %v1218, %v1258
    %v1260 = vpop.f32.mrb[0].mxu0
    %v1261 = vpop.f32.mrb[0].mxu0
    %v1262 = vadd.f32 %v1221, %v1261
    %v1263 = vpop.f32.mrb[0].mxu0
    %1264 = vdwg.mxu0
    %1265 = vmatprep.subr.bf16.mxu0 0
    %1266 = vmatpush1.bf16.msra.mxu0 %v959
    %1267 = vmatprep.subr.bf16.mxu0 0
    %1268 = vmatpush1.bf16.msra.mxu0 %v960
    %1269 = vmatprep.subr.bf16.mxu0 0
    %1270 = vmatpush1.bf16.msra.mxu0 %v961
    %1271 = vmatprep.subr.bf16.mxu0 0
    %1272 = vmatpush1.bf16.msra.mxu0 %v962
    %1273 = vmatprep.subr.bf16.mxu0 0
    %1274 = vmatpush1.bf16.msra.mxu0 %v963
    %1275 = vmatprep.subr.bf16.mxu0 0
    %1276 = vmatpush1.bf16.msra.mxu0 %v964
    %1277 = vmatprep.subr.bf16.mxu0 0
    %1278 = vmatpush1.bf16.msra.mxu0 %v965
    %1279 = vmatprep.subr.bf16.mxu0 0
    %1280 = vmatpush1.bf16.msra.mxu0 %v966
    %1281 = vmatprep.subr.bf16.mxu0 0
    %1282 = vmatpush1.bf16.msra.mxu0 %v967
    %1283 = vmatprep.subr.bf16.mxu0 0
    %1284 = vmatpush1.bf16.msra.mxu0 %v968
    %1285 = vmatprep.subr.bf16.mxu0 0
    %1286 = vmatpush1.bf16.msra.mxu0 %v969
    %1287 = vmatprep.subr.bf16.mxu0 0
    %1288 = vmatpush1.bf16.msra.mxu0 %v970
    %1289 = vmatprep.subr.bf16.mxu0 0
    %1290 = vmatpush1.bf16.msra.mxu0 %v971
    %1291 = vmatprep.subr.bf16.mxu0 0
    %1292 = vmatpush1.bf16.msra.mxu0 %v972
    %1293 = vmatprep.subr.bf16.mxu0 0
    %1294 = vmatpush1.bf16.msra.mxu0 %v973
    %1295 = vmatprep.subr.bf16.mxu0 0
    %1296 = vmatpush1.bf16.msra.mxu0 %v974
    %1297 = vmatprep.mubr.bf16.mxu0 %v388
    %1298 = vmatmul.mubr.bf16.gmra.mrb[0].mxu0 %v387
    %v1299 = vpop.f32.mrb[0].mxu0
    %v1300 = vadd.f32 %v1259, %v1299
    %v1301 = vpop.f32.mrb[0].mxu0
    %v1302 = vpop.f32.mrb[0].mxu0
    %v1303 = vadd.f32 %v1262, %v1302
    %v1304 = vpop.f32.mrb[0].mxu0
    %1305 = vdwg.mxu0
    %1306 = vmatprep.subr.bf16.mxu0 0
    %1307 = vmatpush1.bf16.msra.mxu0 %v975
    %1308 = vmatprep.subr.bf16.mxu0 0
    %1309 = vmatpush1.bf16.msra.mxu0 %v976
    %1310 = vmatprep.subr.bf16.mxu0 0
    %1311 = vmatpush1.bf16.msra.mxu0 %v977
    %1312 = vmatprep.subr.bf16.mxu0 0
    %1313 = vmatpush1.bf16.msra.mxu0 %v978
    %1314 = vmatprep.subr.bf16.mxu0 0
    %1315 = vmatpush1.bf16.msra.mxu0 %v979
    %1316 = vmatprep.subr.bf16.mxu0 0
    %1317 = vmatpush1.bf16.msra.mxu0 %v980
    %1318 = vmatprep.subr.bf16.mxu0 0
    %1319 = vmatpush1.bf16.msra.mxu0 %v981
    %1320 = vmatprep.subr.bf16.mxu0 0
    %1321 = vmatpush1.bf16.msra.mxu0 %v982
    %1322 = vmatprep.subr.bf16.mxu0 0
    %1323 = vmatpush1.bf16.msra.mxu0 %v983
    %1324 = vmatprep.subr.bf16.mxu0 0
    %1325 = vmatpush1.bf16.msra.mxu0 %v984
    %1326 = vmatprep.subr.bf16.mxu0 0
    %1327 = vmatpush1.bf16.msra.mxu0 %v985
    %1328 = vmatprep.subr.bf16.mxu0 0
    %1329 = vmatpush1.bf16.msra.mxu0 %v986
    %1330 = vmatprep.subr.bf16.mxu0 0
    %1331 = vmatpush1.bf16.msra.mxu0 %v987
    %1332 = vmatprep.subr.bf16.mxu0 0
    %1333 = vmatpush1.bf16.msra.mxu0 %v988
    %1334 = vmatprep.subr.bf16.mxu0 0
    %1335 = vmatpush1.bf16.msra.mxu0 %v989
    %1336 = vmatprep.subr.bf16.mxu0 0
    %1337 = vmatpush1.bf16.msra.mxu0 %v990
    %1338 = vmatprep.mubr.bf16.mxu0 %v390
    %1339 = vmatmul.mubr.bf16.gmra.mrb[0].mxu0 %v389
    %v1340 = vpop.f32.mrb[0].mxu0
    %v1341 = vadd.f32 %v1300, %v1340
    %v1342 = vpop.f32.mrb[0].mxu0
    %v1343 = vpop.f32.mrb[0].mxu0
    %v1344 = vadd.f32 %v1303, %v1343
    %v1345 = vpop.f32.mrb[0].mxu0
    %1346 = vdwg.mxu0
    %1347 = vmatprep.subr.bf16.mxu0 0
    %1348 = vmatpush1.bf16.msra.mxu0 %v991
    %1349 = vmatprep.subr.bf16.mxu0 0
    %1350 = vmatpush1.bf16.msra.mxu0 %v992
    %1351 = vmatprep.subr.bf16.mxu0 0
    %1352 = vmatpush1.bf16.msra.mxu0 %v993
    %1353 = vmatprep.subr.bf16.mxu0 0
    %1354 = vmatpush1.bf16.msra.mxu0 %v994
    %1355 = vmatprep.subr.bf16.mxu0 0
    %1356 = vmatpush1.bf16.msra.mxu0 %v995
    %1357 = vmatprep.subr.bf16.mxu0 0
    %1358 = vmatpush1.bf16.msra.mxu0 %v996
    %1359 = vmatprep.subr.bf16.mxu0 0
    %1360 = vmatpush1.bf16.msra.mxu0 %v997
    %1361 = vmatprep.subr.bf16.mxu0 0
    %1362 = vmatpush1.bf16.msra.mxu0 %v998
    %1363 = vmatprep.subr.bf16.mxu0 0
    %1364 = vmatpush1.bf16.msra.mxu0 %v999
    %1365 = vmatprep.subr.bf16.mxu0 0
    %1366 = vmatpush1.bf16.msra.mxu0 %v1000
    %1367 = vmatprep.subr.bf16.mxu0 0
    %1368 = vmatpush1.bf16.msra.mxu0 %v1001
    %1369 = vmatprep.subr.bf16.mxu0 0
    %1370 = vmatpush1.bf16.msra.mxu0 %v1002
    %1371 = vmatprep.subr.bf16.mxu0 0
    %1372 = vmatpush1.bf16.msra.mxu0 %v1003
    %1373 = vmatprep.subr.bf16.mxu0 0
    %1374 = vmatpush1.bf16.msra.mxu0 %v1004
    %1375 = vmatprep.subr.bf16.mxu0 0
    %1376 = vmatpush1.bf16.msra.mxu0 %v1005
    %1377 = vmatprep.subr.bf16.mxu0 0
    %1378 = vmatpush1.bf16.msra.mxu0 %v1006
    %1379 = vmatprep.mubr.bf16.mxu0 %v392
    %1380 = vmatmul.mubr.bf16.gmra.mrb[0].mxu0 %v391
    %v1381 = vpop.f32.mrb[0].mxu0
    %v1382 = vadd.f32 %v1341, %v1381
    %v1383 = vpop.f32.mrb[0].mxu0
    %v1384 = vpop.f32.mrb[0].mxu0
    %v1385 = vadd.f32 %v1344, %v1384
    %v1386 = vpop.f32.mrb[0].mxu0
    %1387 = vdwg.mxu0
    %1388 = vmatprep.subr.bf16.mxu0 0
    %1389 = vmatpush1.bf16.msra.mxu0 %v1007
    %1390 = vmatprep.subr.bf16.mxu0 0
    %1391 = vmatpush1.bf16.msra.mxu0 %v1008
    %1392 = vmatprep.subr.bf16.mxu0 0
    %1393 = vmatpush1.bf16.msra.mxu0 %v1009
    %1394 = vmatprep.subr.bf16.mxu0 0
    %1395 = vmatpush1.bf16.msra.mxu0 %v1010
    %1396 = vmatprep.subr.bf16.mxu0 0
    %1397 = vmatpush1.bf16.msra.mxu0 %v1011
    %1398 = vmatprep.subr.bf16.mxu0 0
    %1399 = vmatpush1.bf16.msra.mxu0 %v1012
    %1400 = vmatprep.subr.bf16.mxu0 0
    %1401 = vmatpush1.bf16.msra.mxu0 %v1013
    %1402 = vmatprep.subr.bf16.mxu0 0
    %1403 = vmatpush1.bf16.msra.mxu0 %v1014
    %1404 = vmatprep.subr.bf16.mxu0 0
    %1405 = vmatpush1.bf16.msra.mxu0 %v1015
    %1406 = vmatprep.subr.bf16.mxu0 0
    %1407 = vmatpush1.bf16.msra.mxu0 %v1016
    %1408 = vmatprep.subr.bf16.mxu0 0
    %1409 = vmatpush1.bf16.msra.mxu0 %v1017
    %1410 = vmatprep.subr.bf16.mxu0 0
    %1411 = vmatpush1.bf16.msra.mxu0 %v1018
    %1412 = vmatprep.subr.bf16.mxu0 0
    %1413 = vmatpush1.bf16.msra.mxu0 %v1019
    %1414 = vmatprep.subr.bf16.mxu0 0
    %1415 = vmatpush1.bf16.msra.mxu0 %v1020
    %1416 = vmatprep.subr.bf16.mxu0 0
    %1417 = vmatpush1.bf16.msra.mxu0 %v1021
    %1418 = vmatprep.subr.bf16.mxu0 0
    %1419 = vmatpush1.bf16.msra.mxu0 %v1022
    %1420 = vmatprep.mubr.bf16.mxu0 %v394
    %1421 = vmatmul.mubr.bf16.gmra.mrb[0].mxu0 %v393
    %v1422 = vpop.f32.mrb[0].mxu0
    %v1423 = vadd.f32 %v1382, %v1422
    %v1424 = vpop.f32.mrb[0].mxu0
    %v1425 = vpop.f32.mrb[0].mxu0
    %v1426 = vadd.f32 %v1385, %v1425
    %v1427 = vpop.f32.mrb[0].mxu0
    %1428 = vdwg.mxu0
    %1429 = vmatprep.subr.bf16.mxu0 0
    %1430 = vmatpush1.bf16.msra.mxu0 %v1023
    %1431 = vmatprep.subr.bf16.mxu0 0
    %1432 = vmatpush1.bf16.msra.mxu0 %v1024
    %1433 = vmatprep.subr.bf16.mxu0 0
    %1434 = vmatpush1.bf16.msra.mxu0 %v1025
    %1435 = vmatprep.subr.bf16.mxu0 0
    %1436 = vmatpush1.bf16.msra.mxu0 %v1026
    %1437 = vmatprep.subr.bf16.mxu0 0
    %1438 = vmatpush1.bf16.msra.mxu0 %v1027
    %1439 = vmatprep.subr.bf16.mxu0 0
    %1440 = vmatpush1.bf16.msra.mxu0 %v1028
    %1441 = vmatprep.subr.bf16.mxu0 0
    %1442 = vmatpush1.bf16.msra.mxu0 %v1029
    %1443 = vmatprep.subr.bf16.mxu0 0
    %1444 = vmatpush1.bf16.msra.mxu0 %v1030
    %1445 = vmatprep.subr.bf16.mxu0 0
    %1446 = vmatpush1.bf16.msra.mxu0 %v1031
    %1447 = vmatprep.subr.bf16.mxu0 0
    %1448 = vmatpush1.bf16.msra.mxu0 %v1032
    %1449 = vmatprep.subr.bf16.mxu0 0
    %1450 = vmatpush1.bf16.msra.mxu0 %v1033
    %1451 = vmatprep.subr.bf16.mxu0 0
    %1452 = vmatpush1.bf16.msra.mxu0 %v1034
    %1453 = vmatprep.subr.bf16.mxu0 0
    %1454 = vmatpush1.bf16.msra.mxu0 %v1035
    %1455 = vmatprep.subr.bf16.mxu0 0
    %1456 = vmatpush1.bf16.msra.mxu0 %v1036
    %1457 = vmatprep.subr.bf16.mxu0 0
    %1458 = vmatpush1.bf16.msra.mxu0 %v1037
    %1459 = vmatprep.subr.bf16.mxu0 0
    %1460 = vmatpush1.bf16.msra.mxu0 %v1038
    %1461 = vmatprep.mubr.bf16.mxu0 %v396
    %1462 = vmatmul.mubr.bf16.gmra.mrb[0].mxu0 %v395
    %v1463 = vpop.f32.mrb[0].mxu0
    %v1464 = vadd.f32 %v1423, %v1463
    %v1465 = vpop.f32.mrb[0].mxu0
    %v1466 = vpop.f32.mrb[0].mxu0
    %v1467 = vadd.f32 %v1426, %v1466
    %v1468 = vpop.f32.mrb[0].mxu0
    %1469 = vdwg.mxu0
    %1470 = vmatprep.subr.bf16.mxu0 0
    %1471 = vmatpush1.bf16.msra.mxu0 %v1039
    %1472 = vmatprep.subr.bf16.mxu0 0
    %1473 = vmatpush1.bf16.msra.mxu0 %v1040
    %1474 = vmatprep.subr.bf16.mxu0 0
    %1475 = vmatpush1.bf16.msra.mxu0 %v1041
    %1476 = vmatprep.subr.bf16.mxu0 0
    %1477 = vmatpush1.bf16.msra.mxu0 %v1042
    %1478 = vmatprep.subr.bf16.mxu0 0
    %1479 = vmatpush1.bf16.msra.mxu0 %v1043
    %1480 = vmatprep.subr.bf16.mxu0 0
    %1481 = vmatpush1.bf16.msra.mxu0 %v1044
    %1482 = vmatprep.subr.bf16.mxu0 0
    %1483 = vmatpush1.bf16.msra.mxu0 %v1045
    %1484 = vmatprep.subr.bf16.mxu0 0
    %1485 = vmatpush1.bf16.msra.mxu0 %v1046
    %1486 = vmatprep.subr.bf16.mxu0 0
    %1487 = vmatpush1.bf16.msra.mxu0 %v1047
    %1488 = vmatprep.subr.bf16.mxu0 0
    %1489 = vmatpush1.bf16.msra.mxu0 %v1048
    %1490 = vmatprep.subr.bf16.mxu0 0
    %1491 = vmatpush1.bf16.msra.mxu0 %v1049
    %1492 = vmatprep.subr.bf16.mxu0 0
    %1493 = vmatpush1.bf16.msra.mxu0 %v1050
    %1494 = vmatprep.subr.bf16.mxu0 0
    %1495 = vmatpush1.bf16.msra.mxu0 %v1051
    %1496 = vmatprep.subr.bf16.mxu0 0
    %1497 = vmatpush1.bf16.msra.mxu0 %v1052
    %1498 = vmatprep.subr.bf16.mxu0 0
    %1499 = vmatpush1.bf16.msra.mxu0 %v1053
    %1500 = vmatprep.subr.bf16.mxu0 0
    %1501 = vmatpush1.bf16.msra.mxu0 %v1054
    %1502 = vmatprep.mubr.bf16.mxu0 %v398
    %1503 = vmatmul.mubr.bf16.gmra.mrb[0].mxu0 %v397
    %v1504 = vpop.f32.mrb[0].mxu0
    %v1505 = vadd.f32 %v1464, %v1504
    %v1506 = vpop.f32.mrb[0].mxu0
    %v1507 = vpop.f32.mrb[0].mxu0
    %v1508 = vadd.f32 %v1467, %v1507
    %v1509 = vpop.f32.mrb[0].mxu0
    %1510 = vdwg.mxu0
    %v1511 = vadd.f32 %v61, %v1505
    %v1512 = vadd.f32 %v62, %v1508
    %1513 = vst [vmem:[#allocation2] sm:$0xff] %v1511
    %1514 = vst [vmem:[#allocation2 + $0x8] sm:$0xff] %v1512
    // Predicated region
    $region30: #{autoencoder_forward.11} parent=1 // pred_check
      %p1515 = pneg %p55
    $region31: #{autoencoder_forward.11} parent=1 // pred_check_branch
      %1517 = sbr.rel (%p1515) target = $region33
    $region32: #{autoencoder_forward.11} parent=1 // pred_region
      %v1518 = vld [vmem:[#allocation2] sm:$0xff]
      %v1519 = vld [vmem:[#allocation2 + $0x8] sm:$0xff]
      %v1520 = vld [vmem:[#allocation8] sm:$0x1]
      %v1522 = vlaneseq
      %v1523 = vshrl.u32 %v1522, 7
      %v1524 = vsub.s32 0, %v1523
      %v1525 = vrot.slane %v1520, %v1524
      %v1527 = vadd.f32 %v1518, %v1525
      %v1528 = vadd.f32 %v1519, %v1525
      %1529 = vst [vmem:[#allocation9] sm:$0xff] %v1527
      %1530 = vst [vmem:[#allocation9 + $0x8] sm:$0xff] %v1528
    $region33: #{autoencoder_forward.11} parent=1 // pred_fallthru
      _
    // Predicated region
    $region34: #{autoencoder_forward.11} parent=1 // pred_check
      _
    $region35: #{autoencoder_forward.11} parent=1 // pred_check_branch
      %1532 = sbr.rel (0) target = $region37
    $region36: #{autoencoder_forward.11} parent=1 // pred_region
      %s1534 = ssub.s32 256, 256
      %1535 = vsyncadd [#allocation5], %s1534
      %s1536 = sshll.u32 [#allocation9], 4
      %s1537 = int_to_ptr.vmem [resolvable:$true] %s1536
      %1542 = dma.vmem_to_hbm [thread:$0]  %s1537, 256, %s3, [#allocation5], 128, 128, 8
    $region37: #{autoencoder_forward.11} parent=1 // pred_fallthru
      _
    // Predicated region
    $region38: #{autoencoder_forward.11} parent=1 // pred_check
      _
    $region39: #{autoencoder_forward.11} parent=1 // pred_check_branch
      %1544 = sbr.rel (0) target = $region41
    $region40: #{autoencoder_forward.11} parent=1 // pred_region
      %1545 = dma.done [#allocation5], 256
    $region41: #{autoencoder_forward.11} parent=1 // pred_fallthru
      _
    %1546 = vsyncpa [#allocation4], 1
    %1547 = vsyncpa [#allocation7], 1
    %1548 = vsyncpa [#allocation5], 1

// kernel: autoencoder_forward.13
$region0: #{autoencoder_forward.13}
  #allocation0 [shape = 'u32[]', space=smem, size = 0x4, offset = 0x4, fixed_abs, tag = 'smem constant byte address 0x4 - core index']
  #allocation1 [shape = 'u32[144,128]{1,0:T(1,128)}', space=vmem, size = 0x12000, scoped, tag = 'internal scratch']
  #allocation2 [shape = 'f32[16,256]{1,0:T(8,128)}', space=vmem, size = 0x4000, scoped, tag = 'scratch operand']
  %s0 = inlined_call_operand.hbm [shape: bf16[4,16,2048], index: 0, kind: input, shape index: {}]
  %s1 = inlined_call_operand.hbm [shape: bf16[4,2048,256], index: 1, kind: input, shape index: {}]
  %s2 = inlined_call_operand.hbm [shape: f32[4,1,256], index: 2, kind: input, shape index: {}]
  %s3 = inlined_call_operand.hbm [shape: bf16[4,16,256], index: 3, kind: output, shape index: {}]
  %s4 = sld [smem:[#allocation0]]
  $region65: #{autoencoder_forward.13} parent=0
    _
  %s6 = ssub.s32 1, %s4
  %s7 = scalar_select 0, %s6, %s4
  $region1: #{autoencoder_forward.13} parent=0
    #allocation3 [shape = 'u8[131072]{0}', space=vmem, size = 0x20000, scoped, tag = 'input window, operand 0']
    #allocation4 [shape = 's32[2]{0}', space=sflag, size = 0x8, scoped, tag = 'scoped memory for autoencoder_forward.13']
    #allocation5 [shape = 's32[2]{0}', space=sflag, size = 0x8, scoped, tag = 'scoped memory for autoencoder_forward.13']
    #allocation6 [shape = 'u8[2097152]{0}', space=vmem, size = 0x200000, scoped, tag = 'input window, operand 1']
    #allocation7 [shape = 's32[2]{0}', space=sflag, size = 0x8, scoped, tag = 'scoped memory for autoencoder_forward.13']
    #allocation8 [shape = 'u8[2048]{0}', space=vmem, size = 0x800, scoped, tag = 'input window, operand 2']
    #allocation9 [shape = 'u8[16384]{0}', space=vmem, size = 0x4000, scoped, tag = 'output window, operand 0']
    %8 = vsyncpa [#allocation4], 0
    %s9 = scalar_lea.sflag [#allocation4], 1
    %10 = vsyncpa %s9, 0
    %11 = vsyncpa [#allocation7], 0
    %s12 = scalar_lea.sflag [#allocation7], 1
    %13 = vsyncpa %s12, 0
    %14 = vsyncpa [#allocation5], 0
    %s15 = scalar_lea.sflag [#allocation5], 1
    %16 = vsyncpa %s15, 0
    loop: start=0, step=1, limit=6
    $region2: #{autoencoder_forward.13} parent=1 // loop_pre_header
      _
    $region3: #{autoencoder_forward.13} parent=1 // loop_header
      %s18 = sphi 0, %s22
      %p19 = scmp.ge.s32.totalorder %s18, 6
      %s25 = sphi 0, %s51
      %s26 = sphi 0, %s47
      %s27 = sphi 0, %s43
      %s28 = sphi 0, %s39
      %s29 = sphi 0, %s25
      %s30 = sphi 0, %s26
      %s31 = sphi 0, %s27
      %s32 = sphi 0, %s28
      %s33 = sphi 0, %s29
      %s34 = sphi 0, %s30
      %s35 = sphi 0, %s31
      %s36 = sphi 0, %s32
      %s58 = sphi 0, %s60
      %s61 = sphi 0, %s58
      %s62 = sphi 0, %s61
      %s78 = sphi 0, %s62
      %s88 = sphi 0, %s90
      %s91 = sphi 0, %s88
      %s92 = sphi 0, %s91
      %s108 = sphi 0, %s92
      %s116 = sphi 0, %s118
      %s119 = sphi 0, %s116
      %s120 = sphi 0, %s119
      %s136 = sphi 0, %s120
      %s146 = sphi 0, %s148
      %s149 = sphi 0, %s146
      %s150 = sphi 0, %s149
      %s166 = sphi 0, %s150
    $region4: #{autoencoder_forward.13} parent=1 // loop_header_branch
      %21 = sbr.rel (%p19) target = $region8
    $region5: #{autoencoder_forward.13} parent=1 // loop_body
      %s23 = ssub.s32 %s18, 1
      %s24 = ssub.s32 %s18, 2
      %s37 = sadd.s32 1, %s28
      %p38 = scmp.ge.s32.totalorder %s37, 1
      %s39 = scalar_select %p38, 0, %s37
      %s40 = sadd.s32 1, %s27
      %s41 = scalar_select %p38, %s40, %s27
      %p42 = scmp.ge.s32.totalorder %s41, 1
      %s43 = scalar_select %p42, 0, %s41
      %s44 = sadd.s32 1, %s26
      %s45 = scalar_select %p42, %s44, %s26
      %p46 = scmp.ge.s32.totalorder %s45, 1
      %s47 = scalar_select %p46, 0, %s45
      %s48 = sadd.s32 1, %s25
      %s49 = scalar_select %p46, %s48, %s25
      %p50 = scmp.ge.s32.totalorder %s49, 4
      %s51 = scalar_select %p50, 0, %s49
      %s52 = ssub.s32 %s25, %s51
      %s53 = ssub.s32 %s26, %s47
      %s54 = sor.u32 %s52, %s53
      %s55 = ssub.s32 %s28, %s39
      %s56 = sor.u32 %s54, %s55
      %p57 = scmp.eq.s32.totalorder %s56, 0
      %s59 = sadd.s32 %s58, 1
      %s60 = scalar_select %p57, %s58, %s59
      %p63 = pneg %p57
      %p64 = scmp.eq.s32.totalorder %s18, 3
      %p65 = por %p63, %p64
      %p66 = scmp.ne.s32.totalorder %s58, %s61
      %p67 = scmp.eq.s32.totalorder %s18, 0
      %p68 = por %p66, %p67
      %p69 = scmp.ne.s32.totalorder %s58, %s61
      %p70 = scmp.eq.s32.totalorder %s23, 3
      %p71 = por %p69, %p70
      %p72 = scmp.ne.s32.totalorder %s61, %s62
      %p73 = scmp.eq.s32.totalorder %s23, 0
      %p74 = por %p72, %p73
      %p75 = scmp.ne.s32.totalorder %s61, %s62
      %p76 = scmp.eq.s32.totalorder %s24, 3
      %p77 = por %p75, %p76
      %p79 = scmp.ne.s32.totalorder %s62, %s78
      %p80 = scmp.eq.s32.totalorder %s24, 0
      %p81 = por %p79, %p80
      %s82 = ssub.s32 %s25, %s51
      %s83 = ssub.s32 %s28, %s39
      %s84 = sor.u32 %s82, %s83
      %s85 = ssub.s32 %s27, %s43
      %s86 = sor.u32 %s84, %s85
      %p87 = scmp.eq.s32.totalorder %s86, 0
      %s89 = sadd.s32 %s88, 1
      %s90 = scalar_select %p87, %s88, %s89
      %p93 = pneg %p87
      %p94 = scmp.eq.s32.totalorder %s18, 3
      %p95 = por %p93, %p94
      %p96 = scmp.ne.s32.totalorder %s88, %s91
      %p97 = scmp.eq.s32.totalorder %s18, 0
      %p98 = por %p96, %p97
      %p99 = scmp.ne.s32.totalorder %s88, %s91
      %p100 = scmp.eq.s32.totalorder %s23, 3
      %p101 = por %p99, %p100
      %p102 = scmp.ne.s32.totalorder %s91, %s92
      %p103 = scmp.eq.s32.totalorder %s23, 0
      %p104 = por %p102, %p103
      %p105 = scmp.ne.s32.totalorder %s91, %s92
      %p106 = scmp.eq.s32.totalorder %s24, 3
      %p107 = por %p105, %p106
      %p109 = scmp.ne.s32.totalorder %s92, %s108
      %p110 = scmp.eq.s32.totalorder %s24, 0
      %p111 = por %p109, %p110
      %s112 = ssub.s32 %s25, %s51
      %s113 = ssub.s32 %s27, %s43
      %s114 = sor.u32 %s112, %s113
      %p115 = scmp.eq.s32.totalorder %s114, 0
      %s117 = sadd.s32 %s116, 1
      %s118 = scalar_select %p115, %s116, %s117
      %p121 = pneg %p115
      %p122 = scmp.eq.s32.totalorder %s18, 3
      %p123 = por %p121, %p122
      %p124 = scmp.ne.s32.totalorder %s116, %s119
      %p125 = scmp.eq.s32.totalorder %s18, 0
      %p126 = por %p124, %p125
      %p127 = scmp.ne.s32.totalorder %s116, %s119
      %p128 = scmp.eq.s32.totalorder %s23, 3
      %p129 = por %p127, %p128
      %p130 = scmp.ne.s32.totalorder %s119, %s120
      %p131 = scmp.eq.s32.totalorder %s23, 0
      %p132 = por %p130, %p131
      %p133 = scmp.ne.s32.totalorder %s119, %s120
      %p134 = scmp.eq.s32.totalorder %s24, 3
      %p135 = por %p133, %p134
      %p137 = scmp.ne.s32.totalorder %s120, %s136
      %p138 = scmp.eq.s32.totalorder %s24, 0
      %p139 = por %p137, %p138
      %s140 = ssub.s32 %s25, %s51
      %s141 = ssub.s32 %s26, %s47
      %s142 = sor.u32 %s140, %s141
      %s143 = ssub.s32 %s27, %s43
      %s144 = sor.u32 %s142, %s143
      %p145 = scmp.eq.s32.totalorder %s144, 0
      %s147 = sadd.s32 %s146, 1
      %s148 = scalar_select %p145, %s146, %s147
      %p151 = pneg %p145
      %p152 = scmp.eq.s32.totalorder %s18, 3
      %p153 = por %p151, %p152
      %p154 = scmp.ne.s32.totalorder %s146, %s149
      %p155 = scmp.eq.s32.totalorder %s18, 0
      %p156 = por %p154, %p155
      %p157 = scmp.ne.s32.totalorder %s146, %s149
      %p158 = scmp.eq.s32.totalorder %s23, 3
      %p159 = por %p157, %p158
      %p160 = scmp.ne.s32.totalorder %s149, %s150
      %p161 = scmp.eq.s32.totalorder %s23, 0
      %p162 = por %p160, %p161
      %p163 = scmp.ne.s32.totalorder %s149, %s150
      %p164 = scmp.eq.s32.totalorder %s24, 3
      %p165 = por %p163, %p164
      %p167 = scmp.ne.s32.totalorder %s150, %s166
      %p168 = scmp.eq.s32.totalorder %s24, 0
      %p169 = por %p167, %p168
      %p170 = scmp.le.s32.totalorder 1, %s18
      %p171 = scmp.lt.s32.totalorder %s18, 5
      %p172 = pnand %p170, %p171
      %p173 = pneg %p172
      // Predicated region
      $region9: #{autoencoder_forward.13} parent=5 // pred_check
        _
      $region10: #{autoencoder_forward.13} parent=5 // pred_check_branch
        %175 = sbr.rel (%p172) target = $region12
      $region11: #{autoencoder_forward.13} parent=5 // pred_region
        %s176 = ssub.s32 %s18, 1
      $region12: #{autoencoder_forward.13} parent=5 // pred_fallthru
        _
      %p177 = scmp.lt.s32.totalorder %s18, 4
      // Predicated region
      $region13: #{autoencoder_forward.13} parent=5 // pred_check
        %p178 = pneg %p177
      $region14: #{autoencoder_forward.13} parent=5 // pred_check_branch
        %180 = sbr.rel (%p178) target = $region16
      $region15: #{autoencoder_forward.13} parent=5 // pred_region
        // Predicated region
        $region17: #{autoencoder_forward.13} parent=15 // pred_check
          %p181 = pneg %p68
        $region18: #{autoencoder_forward.13} parent=15 // pred_check_branch
          %183 = sbr.rel (%p181) target = $region20
        $region19: #{autoencoder_forward.13} parent=15 // pred_region
          %s184 = sand.u32 %s58, 1
          %s185 = scalar_lea.sflag [#allocation4], %s184
          %s186 = sand.u32 %s58, 1
          %s187 = smul.addr %s186, 128
          %s188 = scalar_lea.vmem [#allocation3], %s187
          %s189 = smul.u32 2, %s26
          %s190 = smul.u32 16, %s28
          %s192 = ssub.s32 2048, 2048
          %193 = vsyncadd %s185, %s192
          %s194 = smul.addr %s189, 16
          %s195 = sadd.s32 %s190, %s194
          %s196 = smul.addr %s25, 32
          %s197 = sadd.s32 %s195, %s196
          %s198 = smul.addr %s197, 64
          %s199 = scalar_lea.hbm %s0, %s198
          %s200 = sshll.u32 %s188, 4
          %s201 = int_to_ptr.vmem [resolvable:$true] %s200
          %206 = dma.hbm_to_vmem [thread:$0]  %s199, 2048, %s201, %s185, 1024, 1024, 64
        $region20: #{autoencoder_forward.13} parent=15 // pred_fallthru
          _
        // Predicated region
        $region21: #{autoencoder_forward.13} parent=15 // pred_check
          %p207 = pneg %p98
        $region22: #{autoencoder_forward.13} parent=15 // pred_check_branch
          %209 = sbr.rel (%p207) target = $region24
        $region23: #{autoencoder_forward.13} parent=15 // pred_region
          %s210 = sand.u32 %s18, 1
          %s211 = scalar_lea.sflag [#allocation7], %s210
          %s212 = sand.u32 %s88, 1
          %s213 = smul.addr %s212, 2048
          %s214 = scalar_lea.vmem [#allocation6], %s213
          %s215 = smul.u32 256, %s28
          %s216 = smul.u32 2, %s27
          %s218 = ssub.s32 32768, 32768
          %219 = vsyncadd %s211, %s218
          %s220 = smul.addr %s215, 2
          %s221 = sadd.s32 %s216, %s220
          %s222 = smul.addr %s25, 512
          %s223 = sadd.s32 %s221, %s222
          %s224 = smul.addr %s223, 64
          %s225 = scalar_lea.hbm %s1, %s224
          %s226 = sshll.u32 %s214, 4
          %s227 = int_to_ptr.vmem [resolvable:$true] %s226
          %232 = dma.hbm_to_vmem [thread:$0]  %s225, 32768, %s227, %s211, 128, 128, 8
        $region24: #{autoencoder_forward.13} parent=15 // pred_fallthru
          _
        // Predicated region
        $region25: #{autoencoder_forward.13} parent=15 // pred_check
          %p233 = pneg %p126
        $region26: #{autoencoder_forward.13} parent=15 // pred_check_branch
          %235 = sbr.rel (%p233) target = $region28
        $region27: #{autoencoder_forward.13} parent=15 // pred_region
          %s236 = sand.u32 %s18, 1
          %s237 = scalar_lea.sflag [#allocation7], %s236
          %s238 = sand.u32 %s116, 1
          %s239 = smul.addr %s238, 2
          %s240 = scalar_lea.vmem [#allocation8], %s239
          %s241 = smul.u32 2, %s27
          %s243 = ssub.s32 32, 32
          %244 = vsyncadd %s237, %s243
          %s245 = smul.addr %s25, 2
          %s246 = sadd.s32 %s241, %s245
          %s247 = smul.addr %s246, 16
          %s248 = scalar_lea.hbm %s2, %s247
          %s250 = sshll.u32 %s240, 4
          %s251 = int_to_ptr.vmem [resolvable:$true] %s250
          %253 = dma.hbm_to_vmem [thread:$0]  %s248, 32, %s251, %s237
        $region28: #{autoencoder_forward.13} parent=15 // pred_fallthru
          _
      $region16: #{autoencoder_forward.13} parent=5 // pred_fallthru
        _
      %p254 = scmp.le.s32.totalorder 1, %s18
      %p255 = scmp.lt.s32.totalorder %s18, 5
      %p256 = pnand %p254, %p255
      %p257 = pneg %p256
      // Predicated region
      $region29: #{autoencoder_forward.13} parent=5 // pred_check
        _
      $region30: #{autoencoder_forward.13} parent=5 // pred_check_branch
        %259 = sbr.rel (%p256) target = $region32
      $region31: #{autoencoder_forward.13} parent=5 // pred_region
        %s260 = ssub.s32 %s18, 1
        %s261 = sand.u32 %s61, 1
        %s262 = scalar_lea.sflag [#allocation4], %s261
        %s263 = sand.u32 %s61, 1
        %s264 = smul.addr %s263, 128
        %s265 = scalar_lea.vmem [#allocation3], %s264
        // Predicated region
        $region33: #{autoencoder_forward.13} parent=31 // pred_check
          %p266 = pneg %p74
        $region34: #{autoencoder_forward.13} parent=31 // pred_check_branch
          %268 = sbr.rel (%p266) target = $region36
        $region35: #{autoencoder_forward.13} parent=31 // pred_region
          %269 = dma.done %s262, 2048
        $region36: #{autoencoder_forward.13} parent=31 // pred_fallthru
          _
        %s270 = sand.u32 %s23, 1
        %s271 = scalar_lea.sflag [#allocation7], %s270
        %s272 = sand.u32 %s91, 1
        %s273 = smul.addr %s272, 2048
        %s274 = scalar_lea.vmem [#allocation6], %s273
        // Predicated region
        $region37: #{autoencoder_forward.13} parent=31 // pred_check
          %p275 = pneg %p104
        $region38: #{autoencoder_forward.13} parent=31 // pred_check_branch
          %277 = sbr.rel (%p275) target = $region40
        $region39: #{autoencoder_forward.13} parent=31 // pred_region
          %278 = dma.done %s271, 32768
        $region40: #{autoencoder_forward.13} parent=31 // pred_fallthru
          _
        %s279 = sand.u32 %s23, 1
        %s280 = scalar_lea.sflag [#allocation7], %s279
        %s281 = sand.u32 %s119, 1
        %s282 = smul.addr %s281, 2
        %s283 = scalar_lea.vmem [#allocation8], %s282
        // Predicated region
        $region41: #{autoencoder_forward.13} parent=31 // pred_check
          %p284 = pneg %p132
        $region42: #{autoencoder_forward.13} parent=31 // pred_check_branch
          %286 = sbr.rel (%p284) target = $region44
        $region43: #{autoencoder_forward.13} parent=31 // pred_region
          %287 = dma.done %s280, 32
        $region44: #{autoencoder_forward.13} parent=31 // pred_fallthru
          _
        %s288 = sand.u32 %s61, 1
        %s289 = scalar_lea.sflag [#allocation4], %s288
        %s290 = sand.u32 %s61, 1
        %s291 = smul.addr %s290, 128
        %s292 = scalar_lea.vmem [#allocation3], %s291
        %p293 = pneg %p74
        %p294 = pneg %p71
        %s295 = sand.u32 %s23, 1
        %s296 = scalar_lea.sflag [#allocation7], %s295
        %s297 = sand.u32 %s91, 1
        %s298 = smul.addr %s297, 2048
        %s299 = scalar_lea.vmem [#allocation6], %s298
        %p300 = pneg %p104
        %p301 = pneg %p101
        %s302 = sand.u32 %s23, 1
        %s303 = scalar_lea.sflag [#allocation7], %s302
        %s304 = sand.u32 %s119, 1
        %s305 = smul.addr %s304, 2
        %s306 = scalar_lea.vmem [#allocation8], %s305
        %p307 = pneg %p132
        %p308 = pneg %p129
        %p309 = pneg %p162
        %p310 = pneg %p159
        %s311 = sand.u32 %s149, 1
        %s312 = scalar_lea.sflag [#allocation5], %s311
        %s313 = sand.u32 %s149, 1
        %s314 = smul.addr %s313, 16
        %s315 = scalar_lea.vmem [#allocation9], %s314
        %s316 = smul.u32 2, %s30
        %s317 = smul.u32 16, %s32
        %s318 = smul.u32 256, %s32
        %s319 = smul.u32 2, %s31
        %s320 = smul.u32 2, %s31
        %s321 = smul.u32 2, %s30
        %s322 = smul.u32 2, %s31
        %p323 = scmp.eq.s32.totalorder %s32, 0
        // Predicated region
        $region45: #{autoencoder_forward.13} parent=31 // pred_check
          %p324 = pneg %p323
        $region46: #{autoencoder_forward.13} parent=31 // pred_check_branch
          %326 = sbr.rel (%p324) target = $region48
        $region47: #{autoencoder_forward.13} parent=31 // pred_region
          %327 = vst [vmem:[#allocation2] sm:$0xff] 0.0
          %328 = vst [vmem:[#allocation2 + $0x8] sm:$0xff] 0.0
          %329 = vst [vmem:[#allocation2 + $0x10] sm:$0xff] 0.0
          %330 = vst [vmem:[#allocation2 + $0x18] sm:$0xff] 0.0
        $region48: #{autoencoder_forward.13} parent=31 // pred_fallthru
          _
        %v331 = vld [vmem:[#allocation2] sm:$0xff]
        %v332 = vld [vmem:[#allocation2 + $0x8] sm:$0xff]
        %v333 = vld [vmem:[#allocation2 + $0x10] sm:$0xff]
        %v334 = vld [vmem:[#allocation2 + $0x18] sm:$0xff]
        %v335 = vld [vmem:[%s265] sm:$0xff]
        %v336 = vld [vmem:[%s265 + $0x8] sm:$0xff]
        %v337 = vld [vmem:[%s265 + $0x10] sm:$0xff]
        %v338 = vld [vmem:[%s265 + $0x18] sm:$0xff]
        %v339 = vld [vmem:[%s265 + $0x20] sm:$0xff]
        %v340 = vld [vmem:[%s265 + $0x28] sm:$0xff]
        %v341 = vld [vmem:[%s265 + $0x30] sm:$0xff]
        %v342 = vld [vmem:[%s265 + $0x38] sm:$0xff]
        %v343 = vld [vmem:[%s265 + $0x40] sm:$0xff]
        %v344 = vld [vmem:[%s265 + $0x48] sm:$0xff]
        %v345 = vld [vmem:[%s265 + $0x50] sm:$0xff]
        %v346 = vld [vmem:[%s265 + $0x58] sm:$0xff]
        %v347 = vld [vmem:[%s265 + $0x60] sm:$0xff]
        %v348 = vld [vmem:[%s265 + $0x68] sm:$0xff]
        %v349 = vld [vmem:[%s265 + $0x70] sm:$0xff]
        %v350 = vld [vmem:[%s265 + $0x78] sm:$0xff]
        %v351 = vld [vmem:[%s274] sm:$0xff]
        %v352 = vld [vmem:[%s274 + $0x8] sm:$0xff]
        %v353 = vld [vmem:[%s274 + $0x10] sm:$0xff]
        %v354 = vld [vmem:[%s274 + $0x18] sm:$0xff]
        %v355 = vld [vmem:[%s274 + $0x20] sm:$0xff]
        %v356 = vld [vmem:[%s274 + $0x28] sm:$0xff]
        %v357 = vld [vmem:[%s274 + $0x30] sm:$0xff]
        %v358 = vld [vmem:[%s274 + $0x38] sm:$0xff]
        %v359 = vld [vmem:[%s274 + $0x40] sm:$0xff]
        %v360 = vld [vmem:[%s274 + $0x48] sm:$0xff]
        %v361 = vld [vmem:[%s274 + $0x50] sm:$0xff]
        %v362 = vld [vmem:[%s274 + $0x58] sm:$0xff]
        %v363 = vld [vmem:[%s274 + $0x60] sm:$0xff]
        %v364 = vld [vmem:[%s274 + $0x68] sm:$0xff]
        %v365 = vld [vmem:[%s274 + $0x70] sm:$0xff]
        %v366 = vld [vmem:[%s274 + $0x78] sm:$0xff]
        %v367 = vld [vmem:[%s274 + $0x80] sm:$0xff]
        %v368 = vld [vmem:[%s274 + $0x88] sm:$0xff]
        %v369 = vld [vmem:[%s274 + $0x90] sm:$0xff]
        %v370 = vld [vmem:[%s274 + $0x98] sm:$0xff]
        %v371 = vld [vmem:[%s274 + $0xa0] sm:$0xff]
        %v372 = vld [vmem:[%s274 + $0xa8] sm:$0xff]
        %v373 = vld [vmem:[%s274 + $0xb0] sm:$0xff]
        %v374 = vld [vmem:[%s274 + $0xb8] sm:$0xff]
        %v375 = vld [vmem:[%s274 + $0xc0] sm:$0xff]
        %v376 = vld [vmem:[%s274 + $0xc8] sm:$0xff]
        %v377 = vld [vmem:[%s274 + $0xd0] sm:$0xff]
        %v378 = vld [vmem:[%s274 + $0xd8] sm:$0xff]
        %v379 = vld [vmem:[%s274 + $0xe0] sm:$0xff]
        %v380 = vld [vmem:[%s274 + $0xe8] sm:$0xff]
        %v381 = vld [vmem:[%s274 + $0xf0] sm:$0xff]
        %v382 = vld [vmem:[%s274 + $0xf8] sm:$0xff]
        %v383 = vld [vmem:[%s274 + $0x100] sm:$0xff]
        %v384 = vld [vmem:[%s274 + $0x108] sm:$0xff]
        %v385 = vld [vmem:[%s274 + $0x110] sm:$0xff]
        %v386 = vld [vmem:[%s274 + $0x118] sm:$0xff]
        %v387 = vld [vmem:[%s274 + $0x120] sm:$0xff]
        %v388 = vld [vmem:[%s274 + $0x128] sm:$0xff]
        %v389 = vld [vmem:[%s274 + $0x130] sm:$0xff]
        %v390 = vld [vmem:[%s274 + $0x138] sm:$0xff]
        %v391 = vld [vmem:[%s274 + $0x140] sm:$0xff]
        %v392 = vld [vmem:[%s274 + $0x148] sm:$0xff]
        %v393 = vld [vmem:[%s274 + $0x150] sm:$0xff]
        %v394 = vld [vmem:[%s274 + $0x158] sm:$0xff]
        %v395 = vld [vmem:[%s274 + $0x160] sm:$0xff]
        %v396 = vld [vmem:[%s274 + $0x168] sm:$0xff]
        %v397 = vld [vmem:[%s274 + $0x170] sm:$0xff]
        %v398 = vld [vmem:[%s274 + $0x178] sm:$0xff]
        %v399 = vld [vmem:[%s274 + $0x180] sm:$0xff]
        %v400 = vld [vmem:[%s274 + $0x188] sm:$0xff]
        %v401 = vld [vmem:[%s274 + $0x190] sm:$0xff]
        %v402 = vld [vmem:[%s274 + $0x198] sm:$0xff]
        %v403 = vld [vmem:[%s274 + $0x1a0] sm:$0xff]
        %v404 = vld [vmem:[%s274 + $0x1a8] sm:$0xff]
        %v405 = vld [vmem:[%s274 + $0x1b0] sm:$0xff]
        %v406 = vld [vmem:[%s274 + $0x1b8] sm:$0xff]
        %v407 = vld [vmem:[%s274 + $0x1c0] sm:$0xff]
        %v408 = vld [vmem:[%s274 + $0x1c8] sm:$0xff]
        %v409 = vld [vmem:[%s274 + $0x1d0] sm:$0xff]
        %v410 = vld [vmem:[%s274 + $0x1d8] sm:$0xff]
        %v411 = vld [vmem:[%s274 + $0x1e0] sm:$0xff]
        %v412 = vld [vmem:[%s274 + $0x1e8] sm:$0xff]
        %v413 = vld [vmem:[%s274 + $0x1f0] sm:$0xff]
        %v414 = vld [vmem:[%s274 + $0x1f8] sm:$0xff]
        %v415 = vld [vmem:[%s274 + $0x200] sm:$0xff]
        %v416 = vld [vmem:[%s274 + $0x208] sm:$0xff]
        %v417 = vld [vmem:[%s274 + $0x210] sm:$0xff]
        %v418 = vld [vmem:[%s274 + $0x218] sm:$0xff]
        %v419 = vld [vmem:[%s274 + $0x220] sm:$0xff]
        %v420 = vld [vmem:[%s274 + $0x228] sm:$0xff]
        %v421 = vld [vmem:[%s274 + $0x230] sm:$0xff]
        %v422 = vld [vmem:[%s274 + $0x238] sm:$0xff]
        %v423 = vld [vmem:[%s274 + $0x240] sm:$0xff]
        %v424 = vld [vmem:[%s274 + $0x248] sm:$0xff]
        %v425 = vld [vmem:[%s274 + $0x250] sm:$0xff]
        %v426 = vld [vmem:[%s274 + $0x258] sm:$0xff]
        %v427 = vld [vmem:[%s274 + $0x260] sm:$0xff]
        %v428 = vld [vmem:[%s274 + $0x268] sm:$0xff]
        %v429 = vld [vmem:[%s274 + $0x270] sm:$0xff]
        %v430 = vld [vmem:[%s274 + $0x278] sm:$0xff]
        %v431 = vld [vmem:[%s274 + $0x280] sm:$0xff]
        %v432 = vld [vmem:[%s274 + $0x288] sm:$0xff]
        %v433 = vld [vmem:[%s274 + $0x290] sm:$0xff]
        %v434 = vld [vmem:[%s274 + $0x298] sm:$0xff]
        %v435 = vld [vmem:[%s274 + $0x2a0] sm:$0xff]
        %v436 = vld [vmem:[%s274 + $0x2a8] sm:$0xff]
        %v437 = vld [vmem:[%s274 + $0x2b0] sm:$0xff]
        %v438 = vld [vmem:[%s274 + $0x2b8] sm:$0xff]
        %v439 = vld [vmem:[%s274 + $0x2c0] sm:$0xff]
        %v440 = vld [vmem:[%s274 + $0x2c8] sm:$0xff]
        %v441 = vld [vmem:[%s274 + $0x2d0] sm:$0xff]
        %v442 = vld [vmem:[%s274 + $0x2d8] sm:$0xff]
        %v443 = vld [vmem:[%s274 + $0x2e0] sm:$0xff]
        %v444 = vld [vmem:[%s274 + $0x2e8] sm:$0xff]
        %v445 = vld [vmem:[%s274 + $0x2f0] sm:$0xff]
        %v446 = vld [vmem:[%s274 + $0x2f8] sm:$0xff]
        %v447 = vld [vmem:[%s274 + $0x300] sm:$0xff]
        %v448 = vld [vmem:[%s274 + $0x308] sm:$0xff]
        %v449 = vld [vmem:[%s274 + $0x310] sm:$0xff]
        %v450 = vld [vmem:[%s274 + $0x318] sm:$0xff]
        %v451 = vld [vmem:[%s274 + $0x320] sm:$0xff]
        %v452 = vld [vmem:[%s274 + $0x328] sm:$0xff]
        %v453 = vld [vmem:[%s274 + $0x330] sm:$0xff]
        %v454 = vld [vmem:[%s274 + $0x338] sm:$0xff]
        %v455 = vld [vmem:[%s274 + $0x340] sm:$0xff]
        %v456 = vld [vmem:[%s274 + $0x348] sm:$0xff]
        %v457 = vld [vmem:[%s274 + $0x350] sm:$0xff]
        %v458 = vld [vmem:[%s274 + $0x358] sm:$0xff]
        %v459 = vld [vmem:[%s274 + $0x360] sm:$0xff]
        %v460 = vld [vmem:[%s274 + $0x368] sm:$0xff]
        %v461 = vld [vmem:[%s274 + $0x370] sm:$0xff]
        %v462 = vld [vmem:[%s274 + $0x378] sm:$0xff]
        %v463 = vld [vmem:[%s274 + $0x380] sm:$0xff]
        %v464 = vld [vmem:[%s274 + $0x388] sm:$0xff]
        %v465 = vld [vmem:[%s274 + $0x390] sm:$0xff]
        %v466 = vld [vmem:[%s274 + $0x398] sm:$0xff]
        %v467 = vld [vmem:[%s274 + $0x3a0] sm:$0xff]
        %v468 = vld [vmem:[%s274 + $0x3a8] sm:$0xff]
        %v469 = vld [vmem:[%s274 + $0x3b0] sm:$0xff]
        %v470 = vld [vmem:[%s274 + $0x3b8] sm:$0xff]
        %v471 = vld [vmem:[%s274 + $0x3c0] sm:$0xff]
        %v472 = vld [vmem:[%s274 + $0x3c8] sm:$0xff]
        %v473 = vld [vmem:[%s274 + $0x3d0] sm:$0xff]
        %v474 = vld [vmem:[%s274 + $0x3d8] sm:$0xff]
        %v475 = vld [vmem:[%s274 + $0x3e0] sm:$0xff]
        %v476 = vld [vmem:[%s274 + $0x3e8] sm:$0xff]
        %v477 = vld [vmem:[%s274 + $0x3f0] sm:$0xff]
        %v478 = vld [vmem:[%s274 + $0x3f8] sm:$0xff]
        %v479 = vld [vmem:[%s274 + $0x400] sm:$0xff]
        %v480 = vld [vmem:[%s274 + $0x408] sm:$0xff]
        %v481 = vld [vmem:[%s274 + $0x410] sm:$0xff]
        %v482 = vld [vmem:[%s274 + $0x418] sm:$0xff]
        %v483 = vld [vmem:[%s274 + $0x420] sm:$0xff]
        %v484 = vld [vmem:[%s274 + $0x428] sm:$0xff]
        %v485 = vld [vmem:[%s274 + $0x430] sm:$0xff]
        %v486 = vld [vmem:[%s274 + $0x438] sm:$0xff]
        %v487 = vld [vmem:[%s274 + $0x440] sm:$0xff]
        %v488 = vld [vmem:[%s274 + $0x448] sm:$0xff]
        %v489 = vld [vmem:[%s274 + $0x450] sm:$0xff]
        %v490 = vld [vmem:[%s274 + $0x458] sm:$0xff]
        %v491 = vld [vmem:[%s274 + $0x460] sm:$0xff]
        %v492 = vld [vmem:[%s274 + $0x468] sm:$0xff]
        %v493 = vld [vmem:[%s274 + $0x470] sm:$0xff]
        %v494 = vld [vmem:[%s274 + $0x478] sm:$0xff]
        %v495 = vld [vmem:[%s274 + $0x480] sm:$0xff]
        %v496 = vld [vmem:[%s274 + $0x488] sm:$0xff]
        %v497 = vld [vmem:[%s274 + $0x490] sm:$0xff]
        %v498 = vld [vmem:[%s274 + $0x498] sm:$0xff]
        %v499 = vld [vmem:[%s274 + $0x4a0] sm:$0xff]
        %v500 = vld [vmem:[%s274 + $0x4a8] sm:$0xff]
        %v501 = vld [vmem:[%s274 + $0x4b0] sm:$0xff]
        %v502 = vld [vmem:[%s274 + $0x4b8] sm:$0xff]
        %v503 = vld [vmem:[%s274 + $0x4c0] sm:$0xff]
        %v504 = vld [vmem:[%s274 + $0x4c8] sm:$0xff]
        %v505 = vld [vmem:[%s274 + $0x4d0] sm:$0xff]
        %v506 = vld [vmem:[%s274 + $0x4d8] sm:$0xff]
        %v507 = vld [vmem:[%s274 + $0x4e0] sm:$0xff]
        %v508 = vld [vmem:[%s274 + $0x4e8] sm:$0xff]
        %v509 = vld [vmem:[%s274 + $0x4f0] sm:$0xff]
        %v510 = vld [vmem:[%s274 + $0x4f8] sm:$0xff]
        %v511 = vld [vmem:[%s274 + $0x500] sm:$0xff]
        %v512 = vld [vmem:[%s274 + $0x508] sm:$0xff]
        %v513 = vld [vmem:[%s274 + $0x510] sm:$0xff]
        %v514 = vld [vmem:[%s274 + $0x518] sm:$0xff]
        %v515 = vld [vmem:[%s274 + $0x520] sm:$0xff]
        %v516 = vld [vmem:[%s274 + $0x528] sm:$0xff]
        %v517 = vld [vmem:[%s274 + $0x530] sm:$0xff]
        %v518 = vld [vmem:[%s274 + $0x538] sm:$0xff]
        %v519 = vld [vmem:[%s274 + $0x540] sm:$0xff]
        %v520 = vld [vmem:[%s274 + $0x548] sm:$0xff]
        %v521 = vld [vmem:[%s274 + $0x550] sm:$0xff]
        %v522 = vld [vmem:[%s274 + $0x558] sm:$0xff]
        %v523 = vld [vmem:[%s274 + $0x560] sm:$0xff]
        %v524 = vld [vmem:[%s274 + $0x568] sm:$0xff]
        %v525 = vld [vmem:[%s274 + $0x570] sm:$0xff]
        %v526 = vld [vmem:[%s274 + $0x578] sm:$0xff]
        %v527 = vld [vmem:[%s274 + $0x580] sm:$0xff]
        %v528 = vld [vmem:[%s274 + $0x588] sm:$0xff]
        %v529 = vld [vmem:[%s274 + $0x590] sm:$0xff]
        %v530 = vld [vmem:[%s274 + $0x598] sm:$0xff]
        %v531 = vld [vmem:[%s274 + $0x5a0] sm:$0xff]
        %v532 = vld [vmem:[%s274 + $0x5a8] sm:$0xff]
        %v533 = vld [vmem:[%s274 + $0x5b0] sm:$0xff]
        %v534 = vld [vmem:[%s274 + $0x5b8] sm:$0xff]
        %v535 = vld [vmem:[%s274 + $0x5c0] sm:$0xff]
        %v536 = vld [vmem:[%s274 + $0x5c8] sm:$0xff]
        %v537 = vld [vmem:[%s274 + $0x5d0] sm:$0xff]
        %v538 = vld [vmem:[%s274 + $0x5d8] sm:$0xff]
        %v539 = vld [vmem:[%s274 + $0x5e0] sm:$0xff]
        %v540 = vld [vmem:[%s274 + $0x5e8] sm:$0xff]
        %v541 = vld [vmem:[%s274 + $0x5f0] sm:$0xff]
        %v542 = vld [vmem:[%s274 + $0x5f8] sm:$0xff]
        %v543 = vld [vmem:[%s274 + $0x600] sm:$0xff]
        %v544 = vld [vmem:[%s274 + $0x608] sm:$0xff]
        %v545 = vld [vmem:[%s274 + $0x610] sm:$0xff]
        %v546 = vld [vmem:[%s274 + $0x618] sm:$0xff]
        %v547 = vld [vmem:[%s274 + $0x620] sm:$0xff]
        %v548 = vld [vmem:[%s274 + $0x628] sm:$0xff]
        %v549 = vld [vmem:[%s274 + $0x630] sm:$0xff]
        %v550 = vld [vmem:[%s274 + $0x638] sm:$0xff]
        %v551 = vld [vmem:[%s274 + $0x640] sm:$0xff]
        %v552 = vld [vmem:[%s274 + $0x648] sm:$0xff]
        %v553 = vld [vmem:[%s274 + $0x650] sm:$0xff]
        %v554 = vld [vmem:[%s274 + $0x658] sm:$0xff]
        %v555 = vld [vmem:[%s274 + $0x660] sm:$0xff]
        %v556 = vld [vmem:[%s274 + $0x668] sm:$0xff]
        %v557 = vld [vmem:[%s274 + $0x670] sm:$0xff]
        %v558 = vld [vmem:[%s274 + $0x678] sm:$0xff]
        %v559 = vld [vmem:[%s274 + $0x680] sm:$0xff]
        %v560 = vld [vmem:[%s274 + $0x688] sm:$0xff]
        %v561 = vld [vmem:[%s274 + $0x690] sm:$0xff]
        %v562 = vld [vmem:[%s274 + $0x698] sm:$0xff]
        %v563 = vld [vmem:[%s274 + $0x6a0] sm:$0xff]
        %v564 = vld [vmem:[%s274 + $0x6a8] sm:$0xff]
        %v565 = vld [vmem:[%s274 + $0x6b0] sm:$0xff]
        %v566 = vld [vmem:[%s274 + $0x6b8] sm:$0xff]
        %v567 = vld [vmem:[%s274 + $0x6c0] sm:$0xff]
        %v568 = vld [vmem:[%s274 + $0x6c8] sm:$0xff]
        %v569 = vld [vmem:[%s274 + $0x6d0] sm:$0xff]
        %v570 = vld [vmem:[%s274 + $0x6d8] sm:$0xff]
        %v571 = vld [vmem:[%s274 + $0x6e0] sm:$0xff]
        %v572 = vld [vmem:[%s274 + $0x6e8] sm:$0xff]
        %v573 = vld [vmem:[%s274 + $0x6f0] sm:$0xff]
        %v574 = vld [vmem:[%s274 + $0x6f8] sm:$0xff]
        %v575 = vld [vmem:[%s274 + $0x700] sm:$0xff]
        %v576 = vld [vmem:[%s274 + $0x708] sm:$0xff]
        %v577 = vld [vmem:[%s274 + $0x710] sm:$0xff]
        %v578 = vld [vmem:[%s274 + $0x718] sm:$0xff]
        %v579 = vld [vmem:[%s274 + $0x720] sm:$0xff]
        %v580 = vld [vmem:[%s274 + $0x728] sm:$0xff]
        %v581 = vld [vmem:[%s274 + $0x730] sm:$0xff]
        %v582 = vld [vmem:[%s274 + $0x738] sm:$0xff]
        %v583 = vld [vmem:[%s274 + $0x740] sm:$0xff]
        %v584 = vld [vmem:[%s274 + $0x748] sm:$0xff]
        %v585 = vld [vmem:[%s274 + $0x750] sm:$0xff]
        %v586 = vld [vmem:[%s274 + $0x758] sm:$0xff]
        %v587 = vld [vmem:[%s274 + $0x760] sm:$0xff]
        %v588 = vld [vmem:[%s274 + $0x768] sm:$0xff]
        %v589 = vld [vmem:[%s274 + $0x770] sm:$0xff]
        %v590 = vld [vmem:[%s274 + $0x778] sm:$0xff]
        %v591 = vld [vmem:[%s274 + $0x780] sm:$0xff]
        %v592 = vld [vmem:[%s274 + $0x788] sm:$0xff]
        %v593 = vld [vmem:[%s274 + $0x790] sm:$0xff]
        %v594 = vld [vmem:[%s274 + $0x798] sm:$0xff]
        %v595 = vld [vmem:[%s274 + $0x7a0] sm:$0xff]
        %v596 = vld [vmem:[%s274 + $0x7a8] sm:$0xff]
        %v597 = vld [vmem:[%s274 + $0x7b0] sm:$0xff]
        %v598 = vld [vmem:[%s274 + $0x7b8] sm:$0xff]
        %v599 = vld [vmem:[%s274 + $0x7c0] sm:$0xff]
        %v600 = vld [vmem:[%s274 + $0x7c8] sm:$0xff]
        %v601 = vld [vmem:[%s274 + $0x7d0] sm:$0xff]
        %v602 = vld [vmem:[%s274 + $0x7d8] sm:$0xff]
        %v603 = vld [vmem:[%s274 + $0x7e0] sm:$0xff]
        %v604 = vld [vmem:[%s274 + $0x7e8] sm:$0xff]
        %v605 = vld [vmem:[%s274 + $0x7f0] sm:$0xff]
        %v606 = vld [vmem:[%s274 + $0x7f8] sm:$0xff]
        %v623 = vunpack.c.l.b16 %v335
        %v624 = vunpack.c.h.b16 %v335
        %v625 = vunpack.c.l.b16 %v336
        %v626 = vunpack.c.h.b16 %v336
        %v627 = vunpack.c.l.b16 %v337
        %v628 = vunpack.c.h.b16 %v337
        %v629 = vunpack.c.l.b16 %v338
        %v630 = vunpack.c.h.b16 %v338
        %v631 = vunpack.c.l.b16 %v339
        %v632 = vunpack.c.h.b16 %v339
        %v633 = vunpack.c.l.b16 %v340
        %v634 = vunpack.c.h.b16 %v340
        %v635 = vunpack.c.l.b16 %v341
        %v636 = vunpack.c.h.b16 %v341
        %v637 = vunpack.c.l.b16 %v342
        %v638 = vunpack.c.h.b16 %v342
        %v639 = vunpack.c.l.b16 %v343
        %v640 = vunpack.c.h.b16 %v343
        %v641 = vunpack.c.l.b16 %v344
        %v642 = vunpack.c.h.b16 %v344
        %v643 = vunpack.c.l.b16 %v345
        %v644 = vunpack.c.h.b16 %v345
        %v645 = vunpack.c.l.b16 %v346
        %v646 = vunpack.c.h.b16 %v346
        %v647 = vunpack.c.l.b16 %v347
        %v648 = vunpack.c.h.b16 %v347
        %v649 = vunpack.c.l.b16 %v348
        %v650 = vunpack.c.h.b16 %v348
        %v651 = vunpack.c.l.b16 %v349
        %v652 = vunpack.c.h.b16 %v349
        %v653 = vunpack.c.l.b16 %v350
        %v654 = vunpack.c.h.b16 %v350
        %v655 = vpack.c.b16 %v639, %v623
        %v656 = vpack.c.b16 %v640, %v624
        %v657 = vpack.c.b16 %v641, %v625
        %v658 = vpack.c.b16 %v642, %v626
        %v659 = vpack.c.b16 %v643, %v627
        %v660 = vpack.c.b16 %v644, %v628
        %v661 = vpack.c.b16 %v645, %v629
        %v662 = vpack.c.b16 %v646, %v630
        %v663 = vpack.c.b16 %v647, %v631
        %v664 = vpack.c.b16 %v648, %v632
        %v665 = vpack.c.b16 %v649, %v633
        %v666 = vpack.c.b16 %v650, %v634
        %v667 = vpack.c.b16 %v651, %v635
        %v668 = vpack.c.b16 %v652, %v636
        %v669 = vpack.c.b16 %v653, %v637
        %v670 = vpack.c.b16 %v654, %v638
        %v943 = vunpack.c.l.b16 %v351
        %v944 = vunpack.c.h.b16 %v351
        %v945 = vunpack.c.l.b16 %v352
        %v946 = vunpack.c.h.b16 %v352
        %v947 = vunpack.c.l.b16 %v353
        %v948 = vunpack.c.h.b16 %v353
        %v949 = vunpack.c.l.b16 %v354
        %v950 = vunpack.c.h.b16 %v354
        %v951 = vunpack.c.l.b16 %v355
        %v952 = vunpack.c.h.b16 %v355
        %v953 = vunpack.c.l.b16 %v356
        %v954 = vunpack.c.h.b16 %v356
        %v955 = vunpack.c.l.b16 %v357
        %v956 = vunpack.c.h.b16 %v357
        %v957 = vunpack.c.l.b16 %v358
        %v958 = vunpack.c.h.b16 %v358
        %v959 = vunpack.c.l.b16 %v359
        %v960 = vunpack.c.h.b16 %v359
        %v961 = vunpack.c.l.b16 %v360
        %v962 = vunpack.c.h.b16 %v360
        %v963 = vunpack.c.l.b16 %v361
        %v964 = vunpack.c.h.b16 %v361
        %v965 = vunpack.c.l.b16 %v362
        %v966 = vunpack.c.h.b16 %v362
        %v967 = vunpack.c.l.b16 %v363
        %v968 = vunpack.c.h.b16 %v363
        %v969 = vunpack.c.l.b16 %v364
        %v970 = vunpack.c.h.b16 %v364
        %v971 = vunpack.c.l.b16 %v365
        %v972 = vunpack.c.h.b16 %v365
        %v973 = vunpack.c.l.b16 %v366
        %v974 = vunpack.c.h.b16 %v366
        %v975 = vunpack.c.l.b16 %v367
        %v976 = vunpack.c.h.b16 %v367
        %v977 = vunpack.c.l.b16 %v368
        %v978 = vunpack.c.h.b16 %v368
        %v979 = vunpack.c.l.b16 %v369
        %v980 = vunpack.c.h.b16 %v369
        %v981 = vunpack.c.l.b16 %v370
        %v982 = vunpack.c.h.b16 %v370
        %v983 = vunpack.c.l.b16 %v371
        %v984 = vunpack.c.h.b16 %v371
        %v985 = vunpack.c.l.b16 %v372
        %v986 = vunpack.c.h.b16 %v372
        %v987 = vunpack.c.l.b16 %v373
        %v988 = vunpack.c.h.b16 %v373
        %v989 = vunpack.c.l.b16 %v374
        %v990 = vunpack.c.h.b16 %v374
        %v991 = vunpack.c.l.b16 %v375
        %v992 = vunpack.c.h.b16 %v375
        %v993 = vunpack.c.l.b16 %v376
        %v994 = vunpack.c.h.b16 %v376
        %v995 = vunpack.c.l.b16 %v377
        %v996 = vunpack.c.h.b16 %v377
        %v997 = vunpack.c.l.b16 %v378
        %v998 = vunpack.c.h.b16 %v378
        %v999 = vunpack.c.l.b16 %v379
        %v1000 = vunpack.c.h.b16 %v379
        %v1001 = vunpack.c.l.b16 %v380
        %v1002 = vunpack.c.h.b16 %v380
        %v1003 = vunpack.c.l.b16 %v381
        %v1004 = vunpack.c.h.b16 %v381
        %v1005 = vunpack.c.l.b16 %v382
        %v1006 = vunpack.c.h.b16 %v382
        %v1007 = vunpack.c.l.b16 %v383
        %v1008 = vunpack.c.h.b16 %v383
        %v1009 = vunpack.c.l.b16 %v384
        %v1010 = vunpack.c.h.b16 %v384
        %v1011 = vunpack.c.l.b16 %v385
        %v1012 = vunpack.c.h.b16 %v385
        %v1013 = vunpack.c.l.b16 %v386
        %v1014 = vunpack.c.h.b16 %v386
        %v1015 = vunpack.c.l.b16 %v387
        %v1016 = vunpack.c.h.b16 %v387
        %v1017 = vunpack.c.l.b16 %v388
        %v1018 = vunpack.c.h.b16 %v388
        %v1019 = vunpack.c.l.b16 %v389
        %v1020 = vunpack.c.h.b16 %v389
        %v1021 = vunpack.c.l.b16 %v390
        %v1022 = vunpack.c.h.b16 %v390
        %v1023 = vunpack.c.l.b16 %v391
        %v1024 = vunpack.c.h.b16 %v391
        %v1025 = vunpack.c.l.b16 %v392
        %v1026 = vunpack.c.h.b16 %v392
        %v1027 = vunpack.c.l.b16 %v393
        %v1028 = vunpack.c.h.b16 %v393
        %v1029 = vunpack.c.l.b16 %v394
        %v1030 = vunpack.c.h.b16 %v394
        %v1031 = vunpack.c.l.b16 %v395
        %v1032 = vunpack.c.h.b16 %v395
        %v1033 = vunpack.c.l.b16 %v396
        %v1034 = vunpack.c.h.b16 %v396
        %v1035 = vunpack.c.l.b16 %v397
        %v1036 = vunpack.c.h.b16 %v397
        %v1037 = vunpack.c.l.b16 %v398
        %v1038 = vunpack.c.h.b16 %v398
        %v1039 = vunpack.c.l.b16 %v399
        %v1040 = vunpack.c.h.b16 %v399
        %v1041 = vunpack.c.l.b16 %v400
        %v1042 = vunpack.c.h.b16 %v400
        %v1043 = vunpack.c.l.b16 %v401
        %v1044 = vunpack.c.h.b16 %v401
        %v1045 = vunpack.c.l.b16 %v402
        %v1046 = vunpack.c.h.b16 %v402
        %v1047 = vunpack.c.l.b16 %v403
        %v1048 = vunpack.c.h.b16 %v403
        %v1049 = vunpack.c.l.b16 %v404
        %v1050 = vunpack.c.h.b16 %v404
        %v1051 = vunpack.c.l.b16 %v405
        %v1052 = vunpack.c.h.b16 %v405
        %v1053 = vunpack.c.l.b16 %v406
        %v1054 = vunpack.c.h.b16 %v406
        %v1055 = vunpack.c.l.b16 %v407
        %v1056 = vunpack.c.h.b16 %v407
        %v1057 = vunpack.c.l.b16 %v408
        %v1058 = vunpack.c.h.b16 %v408
        %v1059 = vunpack.c.l.b16 %v409
        %v1060 = vunpack.c.h.b16 %v409
        %v1061 = vunpack.c.l.b16 %v410
        %v1062 = vunpack.c.h.b16 %v410
        %v1063 = vunpack.c.l.b16 %v411
        %v1064 = vunpack.c.h.b16 %v411
        %v1065 = vunpack.c.l.b16 %v412
        %v1066 = vunpack.c.h.b16 %v412
        %v1067 = vunpack.c.l.b16 %v413
        %v1068 = vunpack.c.h.b16 %v413
        %v1069 = vunpack.c.l.b16 %v414
        %v1070 = vunpack.c.h.b16 %v414
        %v1071 = vunpack.c.l.b16 %v415
        %v1072 = vunpack.c.h.b16 %v415
        %v1073 = vunpack.c.l.b16 %v416
        %v1074 = vunpack.c.h.b16 %v416
        %v1075 = vunpack.c.l.b16 %v417
        %v1076 = vunpack.c.h.b16 %v417
        %v1077 = vunpack.c.l.b16 %v418
        %v1078 = vunpack.c.h.b16 %v418
        %v1079 = vunpack.c.l.b16 %v419
        %v1080 = vunpack.c.h.b16 %v419
        %v1081 = vunpack.c.l.b16 %v420
        %v1082 = vunpack.c.h.b16 %v420
        %v1083 = vunpack.c.l.b16 %v421
        %v1084 = vunpack.c.h.b16 %v421
        %v1085 = vunpack.c.l.b16 %v422
        %v1086 = vunpack.c.h.b16 %v422
        %v1087 = vunpack.c.l.b16 %v423
        %v1088 = vunpack.c.h.b16 %v423
        %v1089 = vunpack.c.l.b16 %v424
        %v1090 = vunpack.c.h.b16 %v424
        %v1091 = vunpack.c.l.b16 %v425
        %v1092 = vunpack.c.h.b16 %v425
        %v1093 = vunpack.c.l.b16 %v426
        %v1094 = vunpack.c.h.b16 %v426
        %v1095 = vunpack.c.l.b16 %v427
        %v1096 = vunpack.c.h.b16 %v427
        %v1097 = vunpack.c.l.b16 %v428
        %v1098 = vunpack.c.h.b16 %v428
        %v1099 = vunpack.c.l.b16 %v429
        %v1100 = vunpack.c.h.b16 %v429
        %v1101 = vunpack.c.l.b16 %v430
        %v1102 = vunpack.c.h.b16 %v430
        %v1103 = vunpack.c.l.b16 %v431
        %v1104 = vunpack.c.h.b16 %v431
        %v1105 = vunpack.c.l.b16 %v432
        %v1106 = vunpack.c.h.b16 %v432
        %v1107 = vunpack.c.l.b16 %v433
        %v1108 = vunpack.c.h.b16 %v433
        %v1109 = vunpack.c.l.b16 %v434
        %v1110 = vunpack.c.h.b16 %v434
        %v1111 = vunpack.c.l.b16 %v435
        %v1112 = vunpack.c.h.b16 %v435
        %v1113 = vunpack.c.l.b16 %v436
        %v1114 = vunpack.c.h.b16 %v436
        %v1115 = vunpack.c.l.b16 %v437
        %v1116 = vunpack.c.h.b16 %v437
        %v1117 = vunpack.c.l.b16 %v438
        %v1118 = vunpack.c.h.b16 %v438
        %v1119 = vunpack.c.l.b16 %v439
        %v1120 = vunpack.c.h.b16 %v439
        %v1121 = vunpack.c.l.b16 %v440
        %v1122 = vunpack.c.h.b16 %v440
        %v1123 = vunpack.c.l.b16 %v441
        %v1124 = vunpack.c.h.b16 %v441
        %v1125 = vunpack.c.l.b16 %v442
        %v1126 = vunpack.c.h.b16 %v442
        %v1127 = vunpack.c.l.b16 %v443
        %v1128 = vunpack.c.h.b16 %v443
        %v1129 = vunpack.c.l.b16 %v444
        %v1130 = vunpack.c.h.b16 %v444
        %v1131 = vunpack.c.l.b16 %v445
        %v1132 = vunpack.c.h.b16 %v445
        %v1133 = vunpack.c.l.b16 %v446
        %v1134 = vunpack.c.h.b16 %v446
        %v1135 = vunpack.c.l.b16 %v447
        %v1136 = vunpack.c.h.b16 %v447
        %v1137 = vunpack.c.l.b16 %v448
        %v1138 = vunpack.c.h.b16 %v448
        %v1139 = vunpack.c.l.b16 %v449
        %v1140 = vunpack.c.h.b16 %v449
        %v1141 = vunpack.c.l.b16 %v450
        %v1142 = vunpack.c.h.b16 %v450
        %v1143 = vunpack.c.l.b16 %v451
        %v1144 = vunpack.c.h.b16 %v451
        %v1145 = vunpack.c.l.b16 %v452
        %v1146 = vunpack.c.h.b16 %v452
        %v1147 = vunpack.c.l.b16 %v453
        %v1148 = vunpack.c.h.b16 %v453
        %v1149 = vunpack.c.l.b16 %v454
        %v1150 = vunpack.c.h.b16 %v454
        %v1151 = vunpack.c.l.b16 %v455
        %v1152 = vunpack.c.h.b16 %v455
        %v1153 = vunpack.c.l.b16 %v456
        %v1154 = vunpack.c.h.b16 %v456
        %v1155 = vunpack.c.l.b16 %v457
        %v1156 = vunpack.c.h.b16 %v457
        %v1157 = vunpack.c.l.b16 %v458
        %v1158 = vunpack.c.h.b16 %v458
        %v1159 = vunpack.c.l.b16 %v459
        %v1160 = vunpack.c.h.b16 %v459
        %v1161 = vunpack.c.l.b16 %v460
        %v1162 = vunpack.c.h.b16 %v460
        %v1163 = vunpack.c.l.b16 %v461
        %v1164 = vunpack.c.h.b16 %v461
        %v1165 = vunpack.c.l.b16 %v462
        %v1166 = vunpack.c.h.b16 %v462
        %v1167 = vunpack.c.l.b16 %v463
        %v1168 = vunpack.c.h.b16 %v463
        %v1169 = vunpack.c.l.b16 %v464
        %v1170 = vunpack.c.h.b16 %v464
        %v1171 = vunpack.c.l.b16 %v465
        %v1172 = vunpack.c.h.b16 %v465
        %v1173 = vunpack.c.l.b16 %v466
        %v1174 = vunpack.c.h.b16 %v466
        %v1175 = vunpack.c.l.b16 %v467
        %v1176 = vunpack.c.h.b16 %v467
        %v1177 = vunpack.c.l.b16 %v468
        %v1178 = vunpack.c.h.b16 %v468
        %v1179 = vunpack.c.l.b16 %v469
        %v1180 = vunpack.c.h.b16 %v469
        %v1181 = vunpack.c.l.b16 %v470
        %v1182 = vunpack.c.h.b16 %v470
        %v1183 = vunpack.c.l.b16 %v471
        %v1184 = vunpack.c.h.b16 %v471
        %v1185 = vunpack.c.l.b16 %v472
        %v1186 = vunpack.c.h.b16 %v472
        %v1187 = vunpack.c.l.b16 %v473
        %v1188 = vunpack.c.h.b16 %v473
        %v1189 = vunpack.c.l.b16 %v474
        %v1190 = vunpack.c.h.b16 %v474
        %v1191 = vunpack.c.l.b16 %v475
        %v1192 = vunpack.c.h.b16 %v475
        %v1193 = vunpack.c.l.b16 %v476
        %v1194 = vunpack.c.h.b16 %v476
        %v1195 = vunpack.c.l.b16 %v477
        %v1196 = vunpack.c.h.b16 %v477
        %v1197 = vunpack.c.l.b16 %v478
        %v1198 = vunpack.c.h.b16 %v478
        %v1199 = vunpack.c.l.b16 %v479
        %v1200 = vunpack.c.h.b16 %v479
        %v1201 = vunpack.c.l.b16 %v480
        %v1202 = vunpack.c.h.b16 %v480
        %v1203 = vunpack.c.l.b16 %v481
        %v1204 = vunpack.c.h.b16 %v481
        %v1205 = vunpack.c.l.b16 %v482
        %v1206 = vunpack.c.h.b16 %v482
        %v1207 = vunpack.c.l.b16 %v483
        %v1208 = vunpack.c.h.b16 %v483
        %v1209 = vunpack.c.l.b16 %v484
        %v1210 = vunpack.c.h.b16 %v484
        %v1211 = vunpack.c.l.b16 %v485
        %v1212 = vunpack.c.h.b16 %v485
        %v1213 = vunpack.c.l.b16 %v486
        %v1214 = vunpack.c.h.b16 %v486
        %v1215 = vunpack.c.l.b16 %v487
        %v1216 = vunpack.c.h.b16 %v487
        %v1217 = vunpack.c.l.b16 %v488
        %v1218 = vunpack.c.h.b16 %v488
        %v1219 = vunpack.c.l.b16 %v489
        %v1220 = vunpack.c.h.b16 %v489
        %v1221 = vunpack.c.l.b16 %v490
        %v1222 = vunpack.c.h.b16 %v490
        %v1223 = vunpack.c.l.b16 %v491
        %v1224 = vunpack.c.h.b16 %v491
        %v1225 = vunpack.c.l.b16 %v492
        %v1226 = vunpack.c.h.b16 %v492
        %v1227 = vunpack.c.l.b16 %v493
        %v1228 = vunpack.c.h.b16 %v493
        %v1229 = vunpack.c.l.b16 %v494
        %v1230 = vunpack.c.h.b16 %v494
        %v1231 = vunpack.c.l.b16 %v495
        %v1232 = vunpack.c.h.b16 %v495
        %v1233 = vunpack.c.l.b16 %v496
        %v1234 = vunpack.c.h.b16 %v496
        %v1235 = vunpack.c.l.b16 %v497
        %v1236 = vunpack.c.h.b16 %v497
        %v1237 = vunpack.c.l.b16 %v498
        %v1238 = vunpack.c.h.b16 %v498
        %v1239 = vunpack.c.l.b16 %v499
        %v1240 = vunpack.c.h.b16 %v499
        %v1241 = vunpack.c.l.b16 %v500
        %v1242 = vunpack.c.h.b16 %v500
        %v1243 = vunpack.c.l.b16 %v501
        %v1244 = vunpack.c.h.b16 %v501
        %v1245 = vunpack.c.l.b16 %v502
        %v1246 = vunpack.c.h.b16 %v502
        %v1247 = vunpack.c.l.b16 %v503
        %v1248 = vunpack.c.h.b16 %v503
        %v1249 = vunpack.c.l.b16 %v504
        %v1250 = vunpack.c.h.b16 %v504
        %v1251 = vunpack.c.l.b16 %v505
        %v1252 = vunpack.c.h.b16 %v505
        %v1253 = vunpack.c.l.b16 %v506
        %v1254 = vunpack.c.h.b16 %v506
        %v1255 = vunpack.c.l.b16 %v507
        %v1256 = vunpack.c.h.b16 %v507
        %v1257 = vunpack.c.l.b16 %v508
        %v1258 = vunpack.c.h.b16 %v508
        %v1259 = vunpack.c.l.b16 %v509
        %v1260 = vunpack.c.h.b16 %v509
        %v1261 = vunpack.c.l.b16 %v510
        %v1262 = vunpack.c.h.b16 %v510
        %v1263 = vunpack.c.l.b16 %v511
        %v1264 = vunpack.c.h.b16 %v511
        %v1265 = vunpack.c.l.b16 %v512
        %v1266 = vunpack.c.h.b16 %v512
        %v1267 = vunpack.c.l.b16 %v513
        %v1268 = vunpack.c.h.b16 %v513
        %v1269 = vunpack.c.l.b16 %v514
        %v1270 = vunpack.c.h.b16 %v514
        %v1271 = vunpack.c.l.b16 %v515
        %v1272 = vunpack.c.h.b16 %v515
        %v1273 = vunpack.c.l.b16 %v516
        %v1274 = vunpack.c.h.b16 %v516
        %v1275 = vunpack.c.l.b16 %v517
        %v1276 = vunpack.c.h.b16 %v517
        %v1277 = vunpack.c.l.b16 %v518
        %v1278 = vunpack.c.h.b16 %v518
        %v1279 = vunpack.c.l.b16 %v519
        %v1280 = vunpack.c.h.b16 %v519
        %v1281 = vunpack.c.l.b16 %v520
        %v1282 = vunpack.c.h.b16 %v520
        %v1283 = vunpack.c.l.b16 %v521
        %v1284 = vunpack.c.h.b16 %v521
        %v1285 = vunpack.c.l.b16 %v522
        %v1286 = vunpack.c.h.b16 %v522
        %v1287 = vunpack.c.l.b16 %v523
        %v1288 = vunpack.c.h.b16 %v523
        %v1289 = vunpack.c.l.b16 %v524
        %v1290 = vunpack.c.h.b16 %v524
        %v1291 = vunpack.c.l.b16 %v525
        %v1292 = vunpack.c.h.b16 %v525
        %v1293 = vunpack.c.l.b16 %v526
        %v1294 = vunpack.c.h.b16 %v526
        %v1295 = vunpack.c.l.b16 %v527
        %v1296 = vunpack.c.h.b16 %v527
        %v1297 = vunpack.c.l.b16 %v528
        %v1298 = vunpack.c.h.b16 %v528
        %v1299 = vunpack.c.l.b16 %v529
        %v1300 = vunpack.c.h.b16 %v529
        %v1301 = vunpack.c.l.b16 %v530
        %v1302 = vunpack.c.h.b16 %v530
        %v1303 = vunpack.c.l.b16 %v531
        %v1304 = vunpack.c.h.b16 %v531
        %v1305 = vunpack.c.l.b16 %v532
        %v1306 = vunpack.c.h.b16 %v532
        %v1307 = vunpack.c.l.b16 %v533
        %v1308 = vunpack.c.h.b16 %v533
        %v1309 = vunpack.c.l.b16 %v534
        %v1310 = vunpack.c.h.b16 %v534
        %v1311 = vunpack.c.l.b16 %v535
        %v1312 = vunpack.c.h.b16 %v535
        %v1313 = vunpack.c.l.b16 %v536
        %v1314 = vunpack.c.h.b16 %v536
        %v1315 = vunpack.c.l.b16 %v537
        %v1316 = vunpack.c.h.b16 %v537
        %v1317 = vunpack.c.l.b16 %v538
        %v1318 = vunpack.c.h.b16 %v538
        %v1319 = vunpack.c.l.b16 %v539
        %v1320 = vunpack.c.h.b16 %v539
        %v1321 = vunpack.c.l.b16 %v540
        %v1322 = vunpack.c.h.b16 %v540
        %v1323 = vunpack.c.l.b16 %v541
        %v1324 = vunpack.c.h.b16 %v541
        %v1325 = vunpack.c.l.b16 %v542
        %v1326 = vunpack.c.h.b16 %v542
        %v1327 = vunpack.c.l.b16 %v543
        %v1328 = vunpack.c.h.b16 %v543
        %v1329 = vunpack.c.l.b16 %v544
        %v1330 = vunpack.c.h.b16 %v544
        %v1331 = vunpack.c.l.b16 %v545
        %v1332 = vunpack.c.h.b16 %v545
        %v1333 = vunpack.c.l.b16 %v546
        %v1334 = vunpack.c.h.b16 %v546
        %v1335 = vunpack.c.l.b16 %v547
        %v1336 = vunpack.c.h.b16 %v547
        %v1337 = vunpack.c.l.b16 %v548
        %v1338 = vunpack.c.h.b16 %v548
        %v1339 = vunpack.c.l.b16 %v549
        %v1340 = vunpack.c.h.b16 %v549
        %v1341 = vunpack.c.l.b16 %v550
        %v1342 = vunpack.c.h.b16 %v550
        %v1343 = vunpack.c.l.b16 %v551
        %v1344 = vunpack.c.h.b16 %v551
        %v1345 = vunpack.c.l.b16 %v552
        %v1346 = vunpack.c.h.b16 %v552
        %v1347 = vunpack.c.l.b16 %v553
        %v1348 = vunpack.c.h.b16 %v553
        %v1349 = vunpack.c.l.b16 %v554
        %v1350 = vunpack.c.h.b16 %v554
        %v1351 = vunpack.c.l.b16 %v555
        %v1352 = vunpack.c.h.b16 %v555
        %v1353 = vunpack.c.l.b16 %v556
        %v1354 = vunpack.c.h.b16 %v556
        %v1355 = vunpack.c.l.b16 %v557
        %v1356 = vunpack.c.h.b16 %v557
        %v1357 = vunpack.c.l.b16 %v558
        %v1358 = vunpack.c.h.b16 %v558
        %v1359 = vunpack.c.l.b16 %v559
        %v1360 = vunpack.c.h.b16 %v559
        %v1361 = vunpack.c.l.b16 %v560
        %v1362 = vunpack.c.h.b16 %v560
        %v1363 = vunpack.c.l.b16 %v561
        %v1364 = vunpack.c.h.b16 %v561
        %v1365 = vunpack.c.l.b16 %v562
        %v1366 = vunpack.c.h.b16 %v562
        %v1367 = vunpack.c.l.b16 %v563
        %v1368 = vunpack.c.h.b16 %v563
        %v1369 = vunpack.c.l.b16 %v564
        %v1370 = vunpack.c.h.b16 %v564
        %v1371 = vunpack.c.l.b16 %v565
        %v1372 = vunpack.c.h.b16 %v565
        %v1373 = vunpack.c.l.b16 %v566
        %v1374 = vunpack.c.h.b16 %v566
        %v1375 = vunpack.c.l.b16 %v567
        %v1376 = vunpack.c.h.b16 %v567
        %v1377 = vunpack.c.l.b16 %v568
        %v1378 = vunpack.c.h.b16 %v568
        %v1379 = vunpack.c.l.b16 %v569
        %v1380 = vunpack.c.h.b16 %v569
        %v1381 = vunpack.c.l.b16 %v570
        %v1382 = vunpack.c.h.b16 %v570
        %v1383 = vunpack.c.l.b16 %v571
        %v1384 = vunpack.c.h.b16 %v571
        %v1385 = vunpack.c.l.b16 %v572
        %v1386 = vunpack.c.h.b16 %v572
        %v1387 = vunpack.c.l.b16 %v573
        %v1388 = vunpack.c.h.b16 %v573
        %v1389 = vunpack.c.l.b16 %v574
        %v1390 = vunpack.c.h.b16 %v574
        %v1391 = vunpack.c.l.b16 %v575
        %v1392 = vunpack.c.h.b16 %v575
        %v1393 = vunpack.c.l.b16 %v576
        %v1394 = vunpack.c.h.b16 %v576
        %v1395 = vunpack.c.l.b16 %v577
        %v1396 = vunpack.c.h.b16 %v577
        %v1397 = vunpack.c.l.b16 %v578
        %v1398 = vunpack.c.h.b16 %v578
        %v1399 = vunpack.c.l.b16 %v579
        %v1400 = vunpack.c.h.b16 %v579
        %v1401 = vunpack.c.l.b16 %v580
        %v1402 = vunpack.c.h.b16 %v580
        %v1403 = vunpack.c.l.b16 %v581
        %v1404 = vunpack.c.h.b16 %v581
        %v1405 = vunpack.c.l.b16 %v582
        %v1406 = vunpack.c.h.b16 %v582
        %v1407 = vunpack.c.l.b16 %v583
        %v1408 = vunpack.c.h.b16 %v583
        %v1409 = vunpack.c.l.b16 %v584
        %v1410 = vunpack.c.h.b16 %v584
        %v1411 = vunpack.c.l.b16 %v585
        %v1412 = vunpack.c.h.b16 %v585
        %v1413 = vunpack.c.l.b16 %v586
        %v1414 = vunpack.c.h.b16 %v586
        %v1415 = vunpack.c.l.b16 %v587
        %v1416 = vunpack.c.h.b16 %v587
        %v1417 = vunpack.c.l.b16 %v588
        %v1418 = vunpack.c.h.b16 %v588
        %v1419 = vunpack.c.l.b16 %v589
        %v1420 = vunpack.c.h.b16 %v589
        %v1421 = vunpack.c.l.b16 %v590
        %v1422 = vunpack.c.h.b16 %v590
        %v1423 = vunpack.c.l.b16 %v591
        %v1424 = vunpack.c.h.b16 %v591
        %v1425 = vunpack.c.l.b16 %v592
        %v1426 = vunpack.c.h.b16 %v592
        %v1427 = vunpack.c.l.b16 %v593
        %v1428 = vunpack.c.h.b16 %v593
        %v1429 = vunpack.c.l.b16 %v594
        %v1430 = vunpack.c.h.b16 %v594
        %v1431 = vunpack.c.l.b16 %v595
        %v1432 = vunpack.c.h.b16 %v595
        %v1433 = vunpack.c.l.b16 %v596
        %v1434 = vunpack.c.h.b16 %v596
        %v1435 = vunpack.c.l.b16 %v597
        %v1436 = vunpack.c.h.b16 %v597
        %v1437 = vunpack.c.l.b16 %v598
        %v1438 = vunpack.c.h.b16 %v598
        %v1439 = vunpack.c.l.b16 %v599
        %v1440 = vunpack.c.h.b16 %v599
        %v1441 = vunpack.c.l.b16 %v600
        %v1442 = vunpack.c.h.b16 %v600
        %v1443 = vunpack.c.l.b16 %v601
        %v1444 = vunpack.c.h.b16 %v601
        %v1445 = vunpack.c.l.b16 %v602
        %v1446 = vunpack.c.h.b16 %v602
        %v1447 = vunpack.c.l.b16 %v603
        %v1448 = vunpack.c.h.b16 %v603
        %v1449 = vunpack.c.l.b16 %v604
        %v1450 = vunpack.c.h.b16 %v604
        %v1451 = vunpack.c.l.b16 %v605
        %v1452 = vunpack.c.h.b16 %v605
        %v1453 = vunpack.c.l.b16 %v606
        %v1454 = vunpack.c.h.b16 %v606
        %v1455 = vpack.c.b16 %v945, %v943
        %v1456 = vpack.c.b16 %v946, %v944
        %v1457 = vpack.c.b16 %v949, %v947
        %v1458 = vpack.c.b16 %v950, %v948
        %v1459 = vpack.c.b16 %v953, %v951
        %v1460 = vpack.c.b16 %v954, %v952
        %v1461 = vpack.c.b16 %v957, %v955
        %v1462 = vpack.c.b16 %v958, %v956
        %v1463 = vpack.c.b16 %v961, %v959
        %v1464 = vpack.c.b16 %v962, %v960
        %v1465 = vpack.c.b16 %v965, %v963
        %v1466 = vpack.c.b16 %v966, %v964
        %v1467 = vpack.c.b16 %v969, %v967
        %v1468 = vpack.c.b16 %v970, %v968
        %v1469 = vpack.c.b16 %v973, %v971
        %v1470 = vpack.c.b16 %v974, %v972
        %v1471 = vpack.c.b16 %v977, %v975
        %v1472 = vpack.c.b16 %v978, %v976
        %v1473 = vpack.c.b16 %v981, %v979
        %v1474 = vpack.c.b16 %v982, %v980
        %v1475 = vpack.c.b16 %v985, %v983
        %v1476 = vpack.c.b16 %v986, %v984
        %v1477 = vpack.c.b16 %v989, %v987
        %v1478 = vpack.c.b16 %v990, %v988
        %v1479 = vpack.c.b16 %v993, %v991
        %v1480 = vpack.c.b16 %v994, %v992
        %v1481 = vpack.c.b16 %v997, %v995
        %v1482 = vpack.c.b16 %v998, %v996
        %v1483 = vpack.c.b16 %v1001, %v999
        %v1484 = vpack.c.b16 %v1002, %v1000
        %v1485 = vpack.c.b16 %v1005, %v1003
        %v1486 = vpack.c.b16 %v1006, %v1004
        %v1487 = vpack.c.b16 %v1009, %v1007
        %v1488 = vpack.c.b16 %v1010, %v1008
        %v1489 = vpack.c.b16 %v1013, %v1011
        %v1490 = vpack.c.b16 %v1014, %v1012
        %v1491 = vpack.c.b16 %v1017, %v1015
        %v1492 = vpack.c.b16 %v1018, %v1016
        %v1493 = vpack.c.b16 %v1021, %v1019
        %v1494 = vpack.c.b16 %v1022, %v1020
        %v1495 = vpack.c.b16 %v1025, %v1023
        %v1496 = vpack.c.b16 %v1026, %v1024
        %v1497 = vpack.c.b16 %v1029, %v1027
        %v1498 = vpack.c.b16 %v1030, %v1028
        %v1499 = vpack.c.b16 %v1033, %v1031
        %v1500 = vpack.c.b16 %v1034, %v1032
        %v1501 = vpack.c.b16 %v1037, %v1035
        %v1502 = vpack.c.b16 %v1038, %v1036
        %v1503 = vpack.c.b16 %v1041, %v1039
        %v1504 = vpack.c.b16 %v1042, %v1040
        %v1505 = vpack.c.b16 %v1045, %v1043
        %v1506 = vpack.c.b16 %v1046, %v1044
        %v1507 = vpack.c.b16 %v1049, %v1047
        %v1508 = vpack.c.b16 %v1050, %v1048
        %v1509 = vpack.c.b16 %v1053, %v1051
        %v1510 = vpack.c.b16 %v1054, %v1052
        %v1511 = vpack.c.b16 %v1057, %v1055
        %v1512 = vpack.c.b16 %v1058, %v1056
        %v1513 = vpack.c.b16 %v1061, %v1059
        %v1514 = vpack.c.b16 %v1062, %v1060
        %v1515 = vpack.c.b16 %v1065, %v1063
        %v1516 = vpack.c.b16 %v1066, %v1064
        %v1517 = vpack.c.b16 %v1069, %v1067
        %v1518 = vpack.c.b16 %v1070, %v1068
        %v1519 = vpack.c.b16 %v1073, %v1071
        %v1520 = vpack.c.b16 %v1074, %v1072
        %v1521 = vpack.c.b16 %v1077, %v1075
        %v1522 = vpack.c.b16 %v1078, %v1076
        %v1523 = vpack.c.b16 %v1081, %v1079
        %v1524 = vpack.c.b16 %v1082, %v1080
        %v1525 = vpack.c.b16 %v1085, %v1083
        %v1526 = vpack.c.b16 %v1086, %v1084
        %v1527 = vpack.c.b16 %v1089, %v1087
        %v1528 = vpack.c.b16 %v1090, %v1088
        %v1529 = vpack.c.b16 %v1093, %v1091
        %v1530 = vpack.c.b16 %v1094, %v1092
        %v1531 = vpack.c.b16 %v1097, %v1095
        %v1532 = vpack.c.b16 %v1098, %v1096
        %v1533 = vpack.c.b16 %v1101, %v1099
        %v1534 = vpack.c.b16 %v1102, %v1100
        %v1535 = vpack.c.b16 %v1105, %v1103
        %v1536 = vpack.c.b16 %v1106, %v1104
        %v1537 = vpack.c.b16 %v1109, %v1107
        %v1538 = vpack.c.b16 %v1110, %v1108
        %v1539 = vpack.c.b16 %v1113, %v1111
        %v1540 = vpack.c.b16 %v1114, %v1112
        %v1541 = vpack.c.b16 %v1117, %v1115
        %v1542 = vpack.c.b16 %v1118, %v1116
        %v1543 = vpack.c.b16 %v1121, %v1119
        %v1544 = vpack.c.b16 %v1122, %v1120
        %v1545 = vpack.c.b16 %v1125, %v1123
        %v1546 = vpack.c.b16 %v1126, %v1124
        %v1547 = vpack.c.b16 %v1129, %v1127
        %v1548 = vpack.c.b16 %v1130, %v1128
        %v1549 = vpack.c.b16 %v1133, %v1131
        %v1550 = vpack.c.b16 %v1134, %v1132
        %v1551 = vpack.c.b16 %v1137, %v1135
        %v1552 = vpack.c.b16 %v1138, %v1136
        %v1553 = vpack.c.b16 %v1141, %v1139
        %v1554 = vpack.c.b16 %v1142, %v1140
        %v1555 = vpack.c.b16 %v1145, %v1143
        %v1556 = vpack.c.b16 %v1146, %v1144
        %v1557 = vpack.c.b16 %v1149, %v1147
        %v1558 = vpack.c.b16 %v1150, %v1148
        %v1559 = vpack.c.b16 %v1153, %v1151
        %v1560 = vpack.c.b16 %v1154, %v1152
        %v1561 = vpack.c.b16 %v1157, %v1155
        %v1562 = vpack.c.b16 %v1158, %v1156
        %v1563 = vpack.c.b16 %v1161, %v1159
        %v1564 = vpack.c.b16 %v1162, %v1160
        %v1565 = vpack.c.b16 %v1165, %v1163
        %v1566 = vpack.c.b16 %v1166, %v1164
        %v1567 = vpack.c.b16 %v1169, %v1167
        %v1568 = vpack.c.b16 %v1170, %v1168
        %v1569 = vpack.c.b16 %v1173, %v1171
        %v1570 = vpack.c.b16 %v1174, %v1172
        %v1571 = vpack.c.b16 %v1177, %v1175
        %v1572 = vpack.c.b16 %v1178, %v1176
        %v1573 = vpack.c.b16 %v1181, %v1179
        %v1574 = vpack.c.b16 %v1182, %v1180
        %v1575 = vpack.c.b16 %v1185, %v1183
        %v1576 = vpack.c.b16 %v1186, %v1184
        %v1577 = vpack.c.b16 %v1189, %v1187
        %v1578 = vpack.c.b16 %v1190, %v1188
        %v1579 = vpack.c.b16 %v1193, %v1191
        %v1580 = vpack.c.b16 %v1194, %v1192
        %v1581 = vpack.c.b16 %v1197, %v1195
        %v1582 = vpack.c.b16 %v1198, %v1196
        %v1583 = vpack.c.b16 %v1201, %v1199
        %v1584 = vpack.c.b16 %v1202, %v1200
        %v1585 = vpack.c.b16 %v1205, %v1203
        %v1586 = vpack.c.b16 %v1206, %v1204
        %v1587 = vpack.c.b16 %v1209, %v1207
        %v1588 = vpack.c.b16 %v1210, %v1208
        %v1589 = vpack.c.b16 %v1213, %v1211
        %v1590 = vpack.c.b16 %v1214, %v1212
        %v1591 = vpack.c.b16 %v1217, %v1215
        %v1592 = vpack.c.b16 %v1218, %v1216
        %v1593 = vpack.c.b16 %v1221, %v1219
        %v1594 = vpack.c.b16 %v1222, %v1220
        %v1595 = vpack.c.b16 %v1225, %v1223
        %v1596 = vpack.c.b16 %v1226, %v1224
        %v1597 = vpack.c.b16 %v1229, %v1227
        %v1598 = vpack.c.b16 %v1230, %v1228
        %v1599 = vpack.c.b16 %v1233, %v1231
        %v1600 = vpack.c.b16 %v1234, %v1232
        %v1601 = vpack.c.b16 %v1237, %v1235
        %v1602 = vpack.c.b16 %v1238, %v1236
        %v1603 = vpack.c.b16 %v1241, %v1239
        %v1604 = vpack.c.b16 %v1242, %v1240
        %v1605 = vpack.c.b16 %v1245, %v1243
        %v1606 = vpack.c.b16 %v1246, %v1244
        %v1607 = vpack.c.b16 %v1249, %v1247
        %v1608 = vpack.c.b16 %v1250, %v1248
        %v1609 = vpack.c.b16 %v1253, %v1251
        %v1610 = vpack.c.b16 %v1254, %v1252
        %v1611 = vpack.c.b16 %v1257, %v1255
        %v1612 = vpack.c.b16 %v1258, %v1256
        %v1613 = vpack.c.b16 %v1261, %v1259
        %v1614 = vpack.c.b16 %v1262, %v1260
        %v1615 = vpack.c.b16 %v1265, %v1263
        %v1616 = vpack.c.b16 %v1266, %v1264
        %v1617 = vpack.c.b16 %v1269, %v1267
        %v1618 = vpack.c.b16 %v1270, %v1268
        %v1619 = vpack.c.b16 %v1273, %v1271
        %v1620 = vpack.c.b16 %v1274, %v1272
        %v1621 = vpack.c.b16 %v1277, %v1275
        %v1622 = vpack.c.b16 %v1278, %v1276
        %v1623 = vpack.c.b16 %v1281, %v1279
        %v1624 = vpack.c.b16 %v1282, %v1280
        %v1625 = vpack.c.b16 %v1285, %v1283
        %v1626 = vpack.c.b16 %v1286, %v1284
        %v1627 = vpack.c.b16 %v1289, %v1287
        %v1628 = vpack.c.b16 %v1290, %v1288
        %v1629 = vpack.c.b16 %v1293, %v1291
        %v1630 = vpack.c.b16 %v1294, %v1292
        %v1631 = vpack.c.b16 %v1297, %v1295
        %v1632 = vpack.c.b16 %v1298, %v1296
        %v1633 = vpack.c.b16 %v1301, %v1299
        %v1634 = vpack.c.b16 %v1302, %v1300
        %v1635 = vpack.c.b16 %v1305, %v1303
        %v1636 = vpack.c.b16 %v1306, %v1304
        %v1637 = vpack.c.b16 %v1309, %v1307
        %v1638 = vpack.c.b16 %v1310, %v1308
        %v1639 = vpack.c.b16 %v1313, %v1311
        %v1640 = vpack.c.b16 %v1314, %v1312
        %v1641 = vpack.c.b16 %v1317, %v1315
        %v1642 = vpack.c.b16 %v1318, %v1316
        %v1643 = vpack.c.b16 %v1321, %v1319
        %v1644 = vpack.c.b16 %v1322, %v1320
        %v1645 = vpack.c.b16 %v1325, %v1323
        %v1646 = vpack.c.b16 %v1326, %v1324
        %v1647 = vpack.c.b16 %v1329, %v1327
        %v1648 = vpack.c.b16 %v1330, %v1328
        %v1649 = vpack.c.b16 %v1333, %v1331
        %v1650 = vpack.c.b16 %v1334, %v1332
        %v1651 = vpack.c.b16 %v1337, %v1335
        %v1652 = vpack.c.b16 %v1338, %v1336
        %v1653 = vpack.c.b16 %v1341, %v1339
        %v1654 = vpack.c.b16 %v1342, %v1340
        %v1655 = vpack.c.b16 %v1345, %v1343
        %v1656 = vpack.c.b16 %v1346, %v1344
        %v1657 = vpack.c.b16 %v1349, %v1347
        %v1658 = vpack.c.b16 %v1350, %v1348
        %v1659 = vpack.c.b16 %v1353, %v1351
        %v1660 = vpack.c.b16 %v1354, %v1352
        %v1661 = vpack.c.b16 %v1357, %v1355
        %v1662 = vpack.c.b16 %v1358, %v1356
        %v1663 = vpack.c.b16 %v1361, %v1359
        %v1664 = vpack.c.b16 %v1362, %v1360
        %v1665 = vpack.c.b16 %v1365, %v1363
        %v1666 = vpack.c.b16 %v1366, %v1364
        %v1667 = vpack.c.b16 %v1369, %v1367
        %v1668 = vpack.c.b16 %v1370, %v1368
        %v1669 = vpack.c.b16 %v1373, %v1371
        %v1670 = vpack.c.b16 %v1374, %v1372
        %v1671 = vpack.c.b16 %v1377, %v1375
        %v1672 = vpack.c.b16 %v1378, %v1376
        %v1673 = vpack.c.b16 %v1381, %v1379
        %v1674 = vpack.c.b16 %v1382, %v1380
        %v1675 = vpack.c.b16 %v1385, %v1383
        %v1676 = vpack.c.b16 %v1386, %v1384
        %v1677 = vpack.c.b16 %v1389, %v1387
        %v1678 = vpack.c.b16 %v1390, %v1388
        %v1679 = vpack.c.b16 %v1393, %v1391
        %v1680 = vpack.c.b16 %v1394, %v1392
        %v1681 = vpack.c.b16 %v1397, %v1395
        %v1682 = vpack.c.b16 %v1398, %v1396
        %v1683 = vpack.c.b16 %v1401, %v1399
        %v1684 = vpack.c.b16 %v1402, %v1400
        %v1685 = vpack.c.b16 %v1405, %v1403
        %v1686 = vpack.c.b16 %v1406, %v1404
        %v1687 = vpack.c.b16 %v1409, %v1407
        %v1688 = vpack.c.b16 %v1410, %v1408
        %v1689 = vpack.c.b16 %v1413, %v1411
        %v1690 = vpack.c.b16 %v1414, %v1412
        %v1691 = vpack.c.b16 %v1417, %v1415
        %v1692 = vpack.c.b16 %v1418, %v1416
        %v1693 = vpack.c.b16 %v1421, %v1419
        %v1694 = vpack.c.b16 %v1422, %v1420
        %v1695 = vpack.c.b16 %v1425, %v1423
        %v1696 = vpack.c.b16 %v1426, %v1424
        %v1697 = vpack.c.b16 %v1429, %v1427
        %v1698 = vpack.c.b16 %v1430, %v1428
        %v1699 = vpack.c.b16 %v1433, %v1431
        %v1700 = vpack.c.b16 %v1434, %v1432
        %v1701 = vpack.c.b16 %v1437, %v1435
        %v1702 = vpack.c.b16 %v1438, %v1436
        %v1703 = vpack.c.b16 %v1441, %v1439
        %v1704 = vpack.c.b16 %v1442, %v1440
        %v1705 = vpack.c.b16 %v1445, %v1443
        %v1706 = vpack.c.b16 %v1446, %v1444
        %v1707 = vpack.c.b16 %v1449, %v1447
        %v1708 = vpack.c.b16 %v1450, %v1448
        %v1709 = vpack.c.b16 %v1453, %v1451
        %v1710 = vpack.c.b16 %v1454, %v1452
        %1967 = vmatprep.subr.bf16.mxu0 %v1456
        %1968 = vmatpush1.bf16.msra.mxu0 %v1455
        %1969 = vmatprep.subr.bf16.mxu0 %v1458
        %1970 = vmatpush1.bf16.msra.mxu0 %v1457
        %1971 = vmatprep.subr.bf16.mxu0 %v1460
        %1972 = vmatpush1.bf16.msra.mxu0 %v1459
        %1973 = vmatprep.subr.bf16.mxu0 %v1462
        %1974 = vmatpush1.bf16.msra.mxu0 %v1461
        %1975 = vmatprep.subr.bf16.mxu0 %v1464
        %1976 = vmatpush1.bf16.msra.mxu0 %v1463
        %1977 = vmatprep.subr.bf16.mxu0 %v1466
        %1978 = vmatpush1.bf16.msra.mxu0 %v1465
        %1979 = vmatprep.subr.bf16.mxu0 %v1468
        %1980 = vmatpush1.bf16.msra.mxu0 %v1467
        %1981 = vmatprep.subr.bf16.mxu0 %v1470
        %1982 = vmatpush1.bf16.msra.mxu0 %v1469
        %1983 = vmatprep.subr.bf16.mxu0 %v1472
        %1984 = vmatpush1.bf16.msra.mxu0 %v1471
        %1985 = vmatprep.subr.bf16.mxu0 %v1474
        %1986 = vmatpush1.bf16.msra.mxu0 %v1473
        %1987 = vmatprep.subr.bf16.mxu0 %v1476
        %1988 = vmatpush1.bf16.msra.mxu0 %v1475
        %1989 = vmatprep.subr.bf16.mxu0 %v1478
        %1990 = vmatpush1.bf16.msra.mxu0 %v1477
        %1991 = vmatprep.subr.bf16.mxu0 %v1480
        %1992 = vmatpush1.bf16.msra.mxu0 %v1479
        %1993 = vmatprep.subr.bf16.mxu0 %v1482
        %1994 = vmatpush1.bf16.msra.mxu0 %v1481
        %1995 = vmatprep.subr.bf16.mxu0 %v1484
        %1996 = vmatpush1.bf16.msra.mxu0 %v1483
        %1997 = vmatprep.subr.bf16.mxu0 %v1486
        %1998 = vmatpush1.bf16.msra.mxu0 %v1485
        %1999 = vmatprep.mubr.bf16.mxu0 %v656
        %2000 = vmatmul.mubr.bf16.gmra.mrb[0].mxu0 %v655
        %v2001 = vpop.f32.mrb[0].mxu0
        %v2002 = vadd.f32 0.0, %v2001
        %v2003 = vpop.f32.mrb[0].mxu0
        %v2004 = vadd.f32 0.0, %v2003
        %v2005 = vpop.f32.mrb[0].mxu0
        %v2006 = vadd.f32 0.0, %v2005
        %v2007 = vpop.f32.mrb[0].mxu0
        %v2008 = vadd.f32 0.0, %v2007
        %2009 = vdwg.mxu0
        %2010 = vmatprep.subr.bf16.mxu0 %v1488
        %2011 = vmatpush1.bf16.msra.mxu0 %v1487
        %2012 = vmatprep.subr.bf16.mxu0 %v1490
        %2013 = vmatpush1.bf16.msra.mxu0 %v1489
        %2014 = vmatprep.subr.bf16.mxu0 %v1492
        %2015 = vmatpush1.bf16.msra.mxu0 %v1491
        %2016 = vmatprep.subr.bf16.mxu0 %v1494
        %2017 = vmatpush1.bf16.msra.mxu0 %v1493
        %2018 = vmatprep.subr.bf16.mxu0 %v1496
        %2019 = vmatpush1.bf16.msra.mxu0 %v1495
        %2020 = vmatprep.subr.bf16.mxu0 %v1498
        %2021 = vmatpush1.bf16.msra.mxu0 %v1497
        %2022 = vmatprep.subr.bf16.mxu0 %v1500
        %2023 = vmatpush1.bf16.msra.mxu0 %v1499
        %2024 = vmatprep.subr.bf16.mxu0 %v1502
        %2025 = vmatpush1.bf16.msra.mxu0 %v1501
        %2026 = vmatprep.subr.bf16.mxu0 %v1504
        %2027 = vmatpush1.bf16.msra.mxu0 %v1503
        %2028 = vmatprep.subr.bf16.mxu0 %v1506
        %2029 = vmatpush1.bf16.msra.mxu0 %v1505
        %2030 = vmatprep.subr.bf16.mxu0 %v1508
        %2031 = vmatpush1.bf16.msra.mxu0 %v1507
        %2032 = vmatprep.subr.bf16.mxu0 %v1510
        %2033 = vmatpush1.bf16.msra.mxu0 %v1509
        %2034 = vmatprep.subr.bf16.mxu0 %v1512
        %2035 = vmatpush1.bf16.msra.mxu0 %v1511
        %2036 = vmatprep.subr.bf16.mxu0 %v1514
        %2037 = vmatpush1.bf16.msra.mxu0 %v1513
        %2038 = vmatprep.subr.bf16.mxu0 %v1516
        %2039 = vmatpush1.bf16.msra.mxu0 %v1515
        %2040 = vmatprep.subr.bf16.mxu0 %v1518
        %2041 = vmatpush1.bf16.msra.mxu0 %v1517
        %2042 = vmatprep.mubr.bf16.mxu0 %v658
        %2043 = vmatmul.mubr.bf16.gmra.mrb[0].mxu0 %v657
        %v2044 = vpop.f32.mrb[0].mxu0
        %v2045 = vadd.f32 %v2002, %v2044
        %v2046 = vpop.f32.mrb[0].mxu0
        %v2047 = vadd.f32 %v2004, %v2046
        %v2048 = vpop.f32.mrb[0].mxu0
        %v2049 = vadd.f32 %v2006, %v2048
        %v2050 = vpop.f32.mrb[0].mxu0
        %v2051 = vadd.f32 %v2008, %v2050
        %2052 = vdwg.mxu0
        %2053 = vmatprep.subr.bf16.mxu0 %v1520
        %2054 = vmatpush1.bf16.msra.mxu0 %v1519
        %2055 = vmatprep.subr.bf16.mxu0 %v1522
        %2056 = vmatpush1.bf16.msra.mxu0 %v1521
        %2057 = vmatprep.subr.bf16.mxu0 %v1524
        %2058 = vmatpush1.bf16.msra.mxu0 %v1523
        %2059 = vmatprep.subr.bf16.mxu0 %v1526
        %2060 = vmatpush1.bf16.msra.mxu0 %v1525
        %2061 = vmatprep.subr.bf16.mxu0 %v1528
        %2062 = vmatpush1.bf16.msra.mxu0 %v1527
        %2063 = vmatprep.subr.bf16.mxu0 %v1530
        %2064 = vmatpush1.bf16.msra.mxu0 %v1529
        %2065 = vmatprep.subr.bf16.mxu0 %v1532
        %2066 = vmatpush1.bf16.msra.mxu0 %v1531
        %2067 = vmatprep.subr.bf16.mxu0 %v1534
        %2068 = vmatpush1.bf16.msra.mxu0 %v1533
        %2069 = vmatprep.subr.bf16.mxu0 %v1536
        %2070 = vmatpush1.bf16.msra.mxu0 %v1535
        %2071 = vmatprep.subr.bf16.mxu0 %v1538
        %2072 = vmatpush1.bf16.msra.mxu0 %v1537
        %2073 = vmatprep.subr.bf16.mxu0 %v1540
        %2074 = vmatpush1.bf16.msra.mxu0 %v1539
        %2075 = vmatprep.subr.bf16.mxu0 %v1542
        %2076 = vmatpush1.bf16.msra.mxu0 %v1541
        %2077 = vmatprep.subr.bf16.mxu0 %v1544
        %2078 = vmatpush1.bf16.msra.mxu0 %v1543
        %2079 = vmatprep.subr.bf16.mxu0 %v1546
        %2080 = vmatpush1.bf16.msra.mxu0 %v1545
        %2081 = vmatprep.subr.bf16.mxu0 %v1548
        %2082 = vmatpush1.bf16.msra.mxu0 %v1547
        %2083 = vmatprep.subr.bf16.mxu0 %v1550
        %2084 = vmatpush1.bf16.msra.mxu0 %v1549
        %2085 = vmatprep.mubr.bf16.mxu0 %v660
        %2086 = vmatmul.mubr.bf16.gmra.mrb[0].mxu0 %v659
        %v2087 = vpop.f32.mrb[0].mxu0
        %v2088 = vadd.f32 %v2045, %v2087
        %v2089 = vpop.f32.mrb[0].mxu0
        %v2090 = vadd.f32 %v2047, %v2089
        %v2091 = vpop.f32.mrb[0].mxu0
        %v2092 = vadd.f32 %v2049, %v2091
        %v2093 = vpop.f32.mrb[0].mxu0
        %v2094 = vadd.f32 %v2051, %v2093
        %2095 = vdwg.mxu0
        %2096 = vmatprep.subr.bf16.mxu0 %v1552
        %2097 = vmatpush1.bf16.msra.mxu0 %v1551
        %2098 = vmatprep.subr.bf16.mxu0 %v1554
        %2099 = vmatpush1.bf16.msra.mxu0 %v1553
        %2100 = vmatprep.subr.bf16.mxu0 %v1556
        %2101 = vmatpush1.bf16.msra.mxu0 %v1555
        %2102 = vmatprep.subr.bf16.mxu0 %v1558
        %2103 = vmatpush1.bf16.msra.mxu0 %v1557
        %2104 = vmatprep.subr.bf16.mxu0 %v1560
        %2105 = vmatpush1.bf16.msra.mxu0 %v1559
        %2106 = vmatprep.subr.bf16.mxu0 %v1562
        %2107 = vmatpush1.bf16.msra.mxu0 %v1561
        %2108 = vmatprep.subr.bf16.mxu0 %v1564
        %2109 = vmatpush1.bf16.msra.mxu0 %v1563
        %2110 = vmatprep.subr.bf16.mxu0 %v1566
        %2111 = vmatpush1.bf16.msra.mxu0 %v1565
        %2112 = vmatprep.subr.bf16.mxu0 %v1568
        %2113 = vmatpush1.bf16.msra.mxu0 %v1567
        %2114 = vmatprep.subr.bf16.mxu0 %v1570
        %2115 = vmatpush1.bf16.msra.mxu0 %v1569
        %2116 = vmatprep.subr.bf16.mxu0 %v1572
        %2117 = vmatpush1.bf16.msra.mxu0 %v1571
        %2118 = vmatprep.subr.bf16.mxu0 %v1574
        %2119 = vmatpush1.bf16.msra.mxu0 %v1573
        %2120 = vmatprep.subr.bf16.mxu0 %v1576
        %2121 = vmatpush1.bf16.msra.mxu0 %v1575
        %2122 = vmatprep.subr.bf16.mxu0 %v1578
        %2123 = vmatpush1.bf16.msra.mxu0 %v1577
        %2124 = vmatprep.subr.bf16.mxu0 %v1580
        %2125 = vmatpush1.bf16.msra.mxu0 %v1579
        %2126 = vmatprep.subr.bf16.mxu0 %v1582
        %2127 = vmatpush1.bf16.msra.mxu0 %v1581
        %2128 = vmatprep.mubr.bf16.mxu0 %v662
        %2129 = vmatmul.mubr.bf16.gmra.mrb[0].mxu0 %v661
        %v2130 = vpop.f32.mrb[0].mxu0
        %v2131 = vadd.f32 %v2088, %v2130
        %v2132 = vpop.f32.mrb[0].mxu0
        %v2133 = vadd.f32 %v2090, %v2132
        %v2134 = vpop.f32.mrb[0].mxu0
        %v2135 = vadd.f32 %v2092, %v2134
        %v2136 = vpop.f32.mrb[0].mxu0
        %v2137 = vadd.f32 %v2094, %v2136
        %2138 = vdwg.mxu0
        %2139 = vmatprep.subr.bf16.mxu0 %v1584
        %2140 = vmatpush1.bf16.msra.mxu0 %v1583
        %2141 = vmatprep.subr.bf16.mxu0 %v1586
        %2142 = vmatpush1.bf16.msra.mxu0 %v1585
        %2143 = vmatprep.subr.bf16.mxu0 %v1588
        %2144 = vmatpush1.bf16.msra.mxu0 %v1587
        %2145 = vmatprep.subr.bf16.mxu0 %v1590
        %2146 = vmatpush1.bf16.msra.mxu0 %v1589
        %2147 = vmatprep.subr.bf16.mxu0 %v1592
        %2148 = vmatpush1.bf16.msra.mxu0 %v1591
        %2149 = vmatprep.subr.bf16.mxu0 %v1594
        %2150 = vmatpush1.bf16.msra.mxu0 %v1593
        %2151 = vmatprep.subr.bf16.mxu0 %v1596
        %2152 = vmatpush1.bf16.msra.mxu0 %v1595
        %2153 = vmatprep.subr.bf16.mxu0 %v1598
        %2154 = vmatpush1.bf16.msra.mxu0 %v1597
        %2155 = vmatprep.subr.bf16.mxu0 %v1600
        %2156 = vmatpush1.bf16.msra.mxu0 %v1599
        %2157 = vmatprep.subr.bf16.mxu0 %v1602
        %2158 = vmatpush1.bf16.msra.mxu0 %v1601
        %2159 = vmatprep.subr.bf16.mxu0 %v1604
        %2160 = vmatpush1.bf16.msra.mxu0 %v1603
        %2161 = vmatprep.subr.bf16.mxu0 %v1606
        %2162 = vmatpush1.bf16.msra.mxu0 %v1605
        %2163 = vmatprep.subr.bf16.mxu0 %v1608
        %2164 = vmatpush1.bf16.msra.mxu0 %v1607
        %2165 = vmatprep.subr.bf16.mxu0 %v1610
        %2166 = vmatpush1.bf16.msra.mxu0 %v1609
        %2167 = vmatprep.subr.bf16.mxu0 %v1612
        %2168 = vmatpush1.bf16.msra.mxu0 %v1611
        %2169 = vmatprep.subr.bf16.mxu0 %v1614
        %2170 = vmatpush1.bf16.msra.mxu0 %v1613
        %2171 = vmatprep.mubr.bf16.mxu0 %v664
        %2172 = vmatmul.mubr.bf16.gmra.mrb[0].mxu0 %v663
        %v2173 = vpop.f32.mrb[0].mxu0
        %v2174 = vadd.f32 %v2131, %v2173
        %v2175 = vpop.f32.mrb[0].mxu0
        %v2176 = vadd.f32 %v2133, %v2175
        %v2177 = vpop.f32.mrb[0].mxu0
        %v2178 = vadd.f32 %v2135, %v2177
        %v2179 = vpop.f32.mrb[0].mxu0
        %v2180 = vadd.f32 %v2137, %v2179
        %2181 = vdwg.mxu0
        %2182 = vmatprep.subr.bf16.mxu0 %v1616
        %2183 = vmatpush1.bf16.msra.mxu0 %v1615
        %2184 = vmatprep.subr.bf16.mxu0 %v1618
        %2185 = vmatpush1.bf16.msra.mxu0 %v1617
        %2186 = vmatprep.subr.bf16.mxu0 %v1620
        %2187 = vmatpush1.bf16.msra.mxu0 %v1619
        %2188 = vmatprep.subr.bf16.mxu0 %v1622
        %2189 = vmatpush1.bf16.msra.mxu0 %v1621
        %2190 = vmatprep.subr.bf16.mxu0 %v1624
        %2191 = vmatpush1.bf16.msra.mxu0 %v1623
        %2192 = vmatprep.subr.bf16.mxu0 %v1626
        %2193 = vmatpush1.bf16.msra.mxu0 %v1625
        %2194 = vmatprep.subr.bf16.mxu0 %v1628
        %2195 = vmatpush1.bf16.msra.mxu0 %v1627
        %2196 = vmatprep.subr.bf16.mxu0 %v1630
        %2197 = vmatpush1.bf16.msra.mxu0 %v1629
        %2198 = vmatprep.subr.bf16.mxu0 %v1632
        %2199 = vmatpush1.bf16.msra.mxu0 %v1631
        %2200 = vmatprep.subr.bf16.mxu0 %v1634
        %2201 = vmatpush1.bf16.msra.mxu0 %v1633
        %2202 = vmatprep.subr.bf16.mxu0 %v1636
        %2203 = vmatpush1.bf16.msra.mxu0 %v1635
        %2204 = vmatprep.subr.bf16.mxu0 %v1638
        %2205 = vmatpush1.bf16.msra.mxu0 %v1637
        %2206 = vmatprep.subr.bf16.mxu0 %v1640
        %2207 = vmatpush1.bf16.msra.mxu0 %v1639
        %2208 = vmatprep.subr.bf16.mxu0 %v1642
        %2209 = vmatpush1.bf16.msra.mxu0 %v1641
        %2210 = vmatprep.subr.bf16.mxu0 %v1644
        %2211 = vmatpush1.bf16.msra.mxu0 %v1643
        %2212 = vmatprep.subr.bf16.mxu0 %v1646
        %2213 = vmatpush1.bf16.msra.mxu0 %v1645
        %2214 = vmatprep.mubr.bf16.mxu0 %v666
        %2215 = vmatmul.mubr.bf16.gmra.mrb[0].mxu0 %v665
        %v2216 = vpop.f32.mrb[0].mxu0
        %v2217 = vadd.f32 %v2174, %v2216
        %v2218 = vpop.f32.mrb[0].mxu0
        %v2219 = vadd.f32 %v2176, %v2218
        %v2220 = vpop.f32.mrb[0].mxu0
        %v2221 = vadd.f32 %v2178, %v2220
        %v2222 = vpop.f32.mrb[0].mxu0
        %v2223 = vadd.f32 %v2180, %v2222
        %2224 = vdwg.mxu0
        %2225 = vmatprep.subr.bf16.mxu0 %v1648
        %2226 = vmatpush1.bf16.msra.mxu0 %v1647
        %2227 = vmatprep.subr.bf16.mxu0 %v1650
        %2228 = vmatpush1.bf16.msra.mxu0 %v1649
        %2229 = vmatprep.subr.bf16.mxu0 %v1652
        %2230 = vmatpush1.bf16.msra.mxu0 %v1651
        %2231 = vmatprep.subr.bf16.mxu0 %v1654
        %2232 = vmatpush1.bf16.msra.mxu0 %v1653
        %2233 = vmatprep.subr.bf16.mxu0 %v1656
        %2234 = vmatpush1.bf16.msra.mxu0 %v1655
        %2235 = vmatprep.subr.bf16.mxu0 %v1658
        %2236 = vmatpush1.bf16.msra.mxu0 %v1657
        %2237 = vmatprep.subr.bf16.mxu0 %v1660
        %2238 = vmatpush1.bf16.msra.mxu0 %v1659
        %2239 = vmatprep.subr.bf16.mxu0 %v1662
        %2240 = vmatpush1.bf16.msra.mxu0 %v1661
        %2241 = vmatprep.subr.bf16.mxu0 %v1664
        %2242 = vmatpush1.bf16.msra.mxu0 %v1663
        %2243 = vmatprep.subr.bf16.mxu0 %v1666
        %2244 = vmatpush1.bf16.msra.mxu0 %v1665
        %2245 = vmatprep.subr.bf16.mxu0 %v1668
        %2246 = vmatpush1.bf16.msra.mxu0 %v1667
        %2247 = vmatprep.subr.bf16.mxu0 %v1670
        %2248 = vmatpush1.bf16.msra.mxu0 %v1669
        %2249 = vmatprep.subr.bf16.mxu0 %v1672
        %2250 = vmatpush1.bf16.msra.mxu0 %v1671
        %2251 = vmatprep.subr.bf16.mxu0 %v1674
        %2252 = vmatpush1.bf16.msra.mxu0 %v1673
        %2253 = vmatprep.subr.bf16.mxu0 %v1676
        %2254 = vmatpush1.bf16.msra.mxu0 %v1675
        %2255 = vmatprep.subr.bf16.mxu0 %v1678
        %2256 = vmatpush1.bf16.msra.mxu0 %v1677
        %2257 = vmatprep.mubr.bf16.mxu0 %v668
        %2258 = vmatmul.mubr.bf16.gmra.mrb[0].mxu0 %v667
        %v2259 = vpop.f32.mrb[0].mxu0
        %v2260 = vadd.f32 %v2217, %v2259
        %v2261 = vpop.f32.mrb[0].mxu0
        %v2262 = vadd.f32 %v2219, %v2261
        %v2263 = vpop.f32.mrb[0].mxu0
        %v2264 = vadd.f32 %v2221, %v2263
        %v2265 = vpop.f32.mrb[0].mxu0
        %v2266 = vadd.f32 %v2223, %v2265
        %2267 = vdwg.mxu0
        %2268 = vmatprep.subr.bf16.mxu0 %v1680
        %2269 = vmatpush1.bf16.msra.mxu0 %v1679
        %2270 = vmatprep.subr.bf16.mxu0 %v1682
        %2271 = vmatpush1.bf16.msra.mxu0 %v1681
        %2272 = vmatprep.subr.bf16.mxu0 %v1684
        %2273 = vmatpush1.bf16.msra.mxu0 %v1683
        %2274 = vmatprep.subr.bf16.mxu0 %v1686
        %2275 = vmatpush1.bf16.msra.mxu0 %v1685
        %2276 = vmatprep.subr.bf16.mxu0 %v1688
        %2277 = vmatpush1.bf16.msra.mxu0 %v1687
        %2278 = vmatprep.subr.bf16.mxu0 %v1690
        %2279 = vmatpush1.bf16.msra.mxu0 %v1689
        %2280 = vmatprep.subr.bf16.mxu0 %v1692
        %2281 = vmatpush1.bf16.msra.mxu0 %v1691
        %2282 = vmatprep.subr.bf16.mxu0 %v1694
        %2283 = vmatpush1.bf16.msra.mxu0 %v1693
        %2284 = vmatprep.subr.bf16.mxu0 %v1696
        %2285 = vmatpush1.bf16.msra.mxu0 %v1695
        %2286 = vmatprep.subr.bf16.mxu0 %v1698
        %2287 = vmatpush1.bf16.msra.mxu0 %v1697
        %2288 = vmatprep.subr.bf16.mxu0 %v1700
        %2289 = vmatpush1.bf16.msra.mxu0 %v1699
        %2290 = vmatprep.subr.bf16.mxu0 %v1702
        %2291 = vmatpush1.bf16.msra.mxu0 %v1701
        %2292 = vmatprep.subr.bf16.mxu0 %v1704
        %2293 = vmatpush1.bf16.msra.mxu0 %v1703
        %2294 = vmatprep.subr.bf16.mxu0 %v1706
        %2295 = vmatpush1.bf16.msra.mxu0 %v1705
        %2296 = vmatprep.subr.bf16.mxu0 %v1708
        %2297 = vmatpush1.bf16.msra.mxu0 %v1707
        %2298 = vmatprep.subr.bf16.mxu0 %v1710
        %2299 = vmatpush1.bf16.msra.mxu0 %v1709
        %2300 = vmatprep.mubr.bf16.mxu0 %v670
        %2301 = vmatmul.mubr.bf16.gmra.mrb[0].mxu0 %v669
        %v2302 = vpop.f32.mrb[0].mxu0
        %v2303 = vadd.f32 %v2260, %v2302
        %v2304 = vpop.f32.mrb[0].mxu0
        %v2305 = vadd.f32 %v2262, %v2304
        %v2306 = vpop.f32.mrb[0].mxu0
        %v2307 = vadd.f32 %v2264, %v2306
        %v2308 = vpop.f32.mrb[0].mxu0
        %v2309 = vadd.f32 %v2266, %v2308
        %2310 = vdwg.mxu0
        %v2311 = vadd.f32 %v331, %v2303
        %v2312 = vadd.f32 %v332, %v2305
        %v2313 = vadd.f32 %v333, %v2307
        %v2314 = vadd.f32 %v334, %v2309
        %2315 = vst [vmem:[#allocation2] sm:$0xff] %v2311
        %2316 = vst [vmem:[#allocation2 + $0x8] sm:$0xff] %v2312
        %2317 = vst [vmem:[#allocation2 + $0x10] sm:$0xff] %v2313
        %2318 = vst [vmem:[#allocation2 + $0x18] sm:$0xff] %v2314
        // Predicated region
        $region49: #{autoencoder_forward.13} parent=31 // pred_check
          %p2319 = pneg %p323
        $region50: #{autoencoder_forward.13} parent=31 // pred_check_branch
          %2321 = sbr.rel (%p2319) target = $region52
        $region51: #{autoencoder_forward.13} parent=31 // pred_region
          %v2322 = vld [vmem:[#allocation2] sm:$0xff]
          %v2323 = vld [vmem:[#allocation2 + $0x8] sm:$0xff]
          %v2324 = vld [vmem:[#allocation2 + $0x10] sm:$0xff]
          %v2325 = vld [vmem:[#allocation2 + $0x18] sm:$0xff]
          %v2326 = vld [vmem:[%s283] sm:$0x3]
          %v2328 = vlaneseq
          %v2329 = vshrl.u32 %v2328, 7
          %v2330 = vsub.s32 0, %v2329
          %v2331 = vrot.slane %v2326, %v2330
          %v2332 = vlaneseq
          %v2333 = vshrl.u32 %v2332, 7
          %v2334 = vsub.s32 1, %v2333
          %v2335 = vrot.slane %v2326, %v2334
          %v2338 = vadd.f32 %v2322, %v2331
          %v2339 = vadd.f32 %v2323, %v2335
          %v2340 = vadd.f32 %v2324, %v2331
          %v2341 = vadd.f32 %v2325, %v2335
          %v2342 = vmax.f32 %v2338, 0.0
          %v2343 = vmax.f32 %v2339, 0.0
          %v2344 = vmax.f32 %v2340, 0.0
          %v2345 = vmax.f32 %v2341, 0.0
          %v2346 = vpack.c.bf16 %v2344, %v2342
          %v2347 = vpack.c.bf16 %v2345, %v2343
          %v2350 = vunpack.c.l.b16 %v2346
          %v2351 = vunpack.c.l.b16 %v2347
          %v2352 = vunpack.c.h.b16 %v2346
          %v2353 = vunpack.c.h.b16 %v2347
          %v2354 = vpack.c.b16 %v2351, %v2350
          %v2355 = vpack.c.b16 %v2353, %v2352
          %2358 = vst [vmem:[%s315] sm:$0xff] %v2354
          %2359 = vst [vmem:[%s315 + $0x8] sm:$0xff] %v2355
        $region52: #{autoencoder_forward.13} parent=31 // pred_fallthru
          _
        %s2360 = sand.u32 %s149, 1
        %s2361 = scalar_lea.sflag [#allocation5], %s2360
        %s2362 = sand.u32 %s149, 1
        %s2363 = smul.addr %s2362, 16
        %s2364 = scalar_lea.vmem [#allocation9], %s2363
        // Predicated region
        $region53: #{autoencoder_forward.13} parent=31 // pred_check
          %p2365 = pneg %p159
        $region54: #{autoencoder_forward.13} parent=31 // pred_check_branch
          %2367 = sbr.rel (%p2365) target = $region56
        $region55: #{autoencoder_forward.13} parent=31 // pred_region
          %s2368 = smul.u32 2, %s30
          %s2369 = smul.u32 2, %s31
          %s2371 = ssub.s32 256, 256
          %2372 = vsyncadd %s2361, %s2371
          %s2373 = smul.addr %s2368, 2
          %s2374 = sadd.s32 %s2369, %s2373
          %s2375 = smul.addr %s29, 4
          %s2376 = sadd.s32 %s2374, %s2375
          %s2377 = smul.addr %s2376, 64
          %s2378 = scalar_lea.hbm %s3, %s2377
          %s2379 = sshll.u32 %s2364, 4
          %s2380 = int_to_ptr.vmem [resolvable:$true] %s2379
          %2385 = dma.vmem_to_hbm [thread:$0]  %s2380, 256, %s2378, %s2361, 128, 128, 8
        $region56: #{autoencoder_forward.13} parent=31 // pred_fallthru
          _
      $region32: #{autoencoder_forward.13} parent=5 // pred_fallthru
        _
      %p2386 = scmp.le.s32.totalorder 2, %s18
      // Predicated region
      $region57: #{autoencoder_forward.13} parent=5 // pred_check
        %p2387 = pneg %p2386
      $region58: #{autoencoder_forward.13} parent=5 // pred_check_branch
        %2389 = sbr.rel (%p2387) target = $region60
      $region59: #{autoencoder_forward.13} parent=5 // pred_region
        %s2390 = ssub.s32 %s18, 2
        // Predicated region
        $region61: #{autoencoder_forward.13} parent=59 // pred_check
          %p2391 = pneg %p165
        $region62: #{autoencoder_forward.13} parent=59 // pred_check_branch
          %2393 = sbr.rel (%p2391) target = $region64
        $region63: #{autoencoder_forward.13} parent=59 // pred_region
          %s2394 = sand.u32 %s150, 1
          %s2395 = scalar_lea.sflag [#allocation5], %s2394
          %s2396 = sand.u32 %s150, 1
          %s2397 = smul.addr %s2396, 16
          %s2398 = scalar_lea.vmem [#allocation9], %s2397
          %2399 = dma.done %s2395, 256
        $region64: #{autoencoder_forward.13} parent=59 // pred_fallthru
          _
      $region60: #{autoencoder_forward.13} parent=5 // pred_fallthru
        _
    $region6: #{autoencoder_forward.13} parent=1 // loop_footer
      %s22 = sadd.s32 1, %s18
    $region7: #{autoencoder_forward.13} parent=1 // loop_footer_branch
      %17 = sbr.rel target = $region3
    $region8: #{autoencoder_forward.13} parent=1 // loop_exit
      _
    %2400 = vsyncpa [#allocation4], 1
    %s2401 = scalar_lea.sflag [#allocation4], 1
    %2402 = vsyncpa %s2401, 1
    %2403 = vsyncpa [#allocation7], 1
    %s2404 = scalar_lea.sflag [#allocation7], 1
    %2405 = vsyncpa %s2404, 1
    %2406 = vsyncpa [#allocation5], 1
    %s2407 = scalar_lea.sflag [#allocation5], 1
    %2408 = vsyncpa %s2407, 1

// kernel: autoencoder_forward.14
$region0: #{autoencoder_forward.14}
  #allocation0 [shape = 'u32[]', space=smem, size = 0x4, offset = 0x4, fixed_abs, tag = 'smem constant byte address 0x4 - core index']
  #allocation1 [shape = 'u32[144,128]{1,0:T(1,128)}', space=vmem, size = 0x12000, scoped, tag = 'internal scratch']
  #allocation2 [shape = 'f32[32,128]{1,0:T(8,128)}', space=vmem, size = 0x4000, scoped, tag = 'scratch operand']
  %s0 = inlined_call_operand.hbm [shape: bf16[4,32,1024], index: 0, kind: input, shape index: {}]
  %s1 = inlined_call_operand.hbm [shape: bf16[4,1024,128], index: 1, kind: input, shape index: {}]
  %s2 = inlined_call_operand.hbm [shape: f32[4,1,128], index: 2, kind: input, shape index: {}]
  %s3 = inlined_call_operand.hbm [shape: bf16[4,32,128], index: 3, kind: output, shape index: {}]
  %s4 = sld [smem:[#allocation0]]
  $region65: #{autoencoder_forward.14} parent=0
    _
  %s6 = ssub.s32 1, %s4
  %s7 = scalar_select 0, %s6, %s4
  $region1: #{autoencoder_forward.14} parent=0
    #allocation3 [shape = 'u8[131072]{0}', space=vmem, size = 0x20000, scoped, tag = 'input window, operand 0']
    #allocation4 [shape = 's32[2]{0}', space=sflag, size = 0x8, scoped, tag = 'scoped memory for autoencoder_forward.14']
    #allocation5 [shape = 's32[2]{0}', space=sflag, size = 0x8, scoped, tag = 'scoped memory for autoencoder_forward.14']
    #allocation6 [shape = 'u8[524288]{0}', space=vmem, size = 0x80000, scoped, tag = 'input window, operand 1']
    #allocation7 [shape = 's32[2]{0}', space=sflag, size = 0x8, scoped, tag = 'scoped memory for autoencoder_forward.14']
    #allocation8 [shape = 'u8[1024]{0}', space=vmem, size = 0x400, scoped, tag = 'input window, operand 2']
    #allocation9 [shape = 'u8[16384]{0}', space=vmem, size = 0x4000, scoped, tag = 'output window, operand 0']
    %8 = vsyncpa [#allocation4], 0
    %s9 = scalar_lea.sflag [#allocation4], 1
    %10 = vsyncpa %s9, 0
    %11 = vsyncpa [#allocation7], 0
    %s12 = scalar_lea.sflag [#allocation7], 1
    %13 = vsyncpa %s12, 0
    %14 = vsyncpa [#allocation5], 0
    %s15 = scalar_lea.sflag [#allocation5], 1
    %16 = vsyncpa %s15, 0
    loop: start=0, step=1, limit=6
    $region2: #{autoencoder_forward.14} parent=1 // loop_pre_header
      _
    $region3: #{autoencoder_forward.14} parent=1 // loop_header
      %s18 = sphi 0, %s22
      %p19 = scmp.ge.s32.totalorder %s18, 6
      %s25 = sphi 0, %s51
      %s26 = sphi 0, %s47
      %s27 = sphi 0, %s43
      %s28 = sphi 0, %s39
      %s29 = sphi 0, %s25
      %s30 = sphi 0, %s26
      %s31 = sphi 0, %s27
      %s32 = sphi 0, %s28
      %s33 = sphi 0, %s29
      %s34 = sphi 0, %s30
      %s35 = sphi 0, %s31
      %s36 = sphi 0, %s32
      %s58 = sphi 0, %s60
      %s61 = sphi 0, %s58
      %s62 = sphi 0, %s61
      %s78 = sphi 0, %s62
      %s88 = sphi 0, %s90
      %s91 = sphi 0, %s88
      %s92 = sphi 0, %s91
      %s108 = sphi 0, %s92
      %s116 = sphi 0, %s118
      %s119 = sphi 0, %s116
      %s120 = sphi 0, %s119
      %s136 = sphi 0, %s120
      %s146 = sphi 0, %s148
      %s149 = sphi 0, %s146
      %s150 = sphi 0, %s149
      %s166 = sphi 0, %s150
    $region4: #{autoencoder_forward.14} parent=1 // loop_header_branch
      %21 = sbr.rel (%p19) target = $region8
    $region5: #{autoencoder_forward.14} parent=1 // loop_body
      %s23 = ssub.s32 %s18, 1
      %s24 = ssub.s32 %s18, 2
      %s37 = sadd.s32 1, %s28
      %p38 = scmp.ge.s32.totalorder %s37, 1
      %s39 = scalar_select %p38, 0, %s37
      %s40 = sadd.s32 1, %s27
      %s41 = scalar_select %p38, %s40, %s27
      %p42 = scmp.ge.s32.totalorder %s41, 1
      %s43 = scalar_select %p42, 0, %s41
      %s44 = sadd.s32 1, %s26
      %s45 = scalar_select %p42, %s44, %s26
      %p46 = scmp.ge.s32.totalorder %s45, 1
      %s47 = scalar_select %p46, 0, %s45
      %s48 = sadd.s32 1, %s25
      %s49 = scalar_select %p46, %s48, %s25
      %p50 = scmp.ge.s32.totalorder %s49, 4
      %s51 = scalar_select %p50, 0, %s49
      %s52 = ssub.s32 %s25, %s51
      %s53 = ssub.s32 %s26, %s47
      %s54 = sor.u32 %s52, %s53
      %s55 = ssub.s32 %s28, %s39
      %s56 = sor.u32 %s54, %s55
      %p57 = scmp.eq.s32.totalorder %s56, 0
      %s59 = sadd.s32 %s58, 1
      %s60 = scalar_select %p57, %s58, %s59
      %p63 = pneg %p57
      %p64 = scmp.eq.s32.totalorder %s18, 3
      %p65 = por %p63, %p64
      %p66 = scmp.ne.s32.totalorder %s58, %s61
      %p67 = scmp.eq.s32.totalorder %s18, 0
      %p68 = por %p66, %p67
      %p69 = scmp.ne.s32.totalorder %s58, %s61
      %p70 = scmp.eq.s32.totalorder %s23, 3
      %p71 = por %p69, %p70
      %p72 = scmp.ne.s32.totalorder %s61, %s62
      %p73 = scmp.eq.s32.totalorder %s23, 0
      %p74 = por %p72, %p73
      %p75 = scmp.ne.s32.totalorder %s61, %s62
      %p76 = scmp.eq.s32.totalorder %s24, 3
      %p77 = por %p75, %p76
      %p79 = scmp.ne.s32.totalorder %s62, %s78
      %p80 = scmp.eq.s32.totalorder %s24, 0
      %p81 = por %p79, %p80
      %s82 = ssub.s32 %s25, %s51
      %s83 = ssub.s32 %s28, %s39
      %s84 = sor.u32 %s82, %s83
      %s85 = ssub.s32 %s27, %s43
      %s86 = sor.u32 %s84, %s85
      %p87 = scmp.eq.s32.totalorder %s86, 0
      %s89 = sadd.s32 %s88, 1
      %s90 = scalar_select %p87, %s88, %s89
      %p93 = pneg %p87
      %p94 = scmp.eq.s32.totalorder %s18, 3
      %p95 = por %p93, %p94
      %p96 = scmp.ne.s32.totalorder %s88, %s91
      %p97 = scmp.eq.s32.totalorder %s18, 0
      %p98 = por %p96, %p97
      %p99 = scmp.ne.s32.totalorder %s88, %s91
      %p100 = scmp.eq.s32.totalorder %s23, 3
      %p101 = por %p99, %p100
      %p102 = scmp.ne.s32.totalorder %s91, %s92
      %p103 = scmp.eq.s32.totalorder %s23, 0
      %p104 = por %p102, %p103
      %p105 = scmp.ne.s32.totalorder %s91, %s92
      %p106 = scmp.eq.s32.totalorder %s24, 3
      %p107 = por %p105, %p106
      %p109 = scmp.ne.s32.totalorder %s92, %s108
      %p110 = scmp.eq.s32.totalorder %s24, 0
      %p111 = por %p109, %p110
      %s112 = ssub.s32 %s25, %s51
      %s113 = ssub.s32 %s27, %s43
      %s114 = sor.u32 %s112, %s113
      %p115 = scmp.eq.s32.totalorder %s114, 0
      %s117 = sadd.s32 %s116, 1
      %s118 = scalar_select %p115, %s116, %s117
      %p121 = pneg %p115
      %p122 = scmp.eq.s32.totalorder %s18, 3
      %p123 = por %p121, %p122
      %p124 = scmp.ne.s32.totalorder %s116, %s119
      %p125 = scmp.eq.s32.totalorder %s18, 0
      %p126 = por %p124, %p125
      %p127 = scmp.ne.s32.totalorder %s116, %s119
      %p128 = scmp.eq.s32.totalorder %s23, 3
      %p129 = por %p127, %p128
      %p130 = scmp.ne.s32.totalorder %s119, %s120
      %p131 = scmp.eq.s32.totalorder %s23, 0
      %p132 = por %p130, %p131
      %p133 = scmp.ne.s32.totalorder %s119, %s120
      %p134 = scmp.eq.s32.totalorder %s24, 3
      %p135 = por %p133, %p134
      %p137 = scmp.ne.s32.totalorder %s120, %s136
      %p138 = scmp.eq.s32.totalorder %s24, 0
      %p139 = por %p137, %p138
      %s140 = ssub.s32 %s25, %s51
      %s141 = ssub.s32 %s26, %s47
      %s142 = sor.u32 %s140, %s141
      %s143 = ssub.s32 %s27, %s43
      %s144 = sor.u32 %s142, %s143
      %p145 = scmp.eq.s32.totalorder %s144, 0
      %s147 = sadd.s32 %s146, 1
      %s148 = scalar_select %p145, %s146, %s147
      %p151 = pneg %p145
      %p152 = scmp.eq.s32.totalorder %s18, 3
      %p153 = por %p151, %p152
      %p154 = scmp.ne.s32.totalorder %s146, %s149
      %p155 = scmp.eq.s32.totalorder %s18, 0
      %p156 = por %p154, %p155
      %p157 = scmp.ne.s32.totalorder %s146, %s149
      %p158 = scmp.eq.s32.totalorder %s23, 3
      %p159 = por %p157, %p158
      %p160 = scmp.ne.s32.totalorder %s149, %s150
      %p161 = scmp.eq.s32.totalorder %s23, 0
      %p162 = por %p160, %p161
      %p163 = scmp.ne.s32.totalorder %s149, %s150
      %p164 = scmp.eq.s32.totalorder %s24, 3
      %p165 = por %p163, %p164
      %p167 = scmp.ne.s32.totalorder %s150, %s166
      %p168 = scmp.eq.s32.totalorder %s24, 0
      %p169 = por %p167, %p168
      %p170 = scmp.le.s32.totalorder 1, %s18
      %p171 = scmp.lt.s32.totalorder %s18, 5
      %p172 = pnand %p170, %p171
      %p173 = pneg %p172
      // Predicated region
      $region9: #{autoencoder_forward.14} parent=5 // pred_check
        _
      $region10: #{autoencoder_forward.14} parent=5 // pred_check_branch
        %175 = sbr.rel (%p172) target = $region12
      $region11: #{autoencoder_forward.14} parent=5 // pred_region
        %s176 = ssub.s32 %s18, 1
      $region12: #{autoencoder_forward.14} parent=5 // pred_fallthru
        _
      %p177 = scmp.lt.s32.totalorder %s18, 4
      // Predicated region
      $region13: #{autoencoder_forward.14} parent=5 // pred_check
        %p178 = pneg %p177
      $region14: #{autoencoder_forward.14} parent=5 // pred_check_branch
        %180 = sbr.rel (%p178) target = $region16
      $region15: #{autoencoder_forward.14} parent=5 // pred_region
        // Predicated region
        $region17: #{autoencoder_forward.14} parent=15 // pred_check
          %p181 = pneg %p68
        $region18: #{autoencoder_forward.14} parent=15 // pred_check_branch
          %183 = sbr.rel (%p181) target = $region20
        $region19: #{autoencoder_forward.14} parent=15 // pred_region
          %s184 = sand.u32 %s58, 1
          %s185 = scalar_lea.sflag [#allocation4], %s184
          %s186 = sand.u32 %s58, 1
          %s187 = smul.addr %s186, 128
          %s188 = scalar_lea.vmem [#allocation3], %s187
          %s189 = smul.u32 4, %s26
          %s190 = smul.u32 8, %s28
          %s192 = ssub.s32 2048, 2048
          %193 = vsyncadd %s185, %s192
          %s194 = smul.addr %s189, 8
          %s195 = sadd.s32 %s190, %s194
          %s196 = smul.addr %s25, 32
          %s197 = sadd.s32 %s195, %s196
          %s198 = smul.addr %s197, 64
          %s199 = scalar_lea.hbm %s0, %s198
          %s200 = sshll.u32 %s188, 4
          %s201 = int_to_ptr.vmem [resolvable:$true] %s200
          %206 = dma.hbm_to_vmem [thread:$0]  %s199, 2048, %s201, %s185, 512, 512, 32
        $region20: #{autoencoder_forward.14} parent=15 // pred_fallthru
          _
        // Predicated region
        $region21: #{autoencoder_forward.14} parent=15 // pred_check
          %p207 = pneg %p98
        $region22: #{autoencoder_forward.14} parent=15 // pred_check_branch
          %209 = sbr.rel (%p207) target = $region24
        $region23: #{autoencoder_forward.14} parent=15 // pred_region
          %s210 = sand.u32 %s18, 1
          %s211 = scalar_lea.sflag [#allocation7], %s210
          %s212 = sand.u32 %s88, 1
          %s213 = smul.addr %s212, 512
          %s214 = scalar_lea.vmem [#allocation6], %s213
          %s215 = smul.u32 128, %s28
          %s217 = ssub.s32 8192, 8192
          %218 = vsyncadd %s211, %s217
          %s219 = sadd.s32 %s27, %s215
          %s220 = smul.addr %s25, 128
          %s221 = sadd.s32 %s219, %s220
          %s222 = smul.addr %s221, 64
          %s223 = scalar_lea.hbm %s1, %s222
          %s224 = sshll.u32 %s214, 4
          %s225 = int_to_ptr.vmem [resolvable:$true] %s224
          %230 = dma.hbm_to_vmem [thread:$0]  %s223, 8192, %s225, %s211, 64, 64, 4
        $region24: #{autoencoder_forward.14} parent=15 // pred_fallthru
          _
        // Predicated region
        $region25: #{autoencoder_forward.14} parent=15 // pred_check
          %p231 = pneg %p126
        $region26: #{autoencoder_forward.14} parent=15 // pred_check_branch
          %233 = sbr.rel (%p231) target = $region28
        $region27: #{autoencoder_forward.14} parent=15 // pred_region
          %s234 = sand.u32 %s18, 1
          %s235 = scalar_lea.sflag [#allocation7], %s234
          %s236 = sand.u32 %s116, 1
          %s237 = scalar_lea.vmem [#allocation8], %s236
          %s239 = ssub.s32 16, 16
          %240 = vsyncadd %s235, %s239
          %s241 = sadd.s32 %s27, %s25
          %s242 = smul.addr %s241, 16
          %s243 = scalar_lea.hbm %s2, %s242
          %s245 = sshll.u32 %s237, 4
          %s246 = int_to_ptr.vmem [resolvable:$true] %s245
          %248 = dma.hbm_to_vmem [thread:$0]  %s243, 16, %s246, %s235
        $region28: #{autoencoder_forward.14} parent=15 // pred_fallthru
          _
      $region16: #{autoencoder_forward.14} parent=5 // pred_fallthru
        _
      %p249 = scmp.le.s32.totalorder 1, %s18
      %p250 = scmp.lt.s32.totalorder %s18, 5
      %p251 = pnand %p249, %p250
      %p252 = pneg %p251
      // Predicated region
      $region29: #{autoencoder_forward.14} parent=5 // pred_check
        _
      $region30: #{autoencoder_forward.14} parent=5 // pred_check_branch
        %254 = sbr.rel (%p251) target = $region32
      $region31: #{autoencoder_forward.14} parent=5 // pred_region
        %s255 = ssub.s32 %s18, 1
        %s256 = sand.u32 %s61, 1
        %s257 = scalar_lea.sflag [#allocation4], %s256
        %s258 = sand.u32 %s61, 1
        %s259 = smul.addr %s258, 128
        %s260 = scalar_lea.vmem [#allocation3], %s259
        // Predicated region
        $region33: #{autoencoder_forward.14} parent=31 // pred_check
          %p261 = pneg %p74
        $region34: #{autoencoder_forward.14} parent=31 // pred_check_branch
          %263 = sbr.rel (%p261) target = $region36
        $region35: #{autoencoder_forward.14} parent=31 // pred_region
          %264 = dma.done %s257, 2048
        $region36: #{autoencoder_forward.14} parent=31 // pred_fallthru
          _
        %s265 = sand.u32 %s23, 1
        %s266 = scalar_lea.sflag [#allocation7], %s265
        %s267 = sand.u32 %s91, 1
        %s268 = smul.addr %s267, 512
        %s269 = scalar_lea.vmem [#allocation6], %s268
        // Predicated region
        $region37: #{autoencoder_forward.14} parent=31 // pred_check
          %p270 = pneg %p104
        $region38: #{autoencoder_forward.14} parent=31 // pred_check_branch
          %272 = sbr.rel (%p270) target = $region40
        $region39: #{autoencoder_forward.14} parent=31 // pred_region
          %273 = dma.done %s266, 8192
        $region40: #{autoencoder_forward.14} parent=31 // pred_fallthru
          _
        %s274 = sand.u32 %s23, 1
        %s275 = scalar_lea.sflag [#allocation7], %s274
        %s276 = sand.u32 %s119, 1
        %s277 = scalar_lea.vmem [#allocation8], %s276
        // Predicated region
        $region41: #{autoencoder_forward.14} parent=31 // pred_check
          %p278 = pneg %p132
        $region42: #{autoencoder_forward.14} parent=31 // pred_check_branch
          %280 = sbr.rel (%p278) target = $region44
        $region43: #{autoencoder_forward.14} parent=31 // pred_region
          %281 = dma.done %s275, 16
        $region44: #{autoencoder_forward.14} parent=31 // pred_fallthru
          _
        %s282 = sand.u32 %s61, 1
        %s283 = scalar_lea.sflag [#allocation4], %s282
        %s284 = sand.u32 %s61, 1
        %s285 = smul.addr %s284, 128
        %s286 = scalar_lea.vmem [#allocation3], %s285
        %p287 = pneg %p74
        %p288 = pneg %p71
        %s289 = sand.u32 %s23, 1
        %s290 = scalar_lea.sflag [#allocation7], %s289
        %s291 = sand.u32 %s91, 1
        %s292 = smul.addr %s291, 512
        %s293 = scalar_lea.vmem [#allocation6], %s292
        %p294 = pneg %p104
        %p295 = pneg %p101
        %s296 = sand.u32 %s23, 1
        %s297 = scalar_lea.sflag [#allocation7], %s296
        %s298 = sand.u32 %s119, 1
        %s299 = scalar_lea.vmem [#allocation8], %s298
        %p300 = pneg %p132
        %p301 = pneg %p129
        %p302 = pneg %p162
        %p303 = pneg %p159
        %s304 = sand.u32 %s149, 1
        %s305 = scalar_lea.sflag [#allocation5], %s304
        %s306 = sand.u32 %s149, 1
        %s307 = smul.addr %s306, 16
        %s308 = scalar_lea.vmem [#allocation9], %s307
        %s309 = smul.u32 4, %s30
        %s310 = smul.u32 8, %s32
        %s311 = smul.u32 128, %s32
        %s312 = smul.u32 4, %s30
        %p314 = scmp.eq.s32.totalorder %s32, 0
        // Predicated region
        $region45: #{autoencoder_forward.14} parent=31 // pred_check
          %p315 = pneg %p314
        $region46: #{autoencoder_forward.14} parent=31 // pred_check_branch
          %317 = sbr.rel (%p315) target = $region48
        $region47: #{autoencoder_forward.14} parent=31 // pred_region
          %318 = vst [vmem:[#allocation2] sm:$0xff] 0.0
          %319 = vst [vmem:[#allocation2 + $0x8] sm:$0xff] 0.0
          %320 = vst [vmem:[#allocation2 + $0x10] sm:$0xff] 0.0
          %321 = vst [vmem:[#allocation2 + $0x18] sm:$0xff] 0.0
        $region48: #{autoencoder_forward.14} parent=31 // pred_fallthru
          _
        %v322 = vld [vmem:[#allocation2] sm:$0xff]
        %v323 = vld [vmem:[#allocation2 + $0x8] sm:$0xff]
        %v324 = vld [vmem:[#allocation2 + $0x10] sm:$0xff]
        %v325 = vld [vmem:[#allocation2 + $0x18] sm:$0xff]
        %v326 = vld [vmem:[%s260] sm:$0xff]
        %v327 = vld [vmem:[%s260 + $0x8] sm:$0xff]
        %v328 = vld [vmem:[%s260 + $0x10] sm:$0xff]
        %v329 = vld [vmem:[%s260 + $0x18] sm:$0xff]
        %v330 = vld [vmem:[%s260 + $0x20] sm:$0xff]
        %v331 = vld [vmem:[%s260 + $0x28] sm:$0xff]
        %v332 = vld [vmem:[%s260 + $0x30] sm:$0xff]
        %v333 = vld [vmem:[%s260 + $0x38] sm:$0xff]
        %v334 = vld [vmem:[%s260 + $0x40] sm:$0xff]
        %v335 = vld [vmem:[%s260 + $0x48] sm:$0xff]
        %v336 = vld [vmem:[%s260 + $0x50] sm:$0xff]
        %v337 = vld [vmem:[%s260 + $0x58] sm:$0xff]
        %v338 = vld [vmem:[%s260 + $0x60] sm:$0xff]
        %v339 = vld [vmem:[%s260 + $0x68] sm:$0xff]
        %v340 = vld [vmem:[%s260 + $0x70] sm:$0xff]
        %v341 = vld [vmem:[%s260 + $0x78] sm:$0xff]
        %v342 = vld [vmem:[%s269] sm:$0xf]
        %v343 = vld [vmem:[%s269 + $0x4] sm:$0xf]
        %v344 = vld [vmem:[%s269 + $0x8] sm:$0xf]
        %v345 = vld [vmem:[%s269 + $0xc] sm:$0xf]
        %v346 = vld [vmem:[%s269 + $0x10] sm:$0xf]
        %v347 = vld [vmem:[%s269 + $0x14] sm:$0xf]
        %v348 = vld [vmem:[%s269 + $0x18] sm:$0xf]
        %v349 = vld [vmem:[%s269 + $0x1c] sm:$0xf]
        %v350 = vld [vmem:[%s269 + $0x20] sm:$0xf]
        %v351 = vld [vmem:[%s269 + $0x24] sm:$0xf]
        %v352 = vld [vmem:[%s269 + $0x28] sm:$0xf]
        %v353 = vld [vmem:[%s269 + $0x2c] sm:$0xf]
        %v354 = vld [vmem:[%s269 + $0x30] sm:$0xf]
        %v355 = vld [vmem:[%s269 + $0x34] sm:$0xf]
        %v356 = vld [vmem:[%s269 + $0x38] sm:$0xf]
        %v357 = vld [vmem:[%s269 + $0x3c] sm:$0xf]
        %v358 = vld [vmem:[%s269 + $0x40] sm:$0xf]
        %v359 = vld [vmem:[%s269 + $0x44] sm:$0xf]
        %v360 = vld [vmem:[%s269 + $0x48] sm:$0xf]
        %v361 = vld [vmem:[%s269 + $0x4c] sm:$0xf]
        %v362 = vld [vmem:[%s269 + $0x50] sm:$0xf]
        %v363 = vld [vmem:[%s269 + $0x54] sm:$0xf]
        %v364 = vld [vmem:[%s269 + $0x58] sm:$0xf]
        %v365 = vld [vmem:[%s269 + $0x5c] sm:$0xf]
        %v366 = vld [vmem:[%s269 + $0x60] sm:$0xf]
        %v367 = vld [vmem:[%s269 + $0x64] sm:$0xf]
        %v368 = vld [vmem:[%s269 + $0x68] sm:$0xf]
        %v369 = vld [vmem:[%s269 + $0x6c] sm:$0xf]
        %v370 = vld [vmem:[%s269 + $0x70] sm:$0xf]
        %v371 = vld [vmem:[%s269 + $0x74] sm:$0xf]
        %v372 = vld [vmem:[%s269 + $0x78] sm:$0xf]
        %v373 = vld [vmem:[%s269 + $0x7c] sm:$0xf]
        %v374 = vld [vmem:[%s269 + $0x80] sm:$0xf]
        %v375 = vld [vmem:[%s269 + $0x84] sm:$0xf]
        %v376 = vld [vmem:[%s269 + $0x88] sm:$0xf]
        %v377 = vld [vmem:[%s269 + $0x8c] sm:$0xf]
        %v378 = vld [vmem:[%s269 + $0x90] sm:$0xf]
        %v379 = vld [vmem:[%s269 + $0x94] sm:$0xf]
        %v380 = vld [vmem:[%s269 + $0x98] sm:$0xf]
        %v381 = vld [vmem:[%s269 + $0x9c] sm:$0xf]
        %v382 = vld [vmem:[%s269 + $0xa0] sm:$0xf]
        %v383 = vld [vmem:[%s269 + $0xa4] sm:$0xf]
        %v384 = vld [vmem:[%s269 + $0xa8] sm:$0xf]
        %v385 = vld [vmem:[%s269 + $0xac] sm:$0xf]
        %v386 = vld [vmem:[%s269 + $0xb0] sm:$0xf]
        %v387 = vld [vmem:[%s269 + $0xb4] sm:$0xf]
        %v388 = vld [vmem:[%s269 + $0xb8] sm:$0xf]
        %v389 = vld [vmem:[%s269 + $0xbc] sm:$0xf]
        %v390 = vld [vmem:[%s269 + $0xc0] sm:$0xf]
        %v391 = vld [vmem:[%s269 + $0xc4] sm:$0xf]
        %v392 = vld [vmem:[%s269 + $0xc8] sm:$0xf]
        %v393 = vld [vmem:[%s269 + $0xcc] sm:$0xf]
        %v394 = vld [vmem:[%s269 + $0xd0] sm:$0xf]
        %v395 = vld [vmem:[%s269 + $0xd4] sm:$0xf]
        %v396 = vld [vmem:[%s269 + $0xd8] sm:$0xf]
        %v397 = vld [vmem:[%s269 + $0xdc] sm:$0xf]
        %v398 = vld [vmem:[%s269 + $0xe0] sm:$0xf]
        %v399 = vld [vmem:[%s269 + $0xe4] sm:$0xf]
        %v400 = vld [vmem:[%s269 + $0xe8] sm:$0xf]
        %v401 = vld [vmem:[%s269 + $0xec] sm:$0xf]
        %v402 = vld [vmem:[%s269 + $0xf0] sm:$0xf]
        %v403 = vld [vmem:[%s269 + $0xf4] sm:$0xf]
        %v404 = vld [vmem:[%s269 + $0xf8] sm:$0xf]
        %v405 = vld [vmem:[%s269 + $0xfc] sm:$0xf]
        %v406 = vld [vmem:[%s269 + $0x100] sm:$0xf]
        %v407 = vld [vmem:[%s269 + $0x104] sm:$0xf]
        %v408 = vld [vmem:[%s269 + $0x108] sm:$0xf]
        %v409 = vld [vmem:[%s269 + $0x10c] sm:$0xf]
        %v410 = vld [vmem:[%s269 + $0x110] sm:$0xf]
        %v411 = vld [vmem:[%s269 + $0x114] sm:$0xf]
        %v412 = vld [vmem:[%s269 + $0x118] sm:$0xf]
        %v413 = vld [vmem:[%s269 + $0x11c] sm:$0xf]
        %v414 = vld [vmem:[%s269 + $0x120] sm:$0xf]
        %v415 = vld [vmem:[%s269 + $0x124] sm:$0xf]
        %v416 = vld [vmem:[%s269 + $0x128] sm:$0xf]
        %v417 = vld [vmem:[%s269 + $0x12c] sm:$0xf]
        %v418 = vld [vmem:[%s269 + $0x130] sm:$0xf]
        %v419 = vld [vmem:[%s269 + $0x134] sm:$0xf]
        %v420 = vld [vmem:[%s269 + $0x138] sm:$0xf]
        %v421 = vld [vmem:[%s269 + $0x13c] sm:$0xf]
        %v422 = vld [vmem:[%s269 + $0x140] sm:$0xf]
        %v423 = vld [vmem:[%s269 + $0x144] sm:$0xf]
        %v424 = vld [vmem:[%s269 + $0x148] sm:$0xf]
        %v425 = vld [vmem:[%s269 + $0x14c] sm:$0xf]
        %v426 = vld [vmem:[%s269 + $0x150] sm:$0xf]
        %v427 = vld [vmem:[%s269 + $0x154] sm:$0xf]
        %v428 = vld [vmem:[%s269 + $0x158] sm:$0xf]
        %v429 = vld [vmem:[%s269 + $0x15c] sm:$0xf]
        %v430 = vld [vmem:[%s269 + $0x160] sm:$0xf]
        %v431 = vld [vmem:[%s269 + $0x164] sm:$0xf]
        %v432 = vld [vmem:[%s269 + $0x168] sm:$0xf]
        %v433 = vld [vmem:[%s269 + $0x16c] sm:$0xf]
        %v434 = vld [vmem:[%s269 + $0x170] sm:$0xf]
        %v435 = vld [vmem:[%s269 + $0x174] sm:$0xf]
        %v436 = vld [vmem:[%s269 + $0x178] sm:$0xf]
        %v437 = vld [vmem:[%s269 + $0x17c] sm:$0xf]
        %v438 = vld [vmem:[%s269 + $0x180] sm:$0xf]
        %v439 = vld [vmem:[%s269 + $0x184] sm:$0xf]
        %v440 = vld [vmem:[%s269 + $0x188] sm:$0xf]
        %v441 = vld [vmem:[%s269 + $0x18c] sm:$0xf]
        %v442 = vld [vmem:[%s269 + $0x190] sm:$0xf]
        %v443 = vld [vmem:[%s269 + $0x194] sm:$0xf]
        %v444 = vld [vmem:[%s269 + $0x198] sm:$0xf]
        %v445 = vld [vmem:[%s269 + $0x19c] sm:$0xf]
        %v446 = vld [vmem:[%s269 + $0x1a0] sm:$0xf]
        %v447 = vld [vmem:[%s269 + $0x1a4] sm:$0xf]
        %v448 = vld [vmem:[%s269 + $0x1a8] sm:$0xf]
        %v449 = vld [vmem:[%s269 + $0x1ac] sm:$0xf]
        %v450 = vld [vmem:[%s269 + $0x1b0] sm:$0xf]
        %v451 = vld [vmem:[%s269 + $0x1b4] sm:$0xf]
        %v452 = vld [vmem:[%s269 + $0x1b8] sm:$0xf]
        %v453 = vld [vmem:[%s269 + $0x1bc] sm:$0xf]
        %v454 = vld [vmem:[%s269 + $0x1c0] sm:$0xf]
        %v455 = vld [vmem:[%s269 + $0x1c4] sm:$0xf]
        %v456 = vld [vmem:[%s269 + $0x1c8] sm:$0xf]
        %v457 = vld [vmem:[%s269 + $0x1cc] sm:$0xf]
        %v458 = vld [vmem:[%s269 + $0x1d0] sm:$0xf]
        %v459 = vld [vmem:[%s269 + $0x1d4] sm:$0xf]
        %v460 = vld [vmem:[%s269 + $0x1d8] sm:$0xf]
        %v461 = vld [vmem:[%s269 + $0x1dc] sm:$0xf]
        %v462 = vld [vmem:[%s269 + $0x1e0] sm:$0xf]
        %v463 = vld [vmem:[%s269 + $0x1e4] sm:$0xf]
        %v464 = vld [vmem:[%s269 + $0x1e8] sm:$0xf]
        %v465 = vld [vmem:[%s269 + $0x1ec] sm:$0xf]
        %v466 = vld [vmem:[%s269 + $0x1f0] sm:$0xf]
        %v467 = vld [vmem:[%s269 + $0x1f4] sm:$0xf]
        %v468 = vld [vmem:[%s269 + $0x1f8] sm:$0xf]
        %v469 = vld [vmem:[%s269 + $0x1fc] sm:$0xf]
        %v486 = vunpack.c.l.b16 %v326
        %v487 = vunpack.c.h.b16 %v326
        %v488 = vunpack.c.l.b16 %v327
        %v489 = vunpack.c.h.b16 %v327
        %v490 = vunpack.c.l.b16 %v328
        %v491 = vunpack.c.h.b16 %v328
        %v492 = vunpack.c.l.b16 %v329
        %v493 = vunpack.c.h.b16 %v329
        %v494 = vunpack.c.l.b16 %v330
        %v495 = vunpack.c.h.b16 %v330
        %v496 = vunpack.c.l.b16 %v331
        %v497 = vunpack.c.h.b16 %v331
        %v498 = vunpack.c.l.b16 %v332
        %v499 = vunpack.c.h.b16 %v332
        %v500 = vunpack.c.l.b16 %v333
        %v501 = vunpack.c.h.b16 %v333
        %v502 = vunpack.c.l.b16 %v334
        %v503 = vunpack.c.h.b16 %v334
        %v504 = vunpack.c.l.b16 %v335
        %v505 = vunpack.c.h.b16 %v335
        %v506 = vunpack.c.l.b16 %v336
        %v507 = vunpack.c.h.b16 %v336
        %v508 = vunpack.c.l.b16 %v337
        %v509 = vunpack.c.h.b16 %v337
        %v510 = vunpack.c.l.b16 %v338
        %v511 = vunpack.c.h.b16 %v338
        %v512 = vunpack.c.l.b16 %v339
        %v513 = vunpack.c.h.b16 %v339
        %v514 = vunpack.c.l.b16 %v340
        %v515 = vunpack.c.h.b16 %v340
        %v516 = vunpack.c.l.b16 %v341
        %v517 = vunpack.c.h.b16 %v341
        %v518 = vpack.c.b16 %v494, %v486
        %v519 = vpack.c.b16 %v495, %v487
        %v520 = vpack.c.b16 %v496, %v488
        %v521 = vpack.c.b16 %v497, %v489
        %v522 = vpack.c.b16 %v498, %v490
        %v523 = vpack.c.b16 %v499, %v491
        %v524 = vpack.c.b16 %v500, %v492
        %v525 = vpack.c.b16 %v501, %v493
        %v526 = vpack.c.b16 %v510, %v502
        %v527 = vpack.c.b16 %v511, %v503
        %v528 = vpack.c.b16 %v512, %v504
        %v529 = vpack.c.b16 %v513, %v505
        %v530 = vpack.c.b16 %v514, %v506
        %v531 = vpack.c.b16 %v515, %v507
        %v532 = vpack.c.b16 %v516, %v508
        %v533 = vpack.c.b16 %v517, %v509
        %v678 = vunpack.c.l.b16 %v342
        %v679 = vunpack.c.l.b16 %v343
        %v680 = vunpack.c.l.b16 %v344
        %v681 = vunpack.c.l.b16 %v345
        %v682 = vunpack.c.l.b16 %v346
        %v683 = vunpack.c.l.b16 %v347
        %v684 = vunpack.c.l.b16 %v348
        %v685 = vunpack.c.l.b16 %v349
        %v686 = vunpack.c.l.b16 %v350
        %v687 = vunpack.c.l.b16 %v351
        %v688 = vunpack.c.l.b16 %v352
        %v689 = vunpack.c.l.b16 %v353
        %v690 = vunpack.c.l.b16 %v354
        %v691 = vunpack.c.l.b16 %v355
        %v692 = vunpack.c.l.b16 %v356
        %v693 = vunpack.c.l.b16 %v357
        %v694 = vunpack.c.l.b16 %v358
        %v695 = vunpack.c.l.b16 %v359
        %v696 = vunpack.c.l.b16 %v360
        %v697 = vunpack.c.l.b16 %v361
        %v698 = vunpack.c.l.b16 %v362
        %v699 = vunpack.c.l.b16 %v363
        %v700 = vunpack.c.l.b16 %v364
        %v701 = vunpack.c.l.b16 %v365
        %v702 = vunpack.c.l.b16 %v366
        %v703 = vunpack.c.l.b16 %v367
        %v704 = vunpack.c.l.b16 %v368
        %v705 = vunpack.c.l.b16 %v369
        %v706 = vunpack.c.l.b16 %v370
        %v707 = vunpack.c.l.b16 %v371
        %v708 = vunpack.c.l.b16 %v372
        %v709 = vunpack.c.l.b16 %v373
        %v710 = vunpack.c.l.b16 %v374
        %v711 = vunpack.c.l.b16 %v375
        %v712 = vunpack.c.l.b16 %v376
        %v713 = vunpack.c.l.b16 %v377
        %v714 = vunpack.c.l.b16 %v378
        %v715 = vunpack.c.l.b16 %v379
        %v716 = vunpack.c.l.b16 %v380
        %v717 = vunpack.c.l.b16 %v381
        %v718 = vunpack.c.l.b16 %v382
        %v719 = vunpack.c.l.b16 %v383
        %v720 = vunpack.c.l.b16 %v384
        %v721 = vunpack.c.l.b16 %v385
        %v722 = vunpack.c.l.b16 %v386
        %v723 = vunpack.c.l.b16 %v387
        %v724 = vunpack.c.l.b16 %v388
        %v725 = vunpack.c.l.b16 %v389
        %v726 = vunpack.c.l.b16 %v390
        %v727 = vunpack.c.l.b16 %v391
        %v728 = vunpack.c.l.b16 %v392
        %v729 = vunpack.c.l.b16 %v393
        %v730 = vunpack.c.l.b16 %v394
        %v731 = vunpack.c.l.b16 %v395
        %v732 = vunpack.c.l.b16 %v396
        %v733 = vunpack.c.l.b16 %v397
        %v734 = vunpack.c.l.b16 %v398
        %v735 = vunpack.c.l.b16 %v399
        %v736 = vunpack.c.l.b16 %v400
        %v737 = vunpack.c.l.b16 %v401
        %v738 = vunpack.c.l.b16 %v402
        %v739 = vunpack.c.l.b16 %v403
        %v740 = vunpack.c.l.b16 %v404
        %v741 = vunpack.c.l.b16 %v405
        %v742 = vunpack.c.l.b16 %v406
        %v743 = vunpack.c.l.b16 %v407
        %v744 = vunpack.c.l.b16 %v408
        %v745 = vunpack.c.l.b16 %v409
        %v746 = vunpack.c.l.b16 %v410
        %v747 = vunpack.c.l.b16 %v411
        %v748 = vunpack.c.l.b16 %v412
        %v749 = vunpack.c.l.b16 %v413
        %v750 = vunpack.c.l.b16 %v414
        %v751 = vunpack.c.l.b16 %v415
        %v752 = vunpack.c.l.b16 %v416
        %v753 = vunpack.c.l.b16 %v417
        %v754 = vunpack.c.l.b16 %v418
        %v755 = vunpack.c.l.b16 %v419
        %v756 = vunpack.c.l.b16 %v420
        %v757 = vunpack.c.l.b16 %v421
        %v758 = vunpack.c.l.b16 %v422
        %v759 = vunpack.c.l.b16 %v423
        %v760 = vunpack.c.l.b16 %v424
        %v761 = vunpack.c.l.b16 %v425
        %v762 = vunpack.c.l.b16 %v426
        %v763 = vunpack.c.l.b16 %v427
        %v764 = vunpack.c.l.b16 %v428
        %v765 = vunpack.c.l.b16 %v429
        %v766 = vunpack.c.l.b16 %v430
        %v767 = vunpack.c.l.b16 %v431
        %v768 = vunpack.c.l.b16 %v432
        %v769 = vunpack.c.l.b16 %v433
        %v770 = vunpack.c.l.b16 %v434
        %v771 = vunpack.c.l.b16 %v435
        %v772 = vunpack.c.l.b16 %v436
        %v773 = vunpack.c.l.b16 %v437
        %v774 = vunpack.c.l.b16 %v438
        %v775 = vunpack.c.l.b16 %v439
        %v776 = vunpack.c.l.b16 %v440
        %v777 = vunpack.c.l.b16 %v441
        %v778 = vunpack.c.l.b16 %v442
        %v779 = vunpack.c.l.b16 %v443
        %v780 = vunpack.c.l.b16 %v444
        %v781 = vunpack.c.l.b16 %v445
        %v782 = vunpack.c.l.b16 %v446
        %v783 = vunpack.c.l.b16 %v447
        %v784 = vunpack.c.l.b16 %v448
        %v785 = vunpack.c.l.b16 %v449
        %v786 = vunpack.c.l.b16 %v450
        %v787 = vunpack.c.l.b16 %v451
        %v788 = vunpack.c.l.b16 %v452
        %v789 = vunpack.c.l.b16 %v453
        %v790 = vunpack.c.l.b16 %v454
        %v791 = vunpack.c.l.b16 %v455
        %v792 = vunpack.c.l.b16 %v456
        %v793 = vunpack.c.l.b16 %v457
        %v794 = vunpack.c.l.b16 %v458
        %v795 = vunpack.c.l.b16 %v459
        %v796 = vunpack.c.l.b16 %v460
        %v797 = vunpack.c.l.b16 %v461
        %v798 = vunpack.c.l.b16 %v462
        %v799 = vunpack.c.l.b16 %v463
        %v800 = vunpack.c.l.b16 %v464
        %v801 = vunpack.c.l.b16 %v465
        %v802 = vunpack.c.l.b16 %v466
        %v803 = vunpack.c.l.b16 %v467
        %v804 = vunpack.c.l.b16 %v468
        %v805 = vunpack.c.l.b16 %v469
        %v806 = vpack.c.b16 %v679, %v678
        %v807 = vpack.c.b16 %v681, %v680
        %v808 = vpack.c.b16 %v683, %v682
        %v809 = vpack.c.b16 %v685, %v684
        %v810 = vpack.c.b16 %v687, %v686
        %v811 = vpack.c.b16 %v689, %v688
        %v812 = vpack.c.b16 %v691, %v690
        %v813 = vpack.c.b16 %v693, %v692
        %v814 = vpack.c.b16 %v695, %v694
        %v815 = vpack.c.b16 %v697, %v696
        %v816 = vpack.c.b16 %v699, %v698
        %v817 = vpack.c.b16 %v701, %v700
        %v818 = vpack.c.b16 %v703, %v702
        %v819 = vpack.c.b16 %v705, %v704
        %v820 = vpack.c.b16 %v707, %v706
        %v821 = vpack.c.b16 %v709, %v708
        %v822 = vpack.c.b16 %v711, %v710
        %v823 = vpack.c.b16 %v713, %v712
        %v824 = vpack.c.b16 %v715, %v714
        %v825 = vpack.c.b16 %v717, %v716
        %v826 = vpack.c.b16 %v719, %v718
        %v827 = vpack.c.b16 %v721, %v720
        %v828 = vpack.c.b16 %v723, %v722
        %v829 = vpack.c.b16 %v725, %v724
        %v830 = vpack.c.b16 %v727, %v726
        %v831 = vpack.c.b16 %v729, %v728
        %v832 = vpack.c.b16 %v731, %v730
        %v833 = vpack.c.b16 %v733, %v732
        %v834 = vpack.c.b16 %v735, %v734
        %v835 = vpack.c.b16 %v737, %v736
        %v836 = vpack.c.b16 %v739, %v738
        %v837 = vpack.c.b16 %v741, %v740
        %v838 = vpack.c.b16 %v743, %v742
        %v839 = vpack.c.b16 %v745, %v744
        %v840 = vpack.c.b16 %v747, %v746
        %v841 = vpack.c.b16 %v749, %v748
        %v842 = vpack.c.b16 %v751, %v750
        %v843 = vpack.c.b16 %v753, %v752
        %v844 = vpack.c.b16 %v755, %v754
        %v845 = vpack.c.b16 %v757, %v756
        %v846 = vpack.c.b16 %v759, %v758
        %v847 = vpack.c.b16 %v761, %v760
        %v848 = vpack.c.b16 %v763, %v762
        %v849 = vpack.c.b16 %v765, %v764
        %v850 = vpack.c.b16 %v767, %v766
        %v851 = vpack.c.b16 %v769, %v768
        %v852 = vpack.c.b16 %v771, %v770
        %v853 = vpack.c.b16 %v773, %v772
        %v854 = vpack.c.b16 %v775, %v774
        %v855 = vpack.c.b16 %v777, %v776
        %v856 = vpack.c.b16 %v779, %v778
        %v857 = vpack.c.b16 %v781, %v780
        %v858 = vpack.c.b16 %v783, %v782
        %v859 = vpack.c.b16 %v785, %v784
        %v860 = vpack.c.b16 %v787, %v786
        %v861 = vpack.c.b16 %v789, %v788
        %v862 = vpack.c.b16 %v791, %v790
        %v863 = vpack.c.b16 %v793, %v792
        %v864 = vpack.c.b16 %v795, %v794
        %v865 = vpack.c.b16 %v797, %v796
        %v866 = vpack.c.b16 %v799, %v798
        %v867 = vpack.c.b16 %v801, %v800
        %v868 = vpack.c.b16 %v803, %v802
        %v869 = vpack.c.b16 %v805, %v804
        %934 = vmatprep.subr.bf16.mxu0 0
        %935 = vmatpush1.bf16.msra.mxu0 %v806
        %936 = vmatprep.subr.bf16.mxu0 0
        %937 = vmatpush1.bf16.msra.mxu0 %v807
        %938 = vmatprep.subr.bf16.mxu0 0
        %939 = vmatpush1.bf16.msra.mxu0 %v808
        %940 = vmatprep.subr.bf16.mxu0 0
        %941 = vmatpush1.bf16.msra.mxu0 %v809
        %942 = vmatprep.subr.bf16.mxu0 0
        %943 = vmatpush1.bf16.msra.mxu0 %v810
        %944 = vmatprep.subr.bf16.mxu0 0
        %945 = vmatpush1.bf16.msra.mxu0 %v811
        %946 = vmatprep.subr.bf16.mxu0 0
        %947 = vmatpush1.bf16.msra.mxu0 %v812
        %948 = vmatprep.subr.bf16.mxu0 0
        %949 = vmatpush1.bf16.msra.mxu0 %v813
        %950 = vmatprep.subr.bf16.mxu0 0
        %951 = vmatpush1.bf16.msra.mxu0 %v814
        %952 = vmatprep.subr.bf16.mxu0 0
        %953 = vmatpush1.bf16.msra.mxu0 %v815
        %954 = vmatprep.subr.bf16.mxu0 0
        %955 = vmatpush1.bf16.msra.mxu0 %v816
        %956 = vmatprep.subr.bf16.mxu0 0
        %957 = vmatpush1.bf16.msra.mxu0 %v817
        %958 = vmatprep.subr.bf16.mxu0 0
        %959 = vmatpush1.bf16.msra.mxu0 %v818
        %960 = vmatprep.subr.bf16.mxu0 0
        %961 = vmatpush1.bf16.msra.mxu0 %v819
        %962 = vmatprep.subr.bf16.mxu0 0
        %963 = vmatpush1.bf16.msra.mxu0 %v820
        %964 = vmatprep.subr.bf16.mxu0 0
        %965 = vmatpush1.bf16.msra.mxu0 %v821
        %966 = vmatprep.mubr.bf16.mxu0 %v519
        %967 = vmatmul.mubr.bf16.gmra.mrb[0].mxu0 %v518
        %v968 = vpop.f32.mrb[0].mxu0
        %v969 = vadd.f32 0.0, %v968
        %v970 = vpop.f32.mrb[0].mxu0
        %v971 = vpop.f32.mrb[0].mxu0
        %v972 = vadd.f32 0.0, %v971
        %v973 = vpop.f32.mrb[0].mxu0
        %974 = vmatprep.mubr.bf16.mxu0 %v527
        %975 = vmatmul.mubr.bf16.gmra.mrb[0].mxu0 %v526
        %v976 = vpop.f32.mrb[0].mxu0
        %v977 = vadd.f32 0.0, %v976
        %v978 = vpop.f32.mrb[0].mxu0
        %v979 = vpop.f32.mrb[0].mxu0
        %v980 = vadd.f32 0.0, %v979
        %v981 = vpop.f32.mrb[0].mxu0
        %982 = vdwg.mxu0
        %983 = vmatprep.subr.bf16.mxu0 0
        %984 = vmatpush1.bf16.msra.mxu0 %v822
        %985 = vmatprep.subr.bf16.mxu0 0
        %986 = vmatpush1.bf16.msra.mxu0 %v823
        %987 = vmatprep.subr.bf16.mxu0 0
        %988 = vmatpush1.bf16.msra.mxu0 %v824
        %989 = vmatprep.subr.bf16.mxu0 0
        %990 = vmatpush1.bf16.msra.mxu0 %v825
        %991 = vmatprep.subr.bf16.mxu0 0
        %992 = vmatpush1.bf16.msra.mxu0 %v826
        %993 = vmatprep.subr.bf16.mxu0 0
        %994 = vmatpush1.bf16.msra.mxu0 %v827
        %995 = vmatprep.subr.bf16.mxu0 0
        %996 = vmatpush1.bf16.msra.mxu0 %v828
        %997 = vmatprep.subr.bf16.mxu0 0
        %998 = vmatpush1.bf16.msra.mxu0 %v829
        %999 = vmatprep.subr.bf16.mxu0 0
        %1000 = vmatpush1.bf16.msra.mxu0 %v830
        %1001 = vmatprep.subr.bf16.mxu0 0
        %1002 = vmatpush1.bf16.msra.mxu0 %v831
        %1003 = vmatprep.subr.bf16.mxu0 0
        %1004 = vmatpush1.bf16.msra.mxu0 %v832
        %1005 = vmatprep.subr.bf16.mxu0 0
        %1006 = vmatpush1.bf16.msra.mxu0 %v833
        %1007 = vmatprep.subr.bf16.mxu0 0
        %1008 = vmatpush1.bf16.msra.mxu0 %v834
        %1009 = vmatprep.subr.bf16.mxu0 0
        %1010 = vmatpush1.bf16.msra.mxu0 %v835
        %1011 = vmatprep.subr.bf16.mxu0 0
        %1012 = vmatpush1.bf16.msra.mxu0 %v836
        %1013 = vmatprep.subr.bf16.mxu0 0
        %1014 = vmatpush1.bf16.msra.mxu0 %v837
        %1015 = vmatprep.mubr.bf16.mxu0 %v521
        %1016 = vmatmul.mubr.bf16.gmra.mrb[0].mxu0 %v520
        %v1017 = vpop.f32.mrb[0].mxu0
        %v1018 = vadd.f32 %v969, %v1017
        %v1019 = vpop.f32.mrb[0].mxu0
        %v1020 = vpop.f32.mrb[0].mxu0
        %v1021 = vadd.f32 %v972, %v1020
        %v1022 = vpop.f32.mrb[0].mxu0
        %1023 = vmatprep.mubr.bf16.mxu0 %v529
        %1024 = vmatmul.mubr.bf16.gmra.mrb[0].mxu0 %v528
        %v1025 = vpop.f32.mrb[0].mxu0
        %v1026 = vadd.f32 %v977, %v1025
        %v1027 = vpop.f32.mrb[0].mxu0
        %v1028 = vpop.f32.mrb[0].mxu0
        %v1029 = vadd.f32 %v980, %v1028
        %v1030 = vpop.f32.mrb[0].mxu0
        %1031 = vdwg.mxu0
        %1032 = vmatprep.subr.bf16.mxu0 0
        %1033 = vmatpush1.bf16.msra.mxu0 %v838
        %1034 = vmatprep.subr.bf16.mxu0 0
        %1035 = vmatpush1.bf16.msra.mxu0 %v839
        %1036 = vmatprep.subr.bf16.mxu0 0
        %1037 = vmatpush1.bf16.msra.mxu0 %v840
        %1038 = vmatprep.subr.bf16.mxu0 0
        %1039 = vmatpush1.bf16.msra.mxu0 %v841
        %1040 = vmatprep.subr.bf16.mxu0 0
        %1041 = vmatpush1.bf16.msra.mxu0 %v842
        %1042 = vmatprep.subr.bf16.mxu0 0
        %1043 = vmatpush1.bf16.msra.mxu0 %v843
        %1044 = vmatprep.subr.bf16.mxu0 0
        %1045 = vmatpush1.bf16.msra.mxu0 %v844
        %1046 = vmatprep.subr.bf16.mxu0 0
        %1047 = vmatpush1.bf16.msra.mxu0 %v845
        %1048 = vmatprep.subr.bf16.mxu0 0
        %1049 = vmatpush1.bf16.msra.mxu0 %v846
        %1050 = vmatprep.subr.bf16.mxu0 0
        %1051 = vmatpush1.bf16.msra.mxu0 %v847
        %1052 = vmatprep.subr.bf16.mxu0 0
        %1053 = vmatpush1.bf16.msra.mxu0 %v848
        %1054 = vmatprep.subr.bf16.mxu0 0
        %1055 = vmatpush1.bf16.msra.mxu0 %v849
        %1056 = vmatprep.subr.bf16.mxu0 0
        %1057 = vmatpush1.bf16.msra.mxu0 %v850
        %1058 = vmatprep.subr.bf16.mxu0 0
        %1059 = vmatpush1.bf16.msra.mxu0 %v851
        %1060 = vmatprep.subr.bf16.mxu0 0
        %1061 = vmatpush1.bf16.msra.mxu0 %v852
        %1062 = vmatprep.subr.bf16.mxu0 0
        %1063 = vmatpush1.bf16.msra.mxu0 %v853
        %1064 = vmatprep.mubr.bf16.mxu0 %v523
        %1065 = vmatmul.mubr.bf16.gmra.mrb[0].mxu0 %v522
        %v1066 = vpop.f32.mrb[0].mxu0
        %v1067 = vadd.f32 %v1018, %v1066
        %v1068 = vpop.f32.mrb[0].mxu0
        %v1069 = vpop.f32.mrb[0].mxu0
        %v1070 = vadd.f32 %v1021, %v1069
        %v1071 = vpop.f32.mrb[0].mxu0
        %1072 = vmatprep.mubr.bf16.mxu0 %v531
        %1073 = vmatmul.mubr.bf16.gmra.mrb[0].mxu0 %v530
        %v1074 = vpop.f32.mrb[0].mxu0
        %v1075 = vadd.f32 %v1026, %v1074
        %v1076 = vpop.f32.mrb[0].mxu0
        %v1077 = vpop.f32.mrb[0].mxu0
        %v1078 = vadd.f32 %v1029, %v1077
        %v1079 = vpop.f32.mrb[0].mxu0
        %1080 = vdwg.mxu0
        %1081 = vmatprep.subr.bf16.mxu0 0
        %1082 = vmatpush1.bf16.msra.mxu0 %v854
        %1083 = vmatprep.subr.bf16.mxu0 0
        %1084 = vmatpush1.bf16.msra.mxu0 %v855
        %1085 = vmatprep.subr.bf16.mxu0 0
        %1086 = vmatpush1.bf16.msra.mxu0 %v856
        %1087 = vmatprep.subr.bf16.mxu0 0
        %1088 = vmatpush1.bf16.msra.mxu0 %v857
        %1089 = vmatprep.subr.bf16.mxu0 0
        %1090 = vmatpush1.bf16.msra.mxu0 %v858
        %1091 = vmatprep.subr.bf16.mxu0 0
        %1092 = vmatpush1.bf16.msra.mxu0 %v859
        %1093 = vmatprep.subr.bf16.mxu0 0
        %1094 = vmatpush1.bf16.msra.mxu0 %v860
        %1095 = vmatprep.subr.bf16.mxu0 0
        %1096 = vmatpush1.bf16.msra.mxu0 %v861
        %1097 = vmatprep.subr.bf16.mxu0 0
        %1098 = vmatpush1.bf16.msra.mxu0 %v862
        %1099 = vmatprep.subr.bf16.mxu0 0
        %1100 = vmatpush1.bf16.msra.mxu0 %v863
        %1101 = vmatprep.subr.bf16.mxu0 0
        %1102 = vmatpush1.bf16.msra.mxu0 %v864
        %1103 = vmatprep.subr.bf16.mxu0 0
        %1104 = vmatpush1.bf16.msra.mxu0 %v865
        %1105 = vmatprep.subr.bf16.mxu0 0
        %1106 = vmatpush1.bf16.msra.mxu0 %v866
        %1107 = vmatprep.subr.bf16.mxu0 0
        %1108 = vmatpush1.bf16.msra.mxu0 %v867
        %1109 = vmatprep.subr.bf16.mxu0 0
        %1110 = vmatpush1.bf16.msra.mxu0 %v868
        %1111 = vmatprep.subr.bf16.mxu0 0
        %1112 = vmatpush1.bf16.msra.mxu0 %v869
        %1113 = vmatprep.mubr.bf16.mxu0 %v525
        %1114 = vmatmul.mubr.bf16.gmra.mrb[0].mxu0 %v524
        %v1115 = vpop.f32.mrb[0].mxu0
        %v1116 = vadd.f32 %v1067, %v1115
        %v1117 = vpop.f32.mrb[0].mxu0
        %v1118 = vpop.f32.mrb[0].mxu0
        %v1119 = vadd.f32 %v1070, %v1118
        %v1120 = vpop.f32.mrb[0].mxu0
        %1121 = vmatprep.mubr.bf16.mxu0 %v533
        %1122 = vmatmul.mubr.bf16.gmra.mrb[0].mxu0 %v532
        %v1123 = vpop.f32.mrb[0].mxu0
        %v1124 = vadd.f32 %v1075, %v1123
        %v1125 = vpop.f32.mrb[0].mxu0
        %v1126 = vpop.f32.mrb[0].mxu0
        %v1127 = vadd.f32 %v1078, %v1126
        %v1128 = vpop.f32.mrb[0].mxu0
        %1129 = vdwg.mxu0
        %v1130 = vadd.f32 %v322, %v1116
        %v1131 = vadd.f32 %v323, %v1119
        %v1132 = vadd.f32 %v324, %v1124
        %v1133 = vadd.f32 %v325, %v1127
        %1134 = vst [vmem:[#allocation2] sm:$0xff] %v1130
        %1135 = vst [vmem:[#allocation2 + $0x8] sm:$0xff] %v1131
        %1136 = vst [vmem:[#allocation2 + $0x10] sm:$0xff] %v1132
        %1137 = vst [vmem:[#allocation2 + $0x18] sm:$0xff] %v1133
        // Predicated region
        $region49: #{autoencoder_forward.14} parent=31 // pred_check
          %p1138 = pneg %p314
        $region50: #{autoencoder_forward.14} parent=31 // pred_check_branch
          %1140 = sbr.rel (%p1138) target = $region52
        $region51: #{autoencoder_forward.14} parent=31 // pred_region
          %v1141 = vld [vmem:[#allocation2] sm:$0xff]
          %v1142 = vld [vmem:[#allocation2 + $0x8] sm:$0xff]
          %v1143 = vld [vmem:[#allocation2 + $0x10] sm:$0xff]
          %v1144 = vld [vmem:[#allocation2 + $0x18] sm:$0xff]
          %v1145 = vld [vmem:[%s277] sm:$0x1]
          %v1147 = vlaneseq
          %v1148 = vshrl.u32 %v1147, 7
          %v1149 = vsub.s32 0, %v1148
          %v1150 = vrot.slane %v1145, %v1149
          %v1152 = vadd.f32 %v1141, %v1150
          %v1153 = vadd.f32 %v1142, %v1150
          %v1154 = vadd.f32 %v1143, %v1150
          %v1155 = vadd.f32 %v1144, %v1150
          %v1156 = vmax.f32 %v1152, 0.0
          %v1157 = vmax.f32 %v1153, 0.0
          %v1158 = vmax.f32 %v1154, 0.0
          %v1159 = vmax.f32 %v1155, 0.0
          %v1160 = vpack.c.bf16 %v1157, %v1156
          %v1161 = vpack.c.bf16 %v1159, %v1158
          %v1164 = vunpack.c.l.b16 %v1160
          %v1165 = vunpack.c.h.b16 %v1160
          %v1166 = vunpack.c.l.b16 %v1161
          %v1167 = vunpack.c.h.b16 %v1161
          %v1168 = vpack.c.b16 %v1164, %v1164
          %v1169 = vpack.c.b16 %v1165, %v1165
          %v1170 = vpack.c.b16 %v1166, %v1166
          %v1171 = vpack.c.b16 %v1167, %v1167
          %1176 = vst [vmem:[%s308] sm:$0xf] %v1168
          %1177 = vst [vmem:[%s308 + $0x4] sm:$0xf] %v1169
          %1178 = vst [vmem:[%s308 + $0x8] sm:$0xf] %v1170
          %1179 = vst [vmem:[%s308 + $0xc] sm:$0xf] %v1171
        $region52: #{autoencoder_forward.14} parent=31 // pred_fallthru
          _
        %s1180 = sand.u32 %s149, 1
        %s1181 = scalar_lea.sflag [#allocation5], %s1180
        %s1182 = sand.u32 %s149, 1
        %s1183 = smul.addr %s1182, 16
        %s1184 = scalar_lea.vmem [#allocation9], %s1183
        // Predicated region
        $region53: #{autoencoder_forward.14} parent=31 // pred_check
          %p1185 = pneg %p159
        $region54: #{autoencoder_forward.14} parent=31 // pred_check_branch
          %1187 = sbr.rel (%p1185) target = $region56
        $region55: #{autoencoder_forward.14} parent=31 // pred_region
          %s1188 = smul.u32 4, %s30
          %s1190 = ssub.s32 256, 256
          %1191 = vsyncadd %s1181, %s1190
          %s1192 = sadd.s32 %s31, %s1188
          %s1193 = smul.addr %s29, 4
          %s1194 = sadd.s32 %s1192, %s1193
          %s1195 = smul.addr %s1194, 64
          %s1196 = scalar_lea.hbm %s3, %s1195
          %s1197 = sshll.u32 %s1184, 4
          %s1198 = int_to_ptr.vmem [resolvable:$true] %s1197
          %1203 = dma.vmem_to_hbm [thread:$0]  %s1198, 256, %s1196, %s1181, 64, 64, 4
        $region56: #{autoencoder_forward.14} parent=31 // pred_fallthru
          _
      $region32: #{autoencoder_forward.14} parent=5 // pred_fallthru
        _
      %p1204 = scmp.le.s32.totalorder 2, %s18
      // Predicated region
      $region57: #{autoencoder_forward.14} parent=5 // pred_check
        %p1205 = pneg %p1204
      $region58: #{autoencoder_forward.14} parent=5 // pred_check_branch
        %1207 = sbr.rel (%p1205) target = $region60
      $region59: #{autoencoder_forward.14} parent=5 // pred_region
        %s1208 = ssub.s32 %s18, 2
        // Predicated region
        $region61: #{autoencoder_forward.14} parent=59 // pred_check
          %p1209 = pneg %p165
        $region62: #{autoencoder_forward.14} parent=59 // pred_check_branch
          %1211 = sbr.rel (%p1209) target = $region64
        $region63: #{autoencoder_forward.14} parent=59 // pred_region
          %s1212 = sand.u32 %s150, 1
          %s1213 = scalar_lea.sflag [#allocation5], %s1212
          %s1214 = sand.u32 %s150, 1
          %s1215 = smul.addr %s1214, 16
          %s1216 = scalar_lea.vmem [#allocation9], %s1215
          %1217 = dma.done %s1213, 256
        $region64: #{autoencoder_forward.14} parent=59 // pred_fallthru
          _
      $region60: #{autoencoder_forward.14} parent=5 // pred_fallthru
        _
    $region6: #{autoencoder_forward.14} parent=1 // loop_footer
      %s22 = sadd.s32 1, %s18
    $region7: #{autoencoder_forward.14} parent=1 // loop_footer_branch
      %17 = sbr.rel target = $region3
    $region8: #{autoencoder_forward.14} parent=1 // loop_exit
      _
    %1218 = vsyncpa [#allocation4], 1
    %s1219 = scalar_lea.sflag [#allocation4], 1
    %1220 = vsyncpa %s1219, 1
    %1221 = vsyncpa [#allocation7], 1
    %s1222 = scalar_lea.sflag [#allocation7], 1
    %1223 = vsyncpa %s1222, 1
    %1224 = vsyncpa [#allocation5], 1
    %s1225 = scalar_lea.sflag [#allocation5], 1
    %1226 = vsyncpa %s1225, 1

// kernel: autoencoder_forward.15
$region0: #{autoencoder_forward.15}
  #allocation0 [shape = 'u32[]', space=smem, size = 0x4, offset = 0x4, fixed_abs, tag = 'smem constant byte address 0x4 - core index']
  #allocation1 [shape = 'u32[144,128]{1,0:T(1,128)}', space=vmem, size = 0x12000, scoped, tag = 'internal scratch']
  #allocation2 [shape = 'f32[128,128]{1,0:T(8,128)}', space=vmem, size = 0x10000, scoped, tag = 'scratch operand']
  %s0 = inlined_call_operand.hbm [shape: bf16[4,128,256], index: 0, kind: input, shape index: {}]
  %s1 = inlined_call_operand.hbm [shape: bf16[4,256,128], index: 1, kind: input, shape index: {}]
  %s2 = inlined_call_operand.hbm [shape: f32[4,1,128], index: 2, kind: input, shape index: {}]
  %s3 = inlined_call_operand.hbm [shape: f32[4,128,128], index: 3, kind: output, shape index: {}]
  %s4 = sld [smem:[#allocation0]]
  $region65: #{autoencoder_forward.15} parent=0
    _
  %s6 = ssub.s32 1, %s4
  %s7 = scalar_select 0, %s6, %s4
  $region1: #{autoencoder_forward.15} parent=0
    #allocation3 [shape = 'u8[131072]{0}', space=vmem, size = 0x20000, scoped, tag = 'input window, operand 0']
    #allocation4 [shape = 's32[2]{0}', space=sflag, size = 0x8, scoped, tag = 'scoped memory for autoencoder_forward.15']
    #allocation5 [shape = 's32[2]{0}', space=sflag, size = 0x8, scoped, tag = 'scoped memory for autoencoder_forward.15']
    #allocation6 [shape = 'u8[131072]{0}', space=vmem, size = 0x20000, scoped, tag = 'input window, operand 1']
    #allocation7 [shape = 's32[2]{0}', space=sflag, size = 0x8, scoped, tag = 'scoped memory for autoencoder_forward.15']
    #allocation8 [shape = 'u8[1024]{0}', space=vmem, size = 0x400, scoped, tag = 'input window, operand 2']
    #allocation9 [shape = 'u8[131072]{0}', space=vmem, size = 0x20000, scoped, tag = 'output window, operand 0']
    %8 = vsyncpa [#allocation4], 0
    %s9 = scalar_lea.sflag [#allocation4], 1
    %10 = vsyncpa %s9, 0
    %11 = vsyncpa [#allocation7], 0
    %s12 = scalar_lea.sflag [#allocation7], 1
    %13 = vsyncpa %s12, 0
    %14 = vsyncpa [#allocation5], 0
    %s15 = scalar_lea.sflag [#allocation5], 1
    %16 = vsyncpa %s15, 0
    loop: start=0, step=1, limit=6
    $region2: #{autoencoder_forward.15} parent=1 // loop_pre_header
      _
    $region3: #{autoencoder_forward.15} parent=1 // loop_header
      %s18 = sphi 0, %s22
      %p19 = scmp.ge.s32.totalorder %s18, 6
      %s25 = sphi 0, %s51
      %s26 = sphi 0, %s47
      %s27 = sphi 0, %s43
      %s28 = sphi 0, %s39
      %s29 = sphi 0, %s25
      %s30 = sphi 0, %s26
      %s31 = sphi 0, %s27
      %s32 = sphi 0, %s28
      %s33 = sphi 0, %s29
      %s34 = sphi 0, %s30
      %s35 = sphi 0, %s31
      %s36 = sphi 0, %s32
      %s58 = sphi 0, %s60
      %s61 = sphi 0, %s58
      %s62 = sphi 0, %s61
      %s78 = sphi 0, %s62
      %s88 = sphi 0, %s90
      %s91 = sphi 0, %s88
      %s92 = sphi 0, %s91
      %s108 = sphi 0, %s92
      %s116 = sphi 0, %s118
      %s119 = sphi 0, %s116
      %s120 = sphi 0, %s119
      %s136 = sphi 0, %s120
      %s146 = sphi 0, %s148
      %s149 = sphi 0, %s146
      %s150 = sphi 0, %s149
      %s166 = sphi 0, %s150
    $region4: #{autoencoder_forward.15} parent=1 // loop_header_branch
      %21 = sbr.rel (%p19) target = $region8
    $region5: #{autoencoder_forward.15} parent=1 // loop_body
      %s23 = ssub.s32 %s18, 1
      %s24 = ssub.s32 %s18, 2
      %s37 = sadd.s32 1, %s28
      %p38 = scmp.ge.s32.totalorder %s37, 1
      %s39 = scalar_select %p38, 0, %s37
      %s40 = sadd.s32 1, %s27
      %s41 = scalar_select %p38, %s40, %s27
      %p42 = scmp.ge.s32.totalorder %s41, 1
      %s43 = scalar_select %p42, 0, %s41
      %s44 = sadd.s32 1, %s26
      %s45 = scalar_select %p42, %s44, %s26
      %p46 = scmp.ge.s32.totalorder %s45, 1
      %s47 = scalar_select %p46, 0, %s45
      %s48 = sadd.s32 1, %s25
      %s49 = scalar_select %p46, %s48, %s25
      %p50 = scmp.ge.s32.totalorder %s49, 4
      %s51 = scalar_select %p50, 0, %s49
      %s52 = ssub.s32 %s25, %s51
      %s53 = ssub.s32 %s26, %s47
      %s54 = sor.u32 %s52, %s53
      %s55 = ssub.s32 %s28, %s39
      %s56 = sor.u32 %s54, %s55
      %p57 = scmp.eq.s32.totalorder %s56, 0
      %s59 = sadd.s32 %s58, 1
      %s60 = scalar_select %p57, %s58, %s59
      %p63 = pneg %p57
      %p64 = scmp.eq.s32.totalorder %s18, 3
      %p65 = por %p63, %p64
      %p66 = scmp.ne.s32.totalorder %s58, %s61
      %p67 = scmp.eq.s32.totalorder %s18, 0
      %p68 = por %p66, %p67
      %p69 = scmp.ne.s32.totalorder %s58, %s61
      %p70 = scmp.eq.s32.totalorder %s23, 3
      %p71 = por %p69, %p70
      %p72 = scmp.ne.s32.totalorder %s61, %s62
      %p73 = scmp.eq.s32.totalorder %s23, 0
      %p74 = por %p72, %p73
      %p75 = scmp.ne.s32.totalorder %s61, %s62
      %p76 = scmp.eq.s32.totalorder %s24, 3
      %p77 = por %p75, %p76
      %p79 = scmp.ne.s32.totalorder %s62, %s78
      %p80 = scmp.eq.s32.totalorder %s24, 0
      %p81 = por %p79, %p80
      %s82 = ssub.s32 %s25, %s51
      %s83 = ssub.s32 %s28, %s39
      %s84 = sor.u32 %s82, %s83
      %s85 = ssub.s32 %s27, %s43
      %s86 = sor.u32 %s84, %s85
      %p87 = scmp.eq.s32.totalorder %s86, 0
      %s89 = sadd.s32 %s88, 1
      %s90 = scalar_select %p87, %s88, %s89
      %p93 = pneg %p87
      %p94 = scmp.eq.s32.totalorder %s18, 3
      %p95 = por %p93, %p94
      %p96 = scmp.ne.s32.totalorder %s88, %s91
      %p97 = scmp.eq.s32.totalorder %s18, 0
      %p98 = por %p96, %p97
      %p99 = scmp.ne.s32.totalorder %s88, %s91
      %p100 = scmp.eq.s32.totalorder %s23, 3
      %p101 = por %p99, %p100
      %p102 = scmp.ne.s32.totalorder %s91, %s92
      %p103 = scmp.eq.s32.totalorder %s23, 0
      %p104 = por %p102, %p103
      %p105 = scmp.ne.s32.totalorder %s91, %s92
      %p106 = scmp.eq.s32.totalorder %s24, 3
      %p107 = por %p105, %p106
      %p109 = scmp.ne.s32.totalorder %s92, %s108
      %p110 = scmp.eq.s32.totalorder %s24, 0
      %p111 = por %p109, %p110
      %s112 = ssub.s32 %s25, %s51
      %s113 = ssub.s32 %s27, %s43
      %s114 = sor.u32 %s112, %s113
      %p115 = scmp.eq.s32.totalorder %s114, 0
      %s117 = sadd.s32 %s116, 1
      %s118 = scalar_select %p115, %s116, %s117
      %p121 = pneg %p115
      %p122 = scmp.eq.s32.totalorder %s18, 3
      %p123 = por %p121, %p122
      %p124 = scmp.ne.s32.totalorder %s116, %s119
      %p125 = scmp.eq.s32.totalorder %s18, 0
      %p126 = por %p124, %p125
      %p127 = scmp.ne.s32.totalorder %s116, %s119
      %p128 = scmp.eq.s32.totalorder %s23, 3
      %p129 = por %p127, %p128
      %p130 = scmp.ne.s32.totalorder %s119, %s120
      %p131 = scmp.eq.s32.totalorder %s23, 0
      %p132 = por %p130, %p131
      %p133 = scmp.ne.s32.totalorder %s119, %s120
      %p134 = scmp.eq.s32.totalorder %s24, 3
      %p135 = por %p133, %p134
      %p137 = scmp.ne.s32.totalorder %s120, %s136
      %p138 = scmp.eq.s32.totalorder %s24, 0
      %p139 = por %p137, %p138
      %s140 = ssub.s32 %s25, %s51
      %s141 = ssub.s32 %s26, %s47
      %s142 = sor.u32 %s140, %s141
      %s143 = ssub.s32 %s27, %s43
      %s144 = sor.u32 %s142, %s143
      %p145 = scmp.eq.s32.totalorder %s144, 0
      %s147 = sadd.s32 %s146, 1
      %s148 = scalar_select %p145, %s146, %s147
      %p151 = pneg %p145
      %p152 = scmp.eq.s32.totalorder %s18, 3
      %p153 = por %p151, %p152
      %p154 = scmp.ne.s32.totalorder %s146, %s149
      %p155 = scmp.eq.s32.totalorder %s18, 0
      %p156 = por %p154, %p155
      %p157 = scmp.ne.s32.totalorder %s146, %s149
      %p158 = scmp.eq.s32.totalorder %s23, 3
      %p159 = por %p157, %p158
      %p160 = scmp.ne.s32.totalorder %s149, %s150
      %p161 = scmp.eq.s32.totalorder %s23, 0
      %p162 = por %p160, %p161
      %p163 = scmp.ne.s32.totalorder %s149, %s150
      %p164 = scmp.eq.s32.totalorder %s24, 3
      %p165 = por %p163, %p164
      %p167 = scmp.ne.s32.totalorder %s150, %s166
      %p168 = scmp.eq.s32.totalorder %s24, 0
      %p169 = por %p167, %p168
      %p170 = scmp.le.s32.totalorder 1, %s18
      %p171 = scmp.lt.s32.totalorder %s18, 5
      %p172 = pnand %p170, %p171
      %p173 = pneg %p172
      // Predicated region
      $region9: #{autoencoder_forward.15} parent=5 // pred_check
        _
      $region10: #{autoencoder_forward.15} parent=5 // pred_check_branch
        %175 = sbr.rel (%p172) target = $region12
      $region11: #{autoencoder_forward.15} parent=5 // pred_region
        %s176 = ssub.s32 %s18, 1
      $region12: #{autoencoder_forward.15} parent=5 // pred_fallthru
        _
      %p177 = scmp.lt.s32.totalorder %s18, 4
      // Predicated region
      $region13: #{autoencoder_forward.15} parent=5 // pred_check
        %p178 = pneg %p177
      $region14: #{autoencoder_forward.15} parent=5 // pred_check_branch
        %180 = sbr.rel (%p178) target = $region16
      $region15: #{autoencoder_forward.15} parent=5 // pred_region
        // Predicated region
        $region17: #{autoencoder_forward.15} parent=15 // pred_check
          %p181 = pneg %p68
        $region18: #{autoencoder_forward.15} parent=15 // pred_check_branch
          %183 = sbr.rel (%p181) target = $region20
        $region19: #{autoencoder_forward.15} parent=15 // pred_region
          %s184 = sand.u32 %s58, 1
          %s185 = scalar_lea.sflag [#allocation4], %s184
          %s186 = sand.u32 %s58, 1
          %s187 = smul.addr %s186, 128
          %s188 = scalar_lea.vmem [#allocation3], %s187
          %s189 = smul.u32 16, %s26
          %s190 = smul.u32 2, %s28
          %s192 = ssub.s32 2048, 2048
          %193 = vsyncadd %s185, %s192
          %s194 = smul.addr %s189, 2
          %s195 = sadd.s32 %s190, %s194
          %s196 = smul.addr %s25, 32
          %s197 = sadd.s32 %s195, %s196
          %s198 = smul.addr %s197, 64
          %s199 = scalar_lea.hbm %s0, %s198
          %s200 = sshll.u32 %s188, 4
          %s201 = int_to_ptr.vmem [resolvable:$true] %s200
          %206 = dma.hbm_to_vmem [thread:$0]  %s199, 2048, %s201, %s185, 128, 128, 8
        $region20: #{autoencoder_forward.15} parent=15 // pred_fallthru
          _
        // Predicated region
        $region21: #{autoencoder_forward.15} parent=15 // pred_check
          %p207 = pneg %p98
        $region22: #{autoencoder_forward.15} parent=15 // pred_check_branch
          %209 = sbr.rel (%p207) target = $region24
        $region23: #{autoencoder_forward.15} parent=15 // pred_region
          %s210 = sand.u32 %s18, 1
          %s211 = scalar_lea.sflag [#allocation7], %s210
          %s212 = sand.u32 %s88, 1
          %s213 = smul.addr %s212, 128
          %s214 = scalar_lea.vmem [#allocation6], %s213
          %s215 = smul.u32 32, %s28
          %s217 = ssub.s32 2048, 2048
          %218 = vsyncadd %s211, %s217
          %s219 = sadd.s32 %s27, %s215
          %s220 = smul.addr %s25, 32
          %s221 = sadd.s32 %s219, %s220
          %s222 = smul.addr %s221, 64
          %s223 = scalar_lea.hbm %s1, %s222
          %s224 = sshll.u32 %s214, 4
          %s225 = int_to_ptr.vmem [resolvable:$true] %s224
          %230 = dma.hbm_to_vmem [thread:$0]  %s223, 2048, %s225, %s211, 64, 64, 4
        $region24: #{autoencoder_forward.15} parent=15 // pred_fallthru
          _
        // Predicated region
        $region25: #{autoencoder_forward.15} parent=15 // pred_check
          %p231 = pneg %p126
        $region26: #{autoencoder_forward.15} parent=15 // pred_check_branch
          %233 = sbr.rel (%p231) target = $region28
        $region27: #{autoencoder_forward.15} parent=15 // pred_region
          %s234 = sand.u32 %s18, 1
          %s235 = scalar_lea.sflag [#allocation7], %s234
          %s236 = sand.u32 %s116, 1
          %s237 = scalar_lea.vmem [#allocation8], %s236
          %s239 = ssub.s32 16, 16
          %240 = vsyncadd %s235, %s239
          %s241 = sadd.s32 %s27, %s25
          %s242 = smul.addr %s241, 16
          %s243 = scalar_lea.hbm %s2, %s242
          %s245 = sshll.u32 %s237, 4
          %s246 = int_to_ptr.vmem [resolvable:$true] %s245
          %248 = dma.hbm_to_vmem [thread:$0]  %s243, 16, %s246, %s235
        $region28: #{autoencoder_forward.15} parent=15 // pred_fallthru
          _
      $region16: #{autoencoder_forward.15} parent=5 // pred_fallthru
        _
      %p249 = scmp.le.s32.totalorder 1, %s18
      %p250 = scmp.lt.s32.totalorder %s18, 5
      %p251 = pnand %p249, %p250
      %p252 = pneg %p251
      // Predicated region
      $region29: #{autoencoder_forward.15} parent=5 // pred_check
        _
      $region30: #{autoencoder_forward.15} parent=5 // pred_check_branch
        %254 = sbr.rel (%p251) target = $region32
      $region31: #{autoencoder_forward.15} parent=5 // pred_region
        %s255 = ssub.s32 %s18, 1
        %s256 = sand.u32 %s61, 1
        %s257 = scalar_lea.sflag [#allocation4], %s256
        %s258 = sand.u32 %s61, 1
        %s259 = smul.addr %s258, 128
        %s260 = scalar_lea.vmem [#allocation3], %s259
        // Predicated region
        $region33: #{autoencoder_forward.15} parent=31 // pred_check
          %p261 = pneg %p74
        $region34: #{autoencoder_forward.15} parent=31 // pred_check_branch
          %263 = sbr.rel (%p261) target = $region36
        $region35: #{autoencoder_forward.15} parent=31 // pred_region
          %264 = dma.done %s257, 2048
        $region36: #{autoencoder_forward.15} parent=31 // pred_fallthru
          _
        %s265 = sand.u32 %s23, 1
        %s266 = scalar_lea.sflag [#allocation7], %s265
        %s267 = sand.u32 %s91, 1
        %s268 = smul.addr %s267, 128
        %s269 = scalar_lea.vmem [#allocation6], %s268
        // Predicated region
        $region37: #{autoencoder_forward.15} parent=31 // pred_check
          %p270 = pneg %p104
        $region38: #{autoencoder_forward.15} parent=31 // pred_check_branch
          %272 = sbr.rel (%p270) target = $region40
        $region39: #{autoencoder_forward.15} parent=31 // pred_region
          %273 = dma.done %s266, 2048
        $region40: #{autoencoder_forward.15} parent=31 // pred_fallthru
          _
        %s274 = sand.u32 %s23, 1
        %s275 = scalar_lea.sflag [#allocation7], %s274
        %s276 = sand.u32 %s119, 1
        %s277 = scalar_lea.vmem [#allocation8], %s276
        // Predicated region
        $region41: #{autoencoder_forward.15} parent=31 // pred_check
          %p278 = pneg %p132
        $region42: #{autoencoder_forward.15} parent=31 // pred_check_branch
          %280 = sbr.rel (%p278) target = $region44
        $region43: #{autoencoder_forward.15} parent=31 // pred_region
          %281 = dma.done %s275, 16
        $region44: #{autoencoder_forward.15} parent=31 // pred_fallthru
          _
        %s282 = sand.u32 %s61, 1
        %s283 = scalar_lea.sflag [#allocation4], %s282
        %s284 = sand.u32 %s61, 1
        %s285 = smul.addr %s284, 128
        %s286 = scalar_lea.vmem [#allocation3], %s285
        %p287 = pneg %p74
        %p288 = pneg %p71
        %s289 = sand.u32 %s23, 1
        %s290 = scalar_lea.sflag [#allocation7], %s289
        %s291 = sand.u32 %s91, 1
        %s292 = smul.addr %s291, 128
        %s293 = scalar_lea.vmem [#allocation6], %s292
        %p294 = pneg %p104
        %p295 = pneg %p101
        %s296 = sand.u32 %s23, 1
        %s297 = scalar_lea.sflag [#allocation7], %s296
        %s298 = sand.u32 %s119, 1
        %s299 = scalar_lea.vmem [#allocation8], %s298
        %p300 = pneg %p132
        %p301 = pneg %p129
        %p302 = pneg %p162
        %p303 = pneg %p159
        %s304 = sand.u32 %s149, 1
        %s305 = scalar_lea.sflag [#allocation5], %s304
        %s306 = sand.u32 %s149, 1
        %s307 = smul.addr %s306, 128
        %s308 = scalar_lea.vmem [#allocation9], %s307
        %s309 = smul.u32 16, %s30
        %s310 = smul.u32 2, %s32
        %s311 = smul.u32 32, %s32
        %s312 = smul.u32 16, %s30
        %p314 = scmp.eq.s32.totalorder %s32, 0
        // Predicated region
        $region45: #{autoencoder_forward.15} parent=31 // pred_check
          %p315 = pneg %p314
        $region46: #{autoencoder_forward.15} parent=31 // pred_check_branch
          %317 = sbr.rel (%p315) target = $region48
        $region47: #{autoencoder_forward.15} parent=31 // pred_region
          %318 = vst [vmem:[#allocation2] sm:$0xff] 0.0
          %319 = vst [vmem:[#allocation2 + $0x8] sm:$0xff] 0.0
          %320 = vst [vmem:[#allocation2 + $0x10] sm:$0xff] 0.0
          %321 = vst [vmem:[#allocation2 + $0x18] sm:$0xff] 0.0
          %322 = vst [vmem:[#allocation2 + $0x20] sm:$0xff] 0.0
          %323 = vst [vmem:[#allocation2 + $0x28] sm:$0xff] 0.0
          %324 = vst [vmem:[#allocation2 + $0x30] sm:$0xff] 0.0
          %325 = vst [vmem:[#allocation2 + $0x38] sm:$0xff] 0.0
          %326 = vst [vmem:[#allocation2 + $0x40] sm:$0xff] 0.0
          %327 = vst [vmem:[#allocation2 + $0x48] sm:$0xff] 0.0
          %328 = vst [vmem:[#allocation2 + $0x50] sm:$0xff] 0.0
          %329 = vst [vmem:[#allocation2 + $0x58] sm:$0xff] 0.0
          %330 = vst [vmem:[#allocation2 + $0x60] sm:$0xff] 0.0
          %331 = vst [vmem:[#allocation2 + $0x68] sm:$0xff] 0.0
          %332 = vst [vmem:[#allocation2 + $0x70] sm:$0xff] 0.0
          %333 = vst [vmem:[#allocation2 + $0x78] sm:$0xff] 0.0
        $region48: #{autoencoder_forward.15} parent=31 // pred_fallthru
          _
        %v334 = vld [vmem:[#allocation2] sm:$0xff]
        %v335 = vld [vmem:[#allocation2 + $0x8] sm:$0xff]
        %v336 = vld [vmem:[#allocation2 + $0x10] sm:$0xff]
        %v337 = vld [vmem:[#allocation2 + $0x18] sm:$0xff]
        %v338 = vld [vmem:[#allocation2 + $0x20] sm:$0xff]
        %v339 = vld [vmem:[#allocation2 + $0x28] sm:$0xff]
        %v340 = vld [vmem:[#allocation2 + $0x30] sm:$0xff]
        %v341 = vld [vmem:[#allocation2 + $0x38] sm:$0xff]
        %v342 = vld [vmem:[#allocation2 + $0x40] sm:$0xff]
        %v343 = vld [vmem:[#allocation2 + $0x48] sm:$0xff]
        %v344 = vld [vmem:[#allocation2 + $0x50] sm:$0xff]
        %v345 = vld [vmem:[#allocation2 + $0x58] sm:$0xff]
        %v346 = vld [vmem:[#allocation2 + $0x60] sm:$0xff]
        %v347 = vld [vmem:[#allocation2 + $0x68] sm:$0xff]
        %v348 = vld [vmem:[#allocation2 + $0x70] sm:$0xff]
        %v349 = vld [vmem:[#allocation2 + $0x78] sm:$0xff]
        %v350 = vld [vmem:[%s260] sm:$0xff]
        %v351 = vld [vmem:[%s260 + $0x8] sm:$0xff]
        %v352 = vld [vmem:[%s260 + $0x10] sm:$0xff]
        %v353 = vld [vmem:[%s260 + $0x18] sm:$0xff]
        %v354 = vld [vmem:[%s260 + $0x20] sm:$0xff]
        %v355 = vld [vmem:[%s260 + $0x28] sm:$0xff]
        %v356 = vld [vmem:[%s260 + $0x30] sm:$0xff]
        %v357 = vld [vmem:[%s260 + $0x38] sm:$0xff]
        %v358 = vld [vmem:[%s260 + $0x40] sm:$0xff]
        %v359 = vld [vmem:[%s260 + $0x48] sm:$0xff]
        %v360 = vld [vmem:[%s260 + $0x50] sm:$0xff]
        %v361 = vld [vmem:[%s260 + $0x58] sm:$0xff]
        %v362 = vld [vmem:[%s260 + $0x60] sm:$0xff]
        %v363 = vld [vmem:[%s260 + $0x68] sm:$0xff]
        %v364 = vld [vmem:[%s260 + $0x70] sm:$0xff]
        %v365 = vld [vmem:[%s260 + $0x78] sm:$0xff]
        %v366 = vld [vmem:[%s269] sm:$0xf]
        %v367 = vld [vmem:[%s269 + $0x4] sm:$0xf]
        %v368 = vld [vmem:[%s269 + $0x8] sm:$0xf]
        %v369 = vld [vmem:[%s269 + $0xc] sm:$0xf]
        %v370 = vld [vmem:[%s269 + $0x10] sm:$0xf]
        %v371 = vld [vmem:[%s269 + $0x14] sm:$0xf]
        %v372 = vld [vmem:[%s269 + $0x18] sm:$0xf]
        %v373 = vld [vmem:[%s269 + $0x1c] sm:$0xf]
        %v374 = vld [vmem:[%s269 + $0x20] sm:$0xf]
        %v375 = vld [vmem:[%s269 + $0x24] sm:$0xf]
        %v376 = vld [vmem:[%s269 + $0x28] sm:$0xf]
        %v377 = vld [vmem:[%s269 + $0x2c] sm:$0xf]
        %v378 = vld [vmem:[%s269 + $0x30] sm:$0xf]
        %v379 = vld [vmem:[%s269 + $0x34] sm:$0xf]
        %v380 = vld [vmem:[%s269 + $0x38] sm:$0xf]
        %v381 = vld [vmem:[%s269 + $0x3c] sm:$0xf]
        %v382 = vld [vmem:[%s269 + $0x40] sm:$0xf]
        %v383 = vld [vmem:[%s269 + $0x44] sm:$0xf]
        %v384 = vld [vmem:[%s269 + $0x48] sm:$0xf]
        %v385 = vld [vmem:[%s269 + $0x4c] sm:$0xf]
        %v386 = vld [vmem:[%s269 + $0x50] sm:$0xf]
        %v387 = vld [vmem:[%s269 + $0x54] sm:$0xf]
        %v388 = vld [vmem:[%s269 + $0x58] sm:$0xf]
        %v389 = vld [vmem:[%s269 + $0x5c] sm:$0xf]
        %v390 = vld [vmem:[%s269 + $0x60] sm:$0xf]
        %v391 = vld [vmem:[%s269 + $0x64] sm:$0xf]
        %v392 = vld [vmem:[%s269 + $0x68] sm:$0xf]
        %v393 = vld [vmem:[%s269 + $0x6c] sm:$0xf]
        %v394 = vld [vmem:[%s269 + $0x70] sm:$0xf]
        %v395 = vld [vmem:[%s269 + $0x74] sm:$0xf]
        %v396 = vld [vmem:[%s269 + $0x78] sm:$0xf]
        %v397 = vld [vmem:[%s269 + $0x7c] sm:$0xf]
        %v414 = vunpack.c.l.b16 %v350
        %v415 = vunpack.c.h.b16 %v350
        %v416 = vunpack.c.l.b16 %v351
        %v417 = vunpack.c.h.b16 %v351
        %v418 = vunpack.c.l.b16 %v352
        %v419 = vunpack.c.h.b16 %v352
        %v420 = vunpack.c.l.b16 %v353
        %v421 = vunpack.c.h.b16 %v353
        %v422 = vunpack.c.l.b16 %v354
        %v423 = vunpack.c.h.b16 %v354
        %v424 = vunpack.c.l.b16 %v355
        %v425 = vunpack.c.h.b16 %v355
        %v426 = vunpack.c.l.b16 %v356
        %v427 = vunpack.c.h.b16 %v356
        %v428 = vunpack.c.l.b16 %v357
        %v429 = vunpack.c.h.b16 %v357
        %v430 = vunpack.c.l.b16 %v358
        %v431 = vunpack.c.h.b16 %v358
        %v432 = vunpack.c.l.b16 %v359
        %v433 = vunpack.c.h.b16 %v359
        %v434 = vunpack.c.l.b16 %v360
        %v435 = vunpack.c.h.b16 %v360
        %v436 = vunpack.c.l.b16 %v361
        %v437 = vunpack.c.h.b16 %v361
        %v438 = vunpack.c.l.b16 %v362
        %v439 = vunpack.c.h.b16 %v362
        %v440 = vunpack.c.l.b16 %v363
        %v441 = vunpack.c.h.b16 %v363
        %v442 = vunpack.c.l.b16 %v364
        %v443 = vunpack.c.h.b16 %v364
        %v444 = vunpack.c.l.b16 %v365
        %v445 = vunpack.c.h.b16 %v365
        %v446 = vpack.c.b16 %v416, %v414
        %v447 = vpack.c.b16 %v417, %v415
        %v448 = vpack.c.b16 %v420, %v418
        %v449 = vpack.c.b16 %v421, %v419
        %v450 = vpack.c.b16 %v424, %v422
        %v451 = vpack.c.b16 %v425, %v423
        %v452 = vpack.c.b16 %v428, %v426
        %v453 = vpack.c.b16 %v429, %v427
        %v454 = vpack.c.b16 %v432, %v430
        %v455 = vpack.c.b16 %v433, %v431
        %v456 = vpack.c.b16 %v436, %v434
        %v457 = vpack.c.b16 %v437, %v435
        %v458 = vpack.c.b16 %v440, %v438
        %v459 = vpack.c.b16 %v441, %v439
        %v460 = vpack.c.b16 %v444, %v442
        %v461 = vpack.c.b16 %v445, %v443
        %v510 = vunpack.c.l.b16 %v366
        %v511 = vunpack.c.l.b16 %v367
        %v512 = vunpack.c.l.b16 %v368
        %v513 = vunpack.c.l.b16 %v369
        %v514 = vunpack.c.l.b16 %v370
        %v515 = vunpack.c.l.b16 %v371
        %v516 = vunpack.c.l.b16 %v372
        %v517 = vunpack.c.l.b16 %v373
        %v518 = vunpack.c.l.b16 %v374
        %v519 = vunpack.c.l.b16 %v375
        %v520 = vunpack.c.l.b16 %v376
        %v521 = vunpack.c.l.b16 %v377
        %v522 = vunpack.c.l.b16 %v378
        %v523 = vunpack.c.l.b16 %v379
        %v524 = vunpack.c.l.b16 %v380
        %v525 = vunpack.c.l.b16 %v381
        %v526 = vunpack.c.l.b16 %v382
        %v527 = vunpack.c.l.b16 %v383
        %v528 = vunpack.c.l.b16 %v384
        %v529 = vunpack.c.l.b16 %v385
        %v530 = vunpack.c.l.b16 %v386
        %v531 = vunpack.c.l.b16 %v387
        %v532 = vunpack.c.l.b16 %v388
        %v533 = vunpack.c.l.b16 %v389
        %v534 = vunpack.c.l.b16 %v390
        %v535 = vunpack.c.l.b16 %v391
        %v536 = vunpack.c.l.b16 %v392
        %v537 = vunpack.c.l.b16 %v393
        %v538 = vunpack.c.l.b16 %v394
        %v539 = vunpack.c.l.b16 %v395
        %v540 = vunpack.c.l.b16 %v396
        %v541 = vunpack.c.l.b16 %v397
        %v542 = vpack.c.b16 %v511, %v510
        %v543 = vpack.c.b16 %v513, %v512
        %v544 = vpack.c.b16 %v515, %v514
        %v545 = vpack.c.b16 %v517, %v516
        %v546 = vpack.c.b16 %v519, %v518
        %v547 = vpack.c.b16 %v521, %v520
        %v548 = vpack.c.b16 %v523, %v522
        %v549 = vpack.c.b16 %v525, %v524
        %v550 = vpack.c.b16 %v527, %v526
        %v551 = vpack.c.b16 %v529, %v528
        %v552 = vpack.c.b16 %v531, %v530
        %v553 = vpack.c.b16 %v533, %v532
        %v554 = vpack.c.b16 %v535, %v534
        %v555 = vpack.c.b16 %v537, %v536
        %v556 = vpack.c.b16 %v539, %v538
        %v557 = vpack.c.b16 %v541, %v540
        %574 = vmatprep.subr.bf16.mxu0 0
        %575 = vmatpush1.bf16.msra.mxu0 %v542
        %576 = vmatprep.subr.bf16.mxu0 0
        %577 = vmatpush1.bf16.msra.mxu0 %v543
        %578 = vmatprep.subr.bf16.mxu0 0
        %579 = vmatpush1.bf16.msra.mxu0 %v544
        %580 = vmatprep.subr.bf16.mxu0 0
        %581 = vmatpush1.bf16.msra.mxu0 %v545
        %582 = vmatprep.subr.bf16.mxu0 0
        %583 = vmatpush1.bf16.msra.mxu0 %v546
        %584 = vmatprep.subr.bf16.mxu0 0
        %585 = vmatpush1.bf16.msra.mxu0 %v547
        %586 = vmatprep.subr.bf16.mxu0 0
        %587 = vmatpush1.bf16.msra.mxu0 %v548
        %588 = vmatprep.subr.bf16.mxu0 0
        %589 = vmatpush1.bf16.msra.mxu0 %v549
        %590 = vmatprep.subr.bf16.mxu0 0
        %591 = vmatpush1.bf16.msra.mxu0 %v550
        %592 = vmatprep.subr.bf16.mxu0 0
        %593 = vmatpush1.bf16.msra.mxu0 %v551
        %594 = vmatprep.subr.bf16.mxu0 0
        %595 = vmatpush1.bf16.msra.mxu0 %v552
        %596 = vmatprep.subr.bf16.mxu0 0
        %597 = vmatpush1.bf16.msra.mxu0 %v553
        %598 = vmatprep.subr.bf16.mxu0 0
        %599 = vmatpush1.bf16.msra.mxu0 %v554
        %600 = vmatprep.subr.bf16.mxu0 0
        %601 = vmatpush1.bf16.msra.mxu0 %v555
        %602 = vmatprep.subr.bf16.mxu0 0
        %603 = vmatpush1.bf16.msra.mxu0 %v556
        %604 = vmatprep.subr.bf16.mxu0 0
        %605 = vmatpush1.bf16.msra.mxu0 %v557
        %606 = vmatprep.mubr.bf16.mxu0 %v447
        %607 = vmatmul.mubr.bf16.gmra.mrb[0].mxu0 %v446
        %v608 = vpop.f32.mrb[0].mxu0
        %v609 = vadd.f32 0.0, %v608
        %v610 = vpop.f32.mrb[0].mxu0
        %v611 = vpop.f32.mrb[0].mxu0
        %v612 = vadd.f32 0.0, %v611
        %v613 = vpop.f32.mrb[0].mxu0
        %614 = vmatprep.mubr.bf16.mxu0 %v449
        %615 = vmatmul.mubr.bf16.gmra.mrb[0].mxu0 %v448
        %v616 = vpop.f32.mrb[0].mxu0
        %v617 = vadd.f32 0.0, %v616
        %v618 = vpop.f32.mrb[0].mxu0
        %v619 = vpop.f32.mrb[0].mxu0
        %v620 = vadd.f32 0.0, %v619
        %v621 = vpop.f32.mrb[0].mxu0
        %622 = vmatprep.mubr.bf16.mxu0 %v451
        %623 = vmatmul.mubr.bf16.gmra.mrb[0].mxu0 %v450
        %v624 = vpop.f32.mrb[0].mxu0
        %v625 = vadd.f32 0.0, %v624
        %v626 = vpop.f32.mrb[0].mxu0
        %v627 = vpop.f32.mrb[0].mxu0
        %v628 = vadd.f32 0.0, %v627
        %v629 = vpop.f32.mrb[0].mxu0
        %630 = vmatprep.mubr.bf16.mxu0 %v453
        %631 = vmatmul.mubr.bf16.gmra.mrb[0].mxu0 %v452
        %v632 = vpop.f32.mrb[0].mxu0
        %v633 = vadd.f32 0.0, %v632
        %v634 = vpop.f32.mrb[0].mxu0
        %v635 = vpop.f32.mrb[0].mxu0
        %v636 = vadd.f32 0.0, %v635
        %v637 = vpop.f32.mrb[0].mxu0
        %638 = vmatprep.mubr.bf16.mxu0 %v455
        %639 = vmatmul.mubr.bf16.gmra.mrb[0].mxu0 %v454
        %v640 = vpop.f32.mrb[0].mxu0
        %v641 = vadd.f32 0.0, %v640
        %v642 = vpop.f32.mrb[0].mxu0
        %v643 = vpop.f32.mrb[0].mxu0
        %v644 = vadd.f32 0.0, %v643
        %v645 = vpop.f32.mrb[0].mxu0
        %646 = vmatprep.mubr.bf16.mxu0 %v457
        %647 = vmatmul.mubr.bf16.gmra.mrb[0].mxu0 %v456
        %v648 = vpop.f32.mrb[0].mxu0
        %v649 = vadd.f32 0.0, %v648
        %v650 = vpop.f32.mrb[0].mxu0
        %v651 = vpop.f32.mrb[0].mxu0
        %v652 = vadd.f32 0.0, %v651
        %v653 = vpop.f32.mrb[0].mxu0
        %654 = vmatprep.mubr.bf16.mxu0 %v459
        %655 = vmatmul.mubr.bf16.gmra.mrb[0].mxu0 %v458
        %v656 = vpop.f32.mrb[0].mxu0
        %v657 = vadd.f32 0.0, %v656
        %v658 = vpop.f32.mrb[0].mxu0
        %v659 = vpop.f32.mrb[0].mxu0
        %v660 = vadd.f32 0.0, %v659
        %v661 = vpop.f32.mrb[0].mxu0
        %662 = vmatprep.mubr.bf16.mxu0 %v461
        %663 = vmatmul.mubr.bf16.gmra.mrb[0].mxu0 %v460
        %v664 = vpop.f32.mrb[0].mxu0
        %v665 = vadd.f32 0.0, %v664
        %v666 = vpop.f32.mrb[0].mxu0
        %v667 = vpop.f32.mrb[0].mxu0
        %v668 = vadd.f32 0.0, %v667
        %v669 = vpop.f32.mrb[0].mxu0
        %670 = vdwg.mxu0
        %v671 = vadd.f32 %v334, %v609
        %v672 = vadd.f32 %v335, %v612
        %v673 = vadd.f32 %v336, %v617
        %v674 = vadd.f32 %v337, %v620
        %v675 = vadd.f32 %v338, %v625
        %v676 = vadd.f32 %v339, %v628
        %v677 = vadd.f32 %v340, %v633
        %v678 = vadd.f32 %v341, %v636
        %v679 = vadd.f32 %v342, %v641
        %v680 = vadd.f32 %v343, %v644
        %v681 = vadd.f32 %v344, %v649
        %v682 = vadd.f32 %v345, %v652
        %v683 = vadd.f32 %v346, %v657
        %v684 = vadd.f32 %v347, %v660
        %v685 = vadd.f32 %v348, %v665
        %v686 = vadd.f32 %v349, %v668
        %687 = vst [vmem:[#allocation2] sm:$0xff] %v671
        %688 = vst [vmem:[#allocation2 + $0x8] sm:$0xff] %v672
        %689 = vst [vmem:[#allocation2 + $0x10] sm:$0xff] %v673
        %690 = vst [vmem:[#allocation2 + $0x18] sm:$0xff] %v674
        %691 = vst [vmem:[#allocation2 + $0x20] sm:$0xff] %v675
        %692 = vst [vmem:[#allocation2 + $0x28] sm:$0xff] %v676
        %693 = vst [vmem:[#allocation2 + $0x30] sm:$0xff] %v677
        %694 = vst [vmem:[#allocation2 + $0x38] sm:$0xff] %v678
        %695 = vst [vmem:[#allocation2 + $0x40] sm:$0xff] %v679
        %696 = vst [vmem:[#allocation2 + $0x48] sm:$0xff] %v680
        %697 = vst [vmem:[#allocation2 + $0x50] sm:$0xff] %v681
        %698 = vst [vmem:[#allocation2 + $0x58] sm:$0xff] %v682
        %699 = vst [vmem:[#allocation2 + $0x60] sm:$0xff] %v683
        %700 = vst [vmem:[#allocation2 + $0x68] sm:$0xff] %v684
        %701 = vst [vmem:[#allocation2 + $0x70] sm:$0xff] %v685
        %702 = vst [vmem:[#allocation2 + $0x78] sm:$0xff] %v686
        // Predicated region
        $region49: #{autoencoder_forward.15} parent=31 // pred_check
          %p703 = pneg %p314
        $region50: #{autoencoder_forward.15} parent=31 // pred_check_branch
          %705 = sbr.rel (%p703) target = $region52
        $region51: #{autoencoder_forward.15} parent=31 // pred_region
          %v706 = vld [vmem:[#allocation2] sm:$0xff]
          %v707 = vld [vmem:[#allocation2 + $0x8] sm:$0xff]
          %v708 = vld [vmem:[#allocation2 + $0x10] sm:$0xff]
          %v709 = vld [vmem:[#allocation2 + $0x18] sm:$0xff]
          %v710 = vld [vmem:[#allocation2 + $0x20] sm:$0xff]
          %v711 = vld [vmem:[#allocation2 + $0x28] sm:$0xff]
          %v712 = vld [vmem:[#allocation2 + $0x30] sm:$0xff]
          %v713 = vld [vmem:[#allocation2 + $0x38] sm:$0xff]
          %v714 = vld [vmem:[#allocation2 + $0x40] sm:$0xff]
          %v715 = vld [vmem:[#allocation2 + $0x48] sm:$0xff]
          %v716 = vld [vmem:[#allocation2 + $0x50] sm:$0xff]
          %v717 = vld [vmem:[#allocation2 + $0x58] sm:$0xff]
          %v718 = vld [vmem:[#allocation2 + $0x60] sm:$0xff]
          %v719 = vld [vmem:[#allocation2 + $0x68] sm:$0xff]
          %v720 = vld [vmem:[#allocation2 + $0x70] sm:$0xff]
          %v721 = vld [vmem:[#allocation2 + $0x78] sm:$0xff]
          %v722 = vld [vmem:[%s277] sm:$0x1]
          %v724 = vlaneseq
          %v725 = vshrl.u32 %v724, 7
          %v726 = vsub.s32 0, %v725
          %v727 = vrot.slane %v722, %v726
          %v729 = vadd.f32 %v706, %v727
          %v730 = vadd.f32 %v707, %v727
          %v731 = vadd.f32 %v708, %v727
          %v732 = vadd.f32 %v709, %v727
          %v733 = vadd.f32 %v710, %v727
          %v734 = vadd.f32 %v711, %v727
          %v735 = vadd.f32 %v712, %v727
          %v736 = vadd.f32 %v713, %v727
          %v737 = vadd.f32 %v714, %v727
          %v738 = vadd.f32 %v715, %v727
          %v739 = vadd.f32 %v716, %v727
          %v740 = vadd.f32 %v717, %v727
          %v741 = vadd.f32 %v718, %v727
          %v742 = vadd.f32 %v719, %v727
          %v743 = vadd.f32 %v720, %v727
          %v744 = vadd.f32 %v721, %v727
          %v745 = vsub.f32 0.0, %v729
          %v746 = vsub.f32 0.0, %v730
          %v747 = vsub.f32 0.0, %v731
          %v748 = vsub.f32 0.0, %v732
          %v749 = vsub.f32 0.0, %v733
          %v750 = vsub.f32 0.0, %v734
          %v751 = vsub.f32 0.0, %v735
          %v752 = vsub.f32 0.0, %v736
          %v753 = vsub.f32 0.0, %v737
          %v754 = vsub.f32 0.0, %v738
          %v755 = vsub.f32 0.0, %v739
          %v756 = vsub.f32 0.0, %v740
          %v757 = vsub.f32 0.0, %v741
          %v758 = vsub.f32 0.0, %v742
          %v759 = vsub.f32 0.0, %v743
          %v760 = vsub.f32 0.0, %v744
          %v761 = vmul.f32 %v745, 1.442695
          %v762 = vpow.pop %v761
          %v763 = vmul.f32 %v746, 1.442695
          %v764 = vpow.pop %v763
          %v765 = vmul.f32 %v747, 1.442695
          %v766 = vpow.pop %v765
          %v767 = vmul.f32 %v748, 1.442695
          %v768 = vpow.pop %v767
          %v769 = vmul.f32 %v749, 1.442695
          %v770 = vpow.pop %v769
          %v771 = vmul.f32 %v750, 1.442695
          %v772 = vpow.pop %v771
          %v773 = vmul.f32 %v751, 1.442695
          %v774 = vpow.pop %v773
          %v775 = vmul.f32 %v752, 1.442695
          %v776 = vpow.pop %v775
          %v777 = vmul.f32 %v753, 1.442695
          %v778 = vpow.pop %v777
          %v779 = vmul.f32 %v754, 1.442695
          %v780 = vpow.pop %v779
          %v781 = vmul.f32 %v755, 1.442695
          %v782 = vpow.pop %v781
          %v783 = vmul.f32 %v756, 1.442695
          %v784 = vpow.pop %v783
          %v785 = vmul.f32 %v757, 1.442695
          %v786 = vpow.pop %v785
          %v787 = vmul.f32 %v758, 1.442695
          %v788 = vpow.pop %v787
          %v789 = vmul.f32 %v759, 1.442695
          %v790 = vpow.pop %v789
          %v791 = vmul.f32 %v760, 1.442695
          %v792 = vpow.pop %v791
          %v793 = vadd.f32 %v762, 1.0
          %v794 = vadd.f32 %v764, 1.0
          %v795 = vadd.f32 %v766, 1.0
          %v796 = vadd.f32 %v768, 1.0
          %v797 = vadd.f32 %v770, 1.0
          %v798 = vadd.f32 %v772, 1.0
          %v799 = vadd.f32 %v774, 1.0
          %v800 = vadd.f32 %v776, 1.0
          %v801 = vadd.f32 %v778, 1.0
          %v802 = vadd.f32 %v780, 1.0
          %v803 = vadd.f32 %v782, 1.0
          %v804 = vadd.f32 %v784, 1.0
          %v805 = vadd.f32 %v786, 1.0
          %v806 = vadd.f32 %v788, 1.0
          %v807 = vadd.f32 %v790, 1.0
          %v808 = vadd.f32 %v792, 1.0
          %v809 = vrcp.pop %v793
          %v810 = vrcp.pop %v794
          %v811 = vrcp.pop %v795
          %v812 = vrcp.pop %v796
          %v813 = vrcp.pop %v797
          %v814 = vrcp.pop %v798
          %v815 = vrcp.pop %v799
          %v816 = vrcp.pop %v800
          %v817 = vrcp.pop %v801
          %v818 = vrcp.pop %v802
          %v819 = vrcp.pop %v803
          %v820 = vrcp.pop %v804
          %v821 = vrcp.pop %v805
          %v822 = vrcp.pop %v806
          %v823 = vrcp.pop %v807
          %v824 = vrcp.pop %v808
          %v825 = vmax.f32 %v809, 0.0
          %v826 = vmax.f32 %v810, 0.0
          %v827 = vmax.f32 %v811, 0.0
          %v828 = vmax.f32 %v812, 0.0
          %v829 = vmax.f32 %v813, 0.0
          %v830 = vmax.f32 %v814, 0.0
          %v831 = vmax.f32 %v815, 0.0
          %v832 = vmax.f32 %v816, 0.0
          %v833 = vmax.f32 %v817, 0.0
          %v834 = vmax.f32 %v818, 0.0
          %v835 = vmax.f32 %v819, 0.0
          %v836 = vmax.f32 %v820, 0.0
          %v837 = vmax.f32 %v821, 0.0
          %v838 = vmax.f32 %v822, 0.0
          %v839 = vmax.f32 %v823, 0.0
          %v840 = vmax.f32 %v824, 0.0
          %v841 = vmin.f32 %v825, 1.0
          %v842 = vmin.f32 %v826, 1.0
          %v843 = vmin.f32 %v827, 1.0
          %v844 = vmin.f32 %v828, 1.0
          %v845 = vmin.f32 %v829, 1.0
          %v846 = vmin.f32 %v830, 1.0
          %v847 = vmin.f32 %v831, 1.0
          %v848 = vmin.f32 %v832, 1.0
          %v849 = vmin.f32 %v833, 1.0
          %v850 = vmin.f32 %v834, 1.0
          %v851 = vmin.f32 %v835, 1.0
          %v852 = vmin.f32 %v836, 1.0
          %v853 = vmin.f32 %v837, 1.0
          %v854 = vmin.f32 %v838, 1.0
          %v855 = vmin.f32 %v839, 1.0
          %v856 = vmin.f32 %v840, 1.0
          %857 = vst [vmem:[%s308] sm:$0xff] %v841
          %858 = vst [vmem:[%s308 + $0x8] sm:$0xff] %v842
          %859 = vst [vmem:[%s308 + $0x10] sm:$0xff] %v843
          %860 = vst [vmem:[%s308 + $0x18] sm:$0xff] %v844
          %861 = vst [vmem:[%s308 + $0x20] sm:$0xff] %v845
          %862 = vst [vmem:[%s308 + $0x28] sm:$0xff] %v846
          %863 = vst [vmem:[%s308 + $0x30] sm:$0xff] %v847
          %864 = vst [vmem:[%s308 + $0x38] sm:$0xff] %v848
          %865 = vst [vmem:[%s308 + $0x40] sm:$0xff] %v849
          %866 = vst [vmem:[%s308 + $0x48] sm:$0xff] %v850
          %867 = vst [vmem:[%s308 + $0x50] sm:$0xff] %v851
          %868 = vst [vmem:[%s308 + $0x58] sm:$0xff] %v852
          %869 = vst [vmem:[%s308 + $0x60] sm:$0xff] %v853
          %870 = vst [vmem:[%s308 + $0x68] sm:$0xff] %v854
          %871 = vst [vmem:[%s308 + $0x70] sm:$0xff] %v855
          %872 = vst [vmem:[%s308 + $0x78] sm:$0xff] %v856
        $region52: #{autoencoder_forward.15} parent=31 // pred_fallthru
          _
        %s873 = sand.u32 %s149, 1
        %s874 = scalar_lea.sflag [#allocation5], %s873
        %s875 = sand.u32 %s149, 1
        %s876 = smul.addr %s875, 128
        %s877 = scalar_lea.vmem [#allocation9], %s876
        // Predicated region
        $region53: #{autoencoder_forward.15} parent=31 // pred_check
          %p878 = pneg %p159
        $region54: #{autoencoder_forward.15} parent=31 // pred_check_branch
          %880 = sbr.rel (%p878) target = $region56
        $region55: #{autoencoder_forward.15} parent=31 // pred_region
          %s881 = smul.u32 16, %s30
          %s883 = ssub.s32 2048, 2048
          %884 = vsyncadd %s874, %s883
          %s885 = sadd.s32 %s31, %s881
          %s886 = smul.addr %s29, 16
          %s887 = sadd.s32 %s885, %s886
          %s888 = smul.addr %s887, 128
          %s889 = scalar_lea.hbm %s3, %s888
          %s890 = sshll.u32 %s877, 4
          %s891 = int_to_ptr.vmem [resolvable:$true] %s890
          %896 = dma.vmem_to_hbm [thread:$0]  %s891, 2048, %s889, %s874, 128, 128, 8
        $region56: #{autoencoder_forward.15} parent=31 // pred_fallthru
          _
      $region32: #{autoencoder_forward.15} parent=5 // pred_fallthru
        _
      %p897 = scmp.le.s32.totalorder 2, %s18
      // Predicated region
      $region57: #{autoencoder_forward.15} parent=5 // pred_check
        %p898 = pneg %p897
      $region58: #{autoencoder_forward.15} parent=5 // pred_check_branch
        %900 = sbr.rel (%p898) target = $region60
      $region59: #{autoencoder_forward.15} parent=5 // pred_region
        %s901 = ssub.s32 %s18, 2
        // Predicated region
        $region61: #{autoencoder_forward.15} parent=59 // pred_check
          %p902 = pneg %p165
        $region62: #{autoencoder_forward.15} parent=59 // pred_check_branch
          %904 = sbr.rel (%p902) target = $region64
        $region63: #{autoencoder_forward.15} parent=59 // pred_region
          %s905 = sand.u32 %s150, 1
          %s906 = scalar_lea.sflag [#allocation5], %s905
          %s907 = sand.u32 %s150, 1
          %s908 = smul.addr %s907, 128
          %s909 = scalar_lea.vmem [#allocation9], %s908
          %910 = dma.done %s906, 2048
        $region64: #{autoencoder_forward.15} parent=59 // pred_fallthru
          _
      $region60: #{autoencoder_forward.15} parent=5 // pred_fallthru
        _
    $region6: #{autoencoder_forward.15} parent=1 // loop_footer
      %s22 = sadd.s32 1, %s18
    $region7: #{autoencoder_forward.15} parent=1 // loop_footer_branch
      %17 = sbr.rel target = $region3
    $region8: #{autoencoder_forward.15} parent=1 // loop_exit
      _
    %911 = vsyncpa [#allocation4], 1
    %s912 = scalar_lea.sflag [#allocation4], 1
    %913 = vsyncpa %s912, 1
    %914 = vsyncpa [#allocation7], 1
    %s915 = scalar_lea.sflag [#allocation7], 1
    %916 = vsyncpa %s915, 1
    %917 = vsyncpa [#allocation5], 1
    %s918 = scalar_lea.sflag [#allocation5], 1
    %919 = vsyncpa %s918, 1

</llo_original>
